<compile_context>
chip_gen: v5e
topology: v5e:2x2
jax: 0.10.0
libtpu: 0.0.40
codegen_flags: <defaults>
</compile_context>

<pallas_src>
import functools
import math

import numpy as np
import jax
import jax.numpy as jnp
from jax import lax
from jax.experimental import pallas as pl
from jax.experimental.pallas import tpu as pltpu


def _round_up(x, m):
    return ((x + m - 1) // m) * m


# ---------------------------------------------------------------------------
# Fused kernel
# ---------------------------------------------------------------------------
def _fused_mask_conv_kernel(len_ref, x_ref, w1_ref, b1_ref, w2_ref, b2_ref,
                            o_ref, x2d_ref, mid2d_ref, *,
                            C_in, C_mid, H, T, T_pad, T_out):
    """One batch element per grid step.

    x_ref    : (C_in, H, T)            input block (batch dim squeezed)
    w1_ref   : (9, C_mid, C_in)        conv1 taps, tap index t = kh*3 + kw
    b1_ref   : (C_mid, 1)              conv1 bias
    w2_ref   : (9, C_mid, C_mid)       conv2 taps
    b2_ref   : (C_mid, 1)              conv2 bias
    o_ref    : (C_mid, H, T_out)       final masked output block
    x2d_ref  : (C_in,  (H+3)*T_pad)    VMEM: zero-padded flattened input plane
    mid2d_ref: (C_mid, (H+3)*T_pad)    VMEM: zero-padded conv1+hardtanh plane
    len_ref  : (B,) int32 SMEM         scalar prefetch: final (post-conv2) lens
    """
    b = pl.program_id(0)
    length = len_ref[b]
    NP = H * T_pad  # flattened plane size (H output rows x T_pad lanes)

    # ---- stage the input into a zero-padded, flattened plane ---------------
    # Row 0 and row H+1 are the zero H-halo (conv padding (1, 0)); columns
    # [T, T_pad) of each row and the trailing slack row stay zero as well.
    x2d_ref[...] = jnp.zeros_like(x2d_ref)
    for h in range(H):
        x2d_ref[:, (h + 1) * T_pad:(h + 1) * T_pad + T] = x_ref[:, h, :]

    # ---- conv1 + bias + hardtanh: 9 whole-plane MXU dots --------------------
    acc1 = jnp.zeros((C_mid, NP), jnp.float32)
    for kh in range(3):
        for kw in range(3):
            off = kh * T_pad + kw
            acc1 = acc1 + jnp.dot(w1_ref[kh * 3 + kw],
                                  x2d_ref[:, off:off + NP],
                                  preferred_element_type=jnp.float32)
    mid = jnp.clip(acc1 + b1_ref[...], 0.0, 20.0)

    # NOTE: the intermediate time-mask of the reference module is skipped on
    # purpose: every kept output column t < final_length of conv2 only reads
    # conv1 columns t..t+2, all of which are < intermediate_length, and every
    # junk column only feeds output columns that the final mask zeroes anyway.
    mid2d_ref[...] = jnp.zeros_like(mid2d_ref)        # H-halo / tail zeros
    mid2d_ref[:, T_pad:T_pad + NP] = mid

    # ---- conv2 + bias: 9 whole-plane MXU dots -------------------------------
    acc2 = jnp.zeros((C_mid, NP), jnp.float32)
    for kh in range(3):
        for kw in range(3):
            off = kh * T_pad + kw
            acc2 = acc2 + jnp.dot(w2_ref[kh * 3 + kw],
                                  mid2d_ref[:, off:off + NP],
                                  preferred_element_type=jnp.float32)
    acc2 = acc2 + b2_ref[...]

    # ---- final time mask + exact-width store --------------------------------
    keep = lax.broadcasted_iota(jnp.int32, (C_mid, T_out), 1) < length
    for h in range(H):
        row = acc2[:, h * T_pad:h * T_pad + T_out]
        o_ref[:, h, :] = jnp.where(keep, row, 0.0)


# ---------------------------------------------------------------------------
# Wrapper
# ---------------------------------------------------------------------------
def _conv_out_lengths(lengths, kernel_w=3, stride_w=1, pad_w=0, dil_w=1):
    # Same formula as MaskConv2d._get_sequence_lengths. For stride_w == 1 the
    # float-then-trunc of PyTorch and floor-division are identical (exact div).
    numer = lengths + 2 * pad_w - dil_w * (kernel_w - 1) - 1
    return (numer // stride_w + 1).astype(jnp.int32)


def mask_conv2d_forward(x, seq_lengths, params):
    """Fused Pallas implementation of MaskConv2d.forward.

    x: (B, C_in, H, T) float32; seq_lengths: (B,) int.
    Returns (output (B, C_mid, H, T-4), new_seq_lengths (B,)).
    """
    B, C_in, H, T = x.shape
    C_mid = params["w1"].shape[0]
    assert params["w1"].shape == (C_mid, C_in, 3, 3)
    assert params["w2"].shape == (C_mid, C_mid, 3, 3)
    assert T >= 5, "time axis too short for two kernel-3 convs without padding"

    lens1 = _conv_out_lengths(seq_lengths.astype(jnp.int32))   # after conv1
    lens2 = _conv_out_lengths(lens1)                           # after conv2

    T_out = T - 4                       # two convs, kernel 3, no time padding
    T_pad = _round_up(T, 128)           # lane-dense internal time width

    # Weights as (tap, C_out, C_in) so each tap is a single (C_out, C_in) dot.
    w1_taps = jnp.transpose(params["w1"], (2, 3, 0, 1)).reshape(9, C_mid, C_in)
    w2_taps = jnp.transpose(params["w2"], (2, 3, 0, 1)).reshape(9, C_mid, C_mid)
    b1 = params["b1"].reshape(C_mid, 1).astype(jnp.float32)
    b2 = params["b2"].reshape(C_mid, 1).astype(jnp.float32)

    kern = functools.partial(_fused_mask_conv_kernel, C_in=C_in, C_mid=C_mid,
                             H=H, T=T, T_pad=T_pad, T_out=T_out)
    out = pl.pallas_call(
        kern,
        out_shape=jax.ShapeDtypeStruct((B, C_mid, H, T_out), jnp.float32),
        grid_spec=pltpu.PrefetchScalarGridSpec(
            num_scalar_prefetch=1,
            grid=(B,),
            in_specs=[
                pl.BlockSpec((None, C_in, H, T), lambda b, lens: (b, 0, 0, 0)),
                pl.BlockSpec((9, C_mid, C_in), lambda b, lens: (0, 0, 0)),
                pl.BlockSpec((C_mid, 1), lambda b, lens: (0, 0)),
                pl.BlockSpec((9, C_mid, C_mid), lambda b, lens: (0, 0, 0)),
                pl.BlockSpec((C_mid, 1), lambda b, lens: (0, 0)),
            ],
            out_specs=pl.BlockSpec((None, C_mid, H, T_out),
                                   lambda b, lens: (b, 0, 0, 0)),
            scratch_shapes=[
                pltpu.VMEM((C_in, (H + 3) * T_pad), jnp.float32),
                pltpu.VMEM((C_mid, (H + 3) * T_pad), jnp.float32),
            ],
        ),
        compiler_params=pltpu.CompilerParams(
            dimension_semantics=("parallel",)),   # megacore sharding on v7x
    )(lens2, x.astype(jnp.float32), w1_taps, b1, w2_taps, b2)
    return out, lens2


# ---------------------------------------------------------------------------
# Pure-JAX reference (mirrors the PyTorch forward exactly)
# ---------------------------------------------------------------------------
def _mask_time(o, lens):
    t = o.shape[3]
    m = jnp.arange(t)[None, None, None, :] < lens[:, None, None, None]
    return jnp.where(m, o, 0.0)


def ref_forward(x, seq_lengths, params):
    lens = seq_lengths.astype(jnp.int32)

    out = lax.conv_general_dilated(x, params["w1"], window_strides=(1, 1),
                                   padding=((1, 1), (0, 0)),
                                   dimension_numbers=("NCHW", "OIHW", "NCHW"))
    out = out + params["b1"][None, :, None, None]
    lens = _conv_out_lengths(lens)
    out = _mask_time(out, lens)

    out = jnp.clip(out, 0.0, 20.0)
    out = _mask_time(out, lens)

    out = lax.conv_general_dilated(out, params["w2"], window_strides=(1, 1),
                                   padding=((1, 1), (0, 0)),
                                   dimension_numbers=("NCHW", "OIHW", "NCHW"))
    out = out + params["b2"][None, :, None, None]
    lens = _conv_out_lengths(lens)
    out = _mask_time(out, lens)
    return out, lens


# ---------------------------------------------------------------------------
if __name__ == "__main__":
    B, C_in, H, T = 2, 4, 16, 16
    C_mid = 8

    key = jax.random.PRNGKey(0)
    kx, kw1, kb1, kw2, kb2 = jax.random.split(key, 5)

    x = jax.random.normal(kx, (B, C_in, H, T), dtype=jnp.float32)
    seq_lengths = jnp.array([16, 11], dtype=jnp.int32)

    # Deterministic PyTorch-style uniform init: U(-1/sqrt(fan_in), 1/sqrt(fan_in))
    bound1 = 1.0 / math.sqrt(C_in * 3 * 3)
    bound2 = 1.0 / math.sqrt(C_mid * 3 * 3)
    params = {
        "w1": jax.random.uniform(kw1, (C_mid, C_in, 3, 3), jnp.float32, -bound1, bound1),
        "b1": jax.random.uniform(kb1, (C_mid,), jnp.float32, -bound1, bound1),
        "w2": jax.random.uniform(kw2, (C_mid, C_mid, 3, 3), jnp.float32, -bound2, bound2),
        "b2": jax.random.uniform(kb2, (C_mid,), jnp.float32, -bound2, bound2),
    }

    out, out_lens = mask_conv2d_forward(x, seq_lengths, params)
    out = jax.block_until_ready(out)
    out_lens = jax.block_until_ready(out_lens)

    ref_out, ref_lens = ref_forward(x, seq_lengths, params)
    np.testing.assert_allclose(np.asarray(out), np.asarray(ref_out),
                               rtol=1e-4, atol=1e-4)
    np.testing.assert_array_equal(np.asarray(out_lens), np.asarray(ref_lens))

    print("KERNEL_OK")
</pallas_src>

<mosaic_0001>
module attributes {stable_mosaic.version = 11 : i64} {
  func.func @_fused_mask_conv_kernel(%arg0: i32, %arg1: memref<2xi32, #tpu.memory_space<smem>>, %arg2: memref<1x4x16x16xf32, #tpu.memory_space<vmem>>, %arg3: memref<9x8x4xf32, #tpu.memory_space<vmem>>, %arg4: memref<8x1xf32, #tpu.memory_space<vmem>>, %arg5: memref<9x8x8xf32, #tpu.memory_space<vmem>>, %arg6: memref<8x1xf32, #tpu.memory_space<vmem>>, %arg7: memref<1x8x16x12xf32, #tpu.memory_space<vmem>>, %arg8: memref<4x2432xf32, #tpu.memory_space<vmem>>, %arg9: memref<8x2432xf32, #tpu.memory_space<vmem>>) attributes {dimension_semantics = [#tpu.dimension_semantics<parallel>], iteration_bounds = array<i64: 2>, scalar_prefetch = 1 : i64, scratch_operands = 2 : i64, tpu.core_type = #tpu.core_type<tc>, window_params = [{transform_indices = @transform_0, window_bounds = array<i64: 1, 4, 16, 16>}, {pipeline_mode = #tpu.pipeline_mode<synchronous>, transform_indices = @transform_1, window_bounds = array<i64: 9, 8, 4>}, {pipeline_mode = #tpu.pipeline_mode<synchronous>, transform_indices = @transform_2, window_bounds = array<i64: 8, 1>}, {pipeline_mode = #tpu.pipeline_mode<synchronous>, transform_indices = @transform_3, window_bounds = array<i64: 9, 8, 8>}, {pipeline_mode = #tpu.pipeline_mode<synchronous>, transform_indices = @transform_4, window_bounds = array<i64: 8, 1>}, {transform_indices = @transform_5, window_bounds = array<i64: 1, 8, 16, 12>}]} {
    %0 = arith.index_cast %arg0 : i32 to index
    %1 = memref.load %arg1[%0] : memref<2xi32, #tpu.memory_space<smem>>
    %cst = arith.constant 0.000000e+00 : f32
    %2 = vector.broadcast %cst : f32 to vector<4x2432xf32>
    %c0 = arith.constant 0 : index
    %c0_0 = arith.constant 0 : index
    %3 = vector.load %arg8[%c0, %c0_0] : memref<4x2432xf32, #tpu.memory_space<vmem>>, vector<4x2432xf32>
    tpu.vector_store %arg8[%c0, %c0_0], %2 {strides = array<i32>} : memref<4x2432xf32, #tpu.memory_space<vmem>>, vector<4x2432xf32>,
    %c0_1 = arith.constant 0 : index
    %c0_2 = arith.constant 0 : index
    %c0_3 = arith.constant 0 : index
    %c0_4 = arith.constant 0 : index
    %4 = vector.load %arg2[%c0_1, %c0_2, %c0_3, %c0_4] : memref<1x4x16x16xf32, #tpu.memory_space<vmem>>, vector<1x4x1x16xf32>
    %5 = vector.shape_cast %4 : vector<1x4x1x16xf32> to vector<4x16xf32>
    %c0_5 = arith.constant 0 : index
    %c128 = arith.constant 128 : index
    %6 = vector.load %arg8[%c0_5, %c128] : memref<4x2432xf32, #tpu.memory_space<vmem>>, vector<4x16xf32>
    tpu.vector_store %arg8[%c0_5, %c128], %5 {strides = array<i32>} : memref<4x2432xf32, #tpu.memory_space<vmem>>, vector<4x16xf32>,
    %c0_6 = arith.constant 0 : index
    %c0_7 = arith.constant 0 : index
    %c1 = arith.constant 1 : index
    %c0_8 = arith.constant 0 : index
    %7 = vector.load %arg2[%c0_6, %c0_7, %c1, %c0_8] : memref<1x4x16x16xf32, #tpu.memory_space<vmem>>, vector<1x4x1x16xf32>
    %8 = vector.shape_cast %7 : vector<1x4x1x16xf32> to vector<4x16xf32>
    %c0_9 = arith.constant 0 : index
    %c256 = arith.constant 256 : index
    %9 = vector.load %arg8[%c0_9, %c256] : memref<4x2432xf32, #tpu.memory_space<vmem>>, vector<4x16xf32>
    tpu.vector_store %arg8[%c0_9, %c256], %8 {strides = array<i32>} : memref<4x2432xf32, #tpu.memory_space<vmem>>, vector<4x16xf32>,
    %c0_10 = arith.constant 0 : index
    %c0_11 = arith.constant 0 : index
    %c2 = arith.constant 2 : index
    %c0_12 = arith.constant 0 : index
    %10 = vector.load %arg2[%c0_10, %c0_11, %c2, %c0_12] : memref<1x4x16x16xf32, #tpu.memory_space<vmem>>, vector<1x4x1x16xf32>
    %11 = vector.shape_cast %10 : vector<1x4x1x16xf32> to vector<4x16xf32>
    %c0_13 = arith.constant 0 : index
    %c384 = arith.constant 384 : index
    %12 = vector.load %arg8[%c0_13, %c384] : memref<4x2432xf32, #tpu.memory_space<vmem>>, vector<4x16xf32>
    tpu.vector_store %arg8[%c0_13, %c384], %11 {strides = array<i32>} : memref<4x2432xf32, #tpu.memory_space<vmem>>, vector<4x16xf32>,
    %c0_14 = arith.constant 0 : index
    %c0_15 = arith.constant 0 : index
    %c3 = arith.constant 3 : index
    %c0_16 = arith.constant 0 : index
    %13 = vector.load %arg2[%c0_14, %c0_15, %c3, %c0_16] : memref<1x4x16x16xf32, #tpu.memory_space<vmem>>, vector<1x4x1x16xf32>
    %14 = vector.shape_cast %13 : vector<1x4x1x16xf32> to vector<4x16xf32>
    %c0_17 = arith.constant 0 : index
    %c512 = arith.constant 512 : index
    %15 = vector.load %arg8[%c0_17, %c512] : memref<4x2432xf32, #tpu.memory_space<vmem>>, vector<4x16xf32>
    tpu.vector_store %arg8[%c0_17, %c512], %14 {strides = array<i32>} : memref<4x2432xf32, #tpu.memory_space<vmem>>, vector<4x16xf32>,
    %c0_18 = arith.constant 0 : index
    %c0_19 = arith.constant 0 : index
    %c4 = arith.constant 4 : index
    %c0_20 = arith.constant 0 : index
    %16 = vector.load %arg2[%c0_18, %c0_19, %c4, %c0_20] : memref<1x4x16x16xf32, #tpu.memory_space<vmem>>, vector<1x4x1x16xf32>
    %17 = vector.shape_cast %16 : vector<1x4x1x16xf32> to vector<4x16xf32>
    %c0_21 = arith.constant 0 : index
    %c640 = arith.constant 640 : index
    %18 = vector.load %arg8[%c0_21, %c640] : memref<4x2432xf32, #tpu.memory_space<vmem>>, vector<4x16xf32>
    tpu.vector_store %arg8[%c0_21, %c640], %17 {strides = array<i32>} : memref<4x2432xf32, #tpu.memory_space<vmem>>, vector<4x16xf32>,
    %c0_22 = arith.constant 0 : index
    %c0_23 = arith.constant 0 : index
    %c5 = arith.constant 5 : index
    %c0_24 = arith.constant 0 : index
    %19 = vector.load %arg2[%c0_22, %c0_23, %c5, %c0_24] : memref<1x4x16x16xf32, #tpu.memory_space<vmem>>, vector<1x4x1x16xf32>
    %20 = vector.shape_cast %19 : vector<1x4x1x16xf32> to vector<4x16xf32>
    %c0_25 = arith.constant 0 : index
    %c768 = arith.constant 768 : index
    %21 = vector.load %arg8[%c0_25, %c768] : memref<4x2432xf32, #tpu.memory_space<vmem>>, vector<4x16xf32>
    tpu.vector_store %arg8[%c0_25, %c768], %20 {strides = array<i32>} : memref<4x2432xf32, #tpu.memory_space<vmem>>, vector<4x16xf32>,
    %c0_26 = arith.constant 0 : index
    %c0_27 = arith.constant 0 : index
    %c6 = arith.constant 6 : index
    %c0_28 = arith.constant 0 : index
    %22 = vector.load %arg2[%c0_26, %c0_27, %c6, %c0_28] : memref<1x4x16x16xf32, #tpu.memory_space<vmem>>, vector<1x4x1x16xf32>
    %23 = vector.shape_cast %22 : vector<1x4x1x16xf32> to vector<4x16xf32>
    %c0_29 = arith.constant 0 : index
    %c896 = arith.constant 896 : index
    %24 = vector.load %arg8[%c0_29, %c896] : memref<4x2432xf32, #tpu.memory_space<vmem>>, vector<4x16xf32>
    tpu.vector_store %arg8[%c0_29, %c896], %23 {strides = array<i32>} : memref<4x2432xf32, #tpu.memory_space<vmem>>, vector<4x16xf32>,
    %c0_30 = arith.constant 0 : index
    %c0_31 = arith.constant 0 : index
    %c7 = arith.constant 7 : index
    %c0_32 = arith.constant 0 : index
    %25 = vector.load %arg2[%c0_30, %c0_31, %c7, %c0_32] : memref<1x4x16x16xf32, #tpu.memory_space<vmem>>, vector<1x4x1x16xf32>
    %26 = vector.shape_cast %25 : vector<1x4x1x16xf32> to vector<4x16xf32>
    %c0_33 = arith.constant 0 : index
    %c1024 = arith.constant 1024 : index
    %27 = vector.load %arg8[%c0_33, %c1024] : memref<4x2432xf32, #tpu.memory_space<vmem>>, vector<4x16xf32>
    tpu.vector_store %arg8[%c0_33, %c1024], %26 {strides = array<i32>} : memref<4x2432xf32, #tpu.memory_space<vmem>>, vector<4x16xf32>,
    %c0_34 = arith.constant 0 : index
    %c0_35 = arith.constant 0 : index
    %c8 = arith.constant 8 : index
    %c0_36 = arith.constant 0 : index
    %28 = vector.load %arg2[%c0_34, %c0_35, %c8, %c0_36] : memref<1x4x16x16xf32, #tpu.memory_space<vmem>>, vector<1x4x1x16xf32>
    %29 = vector.shape_cast %28 : vector<1x4x1x16xf32> to vector<4x16xf32>
    %c0_37 = arith.constant 0 : index
    %c1152 = arith.constant 1152 : index
    %30 = vector.load %arg8[%c0_37, %c1152] : memref<4x2432xf32, #tpu.memory_space<vmem>>, vector<4x16xf32>
    tpu.vector_store %arg8[%c0_37, %c1152], %29 {strides = array<i32>} : memref<4x2432xf32, #tpu.memory_space<vmem>>, vector<4x16xf32>,
    %c0_38 = arith.constant 0 : index
    %c0_39 = arith.constant 0 : index
    %c9 = arith.constant 9 : index
    %c0_40 = arith.constant 0 : index
    %31 = vector.load %arg2[%c0_38, %c0_39, %c9, %c0_40] : memref<1x4x16x16xf32, #tpu.memory_space<vmem>>, vector<1x4x1x16xf32>
    %32 = vector.shape_cast %31 : vector<1x4x1x16xf32> to vector<4x16xf32>
    %c0_41 = arith.constant 0 : index
    %c1280 = arith.constant 1280 : index
    %33 = vector.load %arg8[%c0_41, %c1280] : memref<4x2432xf32, #tpu.memory_space<vmem>>, vector<4x16xf32>
    tpu.vector_store %arg8[%c0_41, %c1280], %32 {strides = array<i32>} : memref<4x2432xf32, #tpu.memory_space<vmem>>, vector<4x16xf32>,
    %c0_42 = arith.constant 0 : index
    %c0_43 = arith.constant 0 : index
    %c10 = arith.constant 10 : index
    %c0_44 = arith.constant 0 : index
    %34 = vector.load %arg2[%c0_42, %c0_43, %c10, %c0_44] : memref<1x4x16x16xf32, #tpu.memory_space<vmem>>, vector<1x4x1x16xf32>
    %35 = vector.shape_cast %34 : vector<1x4x1x16xf32> to vector<4x16xf32>
    %c0_45 = arith.constant 0 : index
    %c1408 = arith.constant 1408 : index
    %36 = vector.load %arg8[%c0_45, %c1408] : memref<4x2432xf32, #tpu.memory_space<vmem>>, vector<4x16xf32>
    tpu.vector_store %arg8[%c0_45, %c1408], %35 {strides = array<i32>} : memref<4x2432xf32, #tpu.memory_space<vmem>>, vector<4x16xf32>,
    %c0_46 = arith.constant 0 : index
    %c0_47 = arith.constant 0 : index
    %c11 = arith.constant 11 : index
    %c0_48 = arith.constant 0 : index
    %37 = vector.load %arg2[%c0_46, %c0_47, %c11, %c0_48] : memref<1x4x16x16xf32, #tpu.memory_space<vmem>>, vector<1x4x1x16xf32>
    %38 = vector.shape_cast %37 : vector<1x4x1x16xf32> to vector<4x16xf32>
    %c0_49 = arith.constant 0 : index
    %c1536 = arith.constant 1536 : index
    %39 = vector.load %arg8[%c0_49, %c1536] : memref<4x2432xf32, #tpu.memory_space<vmem>>, vector<4x16xf32>
    tpu.vector_store %arg8[%c0_49, %c1536], %38 {strides = array<i32>} : memref<4x2432xf32, #tpu.memory_space<vmem>>, vector<4x16xf32>,
    %c0_50 = arith.constant 0 : index
    %c0_51 = arith.constant 0 : index
    %c12 = arith.constant 12 : index
    %c0_52 = arith.constant 0 : index
    %40 = vector.load %arg2[%c0_50, %c0_51, %c12, %c0_52] : memref<1x4x16x16xf32, #tpu.memory_space<vmem>>, vector<1x4x1x16xf32>
    %41 = vector.shape_cast %40 : vector<1x4x1x16xf32> to vector<4x16xf32>
    %c0_53 = arith.constant 0 : index
    %c1664 = arith.constant 1664 : index
    %42 = vector.load %arg8[%c0_53, %c1664] : memref<4x2432xf32, #tpu.memory_space<vmem>>, vector<4x16xf32>
    tpu.vector_store %arg8[%c0_53, %c1664], %41 {strides = array<i32>} : memref<4x2432xf32, #tpu.memory_space<vmem>>, vector<4x16xf32>,
    %c0_54 = arith.constant 0 : index
    %c0_55 = arith.constant 0 : index
    %c13 = arith.constant 13 : index
    %c0_56 = arith.constant 0 : index
    %43 = vector.load %arg2[%c0_54, %c0_55, %c13, %c0_56] : memref<1x4x16x16xf32, #tpu.memory_space<vmem>>, vector<1x4x1x16xf32>
    %44 = vector.shape_cast %43 : vector<1x4x1x16xf32> to vector<4x16xf32>
    %c0_57 = arith.constant 0 : index
    %c1792 = arith.constant 1792 : index
    %45 = vector.load %arg8[%c0_57, %c1792] : memref<4x2432xf32, #tpu.memory_space<vmem>>, vector<4x16xf32>
    tpu.vector_store %arg8[%c0_57, %c1792], %44 {strides = array<i32>} : memref<4x2432xf32, #tpu.memory_space<vmem>>, vector<4x16xf32>,
    %c0_58 = arith.constant 0 : index
    %c0_59 = arith.constant 0 : index
    %c14 = arith.constant 14 : index
    %c0_60 = arith.constant 0 : index
    %46 = vector.load %arg2[%c0_58, %c0_59, %c14, %c0_60] : memref<1x4x16x16xf32, #tpu.memory_space<vmem>>, vector<1x4x1x16xf32>
    %47 = vector.shape_cast %46 : vector<1x4x1x16xf32> to vector<4x16xf32>
    %c0_61 = arith.constant 0 : index
    %c1920 = arith.constant 1920 : index
    %48 = vector.load %arg8[%c0_61, %c1920] : memref<4x2432xf32, #tpu.memory_space<vmem>>, vector<4x16xf32>
    tpu.vector_store %arg8[%c0_61, %c1920], %47 {strides = array<i32>} : memref<4x2432xf32, #tpu.memory_space<vmem>>, vector<4x16xf32>,
    %c0_62 = arith.constant 0 : index
    %c0_63 = arith.constant 0 : index
    %c15 = arith.constant 15 : index
    %c0_64 = arith.constant 0 : index
    %49 = vector.load %arg2[%c0_62, %c0_63, %c15, %c0_64] : memref<1x4x16x16xf32, #tpu.memory_space<vmem>>, vector<1x4x1x16xf32>
    %50 = vector.shape_cast %49 : vector<1x4x1x16xf32> to vector<4x16xf32>
    %c0_65 = arith.constant 0 : index
    %c2048 = arith.constant 2048 : index
    %51 = vector.load %arg8[%c0_65, %c2048] : memref<4x2432xf32, #tpu.memory_space<vmem>>, vector<4x16xf32>
    tpu.vector_store %arg8[%c0_65, %c2048], %50 {strides = array<i32>} : memref<4x2432xf32, #tpu.memory_space<vmem>>, vector<4x16xf32>,
    %cst_66 = arith.constant 0.000000e+00 : f32
    %52 = vector.broadcast %cst_66 : f32 to vector<8x2048xf32>
    %c0_67 = arith.constant 0 : index
    %c0_68 = arith.constant 0 : index
    %c0_69 = arith.constant 0 : index
    %53 = vector.load %arg3[%c0_67, %c0_68, %c0_69] : memref<9x8x4xf32, #tpu.memory_space<vmem>>, vector<1x8x4xf32>
    %54 = vector.shape_cast %53 : vector<1x8x4xf32> to vector<8x4xf32>
    %c0_70 = arith.constant 0 : index
    %c0_71 = arith.constant 0 : index
    %55 = vector.load %arg8[%c0_70, %c0_71] : memref<4x2432xf32, #tpu.memory_space<vmem>>, vector<4x2048xf32>
    %cst_72 = arith.constant dense<0.000000e+00> : vector<8x2048xf32>
    %56 = tpu.matmul %54, %55, %cst_72 {dimension_numbers = #tpu.dot_dimension_numbers<[1], [0], [0], [1], [0, 0, 1, 1], [], []>} : vector<8x4xf32>, vector<4x2048xf32>, vector<8x2048xf32> -> vector<8x2048xf32>
    %57 = arith.addf %52, %56 : vector<8x2048xf32>
    %c1_73 = arith.constant 1 : index
    %c0_74 = arith.constant 0 : index
    %c0_75 = arith.constant 0 : index
    %58 = vector.load %arg3[%c1_73, %c0_74, %c0_75] : memref<9x8x4xf32, #tpu.memory_space<vmem>>, vector<1x8x4xf32>
    %59 = vector.shape_cast %58 : vector<1x8x4xf32> to vector<8x4xf32>
    %c0_76 = arith.constant 0 : index
    %c1_77 = arith.constant 1 : index
    %60 = vector.load %arg8[%c0_76, %c1_77] : memref<4x2432xf32, #tpu.memory_space<vmem>>, vector<4x2048xf32>
    %cst_78 = arith.constant dense<0.000000e+00> : vector<8x2048xf32>
    %61 = tpu.matmul %59, %60, %cst_78 {dimension_numbers = #tpu.dot_dimension_numbers<[1], [0], [0], [1], [0, 0, 1, 1], [], []>} : vector<8x4xf32>, vector<4x2048xf32>, vector<8x2048xf32> -> vector<8x2048xf32>
    %62 = arith.addf %57, %61 : vector<8x2048xf32>
    %c2_79 = arith.constant 2 : index
    %c0_80 = arith.constant 0 : index
    %c0_81 = arith.constant 0 : index
    %63 = vector.load %arg3[%c2_79, %c0_80, %c0_81] : memref<9x8x4xf32, #tpu.memory_space<vmem>>, vector<1x8x4xf32>
    %64 = vector.shape_cast %63 : vector<1x8x4xf32> to vector<8x4xf32>
    %c0_82 = arith.constant 0 : index
    %c2_83 = arith.constant 2 : index
    %65 = vector.load %arg8[%c0_82, %c2_83] : memref<4x2432xf32, #tpu.memory_space<vmem>>, vector<4x2048xf32>
    %cst_84 = arith.constant dense<0.000000e+00> : vector<8x2048xf32>
    %66 = tpu.matmul %64, %65, %cst_84 {dimension_numbers = #tpu.dot_dimension_numbers<[1], [0], [0], [1], [0, 0, 1, 1], [], []>} : vector<8x4xf32>, vector<4x2048xf32>, vector<8x2048xf32> -> vector<8x2048xf32>
    %67 = arith.addf %62, %66 : vector<8x2048xf32>
    %c3_85 = arith.constant 3 : index
    %c0_86 = arith.constant 0 : index
    %c0_87 = arith.constant 0 : index
    %68 = vector.load %arg3[%c3_85, %c0_86, %c0_87] : memref<9x8x4xf32, #tpu.memory_space<vmem>>, vector<1x8x4xf32>
    %69 = vector.shape_cast %68 : vector<1x8x4xf32> to vector<8x4xf32>
    %c0_88 = arith.constant 0 : index
    %c128_89 = arith.constant 128 : index
    %70 = vector.load %arg8[%c0_88, %c128_89] : memref<4x2432xf32, #tpu.memory_space<vmem>>, vector<4x2048xf32>
    %cst_90 = arith.constant dense<0.000000e+00> : vector<8x2048xf32>
    %71 = tpu.matmul %69, %70, %cst_90 {dimension_numbers = #tpu.dot_dimension_numbers<[1], [0], [0], [1], [0, 0, 1, 1], [], []>} : vector<8x4xf32>, vector<4x2048xf32>, vector<8x2048xf32> -> vector<8x2048xf32>
    %72 = arith.addf %67, %71 : vector<8x2048xf32>
    %c4_91 = arith.constant 4 : index
    %c0_92 = arith.constant 0 : index
    %c0_93 = arith.constant 0 : index
    %73 = vector.load %arg3[%c4_91, %c0_92, %c0_93] : memref<9x8x4xf32, #tpu.memory_space<vmem>>, vector<1x8x4xf32>
    %74 = vector.shape_cast %73 : vector<1x8x4xf32> to vector<8x4xf32>
    %c0_94 = arith.constant 0 : index
    %c129 = arith.constant 129 : index
    %75 = vector.load %arg8[%c0_94, %c129] : memref<4x2432xf32, #tpu.memory_space<vmem>>, vector<4x2048xf32>
    %cst_95 = arith.constant dense<0.000000e+00> : vector<8x2048xf32>
    %76 = tpu.matmul %74, %75, %cst_95 {dimension_numbers = #tpu.dot_dimension_numbers<[1], [0], [0], [1], [0, 0, 1, 1], [], []>} : vector<8x4xf32>, vector<4x2048xf32>, vector<8x2048xf32> -> vector<8x2048xf32>
    %77 = arith.addf %72, %76 : vector<8x2048xf32>
    %c5_96 = arith.constant 5 : index
    %c0_97 = arith.constant 0 : index
    %c0_98 = arith.constant 0 : index
    %78 = vector.load %arg3[%c5_96, %c0_97, %c0_98] : memref<9x8x4xf32, #tpu.memory_space<vmem>>, vector<1x8x4xf32>
    %79 = vector.shape_cast %78 : vector<1x8x4xf32> to vector<8x4xf32>
    %c0_99 = arith.constant 0 : index
    %c130 = arith.constant 130 : index
    %80 = vector.load %arg8[%c0_99, %c130] : memref<4x2432xf32, #tpu.memory_space<vmem>>, vector<4x2048xf32>
    %cst_100 = arith.constant dense<0.000000e+00> : vector<8x2048xf32>
    %81 = tpu.matmul %79, %80, %cst_100 {dimension_numbers = #tpu.dot_dimension_numbers<[1], [0], [0], [1], [0, 0, 1, 1], [], []>} : vector<8x4xf32>, vector<4x2048xf32>, vector<8x2048xf32> -> vector<8x2048xf32>
    %82 = arith.addf %77, %81 : vector<8x2048xf32>
    %c6_101 = arith.constant 6 : index
    %c0_102 = arith.constant 0 : index
    %c0_103 = arith.constant 0 : index
    %83 = vector.load %arg3[%c6_101, %c0_102, %c0_103] : memref<9x8x4xf32, #tpu.memory_space<vmem>>, vector<1x8x4xf32>
    %84 = vector.shape_cast %83 : vector<1x8x4xf32> to vector<8x4xf32>
    %c0_104 = arith.constant 0 : index
    %c256_105 = arith.constant 256 : index
    %85 = vector.load %arg8[%c0_104, %c256_105] : memref<4x2432xf32, #tpu.memory_space<vmem>>, vector<4x2048xf32>
    %cst_106 = arith.constant dense<0.000000e+00> : vector<8x2048xf32>
    %86 = tpu.matmul %84, %85, %cst_106 {dimension_numbers = #tpu.dot_dimension_numbers<[1], [0], [0], [1], [0, 0, 1, 1], [], []>} : vector<8x4xf32>, vector<4x2048xf32>, vector<8x2048xf32> -> vector<8x2048xf32>
    %87 = arith.addf %82, %86 : vector<8x2048xf32>
    %c7_107 = arith.constant 7 : index
    %c0_108 = arith.constant 0 : index
    %c0_109 = arith.constant 0 : index
    %88 = vector.load %arg3[%c7_107, %c0_108, %c0_109] : memref<9x8x4xf32, #tpu.memory_space<vmem>>, vector<1x8x4xf32>
    %89 = vector.shape_cast %88 : vector<1x8x4xf32> to vector<8x4xf32>
    %c0_110 = arith.constant 0 : index
    %c257 = arith.constant 257 : index
    %90 = vector.load %arg8[%c0_110, %c257] : memref<4x2432xf32, #tpu.memory_space<vmem>>, vector<4x2048xf32>
    %cst_111 = arith.constant dense<0.000000e+00> : vector<8x2048xf32>
    %91 = tpu.matmul %89, %90, %cst_111 {dimension_numbers = #tpu.dot_dimension_numbers<[1], [0], [0], [1], [0, 0, 1, 1], [], []>} : vector<8x4xf32>, vector<4x2048xf32>, vector<8x2048xf32> -> vector<8x2048xf32>
    %92 = arith.addf %87, %91 : vector<8x2048xf32>
    %c8_112 = arith.constant 8 : index
    %c0_113 = arith.constant 0 : index
    %c0_114 = arith.constant 0 : index
    %93 = vector.load %arg3[%c8_112, %c0_113, %c0_114] : memref<9x8x4xf32, #tpu.memory_space<vmem>>, vector<1x8x4xf32>
    %94 = vector.shape_cast %93 : vector<1x8x4xf32> to vector<8x4xf32>
    %c0_115 = arith.constant 0 : index
    %c258 = arith.constant 258 : index
    %95 = vector.load %arg8[%c0_115, %c258] : memref<4x2432xf32, #tpu.memory_space<vmem>>, vector<4x2048xf32>
    %cst_116 = arith.constant dense<0.000000e+00> : vector<8x2048xf32>
    %96 = tpu.matmul %94, %95, %cst_116 {dimension_numbers = #tpu.dot_dimension_numbers<[1], [0], [0], [1], [0, 0, 1, 1], [], []>} : vector<8x4xf32>, vector<4x2048xf32>, vector<8x2048xf32> -> vector<8x2048xf32>
    %97 = arith.addf %92, %96 : vector<8x2048xf32>
    %c0_117 = arith.constant 0 : index
    %c0_118 = arith.constant 0 : index
    %98 = vector.load %arg4[%c0_117, %c0_118] : memref<8x1xf32, #tpu.memory_space<vmem>>, vector<8x1xf32>
    %99 = vector.broadcast %98 : vector<8x1xf32> to vector<8x2048xf32>
    %100 = arith.addf %97, %99 : vector<8x2048xf32>
    %cst_119 = arith.constant 0.000000e+00 : f32
    %cst_120 = arith.constant 2.000000e+01 : f32
    %101 = vector.broadcast %cst_119 : f32 to vector<8x2048xf32>
    %102 = arith.maximumf %101, %100 : vector<8x2048xf32>
    %103 = vector.broadcast %cst_120 : f32 to vector<8x2048xf32>
    %104 = arith.minimumf %103, %102 : vector<8x2048xf32>
    %cst_121 = arith.constant 0.000000e+00 : f32
    %105 = vector.broadcast %cst_121 : f32 to vector<8x2432xf32>
    %c0_122 = arith.constant 0 : index
    %c0_123 = arith.constant 0 : index
    %106 = vector.load %arg9[%c0_122, %c0_123] : memref<8x2432xf32, #tpu.memory_space<vmem>>, vector<8x2432xf32>
    tpu.vector_store %arg9[%c0_122, %c0_123], %105 {strides = array<i32>} : memref<8x2432xf32, #tpu.memory_space<vmem>>, vector<8x2432xf32>,
    %c0_124 = arith.constant 0 : index
    %c128_125 = arith.constant 128 : index
    %107 = vector.load %arg9[%c0_124, %c128_125] : memref<8x2432xf32, #tpu.memory_space<vmem>>, vector<8x2048xf32>
    tpu.vector_store %arg9[%c0_124, %c128_125], %104 {strides = array<i32>} : memref<8x2432xf32, #tpu.memory_space<vmem>>, vector<8x2048xf32>,
    %cst_126 = arith.constant 0.000000e+00 : f32
    %108 = vector.broadcast %cst_126 : f32 to vector<8x2048xf32>
    %c0_127 = arith.constant 0 : index
    %c0_128 = arith.constant 0 : index
    %c0_129 = arith.constant 0 : index
    %109 = vector.load %arg5[%c0_127, %c0_128, %c0_129] : memref<9x8x8xf32, #tpu.memory_space<vmem>>, vector<1x8x8xf32>
    %110 = vector.shape_cast %109 : vector<1x8x8xf32> to vector<8x8xf32>
    %c0_130 = arith.constant 0 : index
    %c0_131 = arith.constant 0 : index
    %111 = vector.load %arg9[%c0_130, %c0_131] : memref<8x2432xf32, #tpu.memory_space<vmem>>, vector<8x2048xf32>
    %cst_132 = arith.constant dense<0.000000e+00> : vector<8x2048xf32>
    %112 = tpu.matmul %110, %111, %cst_132 {dimension_numbers = #tpu.dot_dimension_numbers<[1], [0], [0], [1], [0, 0, 1, 1], [], []>} : vector<8x8xf32>, vector<8x2048xf32>, vector<8x2048xf32> -> vector<8x2048xf32>
    %113 = arith.addf %108, %112 : vector<8x2048xf32>
    %c1_133 = arith.constant 1 : index
    %c0_134 = arith.constant 0 : index
    %c0_135 = arith.constant 0 : index
    %114 = vector.load %arg5[%c1_133, %c0_134, %c0_135] : memref<9x8x8xf32, #tpu.memory_space<vmem>>, vector<1x8x8xf32>
    %115 = vector.shape_cast %114 : vector<1x8x8xf32> to vector<8x8xf32>
    %c0_136 = arith.constant 0 : index
    %c1_137 = arith.constant 1 : index
    %116 = vector.load %arg9[%c0_136, %c1_137] : memref<8x2432xf32, #tpu.memory_space<vmem>>, vector<8x2048xf32>
    %cst_138 = arith.constant dense<0.000000e+00> : vector<8x2048xf32>
    %117 = tpu.matmul %115, %116, %cst_138 {dimension_numbers = #tpu.dot_dimension_numbers<[1], [0], [0], [1], [0, 0, 1, 1], [], []>} : vector<8x8xf32>, vector<8x2048xf32>, vector<8x2048xf32> -> vector<8x2048xf32>
    %118 = arith.addf %113, %117 : vector<8x2048xf32>
    %c2_139 = arith.constant 2 : index
    %c0_140 = arith.constant 0 : index
    %c0_141 = arith.constant 0 : index
    %119 = vector.load %arg5[%c2_139, %c0_140, %c0_141] : memref<9x8x8xf32, #tpu.memory_space<vmem>>, vector<1x8x8xf32>
    %120 = vector.shape_cast %119 : vector<1x8x8xf32> to vector<8x8xf32>
    %c0_142 = arith.constant 0 : index
    %c2_143 = arith.constant 2 : index
    %121 = vector.load %arg9[%c0_142, %c2_143] : memref<8x2432xf32, #tpu.memory_space<vmem>>, vector<8x2048xf32>
    %cst_144 = arith.constant dense<0.000000e+00> : vector<8x2048xf32>
    %122 = tpu.matmul %120, %121, %cst_144 {dimension_numbers = #tpu.dot_dimension_numbers<[1], [0], [0], [1], [0, 0, 1, 1], [], []>} : vector<8x8xf32>, vector<8x2048xf32>, vector<8x2048xf32> -> vector<8x2048xf32>
    %123 = arith.addf %118, %122 : vector<8x2048xf32>
    %c3_145 = arith.constant 3 : index
    %c0_146 = arith.constant 0 : index
    %c0_147 = arith.constant 0 : index
    %124 = vector.load %arg5[%c3_145, %c0_146, %c0_147] : memref<9x8x8xf32, #tpu.memory_space<vmem>>, vector<1x8x8xf32>
    %125 = vector.shape_cast %124 : vector<1x8x8xf32> to vector<8x8xf32>
    %c0_148 = arith.constant 0 : index
    %c128_149 = arith.constant 128 : index
    %126 = vector.load %arg9[%c0_148, %c128_149] : memref<8x2432xf32, #tpu.memory_space<vmem>>, vector<8x2048xf32>
    %cst_150 = arith.constant dense<0.000000e+00> : vector<8x2048xf32>
    %127 = tpu.matmul %125, %126, %cst_150 {dimension_numbers = #tpu.dot_dimension_numbers<[1], [0], [0], [1], [0, 0, 1, 1], [], []>} : vector<8x8xf32>, vector<8x2048xf32>, vector<8x2048xf32> -> vector<8x2048xf32>
    %128 = arith.addf %123, %127 : vector<8x2048xf32>
    %c4_151 = arith.constant 4 : index
    %c0_152 = arith.constant 0 : index
    %c0_153 = arith.constant 0 : index
    %129 = vector.load %arg5[%c4_151, %c0_152, %c0_153] : memref<9x8x8xf32, #tpu.memory_space<vmem>>, vector<1x8x8xf32>
    %130 = vector.shape_cast %129 : vector<1x8x8xf32> to vector<8x8xf32>
    %c0_154 = arith.constant 0 : index
    %c129_155 = arith.constant 129 : index
    %131 = vector.load %arg9[%c0_154, %c129_155] : memref<8x2432xf32, #tpu.memory_space<vmem>>, vector<8x2048xf32>
    %cst_156 = arith.constant dense<0.000000e+00> : vector<8x2048xf32>
    %132 = tpu.matmul %130, %131, %cst_156 {dimension_numbers = #tpu.dot_dimension_numbers<[1], [0], [0], [1], [0, 0, 1, 1], [], []>} : vector<8x8xf32>, vector<8x2048xf32>, vector<8x2048xf32> -> vector<8x2048xf32>
    %133 = arith.addf %128, %132 : vector<8x2048xf32>
    %c5_157 = arith.constant 5 : index
    %c0_158 = arith.constant 0 : index
    %c0_159 = arith.constant 0 : index
    %134 = vector.load %arg5[%c5_157, %c0_158, %c0_159] : memref<9x8x8xf32, #tpu.memory_space<vmem>>, vector<1x8x8xf32>
    %135 = vector.shape_cast %134 : vector<1x8x8xf32> to vector<8x8xf32>
    %c0_160 = arith.constant 0 : index
    %c130_161 = arith.constant 130 : index
    %136 = vector.load %arg9[%c0_160, %c130_161] : memref<8x2432xf32, #tpu.memory_space<vmem>>, vector<8x2048xf32>
    %cst_162 = arith.constant dense<0.000000e+00> : vector<8x2048xf32>
    %137 = tpu.matmul %135, %136, %cst_162 {dimension_numbers = #tpu.dot_dimension_numbers<[1], [0], [0], [1], [0, 0, 1, 1], [], []>} : vector<8x8xf32>, vector<8x2048xf32>, vector<8x2048xf32> -> vector<8x2048xf32>
    %138 = arith.addf %133, %137 : vector<8x2048xf32>
    %c6_163 = arith.constant 6 : index
    %c0_164 = arith.constant 0 : index
    %c0_165 = arith.constant 0 : index
    %139 = vector.load %arg5[%c6_163, %c0_164, %c0_165] : memref<9x8x8xf32, #tpu.memory_space<vmem>>, vector<1x8x8xf32>
    %140 = vector.shape_cast %139 : vector<1x8x8xf32> to vector<8x8xf32>
    %c0_166 = arith.constant 0 : index
    %c256_167 = arith.constant 256 : index
    %141 = vector.load %arg9[%c0_166, %c256_167] : memref<8x2432xf32, #tpu.memory_space<vmem>>, vector<8x2048xf32>
    %cst_168 = arith.constant dense<0.000000e+00> : vector<8x2048xf32>
    %142 = tpu.matmul %140, %141, %cst_168 {dimension_numbers = #tpu.dot_dimension_numbers<[1], [0], [0], [1], [0, 0, 1, 1], [], []>} : vector<8x8xf32>, vector<8x2048xf32>, vector<8x2048xf32> -> vector<8x2048xf32>
    %143 = arith.addf %138, %142 : vector<8x2048xf32>
    %c7_169 = arith.constant 7 : index
    %c0_170 = arith.constant 0 : index
    %c0_171 = arith.constant 0 : index
    %144 = vector.load %arg5[%c7_169, %c0_170, %c0_171] : memref<9x8x8xf32, #tpu.memory_space<vmem>>, vector<1x8x8xf32>
    %145 = vector.shape_cast %144 : vector<1x8x8xf32> to vector<8x8xf32>
    %c0_172 = arith.constant 0 : index
    %c257_173 = arith.constant 257 : index
    %146 = vector.load %arg9[%c0_172, %c257_173] : memref<8x2432xf32, #tpu.memory_space<vmem>>, vector<8x2048xf32>
    %cst_174 = arith.constant dense<0.000000e+00> : vector<8x2048xf32>
    %147 = tpu.matmul %145, %146, %cst_174 {dimension_numbers = #tpu.dot_dimension_numbers<[1], [0], [0], [1], [0, 0, 1, 1], [], []>} : vector<8x8xf32>, vector<8x2048xf32>, vector<8x2048xf32> -> vector<8x2048xf32>
    %148 = arith.addf %143, %147 : vector<8x2048xf32>
    %c8_175 = arith.constant 8 : index
    %c0_176 = arith.constant 0 : index
    %c0_177 = arith.constant 0 : index
    %149 = vector.load %arg5[%c8_175, %c0_176, %c0_177] : memref<9x8x8xf32, #tpu.memory_space<vmem>>, vector<1x8x8xf32>
    %150 = vector.shape_cast %149 : vector<1x8x8xf32> to vector<8x8xf32>
    %c0_178 = arith.constant 0 : index
    %c258_179 = arith.constant 258 : index
    %151 = vector.load %arg9[%c0_178, %c258_179] : memref<8x2432xf32, #tpu.memory_space<vmem>>, vector<8x2048xf32>
    %cst_180 = arith.constant dense<0.000000e+00> : vector<8x2048xf32>
    %152 = tpu.matmul %150, %151, %cst_180 {dimension_numbers = #tpu.dot_dimension_numbers<[1], [0], [0], [1], [0, 0, 1, 1], [], []>} : vector<8x8xf32>, vector<8x2048xf32>, vector<8x2048xf32> -> vector<8x2048xf32>
    %153 = arith.addf %148, %152 : vector<8x2048xf32>
    %c0_181 = arith.constant 0 : index
    %c0_182 = arith.constant 0 : index
    %154 = vector.load %arg6[%c0_181, %c0_182] : memref<8x1xf32, #tpu.memory_space<vmem>>, vector<8x1xf32>
    %155 = vector.broadcast %154 : vector<8x1xf32> to vector<8x2048xf32>
    %156 = arith.addf %153, %155 : vector<8x2048xf32>
    %157 = tpu.iota {dimensions = array<i32: 1>} : vector<8x12xi32>
    %158 = vector.broadcast %1 : i32 to vector<8x12xi32>
    %159 = arith.cmpi slt, %157, %158 : vector<8x12xi32>
    %160 = vector.extract_strided_slice %156 {offsets = [0, 0], sizes = [8, 12], strides = [1, 1]} : vector<8x2048xf32> to vector<8x12xf32>
    %cst_183 = arith.constant 0.000000e+00 : f32
    %161 = vector.broadcast %cst_183 : f32 to vector<8x12xf32>
    %162 = arith.select %159, %160, %161 : vector<8x12xi1>, vector<8x12xf32>
    %c0_184 = arith.constant 0 : index
    %c0_185 = arith.constant 0 : index
    %c0_186 = arith.constant 0 : index
    %c0_187 = arith.constant 0 : index
    %163 = vector.load %arg7[%c0_184, %c0_185, %c0_186, %c0_187] : memref<1x8x16x12xf32, #tpu.memory_space<vmem>>, vector<1x8x1x12xf32>
    %164 = vector.shape_cast %163 : vector<1x8x1x12xf32> to vector<8x12xf32>
    %165 = vector.shape_cast %162 : vector<8x12xf32> to vector<1x8x1x12xf32>
    tpu.vector_store %arg7[%c0_184, %c0_185, %c0_186, %c0_187], %165 {strides = array<i32>} : memref<1x8x16x12xf32, #tpu.memory_space<vmem>>, vector<1x8x1x12xf32>,
    %166 = vector.extract_strided_slice %156 {offsets = [0, 128], sizes = [8, 12], strides = [1, 1]} : vector<8x2048xf32> to vector<8x12xf32>
    %cst_188 = arith.constant 0.000000e+00 : f32
    %167 = vector.broadcast %cst_188 : f32 to vector<8x12xf32>
    %168 = arith.select %159, %166, %167 : vector<8x12xi1>, vector<8x12xf32>
    %c0_189 = arith.constant 0 : index
    %c0_190 = arith.constant 0 : index
    %c1_191 = arith.constant 1 : index
    %c0_192 = arith.constant 0 : index
    %169 = vector.load %arg7[%c0_189, %c0_190, %c1_191, %c0_192] : memref<1x8x16x12xf32, #tpu.memory_space<vmem>>, vector<1x8x1x12xf32>
    %170 = vector.shape_cast %169 : vector<1x8x1x12xf32> to vector<8x12xf32>
    %171 = vector.shape_cast %168 : vector<8x12xf32> to vector<1x8x1x12xf32>
    tpu.vector_store %arg7[%c0_189, %c0_190, %c1_191, %c0_192], %171 {strides = array<i32>} : memref<1x8x16x12xf32, #tpu.memory_space<vmem>>, vector<1x8x1x12xf32>,
    %172 = vector.extract_strided_slice %156 {offsets = [0, 256], sizes = [8, 12], strides = [1, 1]} : vector<8x2048xf32> to vector<8x12xf32>
    %cst_193 = arith.constant 0.000000e+00 : f32
    %173 = vector.broadcast %cst_193 : f32 to vector<8x12xf32>
    %174 = arith.select %159, %172, %173 : vector<8x12xi1>, vector<8x12xf32>
    %c0_194 = arith.constant 0 : index
    %c0_195 = arith.constant 0 : index
    %c2_196 = arith.constant 2 : index
    %c0_197 = arith.constant 0 : index
    %175 = vector.load %arg7[%c0_194, %c0_195, %c2_196, %c0_197] : memref<1x8x16x12xf32, #tpu.memory_space<vmem>>, vector<1x8x1x12xf32>
    %176 = vector.shape_cast %175 : vector<1x8x1x12xf32> to vector<8x12xf32>
    %177 = vector.shape_cast %174 : vector<8x12xf32> to vector<1x8x1x12xf32>
    tpu.vector_store %arg7[%c0_194, %c0_195, %c2_196, %c0_197], %177 {strides = array<i32>} : memref<1x8x16x12xf32, #tpu.memory_space<vmem>>, vector<1x8x1x12xf32>,
    %178 = vector.extract_strided_slice %156 {offsets = [0, 384], sizes = [8, 12], strides = [1, 1]} : vector<8x2048xf32> to vector<8x12xf32>
    %cst_198 = arith.constant 0.000000e+00 : f32
    %179 = vector.broadcast %cst_198 : f32 to vector<8x12xf32>
    %180 = arith.select %159, %178, %179 : vector<8x12xi1>, vector<8x12xf32>
    %c0_199 = arith.constant 0 : index
    %c0_200 = arith.constant 0 : index
    %c3_201 = arith.constant 3 : index
    %c0_202 = arith.constant 0 : index
    %181 = vector.load %arg7[%c0_199, %c0_200, %c3_201, %c0_202] : memref<1x8x16x12xf32, #tpu.memory_space<vmem>>, vector<1x8x1x12xf32>
    %182 = vector.shape_cast %181 : vector<1x8x1x12xf32> to vector<8x12xf32>
    %183 = vector.shape_cast %180 : vector<8x12xf32> to vector<1x8x1x12xf32>
    tpu.vector_store %arg7[%c0_199, %c0_200, %c3_201, %c0_202], %183 {strides = array<i32>} : memref<1x8x16x12xf32, #tpu.memory_space<vmem>>, vector<1x8x1x12xf32>,
    %184 = vector.extract_strided_slice %156 {offsets = [0, 512], sizes = [8, 12], strides = [1, 1]} : vector<8x2048xf32> to vector<8x12xf32>
    %cst_203 = arith.constant 0.000000e+00 : f32
    %185 = vector.broadcast %cst_203 : f32 to vector<8x12xf32>
    %186 = arith.select %159, %184, %185 : vector<8x12xi1>, vector<8x12xf32>
    %c0_204 = arith.constant 0 : index
    %c0_205 = arith.constant 0 : index
    %c4_206 = arith.constant 4 : index
    %c0_207 = arith.constant 0 : index
    %187 = vector.load %arg7[%c0_204, %c0_205, %c4_206, %c0_207] : memref<1x8x16x12xf32, #tpu.memory_space<vmem>>, vector<1x8x1x12xf32>
    %188 = vector.shape_cast %187 : vector<1x8x1x12xf32> to vector<8x12xf32>
    %189 = vector.shape_cast %186 : vector<8x12xf32> to vector<1x8x1x12xf32>
    tpu.vector_store %arg7[%c0_204, %c0_205, %c4_206, %c0_207], %189 {strides = array<i32>} : memref<1x8x16x12xf32, #tpu.memory_space<vmem>>, vector<1x8x1x12xf32>,
    %190 = vector.extract_strided_slice %156 {offsets = [0, 640], sizes = [8, 12], strides = [1, 1]} : vector<8x2048xf32> to vector<8x12xf32>
    %cst_208 = arith.constant 0.000000e+00 : f32
    %191 = vector.broadcast %cst_208 : f32 to vector<8x12xf32>
    %192 = arith.select %159, %190, %191 : vector<8x12xi1>, vector<8x12xf32>
    %c0_209 = arith.constant 0 : index
    %c0_210 = arith.constant 0 : index
    %c5_211 = arith.constant 5 : index
    %c0_212 = arith.constant 0 : index
    %193 = vector.load %arg7[%c0_209, %c0_210, %c5_211, %c0_212] : memref<1x8x16x12xf32, #tpu.memory_space<vmem>>, vector<1x8x1x12xf32>
    %194 = vector.shape_cast %193 : vector<1x8x1x12xf32> to vector<8x12xf32>
    %195 = vector.shape_cast %192 : vector<8x12xf32> to vector<1x8x1x12xf32>
    tpu.vector_store %arg7[%c0_209, %c0_210, %c5_211, %c0_212], %195 {strides = array<i32>} : memref<1x8x16x12xf32, #tpu.memory_space<vmem>>, vector<1x8x1x12xf32>,
    %196 = vector.extract_strided_slice %156 {offsets = [0, 768], sizes = [8, 12], strides = [1, 1]} : vector<8x2048xf32> to vector<8x12xf32>
    %cst_213 = arith.constant 0.000000e+00 : f32
    %197 = vector.broadcast %cst_213 : f32 to vector<8x12xf32>
    %198 = arith.select %159, %196, %197 : vector<8x12xi1>, vector<8x12xf32>
    %c0_214 = arith.constant 0 : index
    %c0_215 = arith.constant 0 : index
    %c6_216 = arith.constant 6 : index
    %c0_217 = arith.constant 0 : index
    %199 = vector.load %arg7[%c0_214, %c0_215, %c6_216, %c0_217] : memref<1x8x16x12xf32, #tpu.memory_space<vmem>>, vector<1x8x1x12xf32>
    %200 = vector.shape_cast %199 : vector<1x8x1x12xf32> to vector<8x12xf32>
    %201 = vector.shape_cast %198 : vector<8x12xf32> to vector<1x8x1x12xf32>
    tpu.vector_store %arg7[%c0_214, %c0_215, %c6_216, %c0_217], %201 {strides = array<i32>} : memref<1x8x16x12xf32, #tpu.memory_space<vmem>>, vector<1x8x1x12xf32>,
    %202 = vector.extract_strided_slice %156 {offsets = [0, 896], sizes = [8, 12], strides = [1, 1]} : vector<8x2048xf32> to vector<8x12xf32>
    %cst_218 = arith.constant 0.000000e+00 : f32
    %203 = vector.broadcast %cst_218 : f32 to vector<8x12xf32>
    %204 = arith.select %159, %202, %203 : vector<8x12xi1>, vector<8x12xf32>
    %c0_219 = arith.constant 0 : index
    %c0_220 = arith.constant 0 : index
    %c7_221 = arith.constant 7 : index
    %c0_222 = arith.constant 0 : index
    %205 = vector.load %arg7[%c0_219, %c0_220, %c7_221, %c0_222] : memref<1x8x16x12xf32, #tpu.memory_space<vmem>>, vector<1x8x1x12xf32>
    %206 = vector.shape_cast %205 : vector<1x8x1x12xf32> to vector<8x12xf32>
    %207 = vector.shape_cast %204 : vector<8x12xf32> to vector<1x8x1x12xf32>
    tpu.vector_store %arg7[%c0_219, %c0_220, %c7_221, %c0_222], %207 {strides = array<i32>} : memref<1x8x16x12xf32, #tpu.memory_space<vmem>>, vector<1x8x1x12xf32>,
    %208 = vector.extract_strided_slice %156 {offsets = [0, 1024], sizes = [8, 12], strides = [1, 1]} : vector<8x2048xf32> to vector<8x12xf32>
    %cst_223 = arith.constant 0.000000e+00 : f32
    %209 = vector.broadcast %cst_223 : f32 to vector<8x12xf32>
    %210 = arith.select %159, %208, %209 : vector<8x12xi1>, vector<8x12xf32>
    %c0_224 = arith.constant 0 : index
    %c0_225 = arith.constant 0 : index
    %c8_226 = arith.constant 8 : index
    %c0_227 = arith.constant 0 : index
    %211 = vector.load %arg7[%c0_224, %c0_225, %c8_226, %c0_227] : memref<1x8x16x12xf32, #tpu.memory_space<vmem>>, vector<1x8x1x12xf32>
    %212 = vector.shape_cast %211 : vector<1x8x1x12xf32> to vector<8x12xf32>
    %213 = vector.shape_cast %210 : vector<8x12xf32> to vector<1x8x1x12xf32>
    tpu.vector_store %arg7[%c0_224, %c0_225, %c8_226, %c0_227], %213 {strides = array<i32>} : memref<1x8x16x12xf32, #tpu.memory_space<vmem>>, vector<1x8x1x12xf32>,
    %214 = vector.extract_strided_slice %156 {offsets = [0, 1152], sizes = [8, 12], strides = [1, 1]} : vector<8x2048xf32> to vector<8x12xf32>
    %cst_228 = arith.constant 0.000000e+00 : f32
    %215 = vector.broadcast %cst_228 : f32 to vector<8x12xf32>
    %216 = arith.select %159, %214, %215 : vector<8x12xi1>, vector<8x12xf32>
    %c0_229 = arith.constant 0 : index
    %c0_230 = arith.constant 0 : index
    %c9_231 = arith.constant 9 : index
    %c0_232 = arith.constant 0 : index
    %217 = vector.load %arg7[%c0_229, %c0_230, %c9_231, %c0_232] : memref<1x8x16x12xf32, #tpu.memory_space<vmem>>, vector<1x8x1x12xf32>
    %218 = vector.shape_cast %217 : vector<1x8x1x12xf32> to vector<8x12xf32>
    %219 = vector.shape_cast %216 : vector<8x12xf32> to vector<1x8x1x12xf32>
    tpu.vector_store %arg7[%c0_229, %c0_230, %c9_231, %c0_232], %219 {strides = array<i32>} : memref<1x8x16x12xf32, #tpu.memory_space<vmem>>, vector<1x8x1x12xf32>,
    %220 = vector.extract_strided_slice %156 {offsets = [0, 1280], sizes = [8, 12], strides = [1, 1]} : vector<8x2048xf32> to vector<8x12xf32>
    %cst_233 = arith.constant 0.000000e+00 : f32
    %221 = vector.broadcast %cst_233 : f32 to vector<8x12xf32>
    %222 = arith.select %159, %220, %221 : vector<8x12xi1>, vector<8x12xf32>
    %c0_234 = arith.constant 0 : index
    %c0_235 = arith.constant 0 : index
    %c10_236 = arith.constant 10 : index
    %c0_237 = arith.constant 0 : index
    %223 = vector.load %arg7[%c0_234, %c0_235, %c10_236, %c0_237] : memref<1x8x16x12xf32, #tpu.memory_space<vmem>>, vector<1x8x1x12xf32>
    %224 = vector.shape_cast %223 : vector<1x8x1x12xf32> to vector<8x12xf32>
    %225 = vector.shape_cast %222 : vector<8x12xf32> to vector<1x8x1x12xf32>
    tpu.vector_store %arg7[%c0_234, %c0_235, %c10_236, %c0_237], %225 {strides = array<i32>} : memref<1x8x16x12xf32, #tpu.memory_space<vmem>>, vector<1x8x1x12xf32>,
    %226 = vector.extract_strided_slice %156 {offsets = [0, 1408], sizes = [8, 12], strides = [1, 1]} : vector<8x2048xf32> to vector<8x12xf32>
    %cst_238 = arith.constant 0.000000e+00 : f32
    %227 = vector.broadcast %cst_238 : f32 to vector<8x12xf32>
    %228 = arith.select %159, %226, %227 : vector<8x12xi1>, vector<8x12xf32>
    %c0_239 = arith.constant 0 : index
    %c0_240 = arith.constant 0 : index
    %c11_241 = arith.constant 11 : index
    %c0_242 = arith.constant 0 : index
    %229 = vector.load %arg7[%c0_239, %c0_240, %c11_241, %c0_242] : memref<1x8x16x12xf32, #tpu.memory_space<vmem>>, vector<1x8x1x12xf32>
    %230 = vector.shape_cast %229 : vector<1x8x1x12xf32> to vector<8x12xf32>
    %231 = vector.shape_cast %228 : vector<8x12xf32> to vector<1x8x1x12xf32>
    tpu.vector_store %arg7[%c0_239, %c0_240, %c11_241, %c0_242], %231 {strides = array<i32>} : memref<1x8x16x12xf32, #tpu.memory_space<vmem>>, vector<1x8x1x12xf32>,
    %232 = vector.extract_strided_slice %156 {offsets = [0, 1536], sizes = [8, 12], strides = [1, 1]} : vector<8x2048xf32> to vector<8x12xf32>
    %cst_243 = arith.constant 0.000000e+00 : f32
    %233 = vector.broadcast %cst_243 : f32 to vector<8x12xf32>
    %234 = arith.select %159, %232, %233 : vector<8x12xi1>, vector<8x12xf32>
    %c0_244 = arith.constant 0 : index
    %c0_245 = arith.constant 0 : index
    %c12_246 = arith.constant 12 : index
    %c0_247 = arith.constant 0 : index
    %235 = vector.load %arg7[%c0_244, %c0_245, %c12_246, %c0_247] : memref<1x8x16x12xf32, #tpu.memory_space<vmem>>, vector<1x8x1x12xf32>
    %236 = vector.shape_cast %235 : vector<1x8x1x12xf32> to vector<8x12xf32>
    %237 = vector.shape_cast %234 : vector<8x12xf32> to vector<1x8x1x12xf32>
    tpu.vector_store %arg7[%c0_244, %c0_245, %c12_246, %c0_247], %237 {strides = array<i32>} : memref<1x8x16x12xf32, #tpu.memory_space<vmem>>, vector<1x8x1x12xf32>,
    %238 = vector.extract_strided_slice %156 {offsets = [0, 1664], sizes = [8, 12], strides = [1, 1]} : vector<8x2048xf32> to vector<8x12xf32>
    %cst_248 = arith.constant 0.000000e+00 : f32
    %239 = vector.broadcast %cst_248 : f32 to vector<8x12xf32>
    %240 = arith.select %159, %238, %239 : vector<8x12xi1>, vector<8x12xf32>
    %c0_249 = arith.constant 0 : index
    %c0_250 = arith.constant 0 : index
    %c13_251 = arith.constant 13 : index
    %c0_252 = arith.constant 0 : index
    %241 = vector.load %arg7[%c0_249, %c0_250, %c13_251, %c0_252] : memref<1x8x16x12xf32, #tpu.memory_space<vmem>>, vector<1x8x1x12xf32>
    %242 = vector.shape_cast %241 : vector<1x8x1x12xf32> to vector<8x12xf32>
    %243 = vector.shape_cast %240 : vector<8x12xf32> to vector<1x8x1x12xf32>
    tpu.vector_store %arg7[%c0_249, %c0_250, %c13_251, %c0_252], %243 {strides = array<i32>} : memref<1x8x16x12xf32, #tpu.memory_space<vmem>>, vector<1x8x1x12xf32>,
    %244 = vector.extract_strided_slice %156 {offsets = [0, 1792], sizes = [8, 12], strides = [1, 1]} : vector<8x2048xf32> to vector<8x12xf32>
    %cst_253 = arith.constant 0.000000e+00 : f32
    %245 = vector.broadcast %cst_253 : f32 to vector<8x12xf32>
    %246 = arith.select %159, %244, %245 : vector<8x12xi1>, vector<8x12xf32>
    %c0_254 = arith.constant 0 : index
    %c0_255 = arith.constant 0 : index
    %c14_256 = arith.constant 14 : index
    %c0_257 = arith.constant 0 : index
    %247 = vector.load %arg7[%c0_254, %c0_255, %c14_256, %c0_257] : memref<1x8x16x12xf32, #tpu.memory_space<vmem>>, vector<1x8x1x12xf32>
    %248 = vector.shape_cast %247 : vector<1x8x1x12xf32> to vector<8x12xf32>
    %249 = vector.shape_cast %246 : vector<8x12xf32> to vector<1x8x1x12xf32>
    tpu.vector_store %arg7[%c0_254, %c0_255, %c14_256, %c0_257], %249 {strides = array<i32>} : memref<1x8x16x12xf32, #tpu.memory_space<vmem>>, vector<1x8x1x12xf32>,
    %250 = vector.extract_strided_slice %156 {offsets = [0, 1920], sizes = [8, 12], strides = [1, 1]} : vector<8x2048xf32> to vector<8x12xf32>
    %cst_258 = arith.constant 0.000000e+00 : f32
    %251 = vector.broadcast %cst_258 : f32 to vector<8x12xf32>
    %252 = arith.select %159, %250, %251 : vector<8x12xi1>, vector<8x12xf32>
    %c0_259 = arith.constant 0 : index
    %c0_260 = arith.constant 0 : index
    %c15_261 = arith.constant 15 : index
    %c0_262 = arith.constant 0 : index
    %253 = vector.load %arg7[%c0_259, %c0_260, %c15_261, %c0_262] : memref<1x8x16x12xf32, #tpu.memory_space<vmem>>, vector<1x8x1x12xf32>
    %254 = vector.shape_cast %253 : vector<1x8x1x12xf32> to vector<8x12xf32>
    %255 = vector.shape_cast %252 : vector<8x12xf32> to vector<1x8x1x12xf32>
    tpu.vector_store %arg7[%c0_259, %c0_260, %c15_261, %c0_262], %255 {strides = array<i32>} : memref<1x8x16x12xf32, #tpu.memory_space<vmem>>, vector<1x8x1x12xf32>,
    return
  }
  func.func @transform_0(%arg0: i32, %arg1: memref<2xi32, #tpu.memory_space<smem>>) -> (i32, i32, i32, i32) {
    %c0_i32 = arith.constant 0 : i32
    %c0_i32_0 = arith.constant 0 : i32
    %c0_i32_1 = arith.constant 0 : i32
    %c0_i32_2 = arith.constant 0 : i32
    return %arg0, %c0_i32, %c0_i32_0, %c0_i32_1 : i32, i32, i32, i32
  }
  func.func @transform_1(%arg0: i32, %arg1: memref<2xi32, #tpu.memory_space<smem>>) -> (i32, i32, i32) {
    %c0_i32 = arith.constant 0 : i32
    %c0_i32_0 = arith.constant 0 : i32
    %c0_i32_1 = arith.constant 0 : i32
    %c0_i32_2 = arith.constant 0 : i32
    return %c0_i32, %c0_i32_0, %c0_i32_1 : i32, i32, i32
  }
  func.func @transform_2(%arg0: i32, %arg1: memref<2xi32, #tpu.memory_space<smem>>) -> (i32, i32) {
    %c0_i32 = arith.constant 0 : i32
    %c0_i32_0 = arith.constant 0 : i32
    %c0_i32_1 = arith.constant 0 : i32
    return %c0_i32, %c0_i32_0 : i32, i32
  }
  func.func @transform_3(%arg0: i32, %arg1: memref<2xi32, #tpu.memory_space<smem>>) -> (i32, i32, i32) {
    %c0_i32 = arith.constant 0 : i32
    %c0_i32_0 = arith.constant 0 : i32
    %c0_i32_1 = arith.constant 0 : i32
    %c0_i32_2 = arith.constant 0 : i32
    return %c0_i32, %c0_i32_0, %c0_i32_1 : i32, i32, i32
  }
  func.func @transform_4(%arg0: i32, %arg1: memref<2xi32, #tpu.memory_space<smem>>) -> (i32, i32) {
    %c0_i32 = arith.constant 0 : i32
    %c0_i32_0 = arith.constant 0 : i32
    %c0_i32_1 = arith.constant 0 : i32
    return %c0_i32, %c0_i32_0 : i32, i32
  }
  func.func @transform_5(%arg0: i32, %arg1: memref<2xi32, #tpu.memory_space<smem>>) -> (i32, i32, i32, i32) {
    %c0_i32 = arith.constant 0 : i32
    %c0_i32_0 = arith.constant 0 : i32
    %c0_i32_1 = arith.constant 0 : i32
    %c0_i32_2 = arith.constant 0 : i32
    return %arg0, %c0_i32, %c0_i32_0, %c0_i32_1 : i32, i32, i32, i32
  }
}

</mosaic_0001>

<llo_original>
// kernel: tpu_custom_call.1
$region0: #{tpu_custom_call.1}
  #allocation0 [shape = 'u32[]', space=smem, size = 0x4, offset = 0x4, fixed_abs, tag = 'smem constant byte address 0x4 - core index']
  #allocation1 [shape = 'u32[72,128]{1,0:T(1,128)}', space=vmem, size = 0x9000, scoped, tag = 'internal scratch']
  #allocation2 [shape = 'f32[4,2432]{1,0:T(4,128)}', space=vmem, size = 0x9800, scoped, tag = 'scratch operand']
  #allocation3 [shape = 'f32[8,2432]{1,0:T(8,128)}', space=vmem, size = 0x13000, scoped, tag = 'scratch operand']
  #allocation4 [shape = 's32[1]{0}', space=sflag, size = 0x4, scoped, tag = 'scoped memory for tpu_custom_call.1']
  #allocation5 [shape = 'u8[512]{0}', space=smem, size = 0x200, scoped, tag = 'prefetched SMEM operand 0']
  %s0 = inlined_call_operand.vmem [shape: s32[2], index: 0, kind: input, shape index: {}]
  %s1 = inlined_call_operand.vmem [shape: f32[2,4,16,16], index: 1, kind: input, shape index: {}]
  %s2 = inlined_call_operand.vmem [shape: f32[9,8,4], index: 2, kind: input, shape index: {}]
  %s3 = inlined_call_operand.vmem [shape: f32[8,1], index: 3, kind: input, shape index: {}]
  %s4 = inlined_call_operand.vmem [shape: f32[9,8,8], index: 4, kind: input, shape index: {}]
  %s5 = inlined_call_operand.vmem [shape: f32[8,1], index: 5, kind: input, shape index: {}]
  %s6 = inlined_call_operand.vmem [shape: f32[2,8,16,12], index: 6, kind: output, shape index: {}]
  %s7 = sld [smem:[#allocation0]]
  $region53: #{tpu_custom_call.1} parent=0
    _
  %s9 = ssub.s32 1, %s7
  %s10 = scalar_select 0, %s9, %s7
  %s12 = sshll.u32 %s0, 4
  %s13 = int_to_ptr.vmem [resolvable:$true] %s12
  %15 = dma.vmem_to_smem %s13, 16, [#allocation5], [#allocation4]
  %17 = dma.done [#allocation4], 16
  %18 = sfence
  loop: start=0, step=1, limit=4
  $region2: #{tpu_custom_call.1} parent=0 // loop_pre_header
    _
  $region3: #{tpu_custom_call.1} parent=0 // loop_header
    %s20 = sphi 0, %s24
    %p21 = scmp.ge.s32.totalorder %s20, 4
    %s30 = sphi 0, %s32
    %s33 = sphi 0, %s30
    %s34 = sphi 0, %s33
    %s50 = sphi 0, %s34
    %s54 = sphi 0, %s54
    %s56 = sphi 0, %s54
    %s57 = sphi 0, %s56
    %s71 = sphi 0, %s57
    %s75 = sphi 0, %s75
    %s77 = sphi 0, %s75
    %s78 = sphi 0, %s77
    %s92 = sphi 0, %s78
    %s96 = sphi 0, %s96
    %s98 = sphi 0, %s96
    %s99 = sphi 0, %s98
    %s113 = sphi 0, %s99
    %s117 = sphi 0, %s117
    %s119 = sphi 0, %s117
    %s120 = sphi 0, %s119
    %s134 = sphi 0, %s120
    %s140 = sphi 0, %s142
    %s143 = sphi 0, %s140
    %s144 = sphi 0, %s143
    %s160 = sphi 0, %s144
  $region4: #{tpu_custom_call.1} parent=0 // loop_header_branch
    %23 = sbr.rel (%p21) target = $region8
  $region5: #{tpu_custom_call.1} parent=0 // loop_body
    %s25 = ssub.s32 %s20, 1
    %s26 = ssub.s32 %s20, 2
    %s27 = sadd.s32 %s20, 1
    %s28 = ssub.s32 %s20, %s27
    %p29 = scmp.eq.s32.totalorder %s28, 0
    %s31 = sadd.s32 %s30, 1
    %s32 = scalar_select %p29, %s30, %s31
    %p35 = pneg %p29
    %p36 = scmp.eq.s32.totalorder %s20, 1
    %p37 = por %p35, %p36
    %p38 = scmp.ne.s32.totalorder %s30, %s33
    %p39 = scmp.eq.s32.totalorder %s20, 0
    %p40 = por %p38, %p39
    %p41 = scmp.ne.s32.totalorder %s30, %s33
    %p42 = scmp.eq.s32.totalorder %s25, 1
    %p43 = por %p41, %p42
    %p44 = scmp.ne.s32.totalorder %s33, %s34
    %p45 = scmp.eq.s32.totalorder %s25, 0
    %p46 = por %p44, %p45
    %p47 = scmp.ne.s32.totalorder %s33, %s34
    %p48 = scmp.eq.s32.totalorder %s26, 1
    %p49 = por %p47, %p48
    %p51 = scmp.ne.s32.totalorder %s34, %s50
    %p52 = scmp.eq.s32.totalorder %s26, 0
    %p53 = por %p51, %p52
    %s55 = sadd.s32 %s54, 1
    %p58 = scmp.eq.s32.totalorder %s20, 1
    %p59 = scmp.ne.s32.totalorder %s54, %s56
    %p60 = scmp.eq.s32.totalorder %s20, 0
    %p61 = por %p59, %p60
    %p62 = scmp.ne.s32.totalorder %s54, %s56
    %p63 = scmp.eq.s32.totalorder %s25, 1
    %p64 = por %p62, %p63
    %p65 = scmp.ne.s32.totalorder %s56, %s57
    %p66 = scmp.eq.s32.totalorder %s25, 0
    %p67 = por %p65, %p66
    %p68 = scmp.ne.s32.totalorder %s56, %s57
    %p69 = scmp.eq.s32.totalorder %s26, 1
    %p70 = por %p68, %p69
    %p72 = scmp.ne.s32.totalorder %s57, %s71
    %p73 = scmp.eq.s32.totalorder %s26, 0
    %p74 = por %p72, %p73
    %s76 = sadd.s32 %s75, 1
    %p79 = scmp.eq.s32.totalorder %s20, 1
    %p80 = scmp.ne.s32.totalorder %s75, %s77
    %p81 = scmp.eq.s32.totalorder %s20, 0
    %p82 = por %p80, %p81
    %p83 = scmp.ne.s32.totalorder %s75, %s77
    %p84 = scmp.eq.s32.totalorder %s25, 1
    %p85 = por %p83, %p84
    %p86 = scmp.ne.s32.totalorder %s77, %s78
    %p87 = scmp.eq.s32.totalorder %s25, 0
    %p88 = por %p86, %p87
    %p89 = scmp.ne.s32.totalorder %s77, %s78
    %p90 = scmp.eq.s32.totalorder %s26, 1
    %p91 = por %p89, %p90
    %p93 = scmp.ne.s32.totalorder %s78, %s92
    %p94 = scmp.eq.s32.totalorder %s26, 0
    %p95 = por %p93, %p94
    %s97 = sadd.s32 %s96, 1
    %p100 = scmp.eq.s32.totalorder %s20, 1
    %p101 = scmp.ne.s32.totalorder %s96, %s98
    %p102 = scmp.eq.s32.totalorder %s20, 0
    %p103 = por %p101, %p102
    %p104 = scmp.ne.s32.totalorder %s96, %s98
    %p105 = scmp.eq.s32.totalorder %s25, 1
    %p106 = por %p104, %p105
    %p107 = scmp.ne.s32.totalorder %s98, %s99
    %p108 = scmp.eq.s32.totalorder %s25, 0
    %p109 = por %p107, %p108
    %p110 = scmp.ne.s32.totalorder %s98, %s99
    %p111 = scmp.eq.s32.totalorder %s26, 1
    %p112 = por %p110, %p111
    %p114 = scmp.ne.s32.totalorder %s99, %s113
    %p115 = scmp.eq.s32.totalorder %s26, 0
    %p116 = por %p114, %p115
    %s118 = sadd.s32 %s117, 1
    %p121 = scmp.eq.s32.totalorder %s20, 1
    %p122 = scmp.ne.s32.totalorder %s117, %s119
    %p123 = scmp.eq.s32.totalorder %s20, 0
    %p124 = por %p122, %p123
    %p125 = scmp.ne.s32.totalorder %s117, %s119
    %p126 = scmp.eq.s32.totalorder %s25, 1
    %p127 = por %p125, %p126
    %p128 = scmp.ne.s32.totalorder %s119, %s120
    %p129 = scmp.eq.s32.totalorder %s25, 0
    %p130 = por %p128, %p129
    %p131 = scmp.ne.s32.totalorder %s119, %s120
    %p132 = scmp.eq.s32.totalorder %s26, 1
    %p133 = por %p131, %p132
    %p135 = scmp.ne.s32.totalorder %s120, %s134
    %p136 = scmp.eq.s32.totalorder %s26, 0
    %p137 = por %p135, %p136
    %s138 = ssub.s32 %s20, %s27
    %p139 = scmp.eq.s32.totalorder %s138, 0
    %s141 = sadd.s32 %s140, 1
    %s142 = scalar_select %p139, %s140, %s141
    %p145 = pneg %p139
    %p146 = scmp.eq.s32.totalorder %s20, 1
    %p147 = por %p145, %p146
    %p148 = scmp.ne.s32.totalorder %s140, %s143
    %p149 = scmp.eq.s32.totalorder %s20, 0
    %p150 = por %p148, %p149
    %p151 = scmp.ne.s32.totalorder %s140, %s143
    %p152 = scmp.eq.s32.totalorder %s25, 1
    %p153 = por %p151, %p152
    %p154 = scmp.ne.s32.totalorder %s143, %s144
    %p155 = scmp.eq.s32.totalorder %s25, 0
    %p156 = por %p154, %p155
    %p157 = scmp.ne.s32.totalorder %s143, %s144
    %p158 = scmp.eq.s32.totalorder %s26, 1
    %p159 = por %p157, %p158
    %p161 = scmp.ne.s32.totalorder %s144, %s160
    %p162 = scmp.eq.s32.totalorder %s26, 0
    %p163 = por %p161, %p162
    %p164 = scmp.le.s32.totalorder 1, %s20
    %p165 = scmp.lt.s32.totalorder %s20, 3
    %p166 = pnand %p164, %p165
    %p167 = pneg %p166
    // Predicated region
    $region9: #{tpu_custom_call.1} parent=5 // pred_check
      _
    $region10: #{tpu_custom_call.1} parent=5 // pred_check_branch
      %169 = sbr.rel (%p166) target = $region12
    $region11: #{tpu_custom_call.1} parent=5 // pred_region
      %s170 = ssub.s32 %s20, 1
      // Predicated region
      $region13: #{tpu_custom_call.1} parent=11 // pred_check
        %p171 = pneg %p67
      $region14: #{tpu_custom_call.1} parent=11 // pred_check_branch
        %173 = sbr.rel (%p171) target = $region16
      $region15: #{tpu_custom_call.1} parent=11 // pred_region
        _
      $region16: #{tpu_custom_call.1} parent=11 // pred_fallthru
        _
      // Predicated region
      $region17: #{tpu_custom_call.1} parent=11 // pred_check
        %p174 = pneg %p88
      $region18: #{tpu_custom_call.1} parent=11 // pred_check_branch
        %176 = sbr.rel (%p174) target = $region20
      $region19: #{tpu_custom_call.1} parent=11 // pred_region
        _
      $region20: #{tpu_custom_call.1} parent=11 // pred_fallthru
        _
      // Predicated region
      $region21: #{tpu_custom_call.1} parent=11 // pred_check
        %p177 = pneg %p109
      $region22: #{tpu_custom_call.1} parent=11 // pred_check_branch
        %179 = sbr.rel (%p177) target = $region24
      $region23: #{tpu_custom_call.1} parent=11 // pred_region
        _
      $region24: #{tpu_custom_call.1} parent=11 // pred_fallthru
        _
      // Predicated region
      $region25: #{tpu_custom_call.1} parent=11 // pred_check
        %p180 = pneg %p130
      $region26: #{tpu_custom_call.1} parent=11 // pred_check_branch
        %182 = sbr.rel (%p180) target = $region28
      $region27: #{tpu_custom_call.1} parent=11 // pred_region
        _
      $region28: #{tpu_custom_call.1} parent=11 // pred_fallthru
        _
    $region12: #{tpu_custom_call.1} parent=5 // pred_fallthru
      _
    %p183 = scmp.lt.s32.totalorder %s20, 2
    // Predicated region
    $region29: #{tpu_custom_call.1} parent=5 // pred_check
      %p184 = pneg %p183
    $region30: #{tpu_custom_call.1} parent=5 // pred_check_branch
      %186 = sbr.rel (%p184) target = $region32
    $region31: #{tpu_custom_call.1} parent=5 // pred_region
      // Predicated region
      $region33: #{tpu_custom_call.1} parent=31 // pred_check
        %p187 = pneg %p40
      $region34: #{tpu_custom_call.1} parent=31 // pred_check_branch
        %189 = sbr.rel (%p187) target = $region36
      $region35: #{tpu_custom_call.1} parent=31 // pred_region
        %p190 = scmp.lt.s32.totalorder %s20, 1
        %s191 = scalar_select %p190, %s20, 1
        %s192 = smul.addr %s191, 8
        %s193 = smul.addr %s192, 8
        %s194 = scalar_lea.vmem %s1, %s193
      $region36: #{tpu_custom_call.1} parent=31 // pred_fallthru
        _
    $region32: #{tpu_custom_call.1} parent=5 // pred_fallthru
      _
    %p195 = scmp.le.s32.totalorder 1, %s20
    %p196 = scmp.lt.s32.totalorder %s20, 3
    %p197 = pnand %p195, %p196
    %p198 = pneg %p197
    // Predicated region
    $region37: #{tpu_custom_call.1} parent=5 // pred_check
      _
    $region38: #{tpu_custom_call.1} parent=5 // pred_check_branch
      %200 = sbr.rel (%p197) target = $region40
    $region39: #{tpu_custom_call.1} parent=5 // pred_region
      %s201 = ssub.s32 %s20, 1
      %p202 = scmp.lt.s32.totalorder %s25, 1
      %s203 = scalar_select %p202, %s25, 1
      %s204 = smul.addr %s203, 8
      %s205 = smul.addr %s204, 8
      %s206 = scalar_lea.vmem %s1, %s205
      %p207 = pneg %p46
      %p208 = pneg %p43
      %p209 = pneg %p67
      %p210 = pneg %p64
      %p211 = pneg %p88
      %p212 = pneg %p85
      %p213 = pneg %p109
      %p214 = pneg %p106
      %p215 = pneg %p130
      %p216 = pneg %p127
      %p217 = pneg %p156
      %p218 = pneg %p153
      %p219 = scmp.lt.s32.totalorder %s25, 1
      %s220 = scalar_select %p219, %s25, 1
      %s221 = smul.addr %s220, 16
      %s222 = smul.addr %s221, 8
      %s223 = scalar_lea.vmem %s6, %s222
      %p224 = scmp.lt.s32.totalorder %s25, 1
      %s225 = scalar_select %p224, %s25, 1
      %s226 = smul.addr %s225, 8
      %s227 = smul.addr %s226, 8
      %s228 = scalar_lea.vmem %s1, %s227
      %p229 = scmp.lt.s32.totalorder %s25, 1
      %s230 = scalar_select %p229, %s25, 1
      %s231 = smul.addr %s230, 16
      %s232 = smul.addr %s231, 8
      %s233 = scalar_lea.vmem %s6, %s232
      %s234 = sld [smem:[#allocation5 + %s25]]
      %235 = vst [vmem:[#allocation2] sm:$0xff] 0.0
      %236 = vst [vmem:[#allocation2 + $0x8] sm:$0xff] 0.0
      %237 = vst [vmem:[#allocation2 + $0x10] sm:$0xff] 0.0
      %238 = vst [vmem:[#allocation2 + $0x18] sm:$0xff] 0.0
      %239 = vst [vmem:[#allocation2 + $0x20] sm:$0xff] 0.0
      %240 = vst [vmem:[#allocation2 + $0x28] sm:$0xff] 0.0
      %241 = vst [vmem:[#allocation2 + $0x30] sm:$0xff] 0.0
      %242 = vst [vmem:[#allocation2 + $0x38] sm:$0xff] 0.0
      %243 = vst [vmem:[#allocation2 + $0x40] sm:$0xff] 0.0
      %244 = vst [vmem:[#allocation2 + $0x48] sm:$0xf] 0.0
      %v245 = vld [vmem:[%s228] sm:$0x1]
      %v246 = vld [vmem:[%s228 + $0x10] sm:$0x1]
      %v247 = vld [vmem:[%s228 + $0x20] sm:$0x1]
      %v248 = vld [vmem:[%s228 + $0x30] sm:$0x1]
      %v253 = vrot.slane %v246, 7
      %vm254 = vcmask 1041409
      %v255 = vsel %vm254, %v253, %v245
      %vm256 = vcmask 1045509
      %v257 = vsel %vm256, %v253, %v255
      %v258 = vrot.slane %v247, 6
      %vm259 = vcmask 1042434
      %v260 = vsel %vm259, %v258, %v257
      %vm261 = vcmask 1046534
      %v262 = vsel %vm261, %v258, %v260
      %v263 = vrot.slane %v248, 5
      %vm264 = vcmask 1043459
      %v265 = vsel %vm264, %v263, %v262
      %vm266 = vcmask 1047559
      %v267 = vsel %vm266, %v263, %v265
      %vm269 = vcmask 125952
      %270 = vst.msk [vmem:[#allocation2 + $0x4] sm:$0xf] %vm269, %v267
      %v271 = vld [vmem:[%s228 + $0x1] sm:$0x1]
      %v272 = vld [vmem:[%s228 + $0x11] sm:$0x1]
      %v273 = vld [vmem:[%s228 + $0x21] sm:$0x1]
      %v274 = vld [vmem:[%s228 + $0x31] sm:$0x1]
      %v279 = vrot.slane %v272, 7
      %v280 = vsel %vm254, %v279, %v271
      %v281 = vsel %vm256, %v279, %v280
      %v282 = vrot.slane %v273, 6
      %v283 = vsel %vm259, %v282, %v281
      %v284 = vsel %vm261, %v282, %v283
      %v285 = vrot.slane %v274, 5
      %v286 = vsel %vm264, %v285, %v284
      %v287 = vsel %vm266, %v285, %v286
      %289 = vst.msk [vmem:[#allocation2 + $0x8] sm:$0xf] %vm269, %v287
      %v290 = vld [vmem:[%s228 + $0x2] sm:$0x1]
      %v291 = vld [vmem:[%s228 + $0x12] sm:$0x1]
      %v292 = vld [vmem:[%s228 + $0x22] sm:$0x1]
      %v293 = vld [vmem:[%s228 + $0x32] sm:$0x1]
      %v298 = vrot.slane %v291, 7
      %v299 = vsel %vm254, %v298, %v290
      %v300 = vsel %vm256, %v298, %v299
      %v301 = vrot.slane %v292, 6
      %v302 = vsel %vm259, %v301, %v300
      %v303 = vsel %vm261, %v301, %v302
      %v304 = vrot.slane %v293, 5
      %v305 = vsel %vm264, %v304, %v303
      %v306 = vsel %vm266, %v304, %v305
      %308 = vst.msk [vmem:[#allocation2 + $0xc] sm:$0xf] %vm269, %v306
      %v309 = vld [vmem:[%s228 + $0x3] sm:$0x1]
      %v310 = vld [vmem:[%s228 + $0x13] sm:$0x1]
      %v311 = vld [vmem:[%s228 + $0x23] sm:$0x1]
      %v312 = vld [vmem:[%s228 + $0x33] sm:$0x1]
      %v317 = vrot.slane %v310, 7
      %v318 = vsel %vm254, %v317, %v309
      %v319 = vsel %vm256, %v317, %v318
      %v320 = vrot.slane %v311, 6
      %v321 = vsel %vm259, %v320, %v319
      %v322 = vsel %vm261, %v320, %v321
      %v323 = vrot.slane %v312, 5
      %v324 = vsel %vm264, %v323, %v322
      %v325 = vsel %vm266, %v323, %v324
      %327 = vst.msk [vmem:[#allocation2 + $0x10] sm:$0xf] %vm269, %v325
      %v328 = vld [vmem:[%s228 + $0x4] sm:$0x1]
      %v329 = vld [vmem:[%s228 + $0x14] sm:$0x1]
      %v330 = vld [vmem:[%s228 + $0x24] sm:$0x1]
      %v331 = vld [vmem:[%s228 + $0x34] sm:$0x1]
      %v336 = vrot.slane %v329, 7
      %v337 = vsel %vm254, %v336, %v328
      %v338 = vsel %vm256, %v336, %v337
      %v339 = vrot.slane %v330, 6
      %v340 = vsel %vm259, %v339, %v338
      %v341 = vsel %vm261, %v339, %v340
      %v342 = vrot.slane %v331, 5
      %v343 = vsel %vm264, %v342, %v341
      %v344 = vsel %vm266, %v342, %v343
      %346 = vst.msk [vmem:[#allocation2 + $0x14] sm:$0xf] %vm269, %v344
      %v347 = vld [vmem:[%s228 + $0x5] sm:$0x1]
      %v348 = vld [vmem:[%s228 + $0x15] sm:$0x1]
      %v349 = vld [vmem:[%s228 + $0x25] sm:$0x1]
      %v350 = vld [vmem:[%s228 + $0x35] sm:$0x1]
      %v355 = vrot.slane %v348, 7
      %v356 = vsel %vm254, %v355, %v347
      %v357 = vsel %vm256, %v355, %v356
      %v358 = vrot.slane %v349, 6
      %v359 = vsel %vm259, %v358, %v357
      %v360 = vsel %vm261, %v358, %v359
      %v361 = vrot.slane %v350, 5
      %v362 = vsel %vm264, %v361, %v360
      %v363 = vsel %vm266, %v361, %v362
      %365 = vst.msk [vmem:[#allocation2 + $0x18] sm:$0xf] %vm269, %v363
      %v366 = vld [vmem:[%s228 + $0x6] sm:$0x1]
      %v367 = vld [vmem:[%s228 + $0x16] sm:$0x1]
      %v368 = vld [vmem:[%s228 + $0x26] sm:$0x1]
      %v369 = vld [vmem:[%s228 + $0x36] sm:$0x1]
      %v374 = vrot.slane %v367, 7
      %v375 = vsel %vm254, %v374, %v366
      %v376 = vsel %vm256, %v374, %v375
      %v377 = vrot.slane %v368, 6
      %v378 = vsel %vm259, %v377, %v376
      %v379 = vsel %vm261, %v377, %v378
      %v380 = vrot.slane %v369, 5
      %v381 = vsel %vm264, %v380, %v379
      %v382 = vsel %vm266, %v380, %v381
      %384 = vst.msk [vmem:[#allocation2 + $0x1c] sm:$0xf] %vm269, %v382
      %v385 = vld [vmem:[%s228 + $0x7] sm:$0x1]
      %v386 = vld [vmem:[%s228 + $0x17] sm:$0x1]
      %v387 = vld [vmem:[%s228 + $0x27] sm:$0x1]
      %v388 = vld [vmem:[%s228 + $0x37] sm:$0x1]
      %v393 = vrot.slane %v386, 7
      %v394 = vsel %vm254, %v393, %v385
      %v395 = vsel %vm256, %v393, %v394
      %v396 = vrot.slane %v387, 6
      %v397 = vsel %vm259, %v396, %v395
      %v398 = vsel %vm261, %v396, %v397
      %v399 = vrot.slane %v388, 5
      %v400 = vsel %vm264, %v399, %v398
      %v401 = vsel %vm266, %v399, %v400
      %403 = vst.msk [vmem:[#allocation2 + $0x20] sm:$0xf] %vm269, %v401
      %v404 = vld [vmem:[%s228 + $0x8] sm:$0x1]
      %v405 = vld [vmem:[%s228 + $0x18] sm:$0x1]
      %v406 = vld [vmem:[%s228 + $0x28] sm:$0x1]
      %v407 = vld [vmem:[%s228 + $0x38] sm:$0x1]
      %v412 = vrot.slane %v405, 7
      %v413 = vsel %vm254, %v412, %v404
      %v414 = vsel %vm256, %v412, %v413
      %v415 = vrot.slane %v406, 6
      %v416 = vsel %vm259, %v415, %v414
      %v417 = vsel %vm261, %v415, %v416
      %v418 = vrot.slane %v407, 5
      %v419 = vsel %vm264, %v418, %v417
      %v420 = vsel %vm266, %v418, %v419
      %422 = vst.msk [vmem:[#allocation2 + $0x24] sm:$0xf] %vm269, %v420
      %v423 = vld [vmem:[%s228 + $0x9] sm:$0x1]
      %v424 = vld [vmem:[%s228 + $0x19] sm:$0x1]
      %v425 = vld [vmem:[%s228 + $0x29] sm:$0x1]
      %v426 = vld [vmem:[%s228 + $0x39] sm:$0x1]
      %v431 = vrot.slane %v424, 7
      %v432 = vsel %vm254, %v431, %v423
      %v433 = vsel %vm256, %v431, %v432
      %v434 = vrot.slane %v425, 6
      %v435 = vsel %vm259, %v434, %v433
      %v436 = vsel %vm261, %v434, %v435
      %v437 = vrot.slane %v426, 5
      %v438 = vsel %vm264, %v437, %v436
      %v439 = vsel %vm266, %v437, %v438
      %441 = vst.msk [vmem:[#allocation2 + $0x28] sm:$0xf] %vm269, %v439
      %v442 = vld [vmem:[%s228 + $0xa] sm:$0x1]
      %v443 = vld [vmem:[%s228 + $0x1a] sm:$0x1]
      %v444 = vld [vmem:[%s228 + $0x2a] sm:$0x1]
      %v445 = vld [vmem:[%s228 + $0x3a] sm:$0x1]
      %v450 = vrot.slane %v443, 7
      %v451 = vsel %vm254, %v450, %v442
      %v452 = vsel %vm256, %v450, %v451
      %v453 = vrot.slane %v444, 6
      %v454 = vsel %vm259, %v453, %v452
      %v455 = vsel %vm261, %v453, %v454
      %v456 = vrot.slane %v445, 5
      %v457 = vsel %vm264, %v456, %v455
      %v458 = vsel %vm266, %v456, %v457
      %460 = vst.msk [vmem:[#allocation2 + $0x2c] sm:$0xf] %vm269, %v458
      %v461 = vld [vmem:[%s228 + $0xb] sm:$0x1]
      %v462 = vld [vmem:[%s228 + $0x1b] sm:$0x1]
      %v463 = vld [vmem:[%s228 + $0x2b] sm:$0x1]
      %v464 = vld [vmem:[%s228 + $0x3b] sm:$0x1]
      %v469 = vrot.slane %v462, 7
      %v470 = vsel %vm254, %v469, %v461
      %v471 = vsel %vm256, %v469, %v470
      %v472 = vrot.slane %v463, 6
      %v473 = vsel %vm259, %v472, %v471
      %v474 = vsel %vm261, %v472, %v473
      %v475 = vrot.slane %v464, 5
      %v476 = vsel %vm264, %v475, %v474
      %v477 = vsel %vm266, %v475, %v476
      %479 = vst.msk [vmem:[#allocation2 + $0x30] sm:$0xf] %vm269, %v477
      %v480 = vld [vmem:[%s228 + $0xc] sm:$0x1]
      %v481 = vld [vmem:[%s228 + $0x1c] sm:$0x1]
      %v482 = vld [vmem:[%s228 + $0x2c] sm:$0x1]
      %v483 = vld [vmem:[%s228 + $0x3c] sm:$0x1]
      %v488 = vrot.slane %v481, 7
      %v489 = vsel %vm254, %v488, %v480
      %v490 = vsel %vm256, %v488, %v489
      %v491 = vrot.slane %v482, 6
      %v492 = vsel %vm259, %v491, %v490
      %v493 = vsel %vm261, %v491, %v492
      %v494 = vrot.slane %v483, 5
      %v495 = vsel %vm264, %v494, %v493
      %v496 = vsel %vm266, %v494, %v495
      %498 = vst.msk [vmem:[#allocation2 + $0x34] sm:$0xf] %vm269, %v496
      %v499 = vld [vmem:[%s228 + $0xd] sm:$0x1]
      %v500 = vld [vmem:[%s228 + $0x1d] sm:$0x1]
      %v501 = vld [vmem:[%s228 + $0x2d] sm:$0x1]
      %v502 = vld [vmem:[%s228 + $0x3d] sm:$0x1]
      %v507 = vrot.slane %v500, 7
      %v508 = vsel %vm254, %v507, %v499
      %v509 = vsel %vm256, %v507, %v508
      %v510 = vrot.slane %v501, 6
      %v511 = vsel %vm259, %v510, %v509
      %v512 = vsel %vm261, %v510, %v511
      %v513 = vrot.slane %v502, 5
      %v514 = vsel %vm264, %v513, %v512
      %v515 = vsel %vm266, %v513, %v514
      %517 = vst.msk [vmem:[#allocation2 + $0x38] sm:$0xf] %vm269, %v515
      %v518 = vld [vmem:[%s228 + $0xe] sm:$0x1]
      %v519 = vld [vmem:[%s228 + $0x1e] sm:$0x1]
      %v520 = vld [vmem:[%s228 + $0x2e] sm:$0x1]
      %v521 = vld [vmem:[%s228 + $0x3e] sm:$0x1]
      %v526 = vrot.slane %v519, 7
      %v527 = vsel %vm254, %v526, %v518
      %v528 = vsel %vm256, %v526, %v527
      %v529 = vrot.slane %v520, 6
      %v530 = vsel %vm259, %v529, %v528
      %v531 = vsel %vm261, %v529, %v530
      %v532 = vrot.slane %v521, 5
      %v533 = vsel %vm264, %v532, %v531
      %v534 = vsel %vm266, %v532, %v533
      %536 = vst.msk [vmem:[#allocation2 + $0x3c] sm:$0xf] %vm269, %v534
      %v537 = vld [vmem:[%s228 + $0xf] sm:$0x1]
      %v538 = vld [vmem:[%s228 + $0x1f] sm:$0x1]
      %v539 = vld [vmem:[%s228 + $0x2f] sm:$0x1]
      %v540 = vld [vmem:[%s228 + $0x3f] sm:$0x1]
      %v545 = vrot.slane %v538, 7
      %v546 = vsel %vm254, %v545, %v537
      %v547 = vsel %vm256, %v545, %v546
      %v548 = vrot.slane %v539, 6
      %v549 = vsel %vm259, %v548, %v547
      %v550 = vsel %vm261, %v548, %v549
      %v551 = vrot.slane %v540, 5
      %v552 = vsel %vm264, %v551, %v550
      %v553 = vsel %vm266, %v551, %v552
      %555 = vst.msk [vmem:[#allocation2 + $0x40] sm:$0xf] %vm269, %v553
      %v556 = vld [vmem:[%s2] sm:$0xff]
      %v557 = vld [vmem:[#allocation2] sm:$0xff]
      %v558 = vld [vmem:[#allocation2 + $0x8] sm:$0xff]
      %v559 = vld [vmem:[#allocation2 + $0x10] sm:$0xff]
      %v560 = vld [vmem:[#allocation2 + $0x18] sm:$0xff]
      %v561 = vld [vmem:[#allocation2 + $0x20] sm:$0xff]
      %v562 = vld [vmem:[#allocation2 + $0x28] sm:$0xff]
      %v563 = vld [vmem:[#allocation2 + $0x30] sm:$0xff]
      %v564 = vld [vmem:[#allocation2 + $0x38] sm:$0xff]
      %s565 = scalar_lea.vmem %s2, 8
      %v566 = vld [vmem:[%s565] sm:$0xff]
      %v567 = vld [vmem:[#allocation2 + $0x40] sm:$0xf]
      %577 = vst [vmem:[#allocation1] ss:$2 sm:$0xff] %v557
      %s578 = scalar_lea.vmem [#allocation1], 16
      %579 = vst [vmem:[%s578] ss:$2 sm:$0xff] %v558
      %s580 = scalar_lea.vmem [#allocation1], 32
      %581 = vst [vmem:[%s580] ss:$2 sm:$0xff] %v559
      %s582 = scalar_lea.vmem [#allocation1], 48
      %583 = vst [vmem:[%s582] ss:$2 sm:$0xff] %v560
      %v584 = vld.sshfl [vmem:[#allocation1] sm:$0xff pattern:$0x75316420]
      %v585 = vld.sshfl [vmem:[#allocation1 + $0x8] sm:$0xff pattern:$0x75316420]
      %v586 = vld.sshfl [vmem:[#allocation1 + $0x10] sm:$0xff pattern:$0x75316420]
      %v587 = vld.sshfl [vmem:[#allocation1 + $0x18] sm:$0xff pattern:$0x75316420]
      %v588 = vld.sshfl [vmem:[#allocation1 + $0x20] sm:$0xff pattern:$0x75316420]
      %v589 = vld.sshfl [vmem:[#allocation1 + $0x28] sm:$0xff pattern:$0x75316420]
      %v590 = vld.sshfl [vmem:[#allocation1 + $0x30] sm:$0xff pattern:$0x75316420]
      %v591 = vld.sshfl [vmem:[#allocation1 + $0x38] sm:$0xff pattern:$0x75316420]
      %592 = vst [vmem:[#allocation1] ss:$2 sm:$0xff] %v561
      %593 = vst [vmem:[%s578] ss:$2 sm:$0xff] %v562
      %594 = vst [vmem:[%s580] ss:$2 sm:$0xff] %v563
      %595 = vst [vmem:[%s582] ss:$2 sm:$0xff] %v564
      %v596 = vld.sshfl [vmem:[#allocation1] sm:$0xff pattern:$0x75316420]
      %v597 = vld.sshfl [vmem:[#allocation1 + $0x8] sm:$0xff pattern:$0x75316420]
      %v598 = vld.sshfl [vmem:[#allocation1 + $0x10] sm:$0xff pattern:$0x75316420]
      %v599 = vld.sshfl [vmem:[#allocation1 + $0x18] sm:$0xff pattern:$0x75316420]
      %v600 = vld.sshfl [vmem:[#allocation1 + $0x20] sm:$0xff pattern:$0x75316420]
      %v601 = vld.sshfl [vmem:[#allocation1 + $0x28] sm:$0xff pattern:$0x75316420]
      %v602 = vld.sshfl [vmem:[#allocation1 + $0x30] sm:$0xff pattern:$0x75316420]
      %v603 = vld.sshfl [vmem:[#allocation1 + $0x38] sm:$0xff pattern:$0x75316420]
      %604 = vst [vmem:[#allocation1] ss:$2 sm:$0xff] %v567
      %v605 = vld.sshfl [vmem:[#allocation1] sm:$0xff pattern:$0x75316420]
      %606 = vrot.lane.b32.xlu0 %v584, 127
      %v607 = vpop.permute.xlu0 %606
      %608 = vrot.lane.b32.xlu0 %v585, 127
      %v609 = vpop.permute.xlu0 %608
      %610 = vrot.lane.b32.xlu0 %v586, 127
      %v611 = vpop.permute.xlu0 %610
      %612 = vrot.lane.b32.xlu0 %v587, 127
      %v613 = vpop.permute.xlu0 %612
      %614 = vrot.lane.b32.xlu0 %v588, 127
      %v615 = vpop.permute.xlu0 %614
      %616 = vrot.lane.b32.xlu0 %v589, 127
      %v617 = vpop.permute.xlu0 %616
      %618 = vrot.lane.b32.xlu0 %v590, 127
      %v619 = vpop.permute.xlu0 %618
      %620 = vrot.lane.b32.xlu0 %v591, 127
      %v621 = vpop.permute.xlu0 %620
      %622 = vrot.lane.b32.xlu0 %v596, 127
      %v623 = vpop.permute.xlu0 %622
      %624 = vrot.lane.b32.xlu0 %v597, 127
      %v625 = vpop.permute.xlu0 %624
      %626 = vrot.lane.b32.xlu0 %v598, 127
      %v627 = vpop.permute.xlu0 %626
      %628 = vrot.lane.b32.xlu0 %v599, 127
      %v629 = vpop.permute.xlu0 %628
      %630 = vrot.lane.b32.xlu0 %v600, 127
      %v631 = vpop.permute.xlu0 %630
      %632 = vrot.lane.b32.xlu0 %v601, 127
      %v633 = vpop.permute.xlu0 %632
      %634 = vrot.lane.b32.xlu0 %v602, 127
      %v635 = vpop.permute.xlu0 %634
      %636 = vrot.lane.b32.xlu0 %v603, 127
      %v637 = vpop.permute.xlu0 %636
      %638 = vrot.lane.b32.xlu0 %v605, 127
      %v639 = vpop.permute.xlu0 %638
      %vm640 = vcmask 1039360
      %v641 = vsel %vm640, %v607, %v609
      %v642 = vsel %vm640, %v609, %v611
      %v643 = vsel %vm640, %v611, %v613
      %v644 = vsel %vm640, %v613, %v615
      %v645 = vsel %vm640, %v615, %v617
      %v646 = vsel %vm640, %v617, %v619
      %v647 = vsel %vm640, %v619, %v621
      %v648 = vsel %vm640, %v621, %v623
      %v649 = vsel %vm640, %v623, %v625
      %v650 = vsel %vm640, %v625, %v627
      %v651 = vsel %vm640, %v627, %v629
      %v652 = vsel %vm640, %v629, %v631
      %v653 = vsel %vm640, %v631, %v633
      %v654 = vsel %vm640, %v633, %v635
      %v655 = vsel %vm640, %v635, %v637
      %v656 = vsel %vm640, %v637, %v639
      %vm657 = vcmask 31744
      %v659 = vsel %vm657, %v566, 0
      %vm661 = vcmask 1043456
      %v662 = vsel %vm661, %v641, 0
      %v664 = vsel %vm661, %v642, 0
      %v666 = vsel %vm661, %v643, 0
      %v668 = vsel %vm661, %v644, 0
      %v670 = vsel %vm661, %v645, 0
      %v672 = vsel %vm661, %v646, 0
      %v674 = vsel %vm661, %v647, 0
      %v676 = vsel %vm661, %v648, 0
      %v678 = vsel %vm661, %v649, 0
      %v680 = vsel %vm661, %v650, 0
      %v682 = vsel %vm661, %v651, 0
      %v684 = vsel %vm661, %v652, 0
      %v686 = vsel %vm661, %v653, 0
      %v688 = vsel %vm661, %v654, 0
      %v690 = vsel %vm661, %v655, 0
      %v692 = vsel %vm661, %v656, 0
      %694 = vmatpush.msra.mxu0 0.0
      %695 = vmatpush.msra.mxu0 0.0
      %696 = vmatpush.msra.mxu0 0.0
      %697 = vmatpush.msra.mxu0 0.0
      %698 = vmatpush.msra.mxu0 0.0
      %699 = vmatpush.msra.mxu0 0.0
      %700 = vmatpush.msra.mxu0 0.0
      %701 = vmatpush.msra.mxu0 0.0
      %702 = vmatpush.msra.mxu0 0.0
      %703 = vmatpush.msra.mxu0 0.0
      %704 = vmatpush.msra.mxu0 0.0
      %705 = vmatpush.msra.mxu0 0.0
      %706 = vmatpush.msra.mxu0 0.0
      %707 = vmatpush.msra.mxu0 0.0
      %708 = vmatpush.msra.mxu0 0.0
      %709 = vmatpush.msra.mxu0 %v662
      %710 = vmatmul.f32.gmra.mxu0 %v659
      %v711 = vpop.f32.mrf.mxu0
      %v712 = vadd.f32 0.0, %v711
      %713 = vdwg.mxu0
      %714 = vmatpush.msra.mxu0 0.0
      %715 = vmatpush.msra.mxu0 0.0
      %716 = vmatpush.msra.mxu0 0.0
      %717 = vmatpush.msra.mxu0 0.0
      %718 = vmatpush.msra.mxu0 0.0
      %719 = vmatpush.msra.mxu0 0.0
      %720 = vmatpush.msra.mxu0 0.0
      %721 = vmatpush.msra.mxu0 0.0
      %722 = vmatpush.msra.mxu0 0.0
      %723 = vmatpush.msra.mxu0 0.0
      %724 = vmatpush.msra.mxu0 0.0
      %725 = vmatpush.msra.mxu0 0.0
      %726 = vmatpush.msra.mxu0 0.0
      %727 = vmatpush.msra.mxu0 0.0
      %728 = vmatpush.msra.mxu0 0.0
      %729 = vmatpush.msra.mxu0 %v664
      %730 = vmatmul.f32.gmra.mxu0 %v659
      %v731 = vpop.f32.mrf.mxu0
      %v732 = vadd.f32 0.0, %v731
      %733 = vdwg.mxu0
      %734 = vmatpush.msra.mxu0 0.0
      %735 = vmatpush.msra.mxu0 0.0
      %736 = vmatpush.msra.mxu0 0.0
      %737 = vmatpush.msra.mxu0 0.0
      %738 = vmatpush.msra.mxu0 0.0
      %739 = vmatpush.msra.mxu0 0.0
      %740 = vmatpush.msra.mxu0 0.0
      %741 = vmatpush.msra.mxu0 0.0
      %742 = vmatpush.msra.mxu0 0.0
      %743 = vmatpush.msra.mxu0 0.0
      %744 = vmatpush.msra.mxu0 0.0
      %745 = vmatpush.msra.mxu0 0.0
      %746 = vmatpush.msra.mxu0 0.0
      %747 = vmatpush.msra.mxu0 0.0
      %748 = vmatpush.msra.mxu0 0.0
      %749 = vmatpush.msra.mxu0 %v666
      %750 = vmatmul.f32.gmra.mxu0 %v659
      %v751 = vpop.f32.mrf.mxu0
      %v752 = vadd.f32 0.0, %v751
      %753 = vdwg.mxu0
      %754 = vmatpush.msra.mxu0 0.0
      %755 = vmatpush.msra.mxu0 0.0
      %756 = vmatpush.msra.mxu0 0.0
      %757 = vmatpush.msra.mxu0 0.0
      %758 = vmatpush.msra.mxu0 0.0
      %759 = vmatpush.msra.mxu0 0.0
      %760 = vmatpush.msra.mxu0 0.0
      %761 = vmatpush.msra.mxu0 0.0
      %762 = vmatpush.msra.mxu0 0.0
      %763 = vmatpush.msra.mxu0 0.0
      %764 = vmatpush.msra.mxu0 0.0
      %765 = vmatpush.msra.mxu0 0.0
      %766 = vmatpush.msra.mxu0 0.0
      %767 = vmatpush.msra.mxu0 0.0
      %768 = vmatpush.msra.mxu0 0.0
      %769 = vmatpush.msra.mxu0 %v668
      %770 = vmatmul.f32.gmra.mxu0 %v659
      %v771 = vpop.f32.mrf.mxu0
      %v772 = vadd.f32 0.0, %v771
      %773 = vdwg.mxu0
      %774 = vmatpush.msra.mxu0 0.0
      %775 = vmatpush.msra.mxu0 0.0
      %776 = vmatpush.msra.mxu0 0.0
      %777 = vmatpush.msra.mxu0 0.0
      %778 = vmatpush.msra.mxu0 0.0
      %779 = vmatpush.msra.mxu0 0.0
      %780 = vmatpush.msra.mxu0 0.0
      %781 = vmatpush.msra.mxu0 0.0
      %782 = vmatpush.msra.mxu0 0.0
      %783 = vmatpush.msra.mxu0 0.0
      %784 = vmatpush.msra.mxu0 0.0
      %785 = vmatpush.msra.mxu0 0.0
      %786 = vmatpush.msra.mxu0 0.0
      %787 = vmatpush.msra.mxu0 0.0
      %788 = vmatpush.msra.mxu0 0.0
      %789 = vmatpush.msra.mxu0 %v670
      %790 = vmatmul.f32.gmra.mxu0 %v659
      %v791 = vpop.f32.mrf.mxu0
      %v792 = vadd.f32 0.0, %v791
      %793 = vdwg.mxu0
      %794 = vmatpush.msra.mxu0 0.0
      %795 = vmatpush.msra.mxu0 0.0
      %796 = vmatpush.msra.mxu0 0.0
      %797 = vmatpush.msra.mxu0 0.0
      %798 = vmatpush.msra.mxu0 0.0
      %799 = vmatpush.msra.mxu0 0.0
      %800 = vmatpush.msra.mxu0 0.0
      %801 = vmatpush.msra.mxu0 0.0
      %802 = vmatpush.msra.mxu0 0.0
      %803 = vmatpush.msra.mxu0 0.0
      %804 = vmatpush.msra.mxu0 0.0
      %805 = vmatpush.msra.mxu0 0.0
      %806 = vmatpush.msra.mxu0 0.0
      %807 = vmatpush.msra.mxu0 0.0
      %808 = vmatpush.msra.mxu0 0.0
      %809 = vmatpush.msra.mxu0 %v672
      %810 = vmatmul.f32.gmra.mxu0 %v659
      %v811 = vpop.f32.mrf.mxu0
      %v812 = vadd.f32 0.0, %v811
      %813 = vdwg.mxu0
      %814 = vmatpush.msra.mxu0 0.0
      %815 = vmatpush.msra.mxu0 0.0
      %816 = vmatpush.msra.mxu0 0.0
      %817 = vmatpush.msra.mxu0 0.0
      %818 = vmatpush.msra.mxu0 0.0
      %819 = vmatpush.msra.mxu0 0.0
      %820 = vmatpush.msra.mxu0 0.0
      %821 = vmatpush.msra.mxu0 0.0
      %822 = vmatpush.msra.mxu0 0.0
      %823 = vmatpush.msra.mxu0 0.0
      %824 = vmatpush.msra.mxu0 0.0
      %825 = vmatpush.msra.mxu0 0.0
      %826 = vmatpush.msra.mxu0 0.0
      %827 = vmatpush.msra.mxu0 0.0
      %828 = vmatpush.msra.mxu0 0.0
      %829 = vmatpush.msra.mxu0 %v674
      %830 = vmatmul.f32.gmra.mxu0 %v659
      %v831 = vpop.f32.mrf.mxu0
      %v832 = vadd.f32 0.0, %v831
      %833 = vdwg.mxu0
      %834 = vmatpush.msra.mxu0 0.0
      %835 = vmatpush.msra.mxu0 0.0
      %836 = vmatpush.msra.mxu0 0.0
      %837 = vmatpush.msra.mxu0 0.0
      %838 = vmatpush.msra.mxu0 0.0
      %839 = vmatpush.msra.mxu0 0.0
      %840 = vmatpush.msra.mxu0 0.0
      %841 = vmatpush.msra.mxu0 0.0
      %842 = vmatpush.msra.mxu0 0.0
      %843 = vmatpush.msra.mxu0 0.0
      %844 = vmatpush.msra.mxu0 0.0
      %845 = vmatpush.msra.mxu0 0.0
      %846 = vmatpush.msra.mxu0 0.0
      %847 = vmatpush.msra.mxu0 0.0
      %848 = vmatpush.msra.mxu0 0.0
      %849 = vmatpush.msra.mxu0 %v676
      %850 = vmatmul.f32.gmra.mxu0 %v659
      %v851 = vpop.f32.mrf.mxu0
      %v852 = vadd.f32 0.0, %v851
      %853 = vdwg.mxu0
      %854 = vmatpush.msra.mxu0 0.0
      %855 = vmatpush.msra.mxu0 0.0
      %856 = vmatpush.msra.mxu0 0.0
      %857 = vmatpush.msra.mxu0 0.0
      %858 = vmatpush.msra.mxu0 0.0
      %859 = vmatpush.msra.mxu0 0.0
      %860 = vmatpush.msra.mxu0 0.0
      %861 = vmatpush.msra.mxu0 0.0
      %862 = vmatpush.msra.mxu0 0.0
      %863 = vmatpush.msra.mxu0 0.0
      %864 = vmatpush.msra.mxu0 0.0
      %865 = vmatpush.msra.mxu0 0.0
      %866 = vmatpush.msra.mxu0 0.0
      %867 = vmatpush.msra.mxu0 0.0
      %868 = vmatpush.msra.mxu0 0.0
      %869 = vmatpush.msra.mxu0 %v678
      %870 = vmatmul.f32.gmra.mxu0 %v659
      %v871 = vpop.f32.mrf.mxu0
      %v872 = vadd.f32 0.0, %v871
      %873 = vdwg.mxu0
      %874 = vmatpush.msra.mxu0 0.0
      %875 = vmatpush.msra.mxu0 0.0
      %876 = vmatpush.msra.mxu0 0.0
      %877 = vmatpush.msra.mxu0 0.0
      %878 = vmatpush.msra.mxu0 0.0
      %879 = vmatpush.msra.mxu0 0.0
      %880 = vmatpush.msra.mxu0 0.0
      %881 = vmatpush.msra.mxu0 0.0
      %882 = vmatpush.msra.mxu0 0.0
      %883 = vmatpush.msra.mxu0 0.0
      %884 = vmatpush.msra.mxu0 0.0
      %885 = vmatpush.msra.mxu0 0.0
      %886 = vmatpush.msra.mxu0 0.0
      %887 = vmatpush.msra.mxu0 0.0
      %888 = vmatpush.msra.mxu0 0.0
      %889 = vmatpush.msra.mxu0 %v680
      %890 = vmatmul.f32.gmra.mxu0 %v659
      %v891 = vpop.f32.mrf.mxu0
      %v892 = vadd.f32 0.0, %v891
      %893 = vdwg.mxu0
      %894 = vmatpush.msra.mxu0 0.0
      %895 = vmatpush.msra.mxu0 0.0
      %896 = vmatpush.msra.mxu0 0.0
      %897 = vmatpush.msra.mxu0 0.0
      %898 = vmatpush.msra.mxu0 0.0
      %899 = vmatpush.msra.mxu0 0.0
      %900 = vmatpush.msra.mxu0 0.0
      %901 = vmatpush.msra.mxu0 0.0
      %902 = vmatpush.msra.mxu0 0.0
      %903 = vmatpush.msra.mxu0 0.0
      %904 = vmatpush.msra.mxu0 0.0
      %905 = vmatpush.msra.mxu0 0.0
      %906 = vmatpush.msra.mxu0 0.0
      %907 = vmatpush.msra.mxu0 0.0
      %908 = vmatpush.msra.mxu0 0.0
      %909 = vmatpush.msra.mxu0 %v682
      %910 = vmatmul.f32.gmra.mxu0 %v659
      %v911 = vpop.f32.mrf.mxu0
      %v912 = vadd.f32 0.0, %v911
      %913 = vdwg.mxu0
      %914 = vmatpush.msra.mxu0 0.0
      %915 = vmatpush.msra.mxu0 0.0
      %916 = vmatpush.msra.mxu0 0.0
      %917 = vmatpush.msra.mxu0 0.0
      %918 = vmatpush.msra.mxu0 0.0
      %919 = vmatpush.msra.mxu0 0.0
      %920 = vmatpush.msra.mxu0 0.0
      %921 = vmatpush.msra.mxu0 0.0
      %922 = vmatpush.msra.mxu0 0.0
      %923 = vmatpush.msra.mxu0 0.0
      %924 = vmatpush.msra.mxu0 0.0
      %925 = vmatpush.msra.mxu0 0.0
      %926 = vmatpush.msra.mxu0 0.0
      %927 = vmatpush.msra.mxu0 0.0
      %928 = vmatpush.msra.mxu0 0.0
      %929 = vmatpush.msra.mxu0 %v684
      %930 = vmatmul.f32.gmra.mxu0 %v659
      %v931 = vpop.f32.mrf.mxu0
      %v932 = vadd.f32 0.0, %v931
      %933 = vdwg.mxu0
      %934 = vmatpush.msra.mxu0 0.0
      %935 = vmatpush.msra.mxu0 0.0
      %936 = vmatpush.msra.mxu0 0.0
      %937 = vmatpush.msra.mxu0 0.0
      %938 = vmatpush.msra.mxu0 0.0
      %939 = vmatpush.msra.mxu0 0.0
      %940 = vmatpush.msra.mxu0 0.0
      %941 = vmatpush.msra.mxu0 0.0
      %942 = vmatpush.msra.mxu0 0.0
      %943 = vmatpush.msra.mxu0 0.0
      %944 = vmatpush.msra.mxu0 0.0
      %945 = vmatpush.msra.mxu0 0.0
      %946 = vmatpush.msra.mxu0 0.0
      %947 = vmatpush.msra.mxu0 0.0
      %948 = vmatpush.msra.mxu0 0.0
      %949 = vmatpush.msra.mxu0 %v686
      %950 = vmatmul.f32.gmra.mxu0 %v659
      %v951 = vpop.f32.mrf.mxu0
      %v952 = vadd.f32 0.0, %v951
      %953 = vdwg.mxu0
      %954 = vmatpush.msra.mxu0 0.0
      %955 = vmatpush.msra.mxu0 0.0
      %956 = vmatpush.msra.mxu0 0.0
      %957 = vmatpush.msra.mxu0 0.0
      %958 = vmatpush.msra.mxu0 0.0
      %959 = vmatpush.msra.mxu0 0.0
      %960 = vmatpush.msra.mxu0 0.0
      %961 = vmatpush.msra.mxu0 0.0
      %962 = vmatpush.msra.mxu0 0.0
      %963 = vmatpush.msra.mxu0 0.0
      %964 = vmatpush.msra.mxu0 0.0
      %965 = vmatpush.msra.mxu0 0.0
      %966 = vmatpush.msra.mxu0 0.0
      %967 = vmatpush.msra.mxu0 0.0
      %968 = vmatpush.msra.mxu0 0.0
      %969 = vmatpush.msra.mxu0 %v688
      %970 = vmatmul.f32.gmra.mxu0 %v659
      %v971 = vpop.f32.mrf.mxu0
      %v972 = vadd.f32 0.0, %v971
      %973 = vdwg.mxu0
      %974 = vmatpush.msra.mxu0 0.0
      %975 = vmatpush.msra.mxu0 0.0
      %976 = vmatpush.msra.mxu0 0.0
      %977 = vmatpush.msra.mxu0 0.0
      %978 = vmatpush.msra.mxu0 0.0
      %979 = vmatpush.msra.mxu0 0.0
      %980 = vmatpush.msra.mxu0 0.0
      %981 = vmatpush.msra.mxu0 0.0
      %982 = vmatpush.msra.mxu0 0.0
      %983 = vmatpush.msra.mxu0 0.0
      %984 = vmatpush.msra.mxu0 0.0
      %985 = vmatpush.msra.mxu0 0.0
      %986 = vmatpush.msra.mxu0 0.0
      %987 = vmatpush.msra.mxu0 0.0
      %988 = vmatpush.msra.mxu0 0.0
      %989 = vmatpush.msra.mxu0 %v690
      %990 = vmatmul.f32.gmra.mxu0 %v659
      %v991 = vpop.f32.mrf.mxu0
      %v992 = vadd.f32 0.0, %v991
      %993 = vdwg.mxu0
      %994 = vmatpush.msra.mxu0 0.0
      %995 = vmatpush.msra.mxu0 0.0
      %996 = vmatpush.msra.mxu0 0.0
      %997 = vmatpush.msra.mxu0 0.0
      %998 = vmatpush.msra.mxu0 0.0
      %999 = vmatpush.msra.mxu0 0.0
      %1000 = vmatpush.msra.mxu0 0.0
      %1001 = vmatpush.msra.mxu0 0.0
      %1002 = vmatpush.msra.mxu0 0.0
      %1003 = vmatpush.msra.mxu0 0.0
      %1004 = vmatpush.msra.mxu0 0.0
      %1005 = vmatpush.msra.mxu0 0.0
      %1006 = vmatpush.msra.mxu0 0.0
      %1007 = vmatpush.msra.mxu0 0.0
      %1008 = vmatpush.msra.mxu0 0.0
      %1009 = vmatpush.msra.mxu0 %v692
      %1010 = vmatmul.f32.gmra.mxu0 %v659
      %v1011 = vpop.f32.mrf.mxu0
      %v1012 = vadd.f32 0.0, %v1011
      %1013 = vdwg.mxu0
      %1014 = vst [vmem:[#allocation1] ss:$2 sm:$0xff] %v557
      %s1015 = scalar_lea.vmem [#allocation1], 16
      %1016 = vst [vmem:[%s1015] ss:$2 sm:$0xff] %v558
      %s1017 = scalar_lea.vmem [#allocation1], 32
      %1018 = vst [vmem:[%s1017] ss:$2 sm:$0xff] %v559
      %s1019 = scalar_lea.vmem [#allocation1], 48
      %1020 = vst [vmem:[%s1019] ss:$2 sm:$0xff] %v560
      %v1021 = vld.sshfl [vmem:[#allocation1] sm:$0xff pattern:$0x75316420]
      %v1022 = vld.sshfl [vmem:[#allocation1 + $0x8] sm:$0xff pattern:$0x75316420]
      %v1023 = vld.sshfl [vmem:[#allocation1 + $0x10] sm:$0xff pattern:$0x75316420]
      %v1024 = vld.sshfl [vmem:[#allocation1 + $0x18] sm:$0xff pattern:$0x75316420]
      %v1025 = vld.sshfl [vmem:[#allocation1 + $0x20] sm:$0xff pattern:$0x75316420]
      %v1026 = vld.sshfl [vmem:[#allocation1 + $0x28] sm:$0xff pattern:$0x75316420]
      %v1027 = vld.sshfl [vmem:[#allocation1 + $0x30] sm:$0xff pattern:$0x75316420]
      %v1028 = vld.sshfl [vmem:[#allocation1 + $0x38] sm:$0xff pattern:$0x75316420]
      %1029 = vst [vmem:[#allocation1] ss:$2 sm:$0xff] %v561
      %1030 = vst [vmem:[%s1015] ss:$2 sm:$0xff] %v562
      %1031 = vst [vmem:[%s1017] ss:$2 sm:$0xff] %v563
      %1032 = vst [vmem:[%s1019] ss:$2 sm:$0xff] %v564
      %v1033 = vld.sshfl [vmem:[#allocation1] sm:$0xff pattern:$0x75316420]
      %v1034 = vld.sshfl [vmem:[#allocation1 + $0x8] sm:$0xff pattern:$0x75316420]
      %v1035 = vld.sshfl [vmem:[#allocation1 + $0x10] sm:$0xff pattern:$0x75316420]
      %v1036 = vld.sshfl [vmem:[#allocation1 + $0x18] sm:$0xff pattern:$0x75316420]
      %v1037 = vld.sshfl [vmem:[#allocation1 + $0x20] sm:$0xff pattern:$0x75316420]
      %v1038 = vld.sshfl [vmem:[#allocation1 + $0x28] sm:$0xff pattern:$0x75316420]
      %v1039 = vld.sshfl [vmem:[#allocation1 + $0x30] sm:$0xff pattern:$0x75316420]
      %v1040 = vld.sshfl [vmem:[#allocation1 + $0x38] sm:$0xff pattern:$0x75316420]
      %v1042 = vsel %vm657, %v556, 0
      %v1044 = vsel %vm661, %v1021, 0
      %v1046 = vsel %vm661, %v1022, 0
      %v1048 = vsel %vm661, %v1023, 0
      %v1050 = vsel %vm661, %v1024, 0
      %v1052 = vsel %vm661, %v1025, 0
      %v1054 = vsel %vm661, %v1026, 0
      %v1056 = vsel %vm661, %v1027, 0
      %v1058 = vsel %vm661, %v1028, 0
      %v1060 = vsel %vm661, %v1033, 0
      %v1062 = vsel %vm661, %v1034, 0
      %v1064 = vsel %vm661, %v1035, 0
      %v1066 = vsel %vm661, %v1036, 0
      %v1068 = vsel %vm661, %v1037, 0
      %v1070 = vsel %vm661, %v1038, 0
      %v1072 = vsel %vm661, %v1039, 0
      %v1074 = vsel %vm661, %v1040, 0
      %1076 = vmatpush.msra.mxu0 0.0
      %1077 = vmatpush.msra.mxu0 0.0
      %1078 = vmatpush.msra.mxu0 0.0
      %1079 = vmatpush.msra.mxu0 0.0
      %1080 = vmatpush.msra.mxu0 0.0
      %1081 = vmatpush.msra.mxu0 0.0
      %1082 = vmatpush.msra.mxu0 0.0
      %1083 = vmatpush.msra.mxu0 0.0
      %1084 = vmatpush.msra.mxu0 0.0
      %1085 = vmatpush.msra.mxu0 0.0
      %1086 = vmatpush.msra.mxu0 0.0
      %1087 = vmatpush.msra.mxu0 0.0
      %1088 = vmatpush.msra.mxu0 0.0
      %1089 = vmatpush.msra.mxu0 0.0
      %1090 = vmatpush.msra.mxu0 0.0
      %1091 = vmatpush.msra.mxu0 %v1044
      %1092 = vmatmul.f32.gmra.mxu0 %v1042
      %v1093 = vpop.f32.mrf.mxu0
      %v1094 = vadd.f32 %v712, %v1093
      %1095 = vdwg.mxu0
      %1096 = vmatpush.msra.mxu0 0.0
      %1097 = vmatpush.msra.mxu0 0.0
      %1098 = vmatpush.msra.mxu0 0.0
      %1099 = vmatpush.msra.mxu0 0.0
      %1100 = vmatpush.msra.mxu0 0.0
      %1101 = vmatpush.msra.mxu0 0.0
      %1102 = vmatpush.msra.mxu0 0.0
      %1103 = vmatpush.msra.mxu0 0.0
      %1104 = vmatpush.msra.mxu0 0.0
      %1105 = vmatpush.msra.mxu0 0.0
      %1106 = vmatpush.msra.mxu0 0.0
      %1107 = vmatpush.msra.mxu0 0.0
      %1108 = vmatpush.msra.mxu0 0.0
      %1109 = vmatpush.msra.mxu0 0.0
      %1110 = vmatpush.msra.mxu0 0.0
      %1111 = vmatpush.msra.mxu0 %v1046
      %1112 = vmatmul.f32.gmra.mxu0 %v1042
      %v1113 = vpop.f32.mrf.mxu0
      %v1114 = vadd.f32 %v732, %v1113
      %1115 = vdwg.mxu0
      %1116 = vmatpush.msra.mxu0 0.0
      %1117 = vmatpush.msra.mxu0 0.0
      %1118 = vmatpush.msra.mxu0 0.0
      %1119 = vmatpush.msra.mxu0 0.0
      %1120 = vmatpush.msra.mxu0 0.0
      %1121 = vmatpush.msra.mxu0 0.0
      %1122 = vmatpush.msra.mxu0 0.0
      %1123 = vmatpush.msra.mxu0 0.0
      %1124 = vmatpush.msra.mxu0 0.0
      %1125 = vmatpush.msra.mxu0 0.0
      %1126 = vmatpush.msra.mxu0 0.0
      %1127 = vmatpush.msra.mxu0 0.0
      %1128 = vmatpush.msra.mxu0 0.0
      %1129 = vmatpush.msra.mxu0 0.0
      %1130 = vmatpush.msra.mxu0 0.0
      %1131 = vmatpush.msra.mxu0 %v1048
      %1132 = vmatmul.f32.gmra.mxu0 %v1042
      %v1133 = vpop.f32.mrf.mxu0
      %v1134 = vadd.f32 %v752, %v1133
      %1135 = vdwg.mxu0
      %1136 = vmatpush.msra.mxu0 0.0
      %1137 = vmatpush.msra.mxu0 0.0
      %1138 = vmatpush.msra.mxu0 0.0
      %1139 = vmatpush.msra.mxu0 0.0
      %1140 = vmatpush.msra.mxu0 0.0
      %1141 = vmatpush.msra.mxu0 0.0
      %1142 = vmatpush.msra.mxu0 0.0
      %1143 = vmatpush.msra.mxu0 0.0
      %1144 = vmatpush.msra.mxu0 0.0
      %1145 = vmatpush.msra.mxu0 0.0
      %1146 = vmatpush.msra.mxu0 0.0
      %1147 = vmatpush.msra.mxu0 0.0
      %1148 = vmatpush.msra.mxu0 0.0
      %1149 = vmatpush.msra.mxu0 0.0
      %1150 = vmatpush.msra.mxu0 0.0
      %1151 = vmatpush.msra.mxu0 %v1050
      %1152 = vmatmul.f32.gmra.mxu0 %v1042
      %v1153 = vpop.f32.mrf.mxu0
      %v1154 = vadd.f32 %v772, %v1153
      %1155 = vdwg.mxu0
      %1156 = vmatpush.msra.mxu0 0.0
      %1157 = vmatpush.msra.mxu0 0.0
      %1158 = vmatpush.msra.mxu0 0.0
      %1159 = vmatpush.msra.mxu0 0.0
      %1160 = vmatpush.msra.mxu0 0.0
      %1161 = vmatpush.msra.mxu0 0.0
      %1162 = vmatpush.msra.mxu0 0.0
      %1163 = vmatpush.msra.mxu0 0.0
      %1164 = vmatpush.msra.mxu0 0.0
      %1165 = vmatpush.msra.mxu0 0.0
      %1166 = vmatpush.msra.mxu0 0.0
      %1167 = vmatpush.msra.mxu0 0.0
      %1168 = vmatpush.msra.mxu0 0.0
      %1169 = vmatpush.msra.mxu0 0.0
      %1170 = vmatpush.msra.mxu0 0.0
      %1171 = vmatpush.msra.mxu0 %v1052
      %1172 = vmatmul.f32.gmra.mxu0 %v1042
      %v1173 = vpop.f32.mrf.mxu0
      %v1174 = vadd.f32 %v792, %v1173
      %1175 = vdwg.mxu0
      %1176 = vmatpush.msra.mxu0 0.0
      %1177 = vmatpush.msra.mxu0 0.0
      %1178 = vmatpush.msra.mxu0 0.0
      %1179 = vmatpush.msra.mxu0 0.0
      %1180 = vmatpush.msra.mxu0 0.0
      %1181 = vmatpush.msra.mxu0 0.0
      %1182 = vmatpush.msra.mxu0 0.0
      %1183 = vmatpush.msra.mxu0 0.0
      %1184 = vmatpush.msra.mxu0 0.0
      %1185 = vmatpush.msra.mxu0 0.0
      %1186 = vmatpush.msra.mxu0 0.0
      %1187 = vmatpush.msra.mxu0 0.0
      %1188 = vmatpush.msra.mxu0 0.0
      %1189 = vmatpush.msra.mxu0 0.0
      %1190 = vmatpush.msra.mxu0 0.0
      %1191 = vmatpush.msra.mxu0 %v1054
      %1192 = vmatmul.f32.gmra.mxu0 %v1042
      %v1193 = vpop.f32.mrf.mxu0
      %v1194 = vadd.f32 %v812, %v1193
      %1195 = vdwg.mxu0
      %1196 = vmatpush.msra.mxu0 0.0
      %1197 = vmatpush.msra.mxu0 0.0
      %1198 = vmatpush.msra.mxu0 0.0
      %1199 = vmatpush.msra.mxu0 0.0
      %1200 = vmatpush.msra.mxu0 0.0
      %1201 = vmatpush.msra.mxu0 0.0
      %1202 = vmatpush.msra.mxu0 0.0
      %1203 = vmatpush.msra.mxu0 0.0
      %1204 = vmatpush.msra.mxu0 0.0
      %1205 = vmatpush.msra.mxu0 0.0
      %1206 = vmatpush.msra.mxu0 0.0
      %1207 = vmatpush.msra.mxu0 0.0
      %1208 = vmatpush.msra.mxu0 0.0
      %1209 = vmatpush.msra.mxu0 0.0
      %1210 = vmatpush.msra.mxu0 0.0
      %1211 = vmatpush.msra.mxu0 %v1056
      %1212 = vmatmul.f32.gmra.mxu0 %v1042
      %v1213 = vpop.f32.mrf.mxu0
      %v1214 = vadd.f32 %v832, %v1213
      %1215 = vdwg.mxu0
      %1216 = vmatpush.msra.mxu0 0.0
      %1217 = vmatpush.msra.mxu0 0.0
      %1218 = vmatpush.msra.mxu0 0.0
      %1219 = vmatpush.msra.mxu0 0.0
      %1220 = vmatpush.msra.mxu0 0.0
      %1221 = vmatpush.msra.mxu0 0.0
      %1222 = vmatpush.msra.mxu0 0.0
      %1223 = vmatpush.msra.mxu0 0.0
      %1224 = vmatpush.msra.mxu0 0.0
      %1225 = vmatpush.msra.mxu0 0.0
      %1226 = vmatpush.msra.mxu0 0.0
      %1227 = vmatpush.msra.mxu0 0.0
      %1228 = vmatpush.msra.mxu0 0.0
      %1229 = vmatpush.msra.mxu0 0.0
      %1230 = vmatpush.msra.mxu0 0.0
      %1231 = vmatpush.msra.mxu0 %v1058
      %1232 = vmatmul.f32.gmra.mxu0 %v1042
      %v1233 = vpop.f32.mrf.mxu0
      %v1234 = vadd.f32 %v852, %v1233
      %1235 = vdwg.mxu0
      %1236 = vmatpush.msra.mxu0 0.0
      %1237 = vmatpush.msra.mxu0 0.0
      %1238 = vmatpush.msra.mxu0 0.0
      %1239 = vmatpush.msra.mxu0 0.0
      %1240 = vmatpush.msra.mxu0 0.0
      %1241 = vmatpush.msra.mxu0 0.0
      %1242 = vmatpush.msra.mxu0 0.0
      %1243 = vmatpush.msra.mxu0 0.0
      %1244 = vmatpush.msra.mxu0 0.0
      %1245 = vmatpush.msra.mxu0 0.0
      %1246 = vmatpush.msra.mxu0 0.0
      %1247 = vmatpush.msra.mxu0 0.0
      %1248 = vmatpush.msra.mxu0 0.0
      %1249 = vmatpush.msra.mxu0 0.0
      %1250 = vmatpush.msra.mxu0 0.0
      %1251 = vmatpush.msra.mxu0 %v1060
      %1252 = vmatmul.f32.gmra.mxu0 %v1042
      %v1253 = vpop.f32.mrf.mxu0
      %v1254 = vadd.f32 %v872, %v1253
      %1255 = vdwg.mxu0
      %1256 = vmatpush.msra.mxu0 0.0
      %1257 = vmatpush.msra.mxu0 0.0
      %1258 = vmatpush.msra.mxu0 0.0
      %1259 = vmatpush.msra.mxu0 0.0
      %1260 = vmatpush.msra.mxu0 0.0
      %1261 = vmatpush.msra.mxu0 0.0
      %1262 = vmatpush.msra.mxu0 0.0
      %1263 = vmatpush.msra.mxu0 0.0
      %1264 = vmatpush.msra.mxu0 0.0
      %1265 = vmatpush.msra.mxu0 0.0
      %1266 = vmatpush.msra.mxu0 0.0
      %1267 = vmatpush.msra.mxu0 0.0
      %1268 = vmatpush.msra.mxu0 0.0
      %1269 = vmatpush.msra.mxu0 0.0
      %1270 = vmatpush.msra.mxu0 0.0
      %1271 = vmatpush.msra.mxu0 %v1062
      %1272 = vmatmul.f32.gmra.mxu0 %v1042
      %v1273 = vpop.f32.mrf.mxu0
      %v1274 = vadd.f32 %v892, %v1273
      %1275 = vdwg.mxu0
      %1276 = vmatpush.msra.mxu0 0.0
      %1277 = vmatpush.msra.mxu0 0.0
      %1278 = vmatpush.msra.mxu0 0.0
      %1279 = vmatpush.msra.mxu0 0.0
      %1280 = vmatpush.msra.mxu0 0.0
      %1281 = vmatpush.msra.mxu0 0.0
      %1282 = vmatpush.msra.mxu0 0.0
      %1283 = vmatpush.msra.mxu0 0.0
      %1284 = vmatpush.msra.mxu0 0.0
      %1285 = vmatpush.msra.mxu0 0.0
      %1286 = vmatpush.msra.mxu0 0.0
      %1287 = vmatpush.msra.mxu0 0.0
      %1288 = vmatpush.msra.mxu0 0.0
      %1289 = vmatpush.msra.mxu0 0.0
      %1290 = vmatpush.msra.mxu0 0.0
      %1291 = vmatpush.msra.mxu0 %v1064
      %1292 = vmatmul.f32.gmra.mxu0 %v1042
      %v1293 = vpop.f32.mrf.mxu0
      %v1294 = vadd.f32 %v912, %v1293
      %1295 = vdwg.mxu0
      %1296 = vmatpush.msra.mxu0 0.0
      %1297 = vmatpush.msra.mxu0 0.0
      %1298 = vmatpush.msra.mxu0 0.0
      %1299 = vmatpush.msra.mxu0 0.0
      %1300 = vmatpush.msra.mxu0 0.0
      %1301 = vmatpush.msra.mxu0 0.0
      %1302 = vmatpush.msra.mxu0 0.0
      %1303 = vmatpush.msra.mxu0 0.0
      %1304 = vmatpush.msra.mxu0 0.0
      %1305 = vmatpush.msra.mxu0 0.0
      %1306 = vmatpush.msra.mxu0 0.0
      %1307 = vmatpush.msra.mxu0 0.0
      %1308 = vmatpush.msra.mxu0 0.0
      %1309 = vmatpush.msra.mxu0 0.0
      %1310 = vmatpush.msra.mxu0 0.0
      %1311 = vmatpush.msra.mxu0 %v1066
      %1312 = vmatmul.f32.gmra.mxu0 %v1042
      %v1313 = vpop.f32.mrf.mxu0
      %v1314 = vadd.f32 %v932, %v1313
      %1315 = vdwg.mxu0
      %1316 = vmatpush.msra.mxu0 0.0
      %1317 = vmatpush.msra.mxu0 0.0
      %1318 = vmatpush.msra.mxu0 0.0
      %1319 = vmatpush.msra.mxu0 0.0
      %1320 = vmatpush.msra.mxu0 0.0
      %1321 = vmatpush.msra.mxu0 0.0
      %1322 = vmatpush.msra.mxu0 0.0
      %1323 = vmatpush.msra.mxu0 0.0
      %1324 = vmatpush.msra.mxu0 0.0
      %1325 = vmatpush.msra.mxu0 0.0
      %1326 = vmatpush.msra.mxu0 0.0
      %1327 = vmatpush.msra.mxu0 0.0
      %1328 = vmatpush.msra.mxu0 0.0
      %1329 = vmatpush.msra.mxu0 0.0
      %1330 = vmatpush.msra.mxu0 0.0
      %1331 = vmatpush.msra.mxu0 %v1068
      %1332 = vmatmul.f32.gmra.mxu0 %v1042
      %v1333 = vpop.f32.mrf.mxu0
      %v1334 = vadd.f32 %v952, %v1333
      %1335 = vdwg.mxu0
      %1336 = vmatpush.msra.mxu0 0.0
      %1337 = vmatpush.msra.mxu0 0.0
      %1338 = vmatpush.msra.mxu0 0.0
      %1339 = vmatpush.msra.mxu0 0.0
      %1340 = vmatpush.msra.mxu0 0.0
      %1341 = vmatpush.msra.mxu0 0.0
      %1342 = vmatpush.msra.mxu0 0.0
      %1343 = vmatpush.msra.mxu0 0.0
      %1344 = vmatpush.msra.mxu0 0.0
      %1345 = vmatpush.msra.mxu0 0.0
      %1346 = vmatpush.msra.mxu0 0.0
      %1347 = vmatpush.msra.mxu0 0.0
      %1348 = vmatpush.msra.mxu0 0.0
      %1349 = vmatpush.msra.mxu0 0.0
      %1350 = vmatpush.msra.mxu0 0.0
      %1351 = vmatpush.msra.mxu0 %v1070
      %1352 = vmatmul.f32.gmra.mxu0 %v1042
      %v1353 = vpop.f32.mrf.mxu0
      %v1354 = vadd.f32 %v972, %v1353
      %1355 = vdwg.mxu0
      %1356 = vmatpush.msra.mxu0 0.0
      %1357 = vmatpush.msra.mxu0 0.0
      %1358 = vmatpush.msra.mxu0 0.0
      %1359 = vmatpush.msra.mxu0 0.0
      %1360 = vmatpush.msra.mxu0 0.0
      %1361 = vmatpush.msra.mxu0 0.0
      %1362 = vmatpush.msra.mxu0 0.0
      %1363 = vmatpush.msra.mxu0 0.0
      %1364 = vmatpush.msra.mxu0 0.0
      %1365 = vmatpush.msra.mxu0 0.0
      %1366 = vmatpush.msra.mxu0 0.0
      %1367 = vmatpush.msra.mxu0 0.0
      %1368 = vmatpush.msra.mxu0 0.0
      %1369 = vmatpush.msra.mxu0 0.0
      %1370 = vmatpush.msra.mxu0 0.0
      %1371 = vmatpush.msra.mxu0 %v1072
      %1372 = vmatmul.f32.gmra.mxu0 %v1042
      %v1373 = vpop.f32.mrf.mxu0
      %v1374 = vadd.f32 %v992, %v1373
      %1375 = vdwg.mxu0
      %1376 = vmatpush.msra.mxu0 0.0
      %1377 = vmatpush.msra.mxu0 0.0
      %1378 = vmatpush.msra.mxu0 0.0
      %1379 = vmatpush.msra.mxu0 0.0
      %1380 = vmatpush.msra.mxu0 0.0
      %1381 = vmatpush.msra.mxu0 0.0
      %1382 = vmatpush.msra.mxu0 0.0
      %1383 = vmatpush.msra.mxu0 0.0
      %1384 = vmatpush.msra.mxu0 0.0
      %1385 = vmatpush.msra.mxu0 0.0
      %1386 = vmatpush.msra.mxu0 0.0
      %1387 = vmatpush.msra.mxu0 0.0
      %1388 = vmatpush.msra.mxu0 0.0
      %1389 = vmatpush.msra.mxu0 0.0
      %1390 = vmatpush.msra.mxu0 0.0
      %1391 = vmatpush.msra.mxu0 %v1074
      %1392 = vmatmul.f32.gmra.mxu0 %v1042
      %v1393 = vpop.f32.mrf.mxu0
      %v1394 = vadd.f32 %v1012, %v1393
      %1395 = vdwg.mxu0
      %s1396 = scalar_lea.vmem %s2, 16
      %v1397 = vld [vmem:[%s1396] sm:$0xff]
      %v1398 = vld [vmem:[#allocation2] sm:$0xff]
      %v1399 = vld [vmem:[#allocation2 + $0x8] sm:$0xff]
      %v1400 = vld [vmem:[#allocation2 + $0x10] sm:$0xff]
      %v1401 = vld [vmem:[#allocation2 + $0x18] sm:$0xff]
      %v1402 = vld [vmem:[#allocation2 + $0x20] sm:$0xff]
      %v1403 = vld [vmem:[#allocation2 + $0x28] sm:$0xff]
      %v1404 = vld [vmem:[#allocation2 + $0x30] sm:$0xff]
      %v1405 = vld [vmem:[#allocation2 + $0x38] sm:$0xff]
      %v1406 = vld [vmem:[#allocation2 + $0x40] sm:$0xf]
      %1416 = vst [vmem:[#allocation1] ss:$2 sm:$0xff] %v1398
      %s1417 = scalar_lea.vmem [#allocation1], 16
      %1418 = vst [vmem:[%s1417] ss:$2 sm:$0xff] %v1399
      %s1419 = scalar_lea.vmem [#allocation1], 32
      %1420 = vst [vmem:[%s1419] ss:$2 sm:$0xff] %v1400
      %s1421 = scalar_lea.vmem [#allocation1], 48
      %1422 = vst [vmem:[%s1421] ss:$2 sm:$0xff] %v1401
      %v1423 = vld.sshfl [vmem:[#allocation1] sm:$0xff pattern:$0x75316420]
      %v1424 = vld.sshfl [vmem:[#allocation1 + $0x8] sm:$0xff pattern:$0x75316420]
      %v1425 = vld.sshfl [vmem:[#allocation1 + $0x10] sm:$0xff pattern:$0x75316420]
      %v1426 = vld.sshfl [vmem:[#allocation1 + $0x18] sm:$0xff pattern:$0x75316420]
      %v1427 = vld.sshfl [vmem:[#allocation1 + $0x20] sm:$0xff pattern:$0x75316420]
      %v1428 = vld.sshfl [vmem:[#allocation1 + $0x28] sm:$0xff pattern:$0x75316420]
      %v1429 = vld.sshfl [vmem:[#allocation1 + $0x30] sm:$0xff pattern:$0x75316420]
      %v1430 = vld.sshfl [vmem:[#allocation1 + $0x38] sm:$0xff pattern:$0x75316420]
      %1431 = vst [vmem:[#allocation1] ss:$2 sm:$0xff] %v1402
      %1432 = vst [vmem:[%s1417] ss:$2 sm:$0xff] %v1403
      %1433 = vst [vmem:[%s1419] ss:$2 sm:$0xff] %v1404
      %1434 = vst [vmem:[%s1421] ss:$2 sm:$0xff] %v1405
      %v1435 = vld.sshfl [vmem:[#allocation1] sm:$0xff pattern:$0x75316420]
      %v1436 = vld.sshfl [vmem:[#allocation1 + $0x8] sm:$0xff pattern:$0x75316420]
      %v1437 = vld.sshfl [vmem:[#allocation1 + $0x10] sm:$0xff pattern:$0x75316420]
      %v1438 = vld.sshfl [vmem:[#allocation1 + $0x18] sm:$0xff pattern:$0x75316420]
      %v1439 = vld.sshfl [vmem:[#allocation1 + $0x20] sm:$0xff pattern:$0x75316420]
      %v1440 = vld.sshfl [vmem:[#allocation1 + $0x28] sm:$0xff pattern:$0x75316420]
      %v1441 = vld.sshfl [vmem:[#allocation1 + $0x30] sm:$0xff pattern:$0x75316420]
      %v1442 = vld.sshfl [vmem:[#allocation1 + $0x38] sm:$0xff pattern:$0x75316420]
      %1443 = vst [vmem:[#allocation1] ss:$2 sm:$0xff] %v1406
      %v1444 = vld.sshfl [vmem:[#allocation1] sm:$0xff pattern:$0x75316420]
      %1445 = vrot.lane.b32.xlu0 %v1423, 126
      %v1446 = vpop.permute.xlu0 %1445
      %1447 = vrot.lane.b32.xlu0 %v1424, 126
      %v1448 = vpop.permute.xlu0 %1447
      %1449 = vrot.lane.b32.xlu0 %v1425, 126
      %v1450 = vpop.permute.xlu0 %1449
      %1451 = vrot.lane.b32.xlu0 %v1426, 126
      %v1452 = vpop.permute.xlu0 %1451
      %1453 = vrot.lane.b32.xlu0 %v1427, 126
      %v1454 = vpop.permute.xlu0 %1453
      %1455 = vrot.lane.b32.xlu0 %v1428, 126
      %v1456 = vpop.permute.xlu0 %1455
      %1457 = vrot.lane.b32.xlu0 %v1429, 126
      %v1458 = vpop.permute.xlu0 %1457
      %1459 = vrot.lane.b32.xlu0 %v1430, 126
      %v1460 = vpop.permute.xlu0 %1459
      %1461 = vrot.lane.b32.xlu0 %v1435, 126
      %v1462 = vpop.permute.xlu0 %1461
      %1463 = vrot.lane.b32.xlu0 %v1436, 126
      %v1464 = vpop.permute.xlu0 %1463
      %1465 = vrot.lane.b32.xlu0 %v1437, 126
      %v1466 = vpop.permute.xlu0 %1465
      %1467 = vrot.lane.b32.xlu0 %v1438, 126
      %v1468 = vpop.permute.xlu0 %1467
      %1469 = vrot.lane.b32.xlu0 %v1439, 126
      %v1470 = vpop.permute.xlu0 %1469
      %1471 = vrot.lane.b32.xlu0 %v1440, 126
      %v1472 = vpop.permute.xlu0 %1471
      %1473 = vrot.lane.b32.xlu0 %v1441, 126
      %v1474 = vpop.permute.xlu0 %1473
      %1475 = vrot.lane.b32.xlu0 %v1442, 126
      %v1476 = vpop.permute.xlu0 %1475
      %1477 = vrot.lane.b32.xlu0 %v1444, 126
      %v1478 = vpop.permute.xlu0 %1477
      %vm1479 = vcmask 1031168
      %v1480 = vsel %vm1479, %v1446, %v1448
      %v1481 = vsel %vm1479, %v1448, %v1450
      %v1482 = vsel %vm1479, %v1450, %v1452
      %v1483 = vsel %vm1479, %v1452, %v1454
      %v1484 = vsel %vm1479, %v1454, %v1456
      %v1485 = vsel %vm1479, %v1456, %v1458
      %v1486 = vsel %vm1479, %v1458, %v1460
      %v1487 = vsel %vm1479, %v1460, %v1462
      %v1488 = vsel %vm1479, %v1462, %v1464
      %v1489 = vsel %vm1479, %v1464, %v1466
      %v1490 = vsel %vm1479, %v1466, %v1468
      %v1491 = vsel %vm1479, %v1468, %v1470
      %v1492 = vsel %vm1479, %v1470, %v1472
      %v1493 = vsel %vm1479, %v1472, %v1474
      %v1494 = vsel %vm1479, %v1474, %v1476
      %v1495 = vsel %vm1479, %v1476, %v1478
      %v1497 = vsel %vm657, %v1397, 0
      %v1499 = vsel %vm661, %v1480, 0
      %v1501 = vsel %vm661, %v1481, 0
      %v1503 = vsel %vm661, %v1482, 0
      %v1505 = vsel %vm661, %v1483, 0
      %v1507 = vsel %vm661, %v1484, 0
      %v1509 = vsel %vm661, %v1485, 0
      %v1511 = vsel %vm661, %v1486, 0
      %v1513 = vsel %vm661, %v1487, 0
      %v1515 = vsel %vm661, %v1488, 0
      %v1517 = vsel %vm661, %v1489, 0
      %v1519 = vsel %vm661, %v1490, 0
      %v1521 = vsel %vm661, %v1491, 0
      %v1523 = vsel %vm661, %v1492, 0
      %v1525 = vsel %vm661, %v1493, 0
      %v1527 = vsel %vm661, %v1494, 0
      %v1529 = vsel %vm661, %v1495, 0
      %1531 = vmatpush.msra.mxu0 0.0
      %1532 = vmatpush.msra.mxu0 0.0
      %1533 = vmatpush.msra.mxu0 0.0
      %1534 = vmatpush.msra.mxu0 0.0
      %1535 = vmatpush.msra.mxu0 0.0
      %1536 = vmatpush.msra.mxu0 0.0
      %1537 = vmatpush.msra.mxu0 0.0
      %1538 = vmatpush.msra.mxu0 0.0
      %1539 = vmatpush.msra.mxu0 0.0
      %1540 = vmatpush.msra.mxu0 0.0
      %1541 = vmatpush.msra.mxu0 0.0
      %1542 = vmatpush.msra.mxu0 0.0
      %1543 = vmatpush.msra.mxu0 0.0
      %1544 = vmatpush.msra.mxu0 0.0
      %1545 = vmatpush.msra.mxu0 0.0
      %1546 = vmatpush.msra.mxu0 %v1499
      %1547 = vmatmul.f32.gmra.mxu0 %v1497
      %v1548 = vpop.f32.mrf.mxu0
      %v1549 = vadd.f32 0.0, %v1548
      %1550 = vdwg.mxu0
      %1551 = vmatpush.msra.mxu0 0.0
      %1552 = vmatpush.msra.mxu0 0.0
      %1553 = vmatpush.msra.mxu0 0.0
      %1554 = vmatpush.msra.mxu0 0.0
      %1555 = vmatpush.msra.mxu0 0.0
      %1556 = vmatpush.msra.mxu0 0.0
      %1557 = vmatpush.msra.mxu0 0.0
      %1558 = vmatpush.msra.mxu0 0.0
      %1559 = vmatpush.msra.mxu0 0.0
      %1560 = vmatpush.msra.mxu0 0.0
      %1561 = vmatpush.msra.mxu0 0.0
      %1562 = vmatpush.msra.mxu0 0.0
      %1563 = vmatpush.msra.mxu0 0.0
      %1564 = vmatpush.msra.mxu0 0.0
      %1565 = vmatpush.msra.mxu0 0.0
      %1566 = vmatpush.msra.mxu0 %v1501
      %1567 = vmatmul.f32.gmra.mxu0 %v1497
      %v1568 = vpop.f32.mrf.mxu0
      %v1569 = vadd.f32 0.0, %v1568
      %1570 = vdwg.mxu0
      %1571 = vmatpush.msra.mxu0 0.0
      %1572 = vmatpush.msra.mxu0 0.0
      %1573 = vmatpush.msra.mxu0 0.0
      %1574 = vmatpush.msra.mxu0 0.0
      %1575 = vmatpush.msra.mxu0 0.0
      %1576 = vmatpush.msra.mxu0 0.0
      %1577 = vmatpush.msra.mxu0 0.0
      %1578 = vmatpush.msra.mxu0 0.0
      %1579 = vmatpush.msra.mxu0 0.0
      %1580 = vmatpush.msra.mxu0 0.0
      %1581 = vmatpush.msra.mxu0 0.0
      %1582 = vmatpush.msra.mxu0 0.0
      %1583 = vmatpush.msra.mxu0 0.0
      %1584 = vmatpush.msra.mxu0 0.0
      %1585 = vmatpush.msra.mxu0 0.0
      %1586 = vmatpush.msra.mxu0 %v1503
      %1587 = vmatmul.f32.gmra.mxu0 %v1497
      %v1588 = vpop.f32.mrf.mxu0
      %v1589 = vadd.f32 0.0, %v1588
      %1590 = vdwg.mxu0
      %1591 = vmatpush.msra.mxu0 0.0
      %1592 = vmatpush.msra.mxu0 0.0
      %1593 = vmatpush.msra.mxu0 0.0
      %1594 = vmatpush.msra.mxu0 0.0
      %1595 = vmatpush.msra.mxu0 0.0
      %1596 = vmatpush.msra.mxu0 0.0
      %1597 = vmatpush.msra.mxu0 0.0
      %1598 = vmatpush.msra.mxu0 0.0
      %1599 = vmatpush.msra.mxu0 0.0
      %1600 = vmatpush.msra.mxu0 0.0
      %1601 = vmatpush.msra.mxu0 0.0
      %1602 = vmatpush.msra.mxu0 0.0
      %1603 = vmatpush.msra.mxu0 0.0
      %1604 = vmatpush.msra.mxu0 0.0
      %1605 = vmatpush.msra.mxu0 0.0
      %1606 = vmatpush.msra.mxu0 %v1505
      %1607 = vmatmul.f32.gmra.mxu0 %v1497
      %v1608 = vpop.f32.mrf.mxu0
      %v1609 = vadd.f32 0.0, %v1608
      %1610 = vdwg.mxu0
      %1611 = vmatpush.msra.mxu0 0.0
      %1612 = vmatpush.msra.mxu0 0.0
      %1613 = vmatpush.msra.mxu0 0.0
      %1614 = vmatpush.msra.mxu0 0.0
      %1615 = vmatpush.msra.mxu0 0.0
      %1616 = vmatpush.msra.mxu0 0.0
      %1617 = vmatpush.msra.mxu0 0.0
      %1618 = vmatpush.msra.mxu0 0.0
      %1619 = vmatpush.msra.mxu0 0.0
      %1620 = vmatpush.msra.mxu0 0.0
      %1621 = vmatpush.msra.mxu0 0.0
      %1622 = vmatpush.msra.mxu0 0.0
      %1623 = vmatpush.msra.mxu0 0.0
      %1624 = vmatpush.msra.mxu0 0.0
      %1625 = vmatpush.msra.mxu0 0.0
      %1626 = vmatpush.msra.mxu0 %v1507
      %1627 = vmatmul.f32.gmra.mxu0 %v1497
      %v1628 = vpop.f32.mrf.mxu0
      %v1629 = vadd.f32 0.0, %v1628
      %1630 = vdwg.mxu0
      %1631 = vmatpush.msra.mxu0 0.0
      %1632 = vmatpush.msra.mxu0 0.0
      %1633 = vmatpush.msra.mxu0 0.0
      %1634 = vmatpush.msra.mxu0 0.0
      %1635 = vmatpush.msra.mxu0 0.0
      %1636 = vmatpush.msra.mxu0 0.0
      %1637 = vmatpush.msra.mxu0 0.0
      %1638 = vmatpush.msra.mxu0 0.0
      %1639 = vmatpush.msra.mxu0 0.0
      %1640 = vmatpush.msra.mxu0 0.0
      %1641 = vmatpush.msra.mxu0 0.0
      %1642 = vmatpush.msra.mxu0 0.0
      %1643 = vmatpush.msra.mxu0 0.0
      %1644 = vmatpush.msra.mxu0 0.0
      %1645 = vmatpush.msra.mxu0 0.0
      %1646 = vmatpush.msra.mxu0 %v1509
      %1647 = vmatmul.f32.gmra.mxu0 %v1497
      %v1648 = vpop.f32.mrf.mxu0
      %v1649 = vadd.f32 0.0, %v1648
      %1650 = vdwg.mxu0
      %1651 = vmatpush.msra.mxu0 0.0
      %1652 = vmatpush.msra.mxu0 0.0
      %1653 = vmatpush.msra.mxu0 0.0
      %1654 = vmatpush.msra.mxu0 0.0
      %1655 = vmatpush.msra.mxu0 0.0
      %1656 = vmatpush.msra.mxu0 0.0
      %1657 = vmatpush.msra.mxu0 0.0
      %1658 = vmatpush.msra.mxu0 0.0
      %1659 = vmatpush.msra.mxu0 0.0
      %1660 = vmatpush.msra.mxu0 0.0
      %1661 = vmatpush.msra.mxu0 0.0
      %1662 = vmatpush.msra.mxu0 0.0
      %1663 = vmatpush.msra.mxu0 0.0
      %1664 = vmatpush.msra.mxu0 0.0
      %1665 = vmatpush.msra.mxu0 0.0
      %1666 = vmatpush.msra.mxu0 %v1511
      %1667 = vmatmul.f32.gmra.mxu0 %v1497
      %v1668 = vpop.f32.mrf.mxu0
      %v1669 = vadd.f32 0.0, %v1668
      %1670 = vdwg.mxu0
      %1671 = vmatpush.msra.mxu0 0.0
      %1672 = vmatpush.msra.mxu0 0.0
      %1673 = vmatpush.msra.mxu0 0.0
      %1674 = vmatpush.msra.mxu0 0.0
      %1675 = vmatpush.msra.mxu0 0.0
      %1676 = vmatpush.msra.mxu0 0.0
      %1677 = vmatpush.msra.mxu0 0.0
      %1678 = vmatpush.msra.mxu0 0.0
      %1679 = vmatpush.msra.mxu0 0.0
      %1680 = vmatpush.msra.mxu0 0.0
      %1681 = vmatpush.msra.mxu0 0.0
      %1682 = vmatpush.msra.mxu0 0.0
      %1683 = vmatpush.msra.mxu0 0.0
      %1684 = vmatpush.msra.mxu0 0.0
      %1685 = vmatpush.msra.mxu0 0.0
      %1686 = vmatpush.msra.mxu0 %v1513
      %1687 = vmatmul.f32.gmra.mxu0 %v1497
      %v1688 = vpop.f32.mrf.mxu0
      %v1689 = vadd.f32 0.0, %v1688
      %1690 = vdwg.mxu0
      %1691 = vmatpush.msra.mxu0 0.0
      %1692 = vmatpush.msra.mxu0 0.0
      %1693 = vmatpush.msra.mxu0 0.0
      %1694 = vmatpush.msra.mxu0 0.0
      %1695 = vmatpush.msra.mxu0 0.0
      %1696 = vmatpush.msra.mxu0 0.0
      %1697 = vmatpush.msra.mxu0 0.0
      %1698 = vmatpush.msra.mxu0 0.0
      %1699 = vmatpush.msra.mxu0 0.0
      %1700 = vmatpush.msra.mxu0 0.0
      %1701 = vmatpush.msra.mxu0 0.0
      %1702 = vmatpush.msra.mxu0 0.0
      %1703 = vmatpush.msra.mxu0 0.0
      %1704 = vmatpush.msra.mxu0 0.0
      %1705 = vmatpush.msra.mxu0 0.0
      %1706 = vmatpush.msra.mxu0 %v1515
      %1707 = vmatmul.f32.gmra.mxu0 %v1497
      %v1708 = vpop.f32.mrf.mxu0
      %v1709 = vadd.f32 0.0, %v1708
      %1710 = vdwg.mxu0
      %1711 = vmatpush.msra.mxu0 0.0
      %1712 = vmatpush.msra.mxu0 0.0
      %1713 = vmatpush.msra.mxu0 0.0
      %1714 = vmatpush.msra.mxu0 0.0
      %1715 = vmatpush.msra.mxu0 0.0
      %1716 = vmatpush.msra.mxu0 0.0
      %1717 = vmatpush.msra.mxu0 0.0
      %1718 = vmatpush.msra.mxu0 0.0
      %1719 = vmatpush.msra.mxu0 0.0
      %1720 = vmatpush.msra.mxu0 0.0
      %1721 = vmatpush.msra.mxu0 0.0
      %1722 = vmatpush.msra.mxu0 0.0
      %1723 = vmatpush.msra.mxu0 0.0
      %1724 = vmatpush.msra.mxu0 0.0
      %1725 = vmatpush.msra.mxu0 0.0
      %1726 = vmatpush.msra.mxu0 %v1517
      %1727 = vmatmul.f32.gmra.mxu0 %v1497
      %v1728 = vpop.f32.mrf.mxu0
      %v1729 = vadd.f32 0.0, %v1728
      %1730 = vdwg.mxu0
      %1731 = vmatpush.msra.mxu0 0.0
      %1732 = vmatpush.msra.mxu0 0.0
      %1733 = vmatpush.msra.mxu0 0.0
      %1734 = vmatpush.msra.mxu0 0.0
      %1735 = vmatpush.msra.mxu0 0.0
      %1736 = vmatpush.msra.mxu0 0.0
      %1737 = vmatpush.msra.mxu0 0.0
      %1738 = vmatpush.msra.mxu0 0.0
      %1739 = vmatpush.msra.mxu0 0.0
      %1740 = vmatpush.msra.mxu0 0.0
      %1741 = vmatpush.msra.mxu0 0.0
      %1742 = vmatpush.msra.mxu0 0.0
      %1743 = vmatpush.msra.mxu0 0.0
      %1744 = vmatpush.msra.mxu0 0.0
      %1745 = vmatpush.msra.mxu0 0.0
      %1746 = vmatpush.msra.mxu0 %v1519
      %1747 = vmatmul.f32.gmra.mxu0 %v1497
      %v1748 = vpop.f32.mrf.mxu0
      %v1749 = vadd.f32 0.0, %v1748
      %1750 = vdwg.mxu0
      %1751 = vmatpush.msra.mxu0 0.0
      %1752 = vmatpush.msra.mxu0 0.0
      %1753 = vmatpush.msra.mxu0 0.0
      %1754 = vmatpush.msra.mxu0 0.0
      %1755 = vmatpush.msra.mxu0 0.0
      %1756 = vmatpush.msra.mxu0 0.0
      %1757 = vmatpush.msra.mxu0 0.0
      %1758 = vmatpush.msra.mxu0 0.0
      %1759 = vmatpush.msra.mxu0 0.0
      %1760 = vmatpush.msra.mxu0 0.0
      %1761 = vmatpush.msra.mxu0 0.0
      %1762 = vmatpush.msra.mxu0 0.0
      %1763 = vmatpush.msra.mxu0 0.0
      %1764 = vmatpush.msra.mxu0 0.0
      %1765 = vmatpush.msra.mxu0 0.0
      %1766 = vmatpush.msra.mxu0 %v1521
      %1767 = vmatmul.f32.gmra.mxu0 %v1497
      %v1768 = vpop.f32.mrf.mxu0
      %v1769 = vadd.f32 0.0, %v1768
      %1770 = vdwg.mxu0
      %1771 = vmatpush.msra.mxu0 0.0
      %1772 = vmatpush.msra.mxu0 0.0
      %1773 = vmatpush.msra.mxu0 0.0
      %1774 = vmatpush.msra.mxu0 0.0
      %1775 = vmatpush.msra.mxu0 0.0
      %1776 = vmatpush.msra.mxu0 0.0
      %1777 = vmatpush.msra.mxu0 0.0
      %1778 = vmatpush.msra.mxu0 0.0
      %1779 = vmatpush.msra.mxu0 0.0
      %1780 = vmatpush.msra.mxu0 0.0
      %1781 = vmatpush.msra.mxu0 0.0
      %1782 = vmatpush.msra.mxu0 0.0
      %1783 = vmatpush.msra.mxu0 0.0
      %1784 = vmatpush.msra.mxu0 0.0
      %1785 = vmatpush.msra.mxu0 0.0
      %1786 = vmatpush.msra.mxu0 %v1523
      %1787 = vmatmul.f32.gmra.mxu0 %v1497
      %v1788 = vpop.f32.mrf.mxu0
      %v1789 = vadd.f32 0.0, %v1788
      %1790 = vdwg.mxu0
      %1791 = vmatpush.msra.mxu0 0.0
      %1792 = vmatpush.msra.mxu0 0.0
      %1793 = vmatpush.msra.mxu0 0.0
      %1794 = vmatpush.msra.mxu0 0.0
      %1795 = vmatpush.msra.mxu0 0.0
      %1796 = vmatpush.msra.mxu0 0.0
      %1797 = vmatpush.msra.mxu0 0.0
      %1798 = vmatpush.msra.mxu0 0.0
      %1799 = vmatpush.msra.mxu0 0.0
      %1800 = vmatpush.msra.mxu0 0.0
      %1801 = vmatpush.msra.mxu0 0.0
      %1802 = vmatpush.msra.mxu0 0.0
      %1803 = vmatpush.msra.mxu0 0.0
      %1804 = vmatpush.msra.mxu0 0.0
      %1805 = vmatpush.msra.mxu0 0.0
      %1806 = vmatpush.msra.mxu0 %v1525
      %1807 = vmatmul.f32.gmra.mxu0 %v1497
      %v1808 = vpop.f32.mrf.mxu0
      %v1809 = vadd.f32 0.0, %v1808
      %1810 = vdwg.mxu0
      %1811 = vmatpush.msra.mxu0 0.0
      %1812 = vmatpush.msra.mxu0 0.0
      %1813 = vmatpush.msra.mxu0 0.0
      %1814 = vmatpush.msra.mxu0 0.0
      %1815 = vmatpush.msra.mxu0 0.0
      %1816 = vmatpush.msra.mxu0 0.0
      %1817 = vmatpush.msra.mxu0 0.0
      %1818 = vmatpush.msra.mxu0 0.0
      %1819 = vmatpush.msra.mxu0 0.0
      %1820 = vmatpush.msra.mxu0 0.0
      %1821 = vmatpush.msra.mxu0 0.0
      %1822 = vmatpush.msra.mxu0 0.0
      %1823 = vmatpush.msra.mxu0 0.0
      %1824 = vmatpush.msra.mxu0 0.0
      %1825 = vmatpush.msra.mxu0 0.0
      %1826 = vmatpush.msra.mxu0 %v1527
      %1827 = vmatmul.f32.gmra.mxu0 %v1497
      %v1828 = vpop.f32.mrf.mxu0
      %v1829 = vadd.f32 0.0, %v1828
      %1830 = vdwg.mxu0
      %1831 = vmatpush.msra.mxu0 0.0
      %1832 = vmatpush.msra.mxu0 0.0
      %1833 = vmatpush.msra.mxu0 0.0
      %1834 = vmatpush.msra.mxu0 0.0
      %1835 = vmatpush.msra.mxu0 0.0
      %1836 = vmatpush.msra.mxu0 0.0
      %1837 = vmatpush.msra.mxu0 0.0
      %1838 = vmatpush.msra.mxu0 0.0
      %1839 = vmatpush.msra.mxu0 0.0
      %1840 = vmatpush.msra.mxu0 0.0
      %1841 = vmatpush.msra.mxu0 0.0
      %1842 = vmatpush.msra.mxu0 0.0
      %1843 = vmatpush.msra.mxu0 0.0
      %1844 = vmatpush.msra.mxu0 0.0
      %1845 = vmatpush.msra.mxu0 0.0
      %1846 = vmatpush.msra.mxu0 %v1529
      %1847 = vmatmul.f32.gmra.mxu0 %v1497
      %v1848 = vpop.f32.mrf.mxu0
      %v1849 = vadd.f32 0.0, %v1848
      %1850 = vdwg.mxu0
      %v1851 = vadd.f32 %v1094, %v1549
      %v1852 = vadd.f32 %v1114, %v1569
      %v1853 = vadd.f32 %v1134, %v1589
      %v1854 = vadd.f32 %v1154, %v1609
      %v1855 = vadd.f32 %v1174, %v1629
      %v1856 = vadd.f32 %v1194, %v1649
      %v1857 = vadd.f32 %v1214, %v1669
      %v1858 = vadd.f32 %v1234, %v1689
      %v1859 = vadd.f32 %v1254, %v1709
      %v1860 = vadd.f32 %v1274, %v1729
      %v1861 = vadd.f32 %v1294, %v1749
      %v1862 = vadd.f32 %v1314, %v1769
      %v1863 = vadd.f32 %v1334, %v1789
      %v1864 = vadd.f32 %v1354, %v1809
      %v1865 = vadd.f32 %v1374, %v1829
      %v1866 = vadd.f32 %v1394, %v1849
      %s1867 = scalar_lea.vmem %s2, 24
      %v1868 = vld [vmem:[%s1867] sm:$0xff]
      %v1869 = vld [vmem:[#allocation2 + $0x4] sm:$0xff]
      %v1870 = vld [vmem:[#allocation2 + $0xc] sm:$0xff]
      %v1871 = vld [vmem:[#allocation2 + $0x14] sm:$0xff]
      %v1872 = vld [vmem:[#allocation2 + $0x1c] sm:$0xff]
      %v1873 = vld [vmem:[#allocation2 + $0x24] sm:$0xff]
      %v1874 = vld [vmem:[#allocation2 + $0x2c] sm:$0xff]
      %v1875 = vld [vmem:[#allocation2 + $0x34] sm:$0xff]
      %v1876 = vld [vmem:[#allocation2 + $0x3c] sm:$0xff]
      %1885 = vst [vmem:[#allocation1] ss:$2 sm:$0xff] %v1869
      %s1886 = scalar_lea.vmem [#allocation1], 16
      %1887 = vst [vmem:[%s1886] ss:$2 sm:$0xff] %v1870
      %s1888 = scalar_lea.vmem [#allocation1], 32
      %1889 = vst [vmem:[%s1888] ss:$2 sm:$0xff] %v1871
      %s1890 = scalar_lea.vmem [#allocation1], 48
      %1891 = vst [vmem:[%s1890] ss:$2 sm:$0xff] %v1872
      %v1892 = vld.sshfl [vmem:[#allocation1] sm:$0xff pattern:$0x75316420]
      %v1893 = vld.sshfl [vmem:[#allocation1 + $0x8] sm:$0xff pattern:$0x75316420]
      %v1894 = vld.sshfl [vmem:[#allocation1 + $0x10] sm:$0xff pattern:$0x75316420]
      %v1895 = vld.sshfl [vmem:[#allocation1 + $0x18] sm:$0xff pattern:$0x75316420]
      %v1896 = vld.sshfl [vmem:[#allocation1 + $0x20] sm:$0xff pattern:$0x75316420]
      %v1897 = vld.sshfl [vmem:[#allocation1 + $0x28] sm:$0xff pattern:$0x75316420]
      %v1898 = vld.sshfl [vmem:[#allocation1 + $0x30] sm:$0xff pattern:$0x75316420]
      %v1899 = vld.sshfl [vmem:[#allocation1 + $0x38] sm:$0xff pattern:$0x75316420]
      %1900 = vst [vmem:[#allocation1] ss:$2 sm:$0xff] %v1873
      %1901 = vst [vmem:[%s1886] ss:$2 sm:$0xff] %v1874
      %1902 = vst [vmem:[%s1888] ss:$2 sm:$0xff] %v1875
      %1903 = vst [vmem:[%s1890] ss:$2 sm:$0xff] %v1876
      %v1904 = vld.sshfl [vmem:[#allocation1] sm:$0xff pattern:$0x75316420]
      %v1905 = vld.sshfl [vmem:[#allocation1 + $0x8] sm:$0xff pattern:$0x75316420]
      %v1906 = vld.sshfl [vmem:[#allocation1 + $0x10] sm:$0xff pattern:$0x75316420]
      %v1907 = vld.sshfl [vmem:[#allocation1 + $0x18] sm:$0xff pattern:$0x75316420]
      %v1908 = vld.sshfl [vmem:[#allocation1 + $0x20] sm:$0xff pattern:$0x75316420]
      %v1909 = vld.sshfl [vmem:[#allocation1 + $0x28] sm:$0xff pattern:$0x75316420]
      %v1910 = vld.sshfl [vmem:[#allocation1 + $0x30] sm:$0xff pattern:$0x75316420]
      %v1911 = vld.sshfl [vmem:[#allocation1 + $0x38] sm:$0xff pattern:$0x75316420]
      %v1913 = vsel %vm657, %v1868, 0
      %v1915 = vsel %vm661, %v1892, 0
      %v1917 = vsel %vm661, %v1893, 0
      %v1919 = vsel %vm661, %v1894, 0
      %v1921 = vsel %vm661, %v1895, 0
      %v1923 = vsel %vm661, %v1896, 0
      %v1925 = vsel %vm661, %v1897, 0
      %v1927 = vsel %vm661, %v1898, 0
      %v1929 = vsel %vm661, %v1899, 0
      %v1931 = vsel %vm661, %v1904, 0
      %v1933 = vsel %vm661, %v1905, 0
      %v1935 = vsel %vm661, %v1906, 0
      %v1937 = vsel %vm661, %v1907, 0
      %v1939 = vsel %vm661, %v1908, 0
      %v1941 = vsel %vm661, %v1909, 0
      %v1943 = vsel %vm661, %v1910, 0
      %v1945 = vsel %vm661, %v1911, 0
      %1947 = vmatpush.msra.mxu0 0.0
      %1948 = vmatpush.msra.mxu0 0.0
      %1949 = vmatpush.msra.mxu0 0.0
      %1950 = vmatpush.msra.mxu0 0.0
      %1951 = vmatpush.msra.mxu0 0.0
      %1952 = vmatpush.msra.mxu0 0.0
      %1953 = vmatpush.msra.mxu0 0.0
      %1954 = vmatpush.msra.mxu0 0.0
      %1955 = vmatpush.msra.mxu0 0.0
      %1956 = vmatpush.msra.mxu0 0.0
      %1957 = vmatpush.msra.mxu0 0.0
      %1958 = vmatpush.msra.mxu0 0.0
      %1959 = vmatpush.msra.mxu0 0.0
      %1960 = vmatpush.msra.mxu0 0.0
      %1961 = vmatpush.msra.mxu0 0.0
      %1962 = vmatpush.msra.mxu0 %v1915
      %1963 = vmatmul.f32.gmra.mxu0 %v1913
      %v1964 = vpop.f32.mrf.mxu0
      %v1965 = vadd.f32 0.0, %v1964
      %1966 = vdwg.mxu0
      %1967 = vmatpush.msra.mxu0 0.0
      %1968 = vmatpush.msra.mxu0 0.0
      %1969 = vmatpush.msra.mxu0 0.0
      %1970 = vmatpush.msra.mxu0 0.0
      %1971 = vmatpush.msra.mxu0 0.0
      %1972 = vmatpush.msra.mxu0 0.0
      %1973 = vmatpush.msra.mxu0 0.0
      %1974 = vmatpush.msra.mxu0 0.0
      %1975 = vmatpush.msra.mxu0 0.0
      %1976 = vmatpush.msra.mxu0 0.0
      %1977 = vmatpush.msra.mxu0 0.0
      %1978 = vmatpush.msra.mxu0 0.0
      %1979 = vmatpush.msra.mxu0 0.0
      %1980 = vmatpush.msra.mxu0 0.0
      %1981 = vmatpush.msra.mxu0 0.0
      %1982 = vmatpush.msra.mxu0 %v1917
      %1983 = vmatmul.f32.gmra.mxu0 %v1913
      %v1984 = vpop.f32.mrf.mxu0
      %v1985 = vadd.f32 0.0, %v1984
      %1986 = vdwg.mxu0
      %1987 = vmatpush.msra.mxu0 0.0
      %1988 = vmatpush.msra.mxu0 0.0
      %1989 = vmatpush.msra.mxu0 0.0
      %1990 = vmatpush.msra.mxu0 0.0
      %1991 = vmatpush.msra.mxu0 0.0
      %1992 = vmatpush.msra.mxu0 0.0
      %1993 = vmatpush.msra.mxu0 0.0
      %1994 = vmatpush.msra.mxu0 0.0
      %1995 = vmatpush.msra.mxu0 0.0
      %1996 = vmatpush.msra.mxu0 0.0
      %1997 = vmatpush.msra.mxu0 0.0
      %1998 = vmatpush.msra.mxu0 0.0
      %1999 = vmatpush.msra.mxu0 0.0
      %2000 = vmatpush.msra.mxu0 0.0
      %2001 = vmatpush.msra.mxu0 0.0
      %2002 = vmatpush.msra.mxu0 %v1919
      %2003 = vmatmul.f32.gmra.mxu0 %v1913
      %v2004 = vpop.f32.mrf.mxu0
      %v2005 = vadd.f32 0.0, %v2004
      %2006 = vdwg.mxu0
      %2007 = vmatpush.msra.mxu0 0.0
      %2008 = vmatpush.msra.mxu0 0.0
      %2009 = vmatpush.msra.mxu0 0.0
      %2010 = vmatpush.msra.mxu0 0.0
      %2011 = vmatpush.msra.mxu0 0.0
      %2012 = vmatpush.msra.mxu0 0.0
      %2013 = vmatpush.msra.mxu0 0.0
      %2014 = vmatpush.msra.mxu0 0.0
      %2015 = vmatpush.msra.mxu0 0.0
      %2016 = vmatpush.msra.mxu0 0.0
      %2017 = vmatpush.msra.mxu0 0.0
      %2018 = vmatpush.msra.mxu0 0.0
      %2019 = vmatpush.msra.mxu0 0.0
      %2020 = vmatpush.msra.mxu0 0.0
      %2021 = vmatpush.msra.mxu0 0.0
      %2022 = vmatpush.msra.mxu0 %v1921
      %2023 = vmatmul.f32.gmra.mxu0 %v1913
      %v2024 = vpop.f32.mrf.mxu0
      %v2025 = vadd.f32 0.0, %v2024
      %2026 = vdwg.mxu0
      %2027 = vmatpush.msra.mxu0 0.0
      %2028 = vmatpush.msra.mxu0 0.0
      %2029 = vmatpush.msra.mxu0 0.0
      %2030 = vmatpush.msra.mxu0 0.0
      %2031 = vmatpush.msra.mxu0 0.0
      %2032 = vmatpush.msra.mxu0 0.0
      %2033 = vmatpush.msra.mxu0 0.0
      %2034 = vmatpush.msra.mxu0 0.0
      %2035 = vmatpush.msra.mxu0 0.0
      %2036 = vmatpush.msra.mxu0 0.0
      %2037 = vmatpush.msra.mxu0 0.0
      %2038 = vmatpush.msra.mxu0 0.0
      %2039 = vmatpush.msra.mxu0 0.0
      %2040 = vmatpush.msra.mxu0 0.0
      %2041 = vmatpush.msra.mxu0 0.0
      %2042 = vmatpush.msra.mxu0 %v1923
      %2043 = vmatmul.f32.gmra.mxu0 %v1913
      %v2044 = vpop.f32.mrf.mxu0
      %v2045 = vadd.f32 0.0, %v2044
      %2046 = vdwg.mxu0
      %2047 = vmatpush.msra.mxu0 0.0
      %2048 = vmatpush.msra.mxu0 0.0
      %2049 = vmatpush.msra.mxu0 0.0
      %2050 = vmatpush.msra.mxu0 0.0
      %2051 = vmatpush.msra.mxu0 0.0
      %2052 = vmatpush.msra.mxu0 0.0
      %2053 = vmatpush.msra.mxu0 0.0
      %2054 = vmatpush.msra.mxu0 0.0
      %2055 = vmatpush.msra.mxu0 0.0
      %2056 = vmatpush.msra.mxu0 0.0
      %2057 = vmatpush.msra.mxu0 0.0
      %2058 = vmatpush.msra.mxu0 0.0
      %2059 = vmatpush.msra.mxu0 0.0
      %2060 = vmatpush.msra.mxu0 0.0
      %2061 = vmatpush.msra.mxu0 0.0
      %2062 = vmatpush.msra.mxu0 %v1925
      %2063 = vmatmul.f32.gmra.mxu0 %v1913
      %v2064 = vpop.f32.mrf.mxu0
      %v2065 = vadd.f32 0.0, %v2064
      %2066 = vdwg.mxu0
      %2067 = vmatpush.msra.mxu0 0.0
      %2068 = vmatpush.msra.mxu0 0.0
      %2069 = vmatpush.msra.mxu0 0.0
      %2070 = vmatpush.msra.mxu0 0.0
      %2071 = vmatpush.msra.mxu0 0.0
      %2072 = vmatpush.msra.mxu0 0.0
      %2073 = vmatpush.msra.mxu0 0.0
      %2074 = vmatpush.msra.mxu0 0.0
      %2075 = vmatpush.msra.mxu0 0.0
      %2076 = vmatpush.msra.mxu0 0.0
      %2077 = vmatpush.msra.mxu0 0.0
      %2078 = vmatpush.msra.mxu0 0.0
      %2079 = vmatpush.msra.mxu0 0.0
      %2080 = vmatpush.msra.mxu0 0.0
      %2081 = vmatpush.msra.mxu0 0.0
      %2082 = vmatpush.msra.mxu0 %v1927
      %2083 = vmatmul.f32.gmra.mxu0 %v1913
      %v2084 = vpop.f32.mrf.mxu0
      %v2085 = vadd.f32 0.0, %v2084
      %2086 = vdwg.mxu0
      %2087 = vmatpush.msra.mxu0 0.0
      %2088 = vmatpush.msra.mxu0 0.0
      %2089 = vmatpush.msra.mxu0 0.0
      %2090 = vmatpush.msra.mxu0 0.0
      %2091 = vmatpush.msra.mxu0 0.0
      %2092 = vmatpush.msra.mxu0 0.0
      %2093 = vmatpush.msra.mxu0 0.0
      %2094 = vmatpush.msra.mxu0 0.0
      %2095 = vmatpush.msra.mxu0 0.0
      %2096 = vmatpush.msra.mxu0 0.0
      %2097 = vmatpush.msra.mxu0 0.0
      %2098 = vmatpush.msra.mxu0 0.0
      %2099 = vmatpush.msra.mxu0 0.0
      %2100 = vmatpush.msra.mxu0 0.0
      %2101 = vmatpush.msra.mxu0 0.0
      %2102 = vmatpush.msra.mxu0 %v1929
      %2103 = vmatmul.f32.gmra.mxu0 %v1913
      %v2104 = vpop.f32.mrf.mxu0
      %v2105 = vadd.f32 0.0, %v2104
      %2106 = vdwg.mxu0
      %2107 = vmatpush.msra.mxu0 0.0
      %2108 = vmatpush.msra.mxu0 0.0
      %2109 = vmatpush.msra.mxu0 0.0
      %2110 = vmatpush.msra.mxu0 0.0
      %2111 = vmatpush.msra.mxu0 0.0
      %2112 = vmatpush.msra.mxu0 0.0
      %2113 = vmatpush.msra.mxu0 0.0
      %2114 = vmatpush.msra.mxu0 0.0
      %2115 = vmatpush.msra.mxu0 0.0
      %2116 = vmatpush.msra.mxu0 0.0
      %2117 = vmatpush.msra.mxu0 0.0
      %2118 = vmatpush.msra.mxu0 0.0
      %2119 = vmatpush.msra.mxu0 0.0
      %2120 = vmatpush.msra.mxu0 0.0
      %2121 = vmatpush.msra.mxu0 0.0
      %2122 = vmatpush.msra.mxu0 %v1931
      %2123 = vmatmul.f32.gmra.mxu0 %v1913
      %v2124 = vpop.f32.mrf.mxu0
      %v2125 = vadd.f32 0.0, %v2124
      %2126 = vdwg.mxu0
      %2127 = vmatpush.msra.mxu0 0.0
      %2128 = vmatpush.msra.mxu0 0.0
      %2129 = vmatpush.msra.mxu0 0.0
      %2130 = vmatpush.msra.mxu0 0.0
      %2131 = vmatpush.msra.mxu0 0.0
      %2132 = vmatpush.msra.mxu0 0.0
      %2133 = vmatpush.msra.mxu0 0.0
      %2134 = vmatpush.msra.mxu0 0.0
      %2135 = vmatpush.msra.mxu0 0.0
      %2136 = vmatpush.msra.mxu0 0.0
      %2137 = vmatpush.msra.mxu0 0.0
      %2138 = vmatpush.msra.mxu0 0.0
      %2139 = vmatpush.msra.mxu0 0.0
      %2140 = vmatpush.msra.mxu0 0.0
      %2141 = vmatpush.msra.mxu0 0.0
      %2142 = vmatpush.msra.mxu0 %v1933
      %2143 = vmatmul.f32.gmra.mxu0 %v1913
      %v2144 = vpop.f32.mrf.mxu0
      %v2145 = vadd.f32 0.0, %v2144
      %2146 = vdwg.mxu0
      %2147 = vmatpush.msra.mxu0 0.0
      %2148 = vmatpush.msra.mxu0 0.0
      %2149 = vmatpush.msra.mxu0 0.0
      %2150 = vmatpush.msra.mxu0 0.0
      %2151 = vmatpush.msra.mxu0 0.0
      %2152 = vmatpush.msra.mxu0 0.0
      %2153 = vmatpush.msra.mxu0 0.0
      %2154 = vmatpush.msra.mxu0 0.0
      %2155 = vmatpush.msra.mxu0 0.0
      %2156 = vmatpush.msra.mxu0 0.0
      %2157 = vmatpush.msra.mxu0 0.0
      %2158 = vmatpush.msra.mxu0 0.0
      %2159 = vmatpush.msra.mxu0 0.0
      %2160 = vmatpush.msra.mxu0 0.0
      %2161 = vmatpush.msra.mxu0 0.0
      %2162 = vmatpush.msra.mxu0 %v1935
      %2163 = vmatmul.f32.gmra.mxu0 %v1913
      %v2164 = vpop.f32.mrf.mxu0
      %v2165 = vadd.f32 0.0, %v2164
      %2166 = vdwg.mxu0
      %2167 = vmatpush.msra.mxu0 0.0
      %2168 = vmatpush.msra.mxu0 0.0
      %2169 = vmatpush.msra.mxu0 0.0
      %2170 = vmatpush.msra.mxu0 0.0
      %2171 = vmatpush.msra.mxu0 0.0
      %2172 = vmatpush.msra.mxu0 0.0
      %2173 = vmatpush.msra.mxu0 0.0
      %2174 = vmatpush.msra.mxu0 0.0
      %2175 = vmatpush.msra.mxu0 0.0
      %2176 = vmatpush.msra.mxu0 0.0
      %2177 = vmatpush.msra.mxu0 0.0
      %2178 = vmatpush.msra.mxu0 0.0
      %2179 = vmatpush.msra.mxu0 0.0
      %2180 = vmatpush.msra.mxu0 0.0
      %2181 = vmatpush.msra.mxu0 0.0
      %2182 = vmatpush.msra.mxu0 %v1937
      %2183 = vmatmul.f32.gmra.mxu0 %v1913
      %v2184 = vpop.f32.mrf.mxu0
      %v2185 = vadd.f32 0.0, %v2184
      %2186 = vdwg.mxu0
      %2187 = vmatpush.msra.mxu0 0.0
      %2188 = vmatpush.msra.mxu0 0.0
      %2189 = vmatpush.msra.mxu0 0.0
      %2190 = vmatpush.msra.mxu0 0.0
      %2191 = vmatpush.msra.mxu0 0.0
      %2192 = vmatpush.msra.mxu0 0.0
      %2193 = vmatpush.msra.mxu0 0.0
      %2194 = vmatpush.msra.mxu0 0.0
      %2195 = vmatpush.msra.mxu0 0.0
      %2196 = vmatpush.msra.mxu0 0.0
      %2197 = vmatpush.msra.mxu0 0.0
      %2198 = vmatpush.msra.mxu0 0.0
      %2199 = vmatpush.msra.mxu0 0.0
      %2200 = vmatpush.msra.mxu0 0.0
      %2201 = vmatpush.msra.mxu0 0.0
      %2202 = vmatpush.msra.mxu0 %v1939
      %2203 = vmatmul.f32.gmra.mxu0 %v1913
      %v2204 = vpop.f32.mrf.mxu0
      %v2205 = vadd.f32 0.0, %v2204
      %2206 = vdwg.mxu0
      %2207 = vmatpush.msra.mxu0 0.0
      %2208 = vmatpush.msra.mxu0 0.0
      %2209 = vmatpush.msra.mxu0 0.0
      %2210 = vmatpush.msra.mxu0 0.0
      %2211 = vmatpush.msra.mxu0 0.0
      %2212 = vmatpush.msra.mxu0 0.0
      %2213 = vmatpush.msra.mxu0 0.0
      %2214 = vmatpush.msra.mxu0 0.0
      %2215 = vmatpush.msra.mxu0 0.0
      %2216 = vmatpush.msra.mxu0 0.0
      %2217 = vmatpush.msra.mxu0 0.0
      %2218 = vmatpush.msra.mxu0 0.0
      %2219 = vmatpush.msra.mxu0 0.0
      %2220 = vmatpush.msra.mxu0 0.0
      %2221 = vmatpush.msra.mxu0 0.0
      %2222 = vmatpush.msra.mxu0 %v1941
      %2223 = vmatmul.f32.gmra.mxu0 %v1913
      %v2224 = vpop.f32.mrf.mxu0
      %v2225 = vadd.f32 0.0, %v2224
      %2226 = vdwg.mxu0
      %2227 = vmatpush.msra.mxu0 0.0
      %2228 = vmatpush.msra.mxu0 0.0
      %2229 = vmatpush.msra.mxu0 0.0
      %2230 = vmatpush.msra.mxu0 0.0
      %2231 = vmatpush.msra.mxu0 0.0
      %2232 = vmatpush.msra.mxu0 0.0
      %2233 = vmatpush.msra.mxu0 0.0
      %2234 = vmatpush.msra.mxu0 0.0
      %2235 = vmatpush.msra.mxu0 0.0
      %2236 = vmatpush.msra.mxu0 0.0
      %2237 = vmatpush.msra.mxu0 0.0
      %2238 = vmatpush.msra.mxu0 0.0
      %2239 = vmatpush.msra.mxu0 0.0
      %2240 = vmatpush.msra.mxu0 0.0
      %2241 = vmatpush.msra.mxu0 0.0
      %2242 = vmatpush.msra.mxu0 %v1943
      %2243 = vmatmul.f32.gmra.mxu0 %v1913
      %v2244 = vpop.f32.mrf.mxu0
      %v2245 = vadd.f32 0.0, %v2244
      %2246 = vdwg.mxu0
      %2247 = vmatpush.msra.mxu0 0.0
      %2248 = vmatpush.msra.mxu0 0.0
      %2249 = vmatpush.msra.mxu0 0.0
      %2250 = vmatpush.msra.mxu0 0.0
      %2251 = vmatpush.msra.mxu0 0.0
      %2252 = vmatpush.msra.mxu0 0.0
      %2253 = vmatpush.msra.mxu0 0.0
      %2254 = vmatpush.msra.mxu0 0.0
      %2255 = vmatpush.msra.mxu0 0.0
      %2256 = vmatpush.msra.mxu0 0.0
      %2257 = vmatpush.msra.mxu0 0.0
      %2258 = vmatpush.msra.mxu0 0.0
      %2259 = vmatpush.msra.mxu0 0.0
      %2260 = vmatpush.msra.mxu0 0.0
      %2261 = vmatpush.msra.mxu0 0.0
      %2262 = vmatpush.msra.mxu0 %v1945
      %2263 = vmatmul.f32.gmra.mxu0 %v1913
      %v2264 = vpop.f32.mrf.mxu0
      %v2265 = vadd.f32 0.0, %v2264
      %2266 = vdwg.mxu0
      %v2267 = vadd.f32 %v1851, %v1965
      %v2268 = vadd.f32 %v1852, %v1985
      %v2269 = vadd.f32 %v1853, %v2005
      %v2270 = vadd.f32 %v1854, %v2025
      %v2271 = vadd.f32 %v1855, %v2045
      %v2272 = vadd.f32 %v1856, %v2065
      %v2273 = vadd.f32 %v1857, %v2085
      %v2274 = vadd.f32 %v1858, %v2105
      %v2275 = vadd.f32 %v1859, %v2125
      %v2276 = vadd.f32 %v1860, %v2145
      %v2277 = vadd.f32 %v1861, %v2165
      %v2278 = vadd.f32 %v1862, %v2185
      %v2279 = vadd.f32 %v1863, %v2205
      %v2280 = vadd.f32 %v1864, %v2225
      %v2281 = vadd.f32 %v1865, %v2245
      %v2282 = vadd.f32 %v1866, %v2265
      %s2283 = scalar_lea.vmem %s2, 32
      %v2284 = vld [vmem:[%s2283] sm:$0xff]
      %v2285 = vld [vmem:[#allocation2 + $0x4] sm:$0xff]
      %v2286 = vld [vmem:[#allocation2 + $0xc] sm:$0xff]
      %v2287 = vld [vmem:[#allocation2 + $0x14] sm:$0xff]
      %v2288 = vld [vmem:[#allocation2 + $0x1c] sm:$0xff]
      %v2289 = vld [vmem:[#allocation2 + $0x24] sm:$0xff]
      %v2290 = vld [vmem:[#allocation2 + $0x2c] sm:$0xff]
      %v2291 = vld [vmem:[#allocation2 + $0x34] sm:$0xff]
      %v2292 = vld [vmem:[#allocation2 + $0x3c] sm:$0xff]
      %v2293 = vld [vmem:[#allocation2 + $0x44] sm:$0xf]
      %2303 = vst [vmem:[#allocation1] ss:$2 sm:$0xff] %v2285
      %s2304 = scalar_lea.vmem [#allocation1], 16
      %2305 = vst [vmem:[%s2304] ss:$2 sm:$0xff] %v2286
      %s2306 = scalar_lea.vmem [#allocation1], 32
      %2307 = vst [vmem:[%s2306] ss:$2 sm:$0xff] %v2287
      %s2308 = scalar_lea.vmem [#allocation1], 48
      %2309 = vst [vmem:[%s2308] ss:$2 sm:$0xff] %v2288
      %v2310 = vld.sshfl [vmem:[#allocation1] sm:$0xff pattern:$0x75316420]
      %v2311 = vld.sshfl [vmem:[#allocation1 + $0x8] sm:$0xff pattern:$0x75316420]
      %v2312 = vld.sshfl [vmem:[#allocation1 + $0x10] sm:$0xff pattern:$0x75316420]
      %v2313 = vld.sshfl [vmem:[#allocation1 + $0x18] sm:$0xff pattern:$0x75316420]
      %v2314 = vld.sshfl [vmem:[#allocation1 + $0x20] sm:$0xff pattern:$0x75316420]
      %v2315 = vld.sshfl [vmem:[#allocation1 + $0x28] sm:$0xff pattern:$0x75316420]
      %v2316 = vld.sshfl [vmem:[#allocation1 + $0x30] sm:$0xff pattern:$0x75316420]
      %v2317 = vld.sshfl [vmem:[#allocation1 + $0x38] sm:$0xff pattern:$0x75316420]
      %2318 = vst [vmem:[#allocation1] ss:$2 sm:$0xff] %v2289
      %2319 = vst [vmem:[%s2304] ss:$2 sm:$0xff] %v2290
      %2320 = vst [vmem:[%s2306] ss:$2 sm:$0xff] %v2291
      %2321 = vst [vmem:[%s2308] ss:$2 sm:$0xff] %v2292
      %v2322 = vld.sshfl [vmem:[#allocation1] sm:$0xff pattern:$0x75316420]
      %v2323 = vld.sshfl [vmem:[#allocation1 + $0x8] sm:$0xff pattern:$0x75316420]
      %v2324 = vld.sshfl [vmem:[#allocation1 + $0x10] sm:$0xff pattern:$0x75316420]
      %v2325 = vld.sshfl [vmem:[#allocation1 + $0x18] sm:$0xff pattern:$0x75316420]
      %v2326 = vld.sshfl [vmem:[#allocation1 + $0x20] sm:$0xff pattern:$0x75316420]
      %v2327 = vld.sshfl [vmem:[#allocation1 + $0x28] sm:$0xff pattern:$0x75316420]
      %v2328 = vld.sshfl [vmem:[#allocation1 + $0x30] sm:$0xff pattern:$0x75316420]
      %v2329 = vld.sshfl [vmem:[#allocation1 + $0x38] sm:$0xff pattern:$0x75316420]
      %2330 = vst [vmem:[#allocation1] ss:$2 sm:$0xff] %v2293
      %v2331 = vld.sshfl [vmem:[#allocation1] sm:$0xff pattern:$0x75316420]
      %2332 = vrot.lane.b32.xlu0 %v2310, 127
      %v2333 = vpop.permute.xlu0 %2332
      %2334 = vrot.lane.b32.xlu0 %v2311, 127
      %v2335 = vpop.permute.xlu0 %2334
      %2336 = vrot.lane.b32.xlu0 %v2312, 127
      %v2337 = vpop.permute.xlu0 %2336
      %2338 = vrot.lane.b32.xlu0 %v2313, 127
      %v2339 = vpop.permute.xlu0 %2338
      %2340 = vrot.lane.b32.xlu0 %v2314, 127
      %v2341 = vpop.permute.xlu0 %2340
      %2342 = vrot.lane.b32.xlu0 %v2315, 127
      %v2343 = vpop.permute.xlu0 %2342
      %2344 = vrot.lane.b32.xlu0 %v2316, 127
      %v2345 = vpop.permute.xlu0 %2344
      %2346 = vrot.lane.b32.xlu0 %v2317, 127
      %v2347 = vpop.permute.xlu0 %2346
      %2348 = vrot.lane.b32.xlu0 %v2322, 127
      %v2349 = vpop.permute.xlu0 %2348
      %2350 = vrot.lane.b32.xlu0 %v2323, 127
      %v2351 = vpop.permute.xlu0 %2350
      %2352 = vrot.lane.b32.xlu0 %v2324, 127
      %v2353 = vpop.permute.xlu0 %2352
      %2354 = vrot.lane.b32.xlu0 %v2325, 127
      %v2355 = vpop.permute.xlu0 %2354
      %2356 = vrot.lane.b32.xlu0 %v2326, 127
      %v2357 = vpop.permute.xlu0 %2356
      %2358 = vrot.lane.b32.xlu0 %v2327, 127
      %v2359 = vpop.permute.xlu0 %2358
      %2360 = vrot.lane.b32.xlu0 %v2328, 127
      %v2361 = vpop.permute.xlu0 %2360
      %2362 = vrot.lane.b32.xlu0 %v2329, 127
      %v2363 = vpop.permute.xlu0 %2362
      %2364 = vrot.lane.b32.xlu0 %v2331, 127
      %v2365 = vpop.permute.xlu0 %2364
      %v2366 = vsel %vm640, %v2333, %v2335
      %v2367 = vsel %vm640, %v2335, %v2337
      %v2368 = vsel %vm640, %v2337, %v2339
      %v2369 = vsel %vm640, %v2339, %v2341
      %v2370 = vsel %vm640, %v2341, %v2343
      %v2371 = vsel %vm640, %v2343, %v2345
      %v2372 = vsel %vm640, %v2345, %v2347
      %v2373 = vsel %vm640, %v2347, %v2349
      %v2374 = vsel %vm640, %v2349, %v2351
      %v2375 = vsel %vm640, %v2351, %v2353
      %v2376 = vsel %vm640, %v2353, %v2355
      %v2377 = vsel %vm640, %v2355, %v2357
      %v2378 = vsel %vm640, %v2357, %v2359
      %v2379 = vsel %vm640, %v2359, %v2361
      %v2380 = vsel %vm640, %v2361, %v2363
      %v2381 = vsel %vm640, %v2363, %v2365
      %v2383 = vsel %vm657, %v2284, 0
      %v2385 = vsel %vm661, %v2366, 0
      %v2387 = vsel %vm661, %v2367, 0
      %v2389 = vsel %vm661, %v2368, 0
      %v2391 = vsel %vm661, %v2369, 0
      %v2393 = vsel %vm661, %v2370, 0
      %v2395 = vsel %vm661, %v2371, 0
      %v2397 = vsel %vm661, %v2372, 0
      %v2399 = vsel %vm661, %v2373, 0
      %v2401 = vsel %vm661, %v2374, 0
      %v2403 = vsel %vm661, %v2375, 0
      %v2405 = vsel %vm661, %v2376, 0
      %v2407 = vsel %vm661, %v2377, 0
      %v2409 = vsel %vm661, %v2378, 0
      %v2411 = vsel %vm661, %v2379, 0
      %v2413 = vsel %vm661, %v2380, 0
      %v2415 = vsel %vm661, %v2381, 0
      %2417 = vmatpush.msra.mxu0 0.0
      %2418 = vmatpush.msra.mxu0 0.0
      %2419 = vmatpush.msra.mxu0 0.0
      %2420 = vmatpush.msra.mxu0 0.0
      %2421 = vmatpush.msra.mxu0 0.0
      %2422 = vmatpush.msra.mxu0 0.0
      %2423 = vmatpush.msra.mxu0 0.0
      %2424 = vmatpush.msra.mxu0 0.0
      %2425 = vmatpush.msra.mxu0 0.0
      %2426 = vmatpush.msra.mxu0 0.0
      %2427 = vmatpush.msra.mxu0 0.0
      %2428 = vmatpush.msra.mxu0 0.0
      %2429 = vmatpush.msra.mxu0 0.0
      %2430 = vmatpush.msra.mxu0 0.0
      %2431 = vmatpush.msra.mxu0 0.0
      %2432 = vmatpush.msra.mxu0 %v2385
      %2433 = vmatmul.f32.gmra.mxu0 %v2383
      %v2434 = vpop.f32.mrf.mxu0
      %v2435 = vadd.f32 0.0, %v2434
      %2436 = vdwg.mxu0
      %2437 = vmatpush.msra.mxu0 0.0
      %2438 = vmatpush.msra.mxu0 0.0
      %2439 = vmatpush.msra.mxu0 0.0
      %2440 = vmatpush.msra.mxu0 0.0
      %2441 = vmatpush.msra.mxu0 0.0
      %2442 = vmatpush.msra.mxu0 0.0
      %2443 = vmatpush.msra.mxu0 0.0
      %2444 = vmatpush.msra.mxu0 0.0
      %2445 = vmatpush.msra.mxu0 0.0
      %2446 = vmatpush.msra.mxu0 0.0
      %2447 = vmatpush.msra.mxu0 0.0
      %2448 = vmatpush.msra.mxu0 0.0
      %2449 = vmatpush.msra.mxu0 0.0
      %2450 = vmatpush.msra.mxu0 0.0
      %2451 = vmatpush.msra.mxu0 0.0
      %2452 = vmatpush.msra.mxu0 %v2387
      %2453 = vmatmul.f32.gmra.mxu0 %v2383
      %v2454 = vpop.f32.mrf.mxu0
      %v2455 = vadd.f32 0.0, %v2454
      %2456 = vdwg.mxu0
      %2457 = vmatpush.msra.mxu0 0.0
      %2458 = vmatpush.msra.mxu0 0.0
      %2459 = vmatpush.msra.mxu0 0.0
      %2460 = vmatpush.msra.mxu0 0.0
      %2461 = vmatpush.msra.mxu0 0.0
      %2462 = vmatpush.msra.mxu0 0.0
      %2463 = vmatpush.msra.mxu0 0.0
      %2464 = vmatpush.msra.mxu0 0.0
      %2465 = vmatpush.msra.mxu0 0.0
      %2466 = vmatpush.msra.mxu0 0.0
      %2467 = vmatpush.msra.mxu0 0.0
      %2468 = vmatpush.msra.mxu0 0.0
      %2469 = vmatpush.msra.mxu0 0.0
      %2470 = vmatpush.msra.mxu0 0.0
      %2471 = vmatpush.msra.mxu0 0.0
      %2472 = vmatpush.msra.mxu0 %v2389
      %2473 = vmatmul.f32.gmra.mxu0 %v2383
      %v2474 = vpop.f32.mrf.mxu0
      %v2475 = vadd.f32 0.0, %v2474
      %2476 = vdwg.mxu0
      %2477 = vmatpush.msra.mxu0 0.0
      %2478 = vmatpush.msra.mxu0 0.0
      %2479 = vmatpush.msra.mxu0 0.0
      %2480 = vmatpush.msra.mxu0 0.0
      %2481 = vmatpush.msra.mxu0 0.0
      %2482 = vmatpush.msra.mxu0 0.0
      %2483 = vmatpush.msra.mxu0 0.0
      %2484 = vmatpush.msra.mxu0 0.0
      %2485 = vmatpush.msra.mxu0 0.0
      %2486 = vmatpush.msra.mxu0 0.0
      %2487 = vmatpush.msra.mxu0 0.0
      %2488 = vmatpush.msra.mxu0 0.0
      %2489 = vmatpush.msra.mxu0 0.0
      %2490 = vmatpush.msra.mxu0 0.0
      %2491 = vmatpush.msra.mxu0 0.0
      %2492 = vmatpush.msra.mxu0 %v2391
      %2493 = vmatmul.f32.gmra.mxu0 %v2383
      %v2494 = vpop.f32.mrf.mxu0
      %v2495 = vadd.f32 0.0, %v2494
      %2496 = vdwg.mxu0
      %2497 = vmatpush.msra.mxu0 0.0
      %2498 = vmatpush.msra.mxu0 0.0
      %2499 = vmatpush.msra.mxu0 0.0
      %2500 = vmatpush.msra.mxu0 0.0
      %2501 = vmatpush.msra.mxu0 0.0
      %2502 = vmatpush.msra.mxu0 0.0
      %2503 = vmatpush.msra.mxu0 0.0
      %2504 = vmatpush.msra.mxu0 0.0
      %2505 = vmatpush.msra.mxu0 0.0
      %2506 = vmatpush.msra.mxu0 0.0
      %2507 = vmatpush.msra.mxu0 0.0
      %2508 = vmatpush.msra.mxu0 0.0
      %2509 = vmatpush.msra.mxu0 0.0
      %2510 = vmatpush.msra.mxu0 0.0
      %2511 = vmatpush.msra.mxu0 0.0
      %2512 = vmatpush.msra.mxu0 %v2393
      %2513 = vmatmul.f32.gmra.mxu0 %v2383
      %v2514 = vpop.f32.mrf.mxu0
      %v2515 = vadd.f32 0.0, %v2514
      %2516 = vdwg.mxu0
      %2517 = vmatpush.msra.mxu0 0.0
      %2518 = vmatpush.msra.mxu0 0.0
      %2519 = vmatpush.msra.mxu0 0.0
      %2520 = vmatpush.msra.mxu0 0.0
      %2521 = vmatpush.msra.mxu0 0.0
      %2522 = vmatpush.msra.mxu0 0.0
      %2523 = vmatpush.msra.mxu0 0.0
      %2524 = vmatpush.msra.mxu0 0.0
      %2525 = vmatpush.msra.mxu0 0.0
      %2526 = vmatpush.msra.mxu0 0.0
      %2527 = vmatpush.msra.mxu0 0.0
      %2528 = vmatpush.msra.mxu0 0.0
      %2529 = vmatpush.msra.mxu0 0.0
      %2530 = vmatpush.msra.mxu0 0.0
      %2531 = vmatpush.msra.mxu0 0.0
      %2532 = vmatpush.msra.mxu0 %v2395
      %2533 = vmatmul.f32.gmra.mxu0 %v2383
      %v2534 = vpop.f32.mrf.mxu0
      %v2535 = vadd.f32 0.0, %v2534
      %2536 = vdwg.mxu0
      %2537 = vmatpush.msra.mxu0 0.0
      %2538 = vmatpush.msra.mxu0 0.0
      %2539 = vmatpush.msra.mxu0 0.0
      %2540 = vmatpush.msra.mxu0 0.0
      %2541 = vmatpush.msra.mxu0 0.0
      %2542 = vmatpush.msra.mxu0 0.0
      %2543 = vmatpush.msra.mxu0 0.0
      %2544 = vmatpush.msra.mxu0 0.0
      %2545 = vmatpush.msra.mxu0 0.0
      %2546 = vmatpush.msra.mxu0 0.0
      %2547 = vmatpush.msra.mxu0 0.0
      %2548 = vmatpush.msra.mxu0 0.0
      %2549 = vmatpush.msra.mxu0 0.0
      %2550 = vmatpush.msra.mxu0 0.0
      %2551 = vmatpush.msra.mxu0 0.0
      %2552 = vmatpush.msra.mxu0 %v2397
      %2553 = vmatmul.f32.gmra.mxu0 %v2383
      %v2554 = vpop.f32.mrf.mxu0
      %v2555 = vadd.f32 0.0, %v2554
      %2556 = vdwg.mxu0
      %2557 = vmatpush.msra.mxu0 0.0
      %2558 = vmatpush.msra.mxu0 0.0
      %2559 = vmatpush.msra.mxu0 0.0
      %2560 = vmatpush.msra.mxu0 0.0
      %2561 = vmatpush.msra.mxu0 0.0
      %2562 = vmatpush.msra.mxu0 0.0
      %2563 = vmatpush.msra.mxu0 0.0
      %2564 = vmatpush.msra.mxu0 0.0
      %2565 = vmatpush.msra.mxu0 0.0
      %2566 = vmatpush.msra.mxu0 0.0
      %2567 = vmatpush.msra.mxu0 0.0
      %2568 = vmatpush.msra.mxu0 0.0
      %2569 = vmatpush.msra.mxu0 0.0
      %2570 = vmatpush.msra.mxu0 0.0
      %2571 = vmatpush.msra.mxu0 0.0
      %2572 = vmatpush.msra.mxu0 %v2399
      %2573 = vmatmul.f32.gmra.mxu0 %v2383
      %v2574 = vpop.f32.mrf.mxu0
      %v2575 = vadd.f32 0.0, %v2574
      %2576 = vdwg.mxu0
      %2577 = vmatpush.msra.mxu0 0.0
      %2578 = vmatpush.msra.mxu0 0.0
      %2579 = vmatpush.msra.mxu0 0.0
      %2580 = vmatpush.msra.mxu0 0.0
      %2581 = vmatpush.msra.mxu0 0.0
      %2582 = vmatpush.msra.mxu0 0.0
      %2583 = vmatpush.msra.mxu0 0.0
      %2584 = vmatpush.msra.mxu0 0.0
      %2585 = vmatpush.msra.mxu0 0.0
      %2586 = vmatpush.msra.mxu0 0.0
      %2587 = vmatpush.msra.mxu0 0.0
      %2588 = vmatpush.msra.mxu0 0.0
      %2589 = vmatpush.msra.mxu0 0.0
      %2590 = vmatpush.msra.mxu0 0.0
      %2591 = vmatpush.msra.mxu0 0.0
      %2592 = vmatpush.msra.mxu0 %v2401
      %2593 = vmatmul.f32.gmra.mxu0 %v2383
      %v2594 = vpop.f32.mrf.mxu0
      %v2595 = vadd.f32 0.0, %v2594
      %2596 = vdwg.mxu0
      %2597 = vmatpush.msra.mxu0 0.0
      %2598 = vmatpush.msra.mxu0 0.0
      %2599 = vmatpush.msra.mxu0 0.0
      %2600 = vmatpush.msra.mxu0 0.0
      %2601 = vmatpush.msra.mxu0 0.0
      %2602 = vmatpush.msra.mxu0 0.0
      %2603 = vmatpush.msra.mxu0 0.0
      %2604 = vmatpush.msra.mxu0 0.0
      %2605 = vmatpush.msra.mxu0 0.0
      %2606 = vmatpush.msra.mxu0 0.0
      %2607 = vmatpush.msra.mxu0 0.0
      %2608 = vmatpush.msra.mxu0 0.0
      %2609 = vmatpush.msra.mxu0 0.0
      %2610 = vmatpush.msra.mxu0 0.0
      %2611 = vmatpush.msra.mxu0 0.0
      %2612 = vmatpush.msra.mxu0 %v2403
      %2613 = vmatmul.f32.gmra.mxu0 %v2383
      %v2614 = vpop.f32.mrf.mxu0
      %v2615 = vadd.f32 0.0, %v2614
      %2616 = vdwg.mxu0
      %2617 = vmatpush.msra.mxu0 0.0
      %2618 = vmatpush.msra.mxu0 0.0
      %2619 = vmatpush.msra.mxu0 0.0
      %2620 = vmatpush.msra.mxu0 0.0
      %2621 = vmatpush.msra.mxu0 0.0
      %2622 = vmatpush.msra.mxu0 0.0
      %2623 = vmatpush.msra.mxu0 0.0
      %2624 = vmatpush.msra.mxu0 0.0
      %2625 = vmatpush.msra.mxu0 0.0
      %2626 = vmatpush.msra.mxu0 0.0
      %2627 = vmatpush.msra.mxu0 0.0
      %2628 = vmatpush.msra.mxu0 0.0
      %2629 = vmatpush.msra.mxu0 0.0
      %2630 = vmatpush.msra.mxu0 0.0
      %2631 = vmatpush.msra.mxu0 0.0
      %2632 = vmatpush.msra.mxu0 %v2405
      %2633 = vmatmul.f32.gmra.mxu0 %v2383
      %v2634 = vpop.f32.mrf.mxu0
      %v2635 = vadd.f32 0.0, %v2634
      %2636 = vdwg.mxu0
      %2637 = vmatpush.msra.mxu0 0.0
      %2638 = vmatpush.msra.mxu0 0.0
      %2639 = vmatpush.msra.mxu0 0.0
      %2640 = vmatpush.msra.mxu0 0.0
      %2641 = vmatpush.msra.mxu0 0.0
      %2642 = vmatpush.msra.mxu0 0.0
      %2643 = vmatpush.msra.mxu0 0.0
      %2644 = vmatpush.msra.mxu0 0.0
      %2645 = vmatpush.msra.mxu0 0.0
      %2646 = vmatpush.msra.mxu0 0.0
      %2647 = vmatpush.msra.mxu0 0.0
      %2648 = vmatpush.msra.mxu0 0.0
      %2649 = vmatpush.msra.mxu0 0.0
      %2650 = vmatpush.msra.mxu0 0.0
      %2651 = vmatpush.msra.mxu0 0.0
      %2652 = vmatpush.msra.mxu0 %v2407
      %2653 = vmatmul.f32.gmra.mxu0 %v2383
      %v2654 = vpop.f32.mrf.mxu0
      %v2655 = vadd.f32 0.0, %v2654
      %2656 = vdwg.mxu0
      %2657 = vmatpush.msra.mxu0 0.0
      %2658 = vmatpush.msra.mxu0 0.0
      %2659 = vmatpush.msra.mxu0 0.0
      %2660 = vmatpush.msra.mxu0 0.0
      %2661 = vmatpush.msra.mxu0 0.0
      %2662 = vmatpush.msra.mxu0 0.0
      %2663 = vmatpush.msra.mxu0 0.0
      %2664 = vmatpush.msra.mxu0 0.0
      %2665 = vmatpush.msra.mxu0 0.0
      %2666 = vmatpush.msra.mxu0 0.0
      %2667 = vmatpush.msra.mxu0 0.0
      %2668 = vmatpush.msra.mxu0 0.0
      %2669 = vmatpush.msra.mxu0 0.0
      %2670 = vmatpush.msra.mxu0 0.0
      %2671 = vmatpush.msra.mxu0 0.0
      %2672 = vmatpush.msra.mxu0 %v2409
      %2673 = vmatmul.f32.gmra.mxu0 %v2383
      %v2674 = vpop.f32.mrf.mxu0
      %v2675 = vadd.f32 0.0, %v2674
      %2676 = vdwg.mxu0
      %2677 = vmatpush.msra.mxu0 0.0
      %2678 = vmatpush.msra.mxu0 0.0
      %2679 = vmatpush.msra.mxu0 0.0
      %2680 = vmatpush.msra.mxu0 0.0
      %2681 = vmatpush.msra.mxu0 0.0
      %2682 = vmatpush.msra.mxu0 0.0
      %2683 = vmatpush.msra.mxu0 0.0
      %2684 = vmatpush.msra.mxu0 0.0
      %2685 = vmatpush.msra.mxu0 0.0
      %2686 = vmatpush.msra.mxu0 0.0
      %2687 = vmatpush.msra.mxu0 0.0
      %2688 = vmatpush.msra.mxu0 0.0
      %2689 = vmatpush.msra.mxu0 0.0
      %2690 = vmatpush.msra.mxu0 0.0
      %2691 = vmatpush.msra.mxu0 0.0
      %2692 = vmatpush.msra.mxu0 %v2411
      %2693 = vmatmul.f32.gmra.mxu0 %v2383
      %v2694 = vpop.f32.mrf.mxu0
      %v2695 = vadd.f32 0.0, %v2694
      %2696 = vdwg.mxu0
      %2697 = vmatpush.msra.mxu0 0.0
      %2698 = vmatpush.msra.mxu0 0.0
      %2699 = vmatpush.msra.mxu0 0.0
      %2700 = vmatpush.msra.mxu0 0.0
      %2701 = vmatpush.msra.mxu0 0.0
      %2702 = vmatpush.msra.mxu0 0.0
      %2703 = vmatpush.msra.mxu0 0.0
      %2704 = vmatpush.msra.mxu0 0.0
      %2705 = vmatpush.msra.mxu0 0.0
      %2706 = vmatpush.msra.mxu0 0.0
      %2707 = vmatpush.msra.mxu0 0.0
      %2708 = vmatpush.msra.mxu0 0.0
      %2709 = vmatpush.msra.mxu0 0.0
      %2710 = vmatpush.msra.mxu0 0.0
      %2711 = vmatpush.msra.mxu0 0.0
      %2712 = vmatpush.msra.mxu0 %v2413
      %2713 = vmatmul.f32.gmra.mxu0 %v2383
      %v2714 = vpop.f32.mrf.mxu0
      %v2715 = vadd.f32 0.0, %v2714
      %2716 = vdwg.mxu0
      %2717 = vmatpush.msra.mxu0 0.0
      %2718 = vmatpush.msra.mxu0 0.0
      %2719 = vmatpush.msra.mxu0 0.0
      %2720 = vmatpush.msra.mxu0 0.0
      %2721 = vmatpush.msra.mxu0 0.0
      %2722 = vmatpush.msra.mxu0 0.0
      %2723 = vmatpush.msra.mxu0 0.0
      %2724 = vmatpush.msra.mxu0 0.0
      %2725 = vmatpush.msra.mxu0 0.0
      %2726 = vmatpush.msra.mxu0 0.0
      %2727 = vmatpush.msra.mxu0 0.0
      %2728 = vmatpush.msra.mxu0 0.0
      %2729 = vmatpush.msra.mxu0 0.0
      %2730 = vmatpush.msra.mxu0 0.0
      %2731 = vmatpush.msra.mxu0 0.0
      %2732 = vmatpush.msra.mxu0 %v2415
      %2733 = vmatmul.f32.gmra.mxu0 %v2383
      %v2734 = vpop.f32.mrf.mxu0
      %v2735 = vadd.f32 0.0, %v2734
      %2736 = vdwg.mxu0
      %v2737 = vadd.f32 %v2267, %v2435
      %v2738 = vadd.f32 %v2268, %v2455
      %v2739 = vadd.f32 %v2269, %v2475
      %v2740 = vadd.f32 %v2270, %v2495
      %v2741 = vadd.f32 %v2271, %v2515
      %v2742 = vadd.f32 %v2272, %v2535
      %v2743 = vadd.f32 %v2273, %v2555
      %v2744 = vadd.f32 %v2274, %v2575
      %v2745 = vadd.f32 %v2275, %v2595
      %v2746 = vadd.f32 %v2276, %v2615
      %v2747 = vadd.f32 %v2277, %v2635
      %v2748 = vadd.f32 %v2278, %v2655
      %v2749 = vadd.f32 %v2279, %v2675
      %v2750 = vadd.f32 %v2280, %v2695
      %v2751 = vadd.f32 %v2281, %v2715
      %v2752 = vadd.f32 %v2282, %v2735
      %s2753 = scalar_lea.vmem %s2, 40
      %v2754 = vld [vmem:[%s2753] sm:$0xff]
      %v2755 = vld [vmem:[#allocation2 + $0x4] sm:$0xff]
      %v2756 = vld [vmem:[#allocation2 + $0xc] sm:$0xff]
      %v2757 = vld [vmem:[#allocation2 + $0x14] sm:$0xff]
      %v2758 = vld [vmem:[#allocation2 + $0x1c] sm:$0xff]
      %v2759 = vld [vmem:[#allocation2 + $0x24] sm:$0xff]
      %v2760 = vld [vmem:[#allocation2 + $0x2c] sm:$0xff]
      %v2761 = vld [vmem:[#allocation2 + $0x34] sm:$0xff]
      %v2762 = vld [vmem:[#allocation2 + $0x3c] sm:$0xff]
      %v2763 = vld [vmem:[#allocation2 + $0x44] sm:$0xf]
      %2773 = vst [vmem:[#allocation1] ss:$2 sm:$0xff] %v2755
      %s2774 = scalar_lea.vmem [#allocation1], 16
      %2775 = vst [vmem:[%s2774] ss:$2 sm:$0xff] %v2756
      %s2776 = scalar_lea.vmem [#allocation1], 32
      %2777 = vst [vmem:[%s2776] ss:$2 sm:$0xff] %v2757
      %s2778 = scalar_lea.vmem [#allocation1], 48
      %2779 = vst [vmem:[%s2778] ss:$2 sm:$0xff] %v2758
      %v2780 = vld.sshfl [vmem:[#allocation1] sm:$0xff pattern:$0x75316420]
      %v2781 = vld.sshfl [vmem:[#allocation1 + $0x8] sm:$0xff pattern:$0x75316420]
      %v2782 = vld.sshfl [vmem:[#allocation1 + $0x10] sm:$0xff pattern:$0x75316420]
      %v2783 = vld.sshfl [vmem:[#allocation1 + $0x18] sm:$0xff pattern:$0x75316420]
      %v2784 = vld.sshfl [vmem:[#allocation1 + $0x20] sm:$0xff pattern:$0x75316420]
      %v2785 = vld.sshfl [vmem:[#allocation1 + $0x28] sm:$0xff pattern:$0x75316420]
      %v2786 = vld.sshfl [vmem:[#allocation1 + $0x30] sm:$0xff pattern:$0x75316420]
      %v2787 = vld.sshfl [vmem:[#allocation1 + $0x38] sm:$0xff pattern:$0x75316420]
      %2788 = vst [vmem:[#allocation1] ss:$2 sm:$0xff] %v2759
      %2789 = vst [vmem:[%s2774] ss:$2 sm:$0xff] %v2760
      %2790 = vst [vmem:[%s2776] ss:$2 sm:$0xff] %v2761
      %2791 = vst [vmem:[%s2778] ss:$2 sm:$0xff] %v2762
      %v2792 = vld.sshfl [vmem:[#allocation1] sm:$0xff pattern:$0x75316420]
      %v2793 = vld.sshfl [vmem:[#allocation1 + $0x8] sm:$0xff pattern:$0x75316420]
      %v2794 = vld.sshfl [vmem:[#allocation1 + $0x10] sm:$0xff pattern:$0x75316420]
      %v2795 = vld.sshfl [vmem:[#allocation1 + $0x18] sm:$0xff pattern:$0x75316420]
      %v2796 = vld.sshfl [vmem:[#allocation1 + $0x20] sm:$0xff pattern:$0x75316420]
      %v2797 = vld.sshfl [vmem:[#allocation1 + $0x28] sm:$0xff pattern:$0x75316420]
      %v2798 = vld.sshfl [vmem:[#allocation1 + $0x30] sm:$0xff pattern:$0x75316420]
      %v2799 = vld.sshfl [vmem:[#allocation1 + $0x38] sm:$0xff pattern:$0x75316420]
      %2800 = vst [vmem:[#allocation1] ss:$2 sm:$0xff] %v2763
      %v2801 = vld.sshfl [vmem:[#allocation1] sm:$0xff pattern:$0x75316420]
      %2802 = vrot.lane.b32.xlu0 %v2780, 126
      %v2803 = vpop.permute.xlu0 %2802
      %2804 = vrot.lane.b32.xlu0 %v2781, 126
      %v2805 = vpop.permute.xlu0 %2804
      %2806 = vrot.lane.b32.xlu0 %v2782, 126
      %v2807 = vpop.permute.xlu0 %2806
      %2808 = vrot.lane.b32.xlu0 %v2783, 126
      %v2809 = vpop.permute.xlu0 %2808
      %2810 = vrot.lane.b32.xlu0 %v2784, 126
      %v2811 = vpop.permute.xlu0 %2810
      %2812 = vrot.lane.b32.xlu0 %v2785, 126
      %v2813 = vpop.permute.xlu0 %2812
      %2814 = vrot.lane.b32.xlu0 %v2786, 126
      %v2815 = vpop.permute.xlu0 %2814
      %2816 = vrot.lane.b32.xlu0 %v2787, 126
      %v2817 = vpop.permute.xlu0 %2816
      %2818 = vrot.lane.b32.xlu0 %v2792, 126
      %v2819 = vpop.permute.xlu0 %2818
      %2820 = vrot.lane.b32.xlu0 %v2793, 126
      %v2821 = vpop.permute.xlu0 %2820
      %2822 = vrot.lane.b32.xlu0 %v2794, 126
      %v2823 = vpop.permute.xlu0 %2822
      %2824 = vrot.lane.b32.xlu0 %v2795, 126
      %v2825 = vpop.permute.xlu0 %2824
      %2826 = vrot.lane.b32.xlu0 %v2796, 126
      %v2827 = vpop.permute.xlu0 %2826
      %2828 = vrot.lane.b32.xlu0 %v2797, 126
      %v2829 = vpop.permute.xlu0 %2828
      %2830 = vrot.lane.b32.xlu0 %v2798, 126
      %v2831 = vpop.permute.xlu0 %2830
      %2832 = vrot.lane.b32.xlu0 %v2799, 126
      %v2833 = vpop.permute.xlu0 %2832
      %2834 = vrot.lane.b32.xlu0 %v2801, 126
      %v2835 = vpop.permute.xlu0 %2834
      %v2836 = vsel %vm1479, %v2803, %v2805
      %v2837 = vsel %vm1479, %v2805, %v2807
      %v2838 = vsel %vm1479, %v2807, %v2809
      %v2839 = vsel %vm1479, %v2809, %v2811
      %v2840 = vsel %vm1479, %v2811, %v2813
      %v2841 = vsel %vm1479, %v2813, %v2815
      %v2842 = vsel %vm1479, %v2815, %v2817
      %v2843 = vsel %vm1479, %v2817, %v2819
      %v2844 = vsel %vm1479, %v2819, %v2821
      %v2845 = vsel %vm1479, %v2821, %v2823
      %v2846 = vsel %vm1479, %v2823, %v2825
      %v2847 = vsel %vm1479, %v2825, %v2827
      %v2848 = vsel %vm1479, %v2827, %v2829
      %v2849 = vsel %vm1479, %v2829, %v2831
      %v2850 = vsel %vm1479, %v2831, %v2833
      %v2851 = vsel %vm1479, %v2833, %v2835
      %v2853 = vsel %vm657, %v2754, 0
      %v2855 = vsel %vm661, %v2836, 0
      %v2857 = vsel %vm661, %v2837, 0
      %v2859 = vsel %vm661, %v2838, 0
      %v2861 = vsel %vm661, %v2839, 0
      %v2863 = vsel %vm661, %v2840, 0
      %v2865 = vsel %vm661, %v2841, 0
      %v2867 = vsel %vm661, %v2842, 0
      %v2869 = vsel %vm661, %v2843, 0
      %v2871 = vsel %vm661, %v2844, 0
      %v2873 = vsel %vm661, %v2845, 0
      %v2875 = vsel %vm661, %v2846, 0
      %v2877 = vsel %vm661, %v2847, 0
      %v2879 = vsel %vm661, %v2848, 0
      %v2881 = vsel %vm661, %v2849, 0
      %v2883 = vsel %vm661, %v2850, 0
      %v2885 = vsel %vm661, %v2851, 0
      %2887 = vmatpush.msra.mxu0 0.0
      %2888 = vmatpush.msra.mxu0 0.0
      %2889 = vmatpush.msra.mxu0 0.0
      %2890 = vmatpush.msra.mxu0 0.0
      %2891 = vmatpush.msra.mxu0 0.0
      %2892 = vmatpush.msra.mxu0 0.0
      %2893 = vmatpush.msra.mxu0 0.0
      %2894 = vmatpush.msra.mxu0 0.0
      %2895 = vmatpush.msra.mxu0 0.0
      %2896 = vmatpush.msra.mxu0 0.0
      %2897 = vmatpush.msra.mxu0 0.0
      %2898 = vmatpush.msra.mxu0 0.0
      %2899 = vmatpush.msra.mxu0 0.0
      %2900 = vmatpush.msra.mxu0 0.0
      %2901 = vmatpush.msra.mxu0 0.0
      %2902 = vmatpush.msra.mxu0 %v2855
      %2903 = vmatmul.f32.gmra.mxu0 %v2853
      %v2904 = vpop.f32.mrf.mxu0
      %v2905 = vadd.f32 0.0, %v2904
      %2906 = vdwg.mxu0
      %2907 = vmatpush.msra.mxu0 0.0
      %2908 = vmatpush.msra.mxu0 0.0
      %2909 = vmatpush.msra.mxu0 0.0
      %2910 = vmatpush.msra.mxu0 0.0
      %2911 = vmatpush.msra.mxu0 0.0
      %2912 = vmatpush.msra.mxu0 0.0
      %2913 = vmatpush.msra.mxu0 0.0
      %2914 = vmatpush.msra.mxu0 0.0
      %2915 = vmatpush.msra.mxu0 0.0
      %2916 = vmatpush.msra.mxu0 0.0
      %2917 = vmatpush.msra.mxu0 0.0
      %2918 = vmatpush.msra.mxu0 0.0
      %2919 = vmatpush.msra.mxu0 0.0
      %2920 = vmatpush.msra.mxu0 0.0
      %2921 = vmatpush.msra.mxu0 0.0
      %2922 = vmatpush.msra.mxu0 %v2857
      %2923 = vmatmul.f32.gmra.mxu0 %v2853
      %v2924 = vpop.f32.mrf.mxu0
      %v2925 = vadd.f32 0.0, %v2924
      %2926 = vdwg.mxu0
      %2927 = vmatpush.msra.mxu0 0.0
      %2928 = vmatpush.msra.mxu0 0.0
      %2929 = vmatpush.msra.mxu0 0.0
      %2930 = vmatpush.msra.mxu0 0.0
      %2931 = vmatpush.msra.mxu0 0.0
      %2932 = vmatpush.msra.mxu0 0.0
      %2933 = vmatpush.msra.mxu0 0.0
      %2934 = vmatpush.msra.mxu0 0.0
      %2935 = vmatpush.msra.mxu0 0.0
      %2936 = vmatpush.msra.mxu0 0.0
      %2937 = vmatpush.msra.mxu0 0.0
      %2938 = vmatpush.msra.mxu0 0.0
      %2939 = vmatpush.msra.mxu0 0.0
      %2940 = vmatpush.msra.mxu0 0.0
      %2941 = vmatpush.msra.mxu0 0.0
      %2942 = vmatpush.msra.mxu0 %v2859
      %2943 = vmatmul.f32.gmra.mxu0 %v2853
      %v2944 = vpop.f32.mrf.mxu0
      %v2945 = vadd.f32 0.0, %v2944
      %2946 = vdwg.mxu0
      %2947 = vmatpush.msra.mxu0 0.0
      %2948 = vmatpush.msra.mxu0 0.0
      %2949 = vmatpush.msra.mxu0 0.0
      %2950 = vmatpush.msra.mxu0 0.0
      %2951 = vmatpush.msra.mxu0 0.0
      %2952 = vmatpush.msra.mxu0 0.0
      %2953 = vmatpush.msra.mxu0 0.0
      %2954 = vmatpush.msra.mxu0 0.0
      %2955 = vmatpush.msra.mxu0 0.0
      %2956 = vmatpush.msra.mxu0 0.0
      %2957 = vmatpush.msra.mxu0 0.0
      %2958 = vmatpush.msra.mxu0 0.0
      %2959 = vmatpush.msra.mxu0 0.0
      %2960 = vmatpush.msra.mxu0 0.0
      %2961 = vmatpush.msra.mxu0 0.0
      %2962 = vmatpush.msra.mxu0 %v2861
      %2963 = vmatmul.f32.gmra.mxu0 %v2853
      %v2964 = vpop.f32.mrf.mxu0
      %v2965 = vadd.f32 0.0, %v2964
      %2966 = vdwg.mxu0
      %2967 = vmatpush.msra.mxu0 0.0
      %2968 = vmatpush.msra.mxu0 0.0
      %2969 = vmatpush.msra.mxu0 0.0
      %2970 = vmatpush.msra.mxu0 0.0
      %2971 = vmatpush.msra.mxu0 0.0
      %2972 = vmatpush.msra.mxu0 0.0
      %2973 = vmatpush.msra.mxu0 0.0
      %2974 = vmatpush.msra.mxu0 0.0
      %2975 = vmatpush.msra.mxu0 0.0
      %2976 = vmatpush.msra.mxu0 0.0
      %2977 = vmatpush.msra.mxu0 0.0
      %2978 = vmatpush.msra.mxu0 0.0
      %2979 = vmatpush.msra.mxu0 0.0
      %2980 = vmatpush.msra.mxu0 0.0
      %2981 = vmatpush.msra.mxu0 0.0
      %2982 = vmatpush.msra.mxu0 %v2863
      %2983 = vmatmul.f32.gmra.mxu0 %v2853
      %v2984 = vpop.f32.mrf.mxu0
      %v2985 = vadd.f32 0.0, %v2984
      %2986 = vdwg.mxu0
      %2987 = vmatpush.msra.mxu0 0.0
      %2988 = vmatpush.msra.mxu0 0.0
      %2989 = vmatpush.msra.mxu0 0.0
      %2990 = vmatpush.msra.mxu0 0.0
      %2991 = vmatpush.msra.mxu0 0.0
      %2992 = vmatpush.msra.mxu0 0.0
      %2993 = vmatpush.msra.mxu0 0.0
      %2994 = vmatpush.msra.mxu0 0.0
      %2995 = vmatpush.msra.mxu0 0.0
      %2996 = vmatpush.msra.mxu0 0.0
      %2997 = vmatpush.msra.mxu0 0.0
      %2998 = vmatpush.msra.mxu0 0.0
      %2999 = vmatpush.msra.mxu0 0.0
      %3000 = vmatpush.msra.mxu0 0.0
      %3001 = vmatpush.msra.mxu0 0.0
      %3002 = vmatpush.msra.mxu0 %v2865
      %3003 = vmatmul.f32.gmra.mxu0 %v2853
      %v3004 = vpop.f32.mrf.mxu0
      %v3005 = vadd.f32 0.0, %v3004
      %3006 = vdwg.mxu0
      %3007 = vmatpush.msra.mxu0 0.0
      %3008 = vmatpush.msra.mxu0 0.0
      %3009 = vmatpush.msra.mxu0 0.0
      %3010 = vmatpush.msra.mxu0 0.0
      %3011 = vmatpush.msra.mxu0 0.0
      %3012 = vmatpush.msra.mxu0 0.0
      %3013 = vmatpush.msra.mxu0 0.0
      %3014 = vmatpush.msra.mxu0 0.0
      %3015 = vmatpush.msra.mxu0 0.0
      %3016 = vmatpush.msra.mxu0 0.0
      %3017 = vmatpush.msra.mxu0 0.0
      %3018 = vmatpush.msra.mxu0 0.0
      %3019 = vmatpush.msra.mxu0 0.0
      %3020 = vmatpush.msra.mxu0 0.0
      %3021 = vmatpush.msra.mxu0 0.0
      %3022 = vmatpush.msra.mxu0 %v2867
      %3023 = vmatmul.f32.gmra.mxu0 %v2853
      %v3024 = vpop.f32.mrf.mxu0
      %v3025 = vadd.f32 0.0, %v3024
      %3026 = vdwg.mxu0
      %3027 = vmatpush.msra.mxu0 0.0
      %3028 = vmatpush.msra.mxu0 0.0
      %3029 = vmatpush.msra.mxu0 0.0
      %3030 = vmatpush.msra.mxu0 0.0
      %3031 = vmatpush.msra.mxu0 0.0
      %3032 = vmatpush.msra.mxu0 0.0
      %3033 = vmatpush.msra.mxu0 0.0
      %3034 = vmatpush.msra.mxu0 0.0
      %3035 = vmatpush.msra.mxu0 0.0
      %3036 = vmatpush.msra.mxu0 0.0
      %3037 = vmatpush.msra.mxu0 0.0
      %3038 = vmatpush.msra.mxu0 0.0
      %3039 = vmatpush.msra.mxu0 0.0
      %3040 = vmatpush.msra.mxu0 0.0
      %3041 = vmatpush.msra.mxu0 0.0
      %3042 = vmatpush.msra.mxu0 %v2869
      %3043 = vmatmul.f32.gmra.mxu0 %v2853
      %v3044 = vpop.f32.mrf.mxu0
      %v3045 = vadd.f32 0.0, %v3044
      %3046 = vdwg.mxu0
      %3047 = vmatpush.msra.mxu0 0.0
      %3048 = vmatpush.msra.mxu0 0.0
      %3049 = vmatpush.msra.mxu0 0.0
      %3050 = vmatpush.msra.mxu0 0.0
      %3051 = vmatpush.msra.mxu0 0.0
      %3052 = vmatpush.msra.mxu0 0.0
      %3053 = vmatpush.msra.mxu0 0.0
      %3054 = vmatpush.msra.mxu0 0.0
      %3055 = vmatpush.msra.mxu0 0.0
      %3056 = vmatpush.msra.mxu0 0.0
      %3057 = vmatpush.msra.mxu0 0.0
      %3058 = vmatpush.msra.mxu0 0.0
      %3059 = vmatpush.msra.mxu0 0.0
      %3060 = vmatpush.msra.mxu0 0.0
      %3061 = vmatpush.msra.mxu0 0.0
      %3062 = vmatpush.msra.mxu0 %v2871
      %3063 = vmatmul.f32.gmra.mxu0 %v2853
      %v3064 = vpop.f32.mrf.mxu0
      %v3065 = vadd.f32 0.0, %v3064
      %3066 = vdwg.mxu0
      %3067 = vmatpush.msra.mxu0 0.0
      %3068 = vmatpush.msra.mxu0 0.0
      %3069 = vmatpush.msra.mxu0 0.0
      %3070 = vmatpush.msra.mxu0 0.0
      %3071 = vmatpush.msra.mxu0 0.0
      %3072 = vmatpush.msra.mxu0 0.0
      %3073 = vmatpush.msra.mxu0 0.0
      %3074 = vmatpush.msra.mxu0 0.0
      %3075 = vmatpush.msra.mxu0 0.0
      %3076 = vmatpush.msra.mxu0 0.0
      %3077 = vmatpush.msra.mxu0 0.0
      %3078 = vmatpush.msra.mxu0 0.0
      %3079 = vmatpush.msra.mxu0 0.0
      %3080 = vmatpush.msra.mxu0 0.0
      %3081 = vmatpush.msra.mxu0 0.0
      %3082 = vmatpush.msra.mxu0 %v2873
      %3083 = vmatmul.f32.gmra.mxu0 %v2853
      %v3084 = vpop.f32.mrf.mxu0
      %v3085 = vadd.f32 0.0, %v3084
      %3086 = vdwg.mxu0
      %3087 = vmatpush.msra.mxu0 0.0
      %3088 = vmatpush.msra.mxu0 0.0
      %3089 = vmatpush.msra.mxu0 0.0
      %3090 = vmatpush.msra.mxu0 0.0
      %3091 = vmatpush.msra.mxu0 0.0
      %3092 = vmatpush.msra.mxu0 0.0
      %3093 = vmatpush.msra.mxu0 0.0
      %3094 = vmatpush.msra.mxu0 0.0
      %3095 = vmatpush.msra.mxu0 0.0
      %3096 = vmatpush.msra.mxu0 0.0
      %3097 = vmatpush.msra.mxu0 0.0
      %3098 = vmatpush.msra.mxu0 0.0
      %3099 = vmatpush.msra.mxu0 0.0
      %3100 = vmatpush.msra.mxu0 0.0
      %3101 = vmatpush.msra.mxu0 0.0
      %3102 = vmatpush.msra.mxu0 %v2875
      %3103 = vmatmul.f32.gmra.mxu0 %v2853
      %v3104 = vpop.f32.mrf.mxu0
      %v3105 = vadd.f32 0.0, %v3104
      %3106 = vdwg.mxu0
      %3107 = vmatpush.msra.mxu0 0.0
      %3108 = vmatpush.msra.mxu0 0.0
      %3109 = vmatpush.msra.mxu0 0.0
      %3110 = vmatpush.msra.mxu0 0.0
      %3111 = vmatpush.msra.mxu0 0.0
      %3112 = vmatpush.msra.mxu0 0.0
      %3113 = vmatpush.msra.mxu0 0.0
      %3114 = vmatpush.msra.mxu0 0.0
      %3115 = vmatpush.msra.mxu0 0.0
      %3116 = vmatpush.msra.mxu0 0.0
      %3117 = vmatpush.msra.mxu0 0.0
      %3118 = vmatpush.msra.mxu0 0.0
      %3119 = vmatpush.msra.mxu0 0.0
      %3120 = vmatpush.msra.mxu0 0.0
      %3121 = vmatpush.msra.mxu0 0.0
      %3122 = vmatpush.msra.mxu0 %v2877
      %3123 = vmatmul.f32.gmra.mxu0 %v2853
      %v3124 = vpop.f32.mrf.mxu0
      %v3125 = vadd.f32 0.0, %v3124
      %3126 = vdwg.mxu0
      %3127 = vmatpush.msra.mxu0 0.0
      %3128 = vmatpush.msra.mxu0 0.0
      %3129 = vmatpush.msra.mxu0 0.0
      %3130 = vmatpush.msra.mxu0 0.0
      %3131 = vmatpush.msra.mxu0 0.0
      %3132 = vmatpush.msra.mxu0 0.0
      %3133 = vmatpush.msra.mxu0 0.0
      %3134 = vmatpush.msra.mxu0 0.0
      %3135 = vmatpush.msra.mxu0 0.0
      %3136 = vmatpush.msra.mxu0 0.0
      %3137 = vmatpush.msra.mxu0 0.0
      %3138 = vmatpush.msra.mxu0 0.0
      %3139 = vmatpush.msra.mxu0 0.0
      %3140 = vmatpush.msra.mxu0 0.0
      %3141 = vmatpush.msra.mxu0 0.0
      %3142 = vmatpush.msra.mxu0 %v2879
      %3143 = vmatmul.f32.gmra.mxu0 %v2853
      %v3144 = vpop.f32.mrf.mxu0
      %v3145 = vadd.f32 0.0, %v3144
      %3146 = vdwg.mxu0
      %3147 = vmatpush.msra.mxu0 0.0
      %3148 = vmatpush.msra.mxu0 0.0
      %3149 = vmatpush.msra.mxu0 0.0
      %3150 = vmatpush.msra.mxu0 0.0
      %3151 = vmatpush.msra.mxu0 0.0
      %3152 = vmatpush.msra.mxu0 0.0
      %3153 = vmatpush.msra.mxu0 0.0
      %3154 = vmatpush.msra.mxu0 0.0
      %3155 = vmatpush.msra.mxu0 0.0
      %3156 = vmatpush.msra.mxu0 0.0
      %3157 = vmatpush.msra.mxu0 0.0
      %3158 = vmatpush.msra.mxu0 0.0
      %3159 = vmatpush.msra.mxu0 0.0
      %3160 = vmatpush.msra.mxu0 0.0
      %3161 = vmatpush.msra.mxu0 0.0
      %3162 = vmatpush.msra.mxu0 %v2881
      %3163 = vmatmul.f32.gmra.mxu0 %v2853
      %v3164 = vpop.f32.mrf.mxu0
      %v3165 = vadd.f32 0.0, %v3164
      %3166 = vdwg.mxu0
      %3167 = vmatpush.msra.mxu0 0.0
      %3168 = vmatpush.msra.mxu0 0.0
      %3169 = vmatpush.msra.mxu0 0.0
      %3170 = vmatpush.msra.mxu0 0.0
      %3171 = vmatpush.msra.mxu0 0.0
      %3172 = vmatpush.msra.mxu0 0.0
      %3173 = vmatpush.msra.mxu0 0.0
      %3174 = vmatpush.msra.mxu0 0.0
      %3175 = vmatpush.msra.mxu0 0.0
      %3176 = vmatpush.msra.mxu0 0.0
      %3177 = vmatpush.msra.mxu0 0.0
      %3178 = vmatpush.msra.mxu0 0.0
      %3179 = vmatpush.msra.mxu0 0.0
      %3180 = vmatpush.msra.mxu0 0.0
      %3181 = vmatpush.msra.mxu0 0.0
      %3182 = vmatpush.msra.mxu0 %v2883
      %3183 = vmatmul.f32.gmra.mxu0 %v2853
      %v3184 = vpop.f32.mrf.mxu0
      %v3185 = vadd.f32 0.0, %v3184
      %3186 = vdwg.mxu0
      %3187 = vmatpush.msra.mxu0 0.0
      %3188 = vmatpush.msra.mxu0 0.0
      %3189 = vmatpush.msra.mxu0 0.0
      %3190 = vmatpush.msra.mxu0 0.0
      %3191 = vmatpush.msra.mxu0 0.0
      %3192 = vmatpush.msra.mxu0 0.0
      %3193 = vmatpush.msra.mxu0 0.0
      %3194 = vmatpush.msra.mxu0 0.0
      %3195 = vmatpush.msra.mxu0 0.0
      %3196 = vmatpush.msra.mxu0 0.0
      %3197 = vmatpush.msra.mxu0 0.0
      %3198 = vmatpush.msra.mxu0 0.0
      %3199 = vmatpush.msra.mxu0 0.0
      %3200 = vmatpush.msra.mxu0 0.0
      %3201 = vmatpush.msra.mxu0 0.0
      %3202 = vmatpush.msra.mxu0 %v2885
      %3203 = vmatmul.f32.gmra.mxu0 %v2853
      %v3204 = vpop.f32.mrf.mxu0
      %v3205 = vadd.f32 0.0, %v3204
      %3206 = vdwg.mxu0
      %v3207 = vadd.f32 %v2737, %v2905
      %v3208 = vadd.f32 %v2738, %v2925
      %v3209 = vadd.f32 %v2739, %v2945
      %v3210 = vadd.f32 %v2740, %v2965
      %v3211 = vadd.f32 %v2741, %v2985
      %v3212 = vadd.f32 %v2742, %v3005
      %v3213 = vadd.f32 %v2743, %v3025
      %v3214 = vadd.f32 %v2744, %v3045
      %v3215 = vadd.f32 %v2745, %v3065
      %v3216 = vadd.f32 %v2746, %v3085
      %v3217 = vadd.f32 %v2747, %v3105
      %v3218 = vadd.f32 %v2748, %v3125
      %v3219 = vadd.f32 %v2749, %v3145
      %v3220 = vadd.f32 %v2750, %v3165
      %v3221 = vadd.f32 %v2751, %v3185
      %v3222 = vadd.f32 %v2752, %v3205
      %s3223 = scalar_lea.vmem %s2, 48
      %v3224 = vld [vmem:[%s3223] sm:$0xff]
      %v3225 = vld [vmem:[#allocation2 + $0x8] sm:$0xff]
      %v3226 = vld [vmem:[#allocation2 + $0x10] sm:$0xff]
      %v3227 = vld [vmem:[#allocation2 + $0x18] sm:$0xff]
      %v3228 = vld [vmem:[#allocation2 + $0x20] sm:$0xff]
      %v3229 = vld [vmem:[#allocation2 + $0x28] sm:$0xff]
      %v3230 = vld [vmem:[#allocation2 + $0x30] sm:$0xff]
      %v3231 = vld [vmem:[#allocation2 + $0x38] sm:$0xff]
      %v3232 = vld [vmem:[#allocation2 + $0x40] sm:$0xff]
      %3241 = vst [vmem:[#allocation1] ss:$2 sm:$0xff] %v3225
      %s3242 = scalar_lea.vmem [#allocation1], 16
      %3243 = vst [vmem:[%s3242] ss:$2 sm:$0xff] %v3226
      %s3244 = scalar_lea.vmem [#allocation1], 32
      %3245 = vst [vmem:[%s3244] ss:$2 sm:$0xff] %v3227
      %s3246 = scalar_lea.vmem [#allocation1], 48
      %3247 = vst [vmem:[%s3246] ss:$2 sm:$0xff] %v3228
      %v3248 = vld.sshfl [vmem:[#allocation1] sm:$0xff pattern:$0x75316420]
      %v3249 = vld.sshfl [vmem:[#allocation1 + $0x8] sm:$0xff pattern:$0x75316420]
      %v3250 = vld.sshfl [vmem:[#allocation1 + $0x10] sm:$0xff pattern:$0x75316420]
      %v3251 = vld.sshfl [vmem:[#allocation1 + $0x18] sm:$0xff pattern:$0x75316420]
      %v3252 = vld.sshfl [vmem:[#allocation1 + $0x20] sm:$0xff pattern:$0x75316420]
      %v3253 = vld.sshfl [vmem:[#allocation1 + $0x28] sm:$0xff pattern:$0x75316420]
      %v3254 = vld.sshfl [vmem:[#allocation1 + $0x30] sm:$0xff pattern:$0x75316420]
      %v3255 = vld.sshfl [vmem:[#allocation1 + $0x38] sm:$0xff pattern:$0x75316420]
      %3256 = vst [vmem:[#allocation1] ss:$2 sm:$0xff] %v3229
      %3257 = vst [vmem:[%s3242] ss:$2 sm:$0xff] %v3230
      %3258 = vst [vmem:[%s3244] ss:$2 sm:$0xff] %v3231
      %3259 = vst [vmem:[%s3246] ss:$2 sm:$0xff] %v3232
      %v3260 = vld.sshfl [vmem:[#allocation1] sm:$0xff pattern:$0x75316420]
      %v3261 = vld.sshfl [vmem:[#allocation1 + $0x8] sm:$0xff pattern:$0x75316420]
      %v3262 = vld.sshfl [vmem:[#allocation1 + $0x10] sm:$0xff pattern:$0x75316420]
      %v3263 = vld.sshfl [vmem:[#allocation1 + $0x18] sm:$0xff pattern:$0x75316420]
      %v3264 = vld.sshfl [vmem:[#allocation1 + $0x20] sm:$0xff pattern:$0x75316420]
      %v3265 = vld.sshfl [vmem:[#allocation1 + $0x28] sm:$0xff pattern:$0x75316420]
      %v3266 = vld.sshfl [vmem:[#allocation1 + $0x30] sm:$0xff pattern:$0x75316420]
      %v3267 = vld.sshfl [vmem:[#allocation1 + $0x38] sm:$0xff pattern:$0x75316420]
      %v3269 = vsel %vm657, %v3224, 0
      %v3271 = vsel %vm661, %v3248, 0
      %v3273 = vsel %vm661, %v3249, 0
      %v3275 = vsel %vm661, %v3250, 0
      %v3277 = vsel %vm661, %v3251, 0
      %v3279 = vsel %vm661, %v3252, 0
      %v3281 = vsel %vm661, %v3253, 0
      %v3283 = vsel %vm661, %v3254, 0
      %v3285 = vsel %vm661, %v3255, 0
      %v3287 = vsel %vm661, %v3260, 0
      %v3289 = vsel %vm661, %v3261, 0
      %v3291 = vsel %vm661, %v3262, 0
      %v3293 = vsel %vm661, %v3263, 0
      %v3295 = vsel %vm661, %v3264, 0
      %v3297 = vsel %vm661, %v3265, 0
      %v3299 = vsel %vm661, %v3266, 0
      %v3301 = vsel %vm661, %v3267, 0
      %3303 = vmatpush.msra.mxu0 0.0
      %3304 = vmatpush.msra.mxu0 0.0
      %3305 = vmatpush.msra.mxu0 0.0
      %3306 = vmatpush.msra.mxu0 0.0
      %3307 = vmatpush.msra.mxu0 0.0
      %3308 = vmatpush.msra.mxu0 0.0
      %3309 = vmatpush.msra.mxu0 0.0
      %3310 = vmatpush.msra.mxu0 0.0
      %3311 = vmatpush.msra.mxu0 0.0
      %3312 = vmatpush.msra.mxu0 0.0
      %3313 = vmatpush.msra.mxu0 0.0
      %3314 = vmatpush.msra.mxu0 0.0
      %3315 = vmatpush.msra.mxu0 0.0
      %3316 = vmatpush.msra.mxu0 0.0
      %3317 = vmatpush.msra.mxu0 0.0
      %3318 = vmatpush.msra.mxu0 %v3271
      %3319 = vmatmul.f32.gmra.mxu0 %v3269
      %v3320 = vpop.f32.mrf.mxu0
      %v3321 = vadd.f32 0.0, %v3320
      %3322 = vdwg.mxu0
      %3323 = vmatpush.msra.mxu0 0.0
      %3324 = vmatpush.msra.mxu0 0.0
      %3325 = vmatpush.msra.mxu0 0.0
      %3326 = vmatpush.msra.mxu0 0.0
      %3327 = vmatpush.msra.mxu0 0.0
      %3328 = vmatpush.msra.mxu0 0.0
      %3329 = vmatpush.msra.mxu0 0.0
      %3330 = vmatpush.msra.mxu0 0.0
      %3331 = vmatpush.msra.mxu0 0.0
      %3332 = vmatpush.msra.mxu0 0.0
      %3333 = vmatpush.msra.mxu0 0.0
      %3334 = vmatpush.msra.mxu0 0.0
      %3335 = vmatpush.msra.mxu0 0.0
      %3336 = vmatpush.msra.mxu0 0.0
      %3337 = vmatpush.msra.mxu0 0.0
      %3338 = vmatpush.msra.mxu0 %v3273
      %3339 = vmatmul.f32.gmra.mxu0 %v3269
      %v3340 = vpop.f32.mrf.mxu0
      %v3341 = vadd.f32 0.0, %v3340
      %3342 = vdwg.mxu0
      %3343 = vmatpush.msra.mxu0 0.0
      %3344 = vmatpush.msra.mxu0 0.0
      %3345 = vmatpush.msra.mxu0 0.0
      %3346 = vmatpush.msra.mxu0 0.0
      %3347 = vmatpush.msra.mxu0 0.0
      %3348 = vmatpush.msra.mxu0 0.0
      %3349 = vmatpush.msra.mxu0 0.0
      %3350 = vmatpush.msra.mxu0 0.0
      %3351 = vmatpush.msra.mxu0 0.0
      %3352 = vmatpush.msra.mxu0 0.0
      %3353 = vmatpush.msra.mxu0 0.0
      %3354 = vmatpush.msra.mxu0 0.0
      %3355 = vmatpush.msra.mxu0 0.0
      %3356 = vmatpush.msra.mxu0 0.0
      %3357 = vmatpush.msra.mxu0 0.0
      %3358 = vmatpush.msra.mxu0 %v3275
      %3359 = vmatmul.f32.gmra.mxu0 %v3269
      %v3360 = vpop.f32.mrf.mxu0
      %v3361 = vadd.f32 0.0, %v3360
      %3362 = vdwg.mxu0
      %3363 = vmatpush.msra.mxu0 0.0
      %3364 = vmatpush.msra.mxu0 0.0
      %3365 = vmatpush.msra.mxu0 0.0
      %3366 = vmatpush.msra.mxu0 0.0
      %3367 = vmatpush.msra.mxu0 0.0
      %3368 = vmatpush.msra.mxu0 0.0
      %3369 = vmatpush.msra.mxu0 0.0
      %3370 = vmatpush.msra.mxu0 0.0
      %3371 = vmatpush.msra.mxu0 0.0
      %3372 = vmatpush.msra.mxu0 0.0
      %3373 = vmatpush.msra.mxu0 0.0
      %3374 = vmatpush.msra.mxu0 0.0
      %3375 = vmatpush.msra.mxu0 0.0
      %3376 = vmatpush.msra.mxu0 0.0
      %3377 = vmatpush.msra.mxu0 0.0
      %3378 = vmatpush.msra.mxu0 %v3277
      %3379 = vmatmul.f32.gmra.mxu0 %v3269
      %v3380 = vpop.f32.mrf.mxu0
      %v3381 = vadd.f32 0.0, %v3380
      %3382 = vdwg.mxu0
      %3383 = vmatpush.msra.mxu0 0.0
      %3384 = vmatpush.msra.mxu0 0.0
      %3385 = vmatpush.msra.mxu0 0.0
      %3386 = vmatpush.msra.mxu0 0.0
      %3387 = vmatpush.msra.mxu0 0.0
      %3388 = vmatpush.msra.mxu0 0.0
      %3389 = vmatpush.msra.mxu0 0.0
      %3390 = vmatpush.msra.mxu0 0.0
      %3391 = vmatpush.msra.mxu0 0.0
      %3392 = vmatpush.msra.mxu0 0.0
      %3393 = vmatpush.msra.mxu0 0.0
      %3394 = vmatpush.msra.mxu0 0.0
      %3395 = vmatpush.msra.mxu0 0.0
      %3396 = vmatpush.msra.mxu0 0.0
      %3397 = vmatpush.msra.mxu0 0.0
      %3398 = vmatpush.msra.mxu0 %v3279
      %3399 = vmatmul.f32.gmra.mxu0 %v3269
      %v3400 = vpop.f32.mrf.mxu0
      %v3401 = vadd.f32 0.0, %v3400
      %3402 = vdwg.mxu0
      %3403 = vmatpush.msra.mxu0 0.0
      %3404 = vmatpush.msra.mxu0 0.0
      %3405 = vmatpush.msra.mxu0 0.0
      %3406 = vmatpush.msra.mxu0 0.0
      %3407 = vmatpush.msra.mxu0 0.0
      %3408 = vmatpush.msra.mxu0 0.0
      %3409 = vmatpush.msra.mxu0 0.0
      %3410 = vmatpush.msra.mxu0 0.0
      %3411 = vmatpush.msra.mxu0 0.0
      %3412 = vmatpush.msra.mxu0 0.0
      %3413 = vmatpush.msra.mxu0 0.0
      %3414 = vmatpush.msra.mxu0 0.0
      %3415 = vmatpush.msra.mxu0 0.0
      %3416 = vmatpush.msra.mxu0 0.0
      %3417 = vmatpush.msra.mxu0 0.0
      %3418 = vmatpush.msra.mxu0 %v3281
      %3419 = vmatmul.f32.gmra.mxu0 %v3269
      %v3420 = vpop.f32.mrf.mxu0
      %v3421 = vadd.f32 0.0, %v3420
      %3422 = vdwg.mxu0
      %3423 = vmatpush.msra.mxu0 0.0
      %3424 = vmatpush.msra.mxu0 0.0
      %3425 = vmatpush.msra.mxu0 0.0
      %3426 = vmatpush.msra.mxu0 0.0
      %3427 = vmatpush.msra.mxu0 0.0
      %3428 = vmatpush.msra.mxu0 0.0
      %3429 = vmatpush.msra.mxu0 0.0
      %3430 = vmatpush.msra.mxu0 0.0
      %3431 = vmatpush.msra.mxu0 0.0
      %3432 = vmatpush.msra.mxu0 0.0
      %3433 = vmatpush.msra.mxu0 0.0
      %3434 = vmatpush.msra.mxu0 0.0
      %3435 = vmatpush.msra.mxu0 0.0
      %3436 = vmatpush.msra.mxu0 0.0
      %3437 = vmatpush.msra.mxu0 0.0
      %3438 = vmatpush.msra.mxu0 %v3283
      %3439 = vmatmul.f32.gmra.mxu0 %v3269
      %v3440 = vpop.f32.mrf.mxu0
      %v3441 = vadd.f32 0.0, %v3440
      %3442 = vdwg.mxu0
      %3443 = vmatpush.msra.mxu0 0.0
      %3444 = vmatpush.msra.mxu0 0.0
      %3445 = vmatpush.msra.mxu0 0.0
      %3446 = vmatpush.msra.mxu0 0.0
      %3447 = vmatpush.msra.mxu0 0.0
      %3448 = vmatpush.msra.mxu0 0.0
      %3449 = vmatpush.msra.mxu0 0.0
      %3450 = vmatpush.msra.mxu0 0.0
      %3451 = vmatpush.msra.mxu0 0.0
      %3452 = vmatpush.msra.mxu0 0.0
      %3453 = vmatpush.msra.mxu0 0.0
      %3454 = vmatpush.msra.mxu0 0.0
      %3455 = vmatpush.msra.mxu0 0.0
      %3456 = vmatpush.msra.mxu0 0.0
      %3457 = vmatpush.msra.mxu0 0.0
      %3458 = vmatpush.msra.mxu0 %v3285
      %3459 = vmatmul.f32.gmra.mxu0 %v3269
      %v3460 = vpop.f32.mrf.mxu0
      %v3461 = vadd.f32 0.0, %v3460
      %3462 = vdwg.mxu0
      %3463 = vmatpush.msra.mxu0 0.0
      %3464 = vmatpush.msra.mxu0 0.0
      %3465 = vmatpush.msra.mxu0 0.0
      %3466 = vmatpush.msra.mxu0 0.0
      %3467 = vmatpush.msra.mxu0 0.0
      %3468 = vmatpush.msra.mxu0 0.0
      %3469 = vmatpush.msra.mxu0 0.0
      %3470 = vmatpush.msra.mxu0 0.0
      %3471 = vmatpush.msra.mxu0 0.0
      %3472 = vmatpush.msra.mxu0 0.0
      %3473 = vmatpush.msra.mxu0 0.0
      %3474 = vmatpush.msra.mxu0 0.0
      %3475 = vmatpush.msra.mxu0 0.0
      %3476 = vmatpush.msra.mxu0 0.0
      %3477 = vmatpush.msra.mxu0 0.0
      %3478 = vmatpush.msra.mxu0 %v3287
      %3479 = vmatmul.f32.gmra.mxu0 %v3269
      %v3480 = vpop.f32.mrf.mxu0
      %v3481 = vadd.f32 0.0, %v3480
      %3482 = vdwg.mxu0
      %3483 = vmatpush.msra.mxu0 0.0
      %3484 = vmatpush.msra.mxu0 0.0
      %3485 = vmatpush.msra.mxu0 0.0
      %3486 = vmatpush.msra.mxu0 0.0
      %3487 = vmatpush.msra.mxu0 0.0
      %3488 = vmatpush.msra.mxu0 0.0
      %3489 = vmatpush.msra.mxu0 0.0
      %3490 = vmatpush.msra.mxu0 0.0
      %3491 = vmatpush.msra.mxu0 0.0
      %3492 = vmatpush.msra.mxu0 0.0
      %3493 = vmatpush.msra.mxu0 0.0
      %3494 = vmatpush.msra.mxu0 0.0
      %3495 = vmatpush.msra.mxu0 0.0
      %3496 = vmatpush.msra.mxu0 0.0
      %3497 = vmatpush.msra.mxu0 0.0
      %3498 = vmatpush.msra.mxu0 %v3289
      %3499 = vmatmul.f32.gmra.mxu0 %v3269
      %v3500 = vpop.f32.mrf.mxu0
      %v3501 = vadd.f32 0.0, %v3500
      %3502 = vdwg.mxu0
      %3503 = vmatpush.msra.mxu0 0.0
      %3504 = vmatpush.msra.mxu0 0.0
      %3505 = vmatpush.msra.mxu0 0.0
      %3506 = vmatpush.msra.mxu0 0.0
      %3507 = vmatpush.msra.mxu0 0.0
      %3508 = vmatpush.msra.mxu0 0.0
      %3509 = vmatpush.msra.mxu0 0.0
      %3510 = vmatpush.msra.mxu0 0.0
      %3511 = vmatpush.msra.mxu0 0.0
      %3512 = vmatpush.msra.mxu0 0.0
      %3513 = vmatpush.msra.mxu0 0.0
      %3514 = vmatpush.msra.mxu0 0.0
      %3515 = vmatpush.msra.mxu0 0.0
      %3516 = vmatpush.msra.mxu0 0.0
      %3517 = vmatpush.msra.mxu0 0.0
      %3518 = vmatpush.msra.mxu0 %v3291
      %3519 = vmatmul.f32.gmra.mxu0 %v3269
      %v3520 = vpop.f32.mrf.mxu0
      %v3521 = vadd.f32 0.0, %v3520
      %3522 = vdwg.mxu0
      %3523 = vmatpush.msra.mxu0 0.0
      %3524 = vmatpush.msra.mxu0 0.0
      %3525 = vmatpush.msra.mxu0 0.0
      %3526 = vmatpush.msra.mxu0 0.0
      %3527 = vmatpush.msra.mxu0 0.0
      %3528 = vmatpush.msra.mxu0 0.0
      %3529 = vmatpush.msra.mxu0 0.0
      %3530 = vmatpush.msra.mxu0 0.0
      %3531 = vmatpush.msra.mxu0 0.0
      %3532 = vmatpush.msra.mxu0 0.0
      %3533 = vmatpush.msra.mxu0 0.0
      %3534 = vmatpush.msra.mxu0 0.0
      %3535 = vmatpush.msra.mxu0 0.0
      %3536 = vmatpush.msra.mxu0 0.0
      %3537 = vmatpush.msra.mxu0 0.0
      %3538 = vmatpush.msra.mxu0 %v3293
      %3539 = vmatmul.f32.gmra.mxu0 %v3269
      %v3540 = vpop.f32.mrf.mxu0
      %v3541 = vadd.f32 0.0, %v3540
      %3542 = vdwg.mxu0
      %3543 = vmatpush.msra.mxu0 0.0
      %3544 = vmatpush.msra.mxu0 0.0
      %3545 = vmatpush.msra.mxu0 0.0
      %3546 = vmatpush.msra.mxu0 0.0
      %3547 = vmatpush.msra.mxu0 0.0
      %3548 = vmatpush.msra.mxu0 0.0
      %3549 = vmatpush.msra.mxu0 0.0
      %3550 = vmatpush.msra.mxu0 0.0
      %3551 = vmatpush.msra.mxu0 0.0
      %3552 = vmatpush.msra.mxu0 0.0
      %3553 = vmatpush.msra.mxu0 0.0
      %3554 = vmatpush.msra.mxu0 0.0
      %3555 = vmatpush.msra.mxu0 0.0
      %3556 = vmatpush.msra.mxu0 0.0
      %3557 = vmatpush.msra.mxu0 0.0
      %3558 = vmatpush.msra.mxu0 %v3295
      %3559 = vmatmul.f32.gmra.mxu0 %v3269
      %v3560 = vpop.f32.mrf.mxu0
      %v3561 = vadd.f32 0.0, %v3560
      %3562 = vdwg.mxu0
      %3563 = vmatpush.msra.mxu0 0.0
      %3564 = vmatpush.msra.mxu0 0.0
      %3565 = vmatpush.msra.mxu0 0.0
      %3566 = vmatpush.msra.mxu0 0.0
      %3567 = vmatpush.msra.mxu0 0.0
      %3568 = vmatpush.msra.mxu0 0.0
      %3569 = vmatpush.msra.mxu0 0.0
      %3570 = vmatpush.msra.mxu0 0.0
      %3571 = vmatpush.msra.mxu0 0.0
      %3572 = vmatpush.msra.mxu0 0.0
      %3573 = vmatpush.msra.mxu0 0.0
      %3574 = vmatpush.msra.mxu0 0.0
      %3575 = vmatpush.msra.mxu0 0.0
      %3576 = vmatpush.msra.mxu0 0.0
      %3577 = vmatpush.msra.mxu0 0.0
      %3578 = vmatpush.msra.mxu0 %v3297
      %3579 = vmatmul.f32.gmra.mxu0 %v3269
      %v3580 = vpop.f32.mrf.mxu0
      %v3581 = vadd.f32 0.0, %v3580
      %3582 = vdwg.mxu0
      %3583 = vmatpush.msra.mxu0 0.0
      %3584 = vmatpush.msra.mxu0 0.0
      %3585 = vmatpush.msra.mxu0 0.0
      %3586 = vmatpush.msra.mxu0 0.0
      %3587 = vmatpush.msra.mxu0 0.0
      %3588 = vmatpush.msra.mxu0 0.0
      %3589 = vmatpush.msra.mxu0 0.0
      %3590 = vmatpush.msra.mxu0 0.0
      %3591 = vmatpush.msra.mxu0 0.0
      %3592 = vmatpush.msra.mxu0 0.0
      %3593 = vmatpush.msra.mxu0 0.0
      %3594 = vmatpush.msra.mxu0 0.0
      %3595 = vmatpush.msra.mxu0 0.0
      %3596 = vmatpush.msra.mxu0 0.0
      %3597 = vmatpush.msra.mxu0 0.0
      %3598 = vmatpush.msra.mxu0 %v3299
      %3599 = vmatmul.f32.gmra.mxu0 %v3269
      %v3600 = vpop.f32.mrf.mxu0
      %v3601 = vadd.f32 0.0, %v3600
      %3602 = vdwg.mxu0
      %3603 = vmatpush.msra.mxu0 0.0
      %3604 = vmatpush.msra.mxu0 0.0
      %3605 = vmatpush.msra.mxu0 0.0
      %3606 = vmatpush.msra.mxu0 0.0
      %3607 = vmatpush.msra.mxu0 0.0
      %3608 = vmatpush.msra.mxu0 0.0
      %3609 = vmatpush.msra.mxu0 0.0
      %3610 = vmatpush.msra.mxu0 0.0
      %3611 = vmatpush.msra.mxu0 0.0
      %3612 = vmatpush.msra.mxu0 0.0
      %3613 = vmatpush.msra.mxu0 0.0
      %3614 = vmatpush.msra.mxu0 0.0
      %3615 = vmatpush.msra.mxu0 0.0
      %3616 = vmatpush.msra.mxu0 0.0
      %3617 = vmatpush.msra.mxu0 0.0
      %3618 = vmatpush.msra.mxu0 %v3301
      %3619 = vmatmul.f32.gmra.mxu0 %v3269
      %v3620 = vpop.f32.mrf.mxu0
      %v3621 = vadd.f32 0.0, %v3620
      %3622 = vdwg.mxu0
      %v3623 = vadd.f32 %v3207, %v3321
      %v3624 = vadd.f32 %v3208, %v3341
      %v3625 = vadd.f32 %v3209, %v3361
      %v3626 = vadd.f32 %v3210, %v3381
      %v3627 = vadd.f32 %v3211, %v3401
      %v3628 = vadd.f32 %v3212, %v3421
      %v3629 = vadd.f32 %v3213, %v3441
      %v3630 = vadd.f32 %v3214, %v3461
      %v3631 = vadd.f32 %v3215, %v3481
      %v3632 = vadd.f32 %v3216, %v3501
      %v3633 = vadd.f32 %v3217, %v3521
      %v3634 = vadd.f32 %v3218, %v3541
      %v3635 = vadd.f32 %v3219, %v3561
      %v3636 = vadd.f32 %v3220, %v3581
      %v3637 = vadd.f32 %v3221, %v3601
      %v3638 = vadd.f32 %v3222, %v3621
      %s3639 = scalar_lea.vmem %s2, 56
      %v3640 = vld [vmem:[%s3639] sm:$0xff]
      %v3641 = vld [vmem:[#allocation2 + $0x8] sm:$0xff]
      %v3642 = vld [vmem:[#allocation2 + $0x10] sm:$0xff]
      %v3643 = vld [vmem:[#allocation2 + $0x18] sm:$0xff]
      %v3644 = vld [vmem:[#allocation2 + $0x20] sm:$0xff]
      %v3645 = vld [vmem:[#allocation2 + $0x28] sm:$0xff]
      %v3646 = vld [vmem:[#allocation2 + $0x30] sm:$0xff]
      %v3647 = vld [vmem:[#allocation2 + $0x38] sm:$0xff]
      %v3648 = vld [vmem:[#allocation2 + $0x40] sm:$0xff]
      %v3649 = vld [vmem:[#allocation2 + $0x48] sm:$0xf]
      %3659 = vst [vmem:[#allocation1] ss:$2 sm:$0xff] %v3641
      %s3660 = scalar_lea.vmem [#allocation1], 16
      %3661 = vst [vmem:[%s3660] ss:$2 sm:$0xff] %v3642
      %s3662 = scalar_lea.vmem [#allocation1], 32
      %3663 = vst [vmem:[%s3662] ss:$2 sm:$0xff] %v3643
      %s3664 = scalar_lea.vmem [#allocation1], 48
      %3665 = vst [vmem:[%s3664] ss:$2 sm:$0xff] %v3644
      %v3666 = vld.sshfl [vmem:[#allocation1] sm:$0xff pattern:$0x75316420]
      %v3667 = vld.sshfl [vmem:[#allocation1 + $0x8] sm:$0xff pattern:$0x75316420]
      %v3668 = vld.sshfl [vmem:[#allocation1 + $0x10] sm:$0xff pattern:$0x75316420]
      %v3669 = vld.sshfl [vmem:[#allocation1 + $0x18] sm:$0xff pattern:$0x75316420]
      %v3670 = vld.sshfl [vmem:[#allocation1 + $0x20] sm:$0xff pattern:$0x75316420]
      %v3671 = vld.sshfl [vmem:[#allocation1 + $0x28] sm:$0xff pattern:$0x75316420]
      %v3672 = vld.sshfl [vmem:[#allocation1 + $0x30] sm:$0xff pattern:$0x75316420]
      %v3673 = vld.sshfl [vmem:[#allocation1 + $0x38] sm:$0xff pattern:$0x75316420]
      %3674 = vst [vmem:[#allocation1] ss:$2 sm:$0xff] %v3645
      %3675 = vst [vmem:[%s3660] ss:$2 sm:$0xff] %v3646
      %3676 = vst [vmem:[%s3662] ss:$2 sm:$0xff] %v3647
      %3677 = vst [vmem:[%s3664] ss:$2 sm:$0xff] %v3648
      %v3678 = vld.sshfl [vmem:[#allocation1] sm:$0xff pattern:$0x75316420]
      %v3679 = vld.sshfl [vmem:[#allocation1 + $0x8] sm:$0xff pattern:$0x75316420]
      %v3680 = vld.sshfl [vmem:[#allocation1 + $0x10] sm:$0xff pattern:$0x75316420]
      %v3681 = vld.sshfl [vmem:[#allocation1 + $0x18] sm:$0xff pattern:$0x75316420]
      %v3682 = vld.sshfl [vmem:[#allocation1 + $0x20] sm:$0xff pattern:$0x75316420]
      %v3683 = vld.sshfl [vmem:[#allocation1 + $0x28] sm:$0xff pattern:$0x75316420]
      %v3684 = vld.sshfl [vmem:[#allocation1 + $0x30] sm:$0xff pattern:$0x75316420]
      %v3685 = vld.sshfl [vmem:[#allocation1 + $0x38] sm:$0xff pattern:$0x75316420]
      %3686 = vst [vmem:[#allocation1] ss:$2 sm:$0xff] %v3649
      %v3687 = vld.sshfl [vmem:[#allocation1] sm:$0xff pattern:$0x75316420]
      %3688 = vrot.lane.b32.xlu0 %v3666, 127
      %v3689 = vpop.permute.xlu0 %3688
      %3690 = vrot.lane.b32.xlu0 %v3667, 127
      %v3691 = vpop.permute.xlu0 %3690
      %3692 = vrot.lane.b32.xlu0 %v3668, 127
      %v3693 = vpop.permute.xlu0 %3692
      %3694 = vrot.lane.b32.xlu0 %v3669, 127
      %v3695 = vpop.permute.xlu0 %3694
      %3696 = vrot.lane.b32.xlu0 %v3670, 127
      %v3697 = vpop.permute.xlu0 %3696
      %3698 = vrot.lane.b32.xlu0 %v3671, 127
      %v3699 = vpop.permute.xlu0 %3698
      %3700 = vrot.lane.b32.xlu0 %v3672, 127
      %v3701 = vpop.permute.xlu0 %3700
      %3702 = vrot.lane.b32.xlu0 %v3673, 127
      %v3703 = vpop.permute.xlu0 %3702
      %3704 = vrot.lane.b32.xlu0 %v3678, 127
      %v3705 = vpop.permute.xlu0 %3704
      %3706 = vrot.lane.b32.xlu0 %v3679, 127
      %v3707 = vpop.permute.xlu0 %3706
      %3708 = vrot.lane.b32.xlu0 %v3680, 127
      %v3709 = vpop.permute.xlu0 %3708
      %3710 = vrot.lane.b32.xlu0 %v3681, 127
      %v3711 = vpop.permute.xlu0 %3710
      %3712 = vrot.lane.b32.xlu0 %v3682, 127
      %v3713 = vpop.permute.xlu0 %3712
      %3714 = vrot.lane.b32.xlu0 %v3683, 127
      %v3715 = vpop.permute.xlu0 %3714
      %3716 = vrot.lane.b32.xlu0 %v3684, 127
      %v3717 = vpop.permute.xlu0 %3716
      %3718 = vrot.lane.b32.xlu0 %v3685, 127
      %v3719 = vpop.permute.xlu0 %3718
      %3720 = vrot.lane.b32.xlu0 %v3687, 127
      %v3721 = vpop.permute.xlu0 %3720
      %v3722 = vsel %vm640, %v3689, %v3691
      %v3723 = vsel %vm640, %v3691, %v3693
      %v3724 = vsel %vm640, %v3693, %v3695
      %v3725 = vsel %vm640, %v3695, %v3697
      %v3726 = vsel %vm640, %v3697, %v3699
      %v3727 = vsel %vm640, %v3699, %v3701
      %v3728 = vsel %vm640, %v3701, %v3703
      %v3729 = vsel %vm640, %v3703, %v3705
      %v3730 = vsel %vm640, %v3705, %v3707
      %v3731 = vsel %vm640, %v3707, %v3709
      %v3732 = vsel %vm640, %v3709, %v3711
      %v3733 = vsel %vm640, %v3711, %v3713
      %v3734 = vsel %vm640, %v3713, %v3715
      %v3735 = vsel %vm640, %v3715, %v3717
      %v3736 = vsel %vm640, %v3717, %v3719
      %v3737 = vsel %vm640, %v3719, %v3721
      %v3739 = vsel %vm657, %v3640, 0
      %v3741 = vsel %vm661, %v3722, 0
      %v3743 = vsel %vm661, %v3723, 0
      %v3745 = vsel %vm661, %v3724, 0
      %v3747 = vsel %vm661, %v3725, 0
      %v3749 = vsel %vm661, %v3726, 0
      %v3751 = vsel %vm661, %v3727, 0
      %v3753 = vsel %vm661, %v3728, 0
      %v3755 = vsel %vm661, %v3729, 0
      %v3757 = vsel %vm661, %v3730, 0
      %v3759 = vsel %vm661, %v3731, 0
      %v3761 = vsel %vm661, %v3732, 0
      %v3763 = vsel %vm661, %v3733, 0
      %v3765 = vsel %vm661, %v3734, 0
      %v3767 = vsel %vm661, %v3735, 0
      %v3769 = vsel %vm661, %v3736, 0
      %v3771 = vsel %vm661, %v3737, 0
      %3773 = vmatpush.msra.mxu0 0.0
      %3774 = vmatpush.msra.mxu0 0.0
      %3775 = vmatpush.msra.mxu0 0.0
      %3776 = vmatpush.msra.mxu0 0.0
      %3777 = vmatpush.msra.mxu0 0.0
      %3778 = vmatpush.msra.mxu0 0.0
      %3779 = vmatpush.msra.mxu0 0.0
      %3780 = vmatpush.msra.mxu0 0.0
      %3781 = vmatpush.msra.mxu0 0.0
      %3782 = vmatpush.msra.mxu0 0.0
      %3783 = vmatpush.msra.mxu0 0.0
      %3784 = vmatpush.msra.mxu0 0.0
      %3785 = vmatpush.msra.mxu0 0.0
      %3786 = vmatpush.msra.mxu0 0.0
      %3787 = vmatpush.msra.mxu0 0.0
      %3788 = vmatpush.msra.mxu0 %v3741
      %3789 = vmatmul.f32.gmra.mxu0 %v3739
      %v3790 = vpop.f32.mrf.mxu0
      %v3791 = vadd.f32 0.0, %v3790
      %3792 = vdwg.mxu0
      %3793 = vmatpush.msra.mxu0 0.0
      %3794 = vmatpush.msra.mxu0 0.0
      %3795 = vmatpush.msra.mxu0 0.0
      %3796 = vmatpush.msra.mxu0 0.0
      %3797 = vmatpush.msra.mxu0 0.0
      %3798 = vmatpush.msra.mxu0 0.0
      %3799 = vmatpush.msra.mxu0 0.0
      %3800 = vmatpush.msra.mxu0 0.0
      %3801 = vmatpush.msra.mxu0 0.0
      %3802 = vmatpush.msra.mxu0 0.0
      %3803 = vmatpush.msra.mxu0 0.0
      %3804 = vmatpush.msra.mxu0 0.0
      %3805 = vmatpush.msra.mxu0 0.0
      %3806 = vmatpush.msra.mxu0 0.0
      %3807 = vmatpush.msra.mxu0 0.0
      %3808 = vmatpush.msra.mxu0 %v3743
      %3809 = vmatmul.f32.gmra.mxu0 %v3739
      %v3810 = vpop.f32.mrf.mxu0
      %v3811 = vadd.f32 0.0, %v3810
      %3812 = vdwg.mxu0
      %3813 = vmatpush.msra.mxu0 0.0
      %3814 = vmatpush.msra.mxu0 0.0
      %3815 = vmatpush.msra.mxu0 0.0
      %3816 = vmatpush.msra.mxu0 0.0
      %3817 = vmatpush.msra.mxu0 0.0
      %3818 = vmatpush.msra.mxu0 0.0
      %3819 = vmatpush.msra.mxu0 0.0
      %3820 = vmatpush.msra.mxu0 0.0
      %3821 = vmatpush.msra.mxu0 0.0
      %3822 = vmatpush.msra.mxu0 0.0
      %3823 = vmatpush.msra.mxu0 0.0
      %3824 = vmatpush.msra.mxu0 0.0
      %3825 = vmatpush.msra.mxu0 0.0
      %3826 = vmatpush.msra.mxu0 0.0
      %3827 = vmatpush.msra.mxu0 0.0
      %3828 = vmatpush.msra.mxu0 %v3745
      %3829 = vmatmul.f32.gmra.mxu0 %v3739
      %v3830 = vpop.f32.mrf.mxu0
      %v3831 = vadd.f32 0.0, %v3830
      %3832 = vdwg.mxu0
      %3833 = vmatpush.msra.mxu0 0.0
      %3834 = vmatpush.msra.mxu0 0.0
      %3835 = vmatpush.msra.mxu0 0.0
      %3836 = vmatpush.msra.mxu0 0.0
      %3837 = vmatpush.msra.mxu0 0.0
      %3838 = vmatpush.msra.mxu0 0.0
      %3839 = vmatpush.msra.mxu0 0.0
      %3840 = vmatpush.msra.mxu0 0.0
      %3841 = vmatpush.msra.mxu0 0.0
      %3842 = vmatpush.msra.mxu0 0.0
      %3843 = vmatpush.msra.mxu0 0.0
      %3844 = vmatpush.msra.mxu0 0.0
      %3845 = vmatpush.msra.mxu0 0.0
      %3846 = vmatpush.msra.mxu0 0.0
      %3847 = vmatpush.msra.mxu0 0.0
      %3848 = vmatpush.msra.mxu0 %v3747
      %3849 = vmatmul.f32.gmra.mxu0 %v3739
      %v3850 = vpop.f32.mrf.mxu0
      %v3851 = vadd.f32 0.0, %v3850
      %3852 = vdwg.mxu0
      %3853 = vmatpush.msra.mxu0 0.0
      %3854 = vmatpush.msra.mxu0 0.0
      %3855 = vmatpush.msra.mxu0 0.0
      %3856 = vmatpush.msra.mxu0 0.0
      %3857 = vmatpush.msra.mxu0 0.0
      %3858 = vmatpush.msra.mxu0 0.0
      %3859 = vmatpush.msra.mxu0 0.0
      %3860 = vmatpush.msra.mxu0 0.0
      %3861 = vmatpush.msra.mxu0 0.0
      %3862 = vmatpush.msra.mxu0 0.0
      %3863 = vmatpush.msra.mxu0 0.0
      %3864 = vmatpush.msra.mxu0 0.0
      %3865 = vmatpush.msra.mxu0 0.0
      %3866 = vmatpush.msra.mxu0 0.0
      %3867 = vmatpush.msra.mxu0 0.0
      %3868 = vmatpush.msra.mxu0 %v3749
      %3869 = vmatmul.f32.gmra.mxu0 %v3739
      %v3870 = vpop.f32.mrf.mxu0
      %v3871 = vadd.f32 0.0, %v3870
      %3872 = vdwg.mxu0
      %3873 = vmatpush.msra.mxu0 0.0
      %3874 = vmatpush.msra.mxu0 0.0
      %3875 = vmatpush.msra.mxu0 0.0
      %3876 = vmatpush.msra.mxu0 0.0
      %3877 = vmatpush.msra.mxu0 0.0
      %3878 = vmatpush.msra.mxu0 0.0
      %3879 = vmatpush.msra.mxu0 0.0
      %3880 = vmatpush.msra.mxu0 0.0
      %3881 = vmatpush.msra.mxu0 0.0
      %3882 = vmatpush.msra.mxu0 0.0
      %3883 = vmatpush.msra.mxu0 0.0
      %3884 = vmatpush.msra.mxu0 0.0
      %3885 = vmatpush.msra.mxu0 0.0
      %3886 = vmatpush.msra.mxu0 0.0
      %3887 = vmatpush.msra.mxu0 0.0
      %3888 = vmatpush.msra.mxu0 %v3751
      %3889 = vmatmul.f32.gmra.mxu0 %v3739
      %v3890 = vpop.f32.mrf.mxu0
      %v3891 = vadd.f32 0.0, %v3890
      %3892 = vdwg.mxu0
      %3893 = vmatpush.msra.mxu0 0.0
      %3894 = vmatpush.msra.mxu0 0.0
      %3895 = vmatpush.msra.mxu0 0.0
      %3896 = vmatpush.msra.mxu0 0.0
      %3897 = vmatpush.msra.mxu0 0.0
      %3898 = vmatpush.msra.mxu0 0.0
      %3899 = vmatpush.msra.mxu0 0.0
      %3900 = vmatpush.msra.mxu0 0.0
      %3901 = vmatpush.msra.mxu0 0.0
      %3902 = vmatpush.msra.mxu0 0.0
      %3903 = vmatpush.msra.mxu0 0.0
      %3904 = vmatpush.msra.mxu0 0.0
      %3905 = vmatpush.msra.mxu0 0.0
      %3906 = vmatpush.msra.mxu0 0.0
      %3907 = vmatpush.msra.mxu0 0.0
      %3908 = vmatpush.msra.mxu0 %v3753
      %3909 = vmatmul.f32.gmra.mxu0 %v3739
      %v3910 = vpop.f32.mrf.mxu0
      %v3911 = vadd.f32 0.0, %v3910
      %3912 = vdwg.mxu0
      %3913 = vmatpush.msra.mxu0 0.0
      %3914 = vmatpush.msra.mxu0 0.0
      %3915 = vmatpush.msra.mxu0 0.0
      %3916 = vmatpush.msra.mxu0 0.0
      %3917 = vmatpush.msra.mxu0 0.0
      %3918 = vmatpush.msra.mxu0 0.0
      %3919 = vmatpush.msra.mxu0 0.0
      %3920 = vmatpush.msra.mxu0 0.0
      %3921 = vmatpush.msra.mxu0 0.0
      %3922 = vmatpush.msra.mxu0 0.0
      %3923 = vmatpush.msra.mxu0 0.0
      %3924 = vmatpush.msra.mxu0 0.0
      %3925 = vmatpush.msra.mxu0 0.0
      %3926 = vmatpush.msra.mxu0 0.0
      %3927 = vmatpush.msra.mxu0 0.0
      %3928 = vmatpush.msra.mxu0 %v3755
      %3929 = vmatmul.f32.gmra.mxu0 %v3739
      %v3930 = vpop.f32.mrf.mxu0
      %v3931 = vadd.f32 0.0, %v3930
      %3932 = vdwg.mxu0
      %3933 = vmatpush.msra.mxu0 0.0
      %3934 = vmatpush.msra.mxu0 0.0
      %3935 = vmatpush.msra.mxu0 0.0
      %3936 = vmatpush.msra.mxu0 0.0
      %3937 = vmatpush.msra.mxu0 0.0
      %3938 = vmatpush.msra.mxu0 0.0
      %3939 = vmatpush.msra.mxu0 0.0
      %3940 = vmatpush.msra.mxu0 0.0
      %3941 = vmatpush.msra.mxu0 0.0
      %3942 = vmatpush.msra.mxu0 0.0
      %3943 = vmatpush.msra.mxu0 0.0
      %3944 = vmatpush.msra.mxu0 0.0
      %3945 = vmatpush.msra.mxu0 0.0
      %3946 = vmatpush.msra.mxu0 0.0
      %3947 = vmatpush.msra.mxu0 0.0
      %3948 = vmatpush.msra.mxu0 %v3757
      %3949 = vmatmul.f32.gmra.mxu0 %v3739
      %v3950 = vpop.f32.mrf.mxu0
      %v3951 = vadd.f32 0.0, %v3950
      %3952 = vdwg.mxu0
      %3953 = vmatpush.msra.mxu0 0.0
      %3954 = vmatpush.msra.mxu0 0.0
      %3955 = vmatpush.msra.mxu0 0.0
      %3956 = vmatpush.msra.mxu0 0.0
      %3957 = vmatpush.msra.mxu0 0.0
      %3958 = vmatpush.msra.mxu0 0.0
      %3959 = vmatpush.msra.mxu0 0.0
      %3960 = vmatpush.msra.mxu0 0.0
      %3961 = vmatpush.msra.mxu0 0.0
      %3962 = vmatpush.msra.mxu0 0.0
      %3963 = vmatpush.msra.mxu0 0.0
      %3964 = vmatpush.msra.mxu0 0.0
      %3965 = vmatpush.msra.mxu0 0.0
      %3966 = vmatpush.msra.mxu0 0.0
      %3967 = vmatpush.msra.mxu0 0.0
      %3968 = vmatpush.msra.mxu0 %v3759
      %3969 = vmatmul.f32.gmra.mxu0 %v3739
      %v3970 = vpop.f32.mrf.mxu0
      %v3971 = vadd.f32 0.0, %v3970
      %3972 = vdwg.mxu0
      %3973 = vmatpush.msra.mxu0 0.0
      %3974 = vmatpush.msra.mxu0 0.0
      %3975 = vmatpush.msra.mxu0 0.0
      %3976 = vmatpush.msra.mxu0 0.0
      %3977 = vmatpush.msra.mxu0 0.0
      %3978 = vmatpush.msra.mxu0 0.0
      %3979 = vmatpush.msra.mxu0 0.0
      %3980 = vmatpush.msra.mxu0 0.0
      %3981 = vmatpush.msra.mxu0 0.0
      %3982 = vmatpush.msra.mxu0 0.0
      %3983 = vmatpush.msra.mxu0 0.0
      %3984 = vmatpush.msra.mxu0 0.0
      %3985 = vmatpush.msra.mxu0 0.0
      %3986 = vmatpush.msra.mxu0 0.0
      %3987 = vmatpush.msra.mxu0 0.0
      %3988 = vmatpush.msra.mxu0 %v3761
      %3989 = vmatmul.f32.gmra.mxu0 %v3739
      %v3990 = vpop.f32.mrf.mxu0
      %v3991 = vadd.f32 0.0, %v3990
      %3992 = vdwg.mxu0
      %3993 = vmatpush.msra.mxu0 0.0
      %3994 = vmatpush.msra.mxu0 0.0
      %3995 = vmatpush.msra.mxu0 0.0
      %3996 = vmatpush.msra.mxu0 0.0
      %3997 = vmatpush.msra.mxu0 0.0
      %3998 = vmatpush.msra.mxu0 0.0
      %3999 = vmatpush.msra.mxu0 0.0
      %4000 = vmatpush.msra.mxu0 0.0
      %4001 = vmatpush.msra.mxu0 0.0
      %4002 = vmatpush.msra.mxu0 0.0
      %4003 = vmatpush.msra.mxu0 0.0
      %4004 = vmatpush.msra.mxu0 0.0
      %4005 = vmatpush.msra.mxu0 0.0
      %4006 = vmatpush.msra.mxu0 0.0
      %4007 = vmatpush.msra.mxu0 0.0
      %4008 = vmatpush.msra.mxu0 %v3763
      %4009 = vmatmul.f32.gmra.mxu0 %v3739
      %v4010 = vpop.f32.mrf.mxu0
      %v4011 = vadd.f32 0.0, %v4010
      %4012 = vdwg.mxu0
      %4013 = vmatpush.msra.mxu0 0.0
      %4014 = vmatpush.msra.mxu0 0.0
      %4015 = vmatpush.msra.mxu0 0.0
      %4016 = vmatpush.msra.mxu0 0.0
      %4017 = vmatpush.msra.mxu0 0.0
      %4018 = vmatpush.msra.mxu0 0.0
      %4019 = vmatpush.msra.mxu0 0.0
      %4020 = vmatpush.msra.mxu0 0.0
      %4021 = vmatpush.msra.mxu0 0.0
      %4022 = vmatpush.msra.mxu0 0.0
      %4023 = vmatpush.msra.mxu0 0.0
      %4024 = vmatpush.msra.mxu0 0.0
      %4025 = vmatpush.msra.mxu0 0.0
      %4026 = vmatpush.msra.mxu0 0.0
      %4027 = vmatpush.msra.mxu0 0.0
      %4028 = vmatpush.msra.mxu0 %v3765
      %4029 = vmatmul.f32.gmra.mxu0 %v3739
      %v4030 = vpop.f32.mrf.mxu0
      %v4031 = vadd.f32 0.0, %v4030
      %4032 = vdwg.mxu0
      %4033 = vmatpush.msra.mxu0 0.0
      %4034 = vmatpush.msra.mxu0 0.0
      %4035 = vmatpush.msra.mxu0 0.0
      %4036 = vmatpush.msra.mxu0 0.0
      %4037 = vmatpush.msra.mxu0 0.0
      %4038 = vmatpush.msra.mxu0 0.0
      %4039 = vmatpush.msra.mxu0 0.0
      %4040 = vmatpush.msra.mxu0 0.0
      %4041 = vmatpush.msra.mxu0 0.0
      %4042 = vmatpush.msra.mxu0 0.0
      %4043 = vmatpush.msra.mxu0 0.0
      %4044 = vmatpush.msra.mxu0 0.0
      %4045 = vmatpush.msra.mxu0 0.0
      %4046 = vmatpush.msra.mxu0 0.0
      %4047 = vmatpush.msra.mxu0 0.0
      %4048 = vmatpush.msra.mxu0 %v3767
      %4049 = vmatmul.f32.gmra.mxu0 %v3739
      %v4050 = vpop.f32.mrf.mxu0
      %v4051 = vadd.f32 0.0, %v4050
      %4052 = vdwg.mxu0
      %4053 = vmatpush.msra.mxu0 0.0
      %4054 = vmatpush.msra.mxu0 0.0
      %4055 = vmatpush.msra.mxu0 0.0
      %4056 = vmatpush.msra.mxu0 0.0
      %4057 = vmatpush.msra.mxu0 0.0
      %4058 = vmatpush.msra.mxu0 0.0
      %4059 = vmatpush.msra.mxu0 0.0
      %4060 = vmatpush.msra.mxu0 0.0
      %4061 = vmatpush.msra.mxu0 0.0
      %4062 = vmatpush.msra.mxu0 0.0
      %4063 = vmatpush.msra.mxu0 0.0
      %4064 = vmatpush.msra.mxu0 0.0
      %4065 = vmatpush.msra.mxu0 0.0
      %4066 = vmatpush.msra.mxu0 0.0
      %4067 = vmatpush.msra.mxu0 0.0
      %4068 = vmatpush.msra.mxu0 %v3769
      %4069 = vmatmul.f32.gmra.mxu0 %v3739
      %v4070 = vpop.f32.mrf.mxu0
      %v4071 = vadd.f32 0.0, %v4070
      %4072 = vdwg.mxu0
      %4073 = vmatpush.msra.mxu0 0.0
      %4074 = vmatpush.msra.mxu0 0.0
      %4075 = vmatpush.msra.mxu0 0.0
      %4076 = vmatpush.msra.mxu0 0.0
      %4077 = vmatpush.msra.mxu0 0.0
      %4078 = vmatpush.msra.mxu0 0.0
      %4079 = vmatpush.msra.mxu0 0.0
      %4080 = vmatpush.msra.mxu0 0.0
      %4081 = vmatpush.msra.mxu0 0.0
      %4082 = vmatpush.msra.mxu0 0.0
      %4083 = vmatpush.msra.mxu0 0.0
      %4084 = vmatpush.msra.mxu0 0.0
      %4085 = vmatpush.msra.mxu0 0.0
      %4086 = vmatpush.msra.mxu0 0.0
      %4087 = vmatpush.msra.mxu0 0.0
      %4088 = vmatpush.msra.mxu0 %v3771
      %4089 = vmatmul.f32.gmra.mxu0 %v3739
      %v4090 = vpop.f32.mrf.mxu0
      %v4091 = vadd.f32 0.0, %v4090
      %4092 = vdwg.mxu0
      %v4093 = vadd.f32 %v3623, %v3791
      %v4094 = vadd.f32 %v3624, %v3811
      %v4095 = vadd.f32 %v3625, %v3831
      %v4096 = vadd.f32 %v3626, %v3851
      %v4097 = vadd.f32 %v3627, %v3871
      %v4098 = vadd.f32 %v3628, %v3891
      %v4099 = vadd.f32 %v3629, %v3911
      %v4100 = vadd.f32 %v3630, %v3931
      %v4101 = vadd.f32 %v3631, %v3951
      %v4102 = vadd.f32 %v3632, %v3971
      %v4103 = vadd.f32 %v3633, %v3991
      %v4104 = vadd.f32 %v3634, %v4011
      %v4105 = vadd.f32 %v3635, %v4031
      %v4106 = vadd.f32 %v3636, %v4051
      %v4107 = vadd.f32 %v3637, %v4071
      %v4108 = vadd.f32 %v3638, %v4091
      %s4109 = scalar_lea.vmem %s2, 64
      %v4110 = vld [vmem:[%s4109] sm:$0xff]
      %v4111 = vld [vmem:[#allocation2 + $0x8] sm:$0xff]
      %v4112 = vld [vmem:[#allocation2 + $0x10] sm:$0xff]
      %v4113 = vld [vmem:[#allocation2 + $0x18] sm:$0xff]
      %v4114 = vld [vmem:[#allocation2 + $0x20] sm:$0xff]
      %v4115 = vld [vmem:[#allocation2 + $0x28] sm:$0xff]
      %v4116 = vld [vmem:[#allocation2 + $0x30] sm:$0xff]
      %v4117 = vld [vmem:[#allocation2 + $0x38] sm:$0xff]
      %v4118 = vld [vmem:[#allocation2 + $0x40] sm:$0xff]
      %v4119 = vld [vmem:[#allocation2 + $0x48] sm:$0xf]
      %4129 = vst [vmem:[#allocation1] ss:$2 sm:$0xff] %v4111
      %s4130 = scalar_lea.vmem [#allocation1], 16
      %4131 = vst [vmem:[%s4130] ss:$2 sm:$0xff] %v4112
      %s4132 = scalar_lea.vmem [#allocation1], 32
      %4133 = vst [vmem:[%s4132] ss:$2 sm:$0xff] %v4113
      %s4134 = scalar_lea.vmem [#allocation1], 48
      %4135 = vst [vmem:[%s4134] ss:$2 sm:$0xff] %v4114
      %v4136 = vld.sshfl [vmem:[#allocation1] sm:$0xff pattern:$0x75316420]
      %v4137 = vld.sshfl [vmem:[#allocation1 + $0x8] sm:$0xff pattern:$0x75316420]
      %v4138 = vld.sshfl [vmem:[#allocation1 + $0x10] sm:$0xff pattern:$0x75316420]
      %v4139 = vld.sshfl [vmem:[#allocation1 + $0x18] sm:$0xff pattern:$0x75316420]
      %v4140 = vld.sshfl [vmem:[#allocation1 + $0x20] sm:$0xff pattern:$0x75316420]
      %v4141 = vld.sshfl [vmem:[#allocation1 + $0x28] sm:$0xff pattern:$0x75316420]
      %v4142 = vld.sshfl [vmem:[#allocation1 + $0x30] sm:$0xff pattern:$0x75316420]
      %v4143 = vld.sshfl [vmem:[#allocation1 + $0x38] sm:$0xff pattern:$0x75316420]
      %4144 = vst [vmem:[#allocation1] ss:$2 sm:$0xff] %v4115
      %4145 = vst [vmem:[%s4130] ss:$2 sm:$0xff] %v4116
      %4146 = vst [vmem:[%s4132] ss:$2 sm:$0xff] %v4117
      %4147 = vst [vmem:[%s4134] ss:$2 sm:$0xff] %v4118
      %v4148 = vld.sshfl [vmem:[#allocation1] sm:$0xff pattern:$0x75316420]
      %v4149 = vld.sshfl [vmem:[#allocation1 + $0x8] sm:$0xff pattern:$0x75316420]
      %v4150 = vld.sshfl [vmem:[#allocation1 + $0x10] sm:$0xff pattern:$0x75316420]
      %v4151 = vld.sshfl [vmem:[#allocation1 + $0x18] sm:$0xff pattern:$0x75316420]
      %v4152 = vld.sshfl [vmem:[#allocation1 + $0x20] sm:$0xff pattern:$0x75316420]
      %v4153 = vld.sshfl [vmem:[#allocation1 + $0x28] sm:$0xff pattern:$0x75316420]
      %v4154 = vld.sshfl [vmem:[#allocation1 + $0x30] sm:$0xff pattern:$0x75316420]
      %v4155 = vld.sshfl [vmem:[#allocation1 + $0x38] sm:$0xff pattern:$0x75316420]
      %4156 = vst [vmem:[#allocation1] ss:$2 sm:$0xff] %v4119
      %v4157 = vld.sshfl [vmem:[#allocation1] sm:$0xff pattern:$0x75316420]
      %4158 = vrot.lane.b32.xlu0 %v4136, 126
      %v4159 = vpop.permute.xlu0 %4158
      %4160 = vrot.lane.b32.xlu0 %v4137, 126
      %v4161 = vpop.permute.xlu0 %4160
      %4162 = vrot.lane.b32.xlu0 %v4138, 126
      %v4163 = vpop.permute.xlu0 %4162
      %4164 = vrot.lane.b32.xlu0 %v4139, 126
      %v4165 = vpop.permute.xlu0 %4164
      %4166 = vrot.lane.b32.xlu0 %v4140, 126
      %v4167 = vpop.permute.xlu0 %4166
      %4168 = vrot.lane.b32.xlu0 %v4141, 126
      %v4169 = vpop.permute.xlu0 %4168
      %4170 = vrot.lane.b32.xlu0 %v4142, 126
      %v4171 = vpop.permute.xlu0 %4170
      %4172 = vrot.lane.b32.xlu0 %v4143, 126
      %v4173 = vpop.permute.xlu0 %4172
      %4174 = vrot.lane.b32.xlu0 %v4148, 126
      %v4175 = vpop.permute.xlu0 %4174
      %4176 = vrot.lane.b32.xlu0 %v4149, 126
      %v4177 = vpop.permute.xlu0 %4176
      %4178 = vrot.lane.b32.xlu0 %v4150, 126
      %v4179 = vpop.permute.xlu0 %4178
      %4180 = vrot.lane.b32.xlu0 %v4151, 126
      %v4181 = vpop.permute.xlu0 %4180
      %4182 = vrot.lane.b32.xlu0 %v4152, 126
      %v4183 = vpop.permute.xlu0 %4182
      %4184 = vrot.lane.b32.xlu0 %v4153, 126
      %v4185 = vpop.permute.xlu0 %4184
      %4186 = vrot.lane.b32.xlu0 %v4154, 126
      %v4187 = vpop.permute.xlu0 %4186
      %4188 = vrot.lane.b32.xlu0 %v4155, 126
      %v4189 = vpop.permute.xlu0 %4188
      %4190 = vrot.lane.b32.xlu0 %v4157, 126
      %v4191 = vpop.permute.xlu0 %4190
      %v4192 = vsel %vm1479, %v4159, %v4161
      %v4193 = vsel %vm1479, %v4161, %v4163
      %v4194 = vsel %vm1479, %v4163, %v4165
      %v4195 = vsel %vm1479, %v4165, %v4167
      %v4196 = vsel %vm1479, %v4167, %v4169
      %v4197 = vsel %vm1479, %v4169, %v4171
      %v4198 = vsel %vm1479, %v4171, %v4173
      %v4199 = vsel %vm1479, %v4173, %v4175
      %v4200 = vsel %vm1479, %v4175, %v4177
      %v4201 = vsel %vm1479, %v4177, %v4179
      %v4202 = vsel %vm1479, %v4179, %v4181
      %v4203 = vsel %vm1479, %v4181, %v4183
      %v4204 = vsel %vm1479, %v4183, %v4185
      %v4205 = vsel %vm1479, %v4185, %v4187
      %v4206 = vsel %vm1479, %v4187, %v4189
      %v4207 = vsel %vm1479, %v4189, %v4191
      %v4209 = vsel %vm657, %v4110, 0
      %v4211 = vsel %vm661, %v4192, 0
      %v4213 = vsel %vm661, %v4193, 0
      %v4215 = vsel %vm661, %v4194, 0
      %v4217 = vsel %vm661, %v4195, 0
      %v4219 = vsel %vm661, %v4196, 0
      %v4221 = vsel %vm661, %v4197, 0
      %v4223 = vsel %vm661, %v4198, 0
      %v4225 = vsel %vm661, %v4199, 0
      %v4227 = vsel %vm661, %v4200, 0
      %v4229 = vsel %vm661, %v4201, 0
      %v4231 = vsel %vm661, %v4202, 0
      %v4233 = vsel %vm661, %v4203, 0
      %v4235 = vsel %vm661, %v4204, 0
      %v4237 = vsel %vm661, %v4205, 0
      %v4239 = vsel %vm661, %v4206, 0
      %v4241 = vsel %vm661, %v4207, 0
      %4243 = vmatpush.msra.mxu0 0.0
      %4244 = vmatpush.msra.mxu0 0.0
      %4245 = vmatpush.msra.mxu0 0.0
      %4246 = vmatpush.msra.mxu0 0.0
      %4247 = vmatpush.msra.mxu0 0.0
      %4248 = vmatpush.msra.mxu0 0.0
      %4249 = vmatpush.msra.mxu0 0.0
      %4250 = vmatpush.msra.mxu0 0.0
      %4251 = vmatpush.msra.mxu0 0.0
      %4252 = vmatpush.msra.mxu0 0.0
      %4253 = vmatpush.msra.mxu0 0.0
      %4254 = vmatpush.msra.mxu0 0.0
      %4255 = vmatpush.msra.mxu0 0.0
      %4256 = vmatpush.msra.mxu0 0.0
      %4257 = vmatpush.msra.mxu0 0.0
      %4258 = vmatpush.msra.mxu0 %v4211
      %4259 = vmatmul.f32.gmra.mxu0 %v4209
      %v4260 = vpop.f32.mrf.mxu0
      %v4261 = vadd.f32 0.0, %v4260
      %4262 = vdwg.mxu0
      %4263 = vmatpush.msra.mxu0 0.0
      %4264 = vmatpush.msra.mxu0 0.0
      %4265 = vmatpush.msra.mxu0 0.0
      %4266 = vmatpush.msra.mxu0 0.0
      %4267 = vmatpush.msra.mxu0 0.0
      %4268 = vmatpush.msra.mxu0 0.0
      %4269 = vmatpush.msra.mxu0 0.0
      %4270 = vmatpush.msra.mxu0 0.0
      %4271 = vmatpush.msra.mxu0 0.0
      %4272 = vmatpush.msra.mxu0 0.0
      %4273 = vmatpush.msra.mxu0 0.0
      %4274 = vmatpush.msra.mxu0 0.0
      %4275 = vmatpush.msra.mxu0 0.0
      %4276 = vmatpush.msra.mxu0 0.0
      %4277 = vmatpush.msra.mxu0 0.0
      %4278 = vmatpush.msra.mxu0 %v4213
      %4279 = vmatmul.f32.gmra.mxu0 %v4209
      %v4280 = vpop.f32.mrf.mxu0
      %v4281 = vadd.f32 0.0, %v4280
      %4282 = vdwg.mxu0
      %4283 = vmatpush.msra.mxu0 0.0
      %4284 = vmatpush.msra.mxu0 0.0
      %4285 = vmatpush.msra.mxu0 0.0
      %4286 = vmatpush.msra.mxu0 0.0
      %4287 = vmatpush.msra.mxu0 0.0
      %4288 = vmatpush.msra.mxu0 0.0
      %4289 = vmatpush.msra.mxu0 0.0
      %4290 = vmatpush.msra.mxu0 0.0
      %4291 = vmatpush.msra.mxu0 0.0
      %4292 = vmatpush.msra.mxu0 0.0
      %4293 = vmatpush.msra.mxu0 0.0
      %4294 = vmatpush.msra.mxu0 0.0
      %4295 = vmatpush.msra.mxu0 0.0
      %4296 = vmatpush.msra.mxu0 0.0
      %4297 = vmatpush.msra.mxu0 0.0
      %4298 = vmatpush.msra.mxu0 %v4215
      %4299 = vmatmul.f32.gmra.mxu0 %v4209
      %v4300 = vpop.f32.mrf.mxu0
      %v4301 = vadd.f32 0.0, %v4300
      %4302 = vdwg.mxu0
      %4303 = vmatpush.msra.mxu0 0.0
      %4304 = vmatpush.msra.mxu0 0.0
      %4305 = vmatpush.msra.mxu0 0.0
      %4306 = vmatpush.msra.mxu0 0.0
      %4307 = vmatpush.msra.mxu0 0.0
      %4308 = vmatpush.msra.mxu0 0.0
      %4309 = vmatpush.msra.mxu0 0.0
      %4310 = vmatpush.msra.mxu0 0.0
      %4311 = vmatpush.msra.mxu0 0.0
      %4312 = vmatpush.msra.mxu0 0.0
      %4313 = vmatpush.msra.mxu0 0.0
      %4314 = vmatpush.msra.mxu0 0.0
      %4315 = vmatpush.msra.mxu0 0.0
      %4316 = vmatpush.msra.mxu0 0.0
      %4317 = vmatpush.msra.mxu0 0.0
      %4318 = vmatpush.msra.mxu0 %v4217
      %4319 = vmatmul.f32.gmra.mxu0 %v4209
      %v4320 = vpop.f32.mrf.mxu0
      %v4321 = vadd.f32 0.0, %v4320
      %4322 = vdwg.mxu0
      %4323 = vmatpush.msra.mxu0 0.0
      %4324 = vmatpush.msra.mxu0 0.0
      %4325 = vmatpush.msra.mxu0 0.0
      %4326 = vmatpush.msra.mxu0 0.0
      %4327 = vmatpush.msra.mxu0 0.0
      %4328 = vmatpush.msra.mxu0 0.0
      %4329 = vmatpush.msra.mxu0 0.0
      %4330 = vmatpush.msra.mxu0 0.0
      %4331 = vmatpush.msra.mxu0 0.0
      %4332 = vmatpush.msra.mxu0 0.0
      %4333 = vmatpush.msra.mxu0 0.0
      %4334 = vmatpush.msra.mxu0 0.0
      %4335 = vmatpush.msra.mxu0 0.0
      %4336 = vmatpush.msra.mxu0 0.0
      %4337 = vmatpush.msra.mxu0 0.0
      %4338 = vmatpush.msra.mxu0 %v4219
      %4339 = vmatmul.f32.gmra.mxu0 %v4209
      %v4340 = vpop.f32.mrf.mxu0
      %v4341 = vadd.f32 0.0, %v4340
      %4342 = vdwg.mxu0
      %4343 = vmatpush.msra.mxu0 0.0
      %4344 = vmatpush.msra.mxu0 0.0
      %4345 = vmatpush.msra.mxu0 0.0
      %4346 = vmatpush.msra.mxu0 0.0
      %4347 = vmatpush.msra.mxu0 0.0
      %4348 = vmatpush.msra.mxu0 0.0
      %4349 = vmatpush.msra.mxu0 0.0
      %4350 = vmatpush.msra.mxu0 0.0
      %4351 = vmatpush.msra.mxu0 0.0
      %4352 = vmatpush.msra.mxu0 0.0
      %4353 = vmatpush.msra.mxu0 0.0
      %4354 = vmatpush.msra.mxu0 0.0
      %4355 = vmatpush.msra.mxu0 0.0
      %4356 = vmatpush.msra.mxu0 0.0
      %4357 = vmatpush.msra.mxu0 0.0
      %4358 = vmatpush.msra.mxu0 %v4221
      %4359 = vmatmul.f32.gmra.mxu0 %v4209
      %v4360 = vpop.f32.mrf.mxu0
      %v4361 = vadd.f32 0.0, %v4360
      %4362 = vdwg.mxu0
      %4363 = vmatpush.msra.mxu0 0.0
      %4364 = vmatpush.msra.mxu0 0.0
      %4365 = vmatpush.msra.mxu0 0.0
      %4366 = vmatpush.msra.mxu0 0.0
      %4367 = vmatpush.msra.mxu0 0.0
      %4368 = vmatpush.msra.mxu0 0.0
      %4369 = vmatpush.msra.mxu0 0.0
      %4370 = vmatpush.msra.mxu0 0.0
      %4371 = vmatpush.msra.mxu0 0.0
      %4372 = vmatpush.msra.mxu0 0.0
      %4373 = vmatpush.msra.mxu0 0.0
      %4374 = vmatpush.msra.mxu0 0.0
      %4375 = vmatpush.msra.mxu0 0.0
      %4376 = vmatpush.msra.mxu0 0.0
      %4377 = vmatpush.msra.mxu0 0.0
      %4378 = vmatpush.msra.mxu0 %v4223
      %4379 = vmatmul.f32.gmra.mxu0 %v4209
      %v4380 = vpop.f32.mrf.mxu0
      %v4381 = vadd.f32 0.0, %v4380
      %4382 = vdwg.mxu0
      %4383 = vmatpush.msra.mxu0 0.0
      %4384 = vmatpush.msra.mxu0 0.0
      %4385 = vmatpush.msra.mxu0 0.0
      %4386 = vmatpush.msra.mxu0 0.0
      %4387 = vmatpush.msra.mxu0 0.0
      %4388 = vmatpush.msra.mxu0 0.0
      %4389 = vmatpush.msra.mxu0 0.0
      %4390 = vmatpush.msra.mxu0 0.0
      %4391 = vmatpush.msra.mxu0 0.0
      %4392 = vmatpush.msra.mxu0 0.0
      %4393 = vmatpush.msra.mxu0 0.0
      %4394 = vmatpush.msra.mxu0 0.0
      %4395 = vmatpush.msra.mxu0 0.0
      %4396 = vmatpush.msra.mxu0 0.0
      %4397 = vmatpush.msra.mxu0 0.0
      %4398 = vmatpush.msra.mxu0 %v4225
      %4399 = vmatmul.f32.gmra.mxu0 %v4209
      %v4400 = vpop.f32.mrf.mxu0
      %v4401 = vadd.f32 0.0, %v4400
      %4402 = vdwg.mxu0
      %4403 = vmatpush.msra.mxu0 0.0
      %4404 = vmatpush.msra.mxu0 0.0
      %4405 = vmatpush.msra.mxu0 0.0
      %4406 = vmatpush.msra.mxu0 0.0
      %4407 = vmatpush.msra.mxu0 0.0
      %4408 = vmatpush.msra.mxu0 0.0
      %4409 = vmatpush.msra.mxu0 0.0
      %4410 = vmatpush.msra.mxu0 0.0
      %4411 = vmatpush.msra.mxu0 0.0
      %4412 = vmatpush.msra.mxu0 0.0
      %4413 = vmatpush.msra.mxu0 0.0
      %4414 = vmatpush.msra.mxu0 0.0
      %4415 = vmatpush.msra.mxu0 0.0
      %4416 = vmatpush.msra.mxu0 0.0
      %4417 = vmatpush.msra.mxu0 0.0
      %4418 = vmatpush.msra.mxu0 %v4227
      %4419 = vmatmul.f32.gmra.mxu0 %v4209
      %v4420 = vpop.f32.mrf.mxu0
      %v4421 = vadd.f32 0.0, %v4420
      %4422 = vdwg.mxu0
      %4423 = vmatpush.msra.mxu0 0.0
      %4424 = vmatpush.msra.mxu0 0.0
      %4425 = vmatpush.msra.mxu0 0.0
      %4426 = vmatpush.msra.mxu0 0.0
      %4427 = vmatpush.msra.mxu0 0.0
      %4428 = vmatpush.msra.mxu0 0.0
      %4429 = vmatpush.msra.mxu0 0.0
      %4430 = vmatpush.msra.mxu0 0.0
      %4431 = vmatpush.msra.mxu0 0.0
      %4432 = vmatpush.msra.mxu0 0.0
      %4433 = vmatpush.msra.mxu0 0.0
      %4434 = vmatpush.msra.mxu0 0.0
      %4435 = vmatpush.msra.mxu0 0.0
      %4436 = vmatpush.msra.mxu0 0.0
      %4437 = vmatpush.msra.mxu0 0.0
      %4438 = vmatpush.msra.mxu0 %v4229
      %4439 = vmatmul.f32.gmra.mxu0 %v4209
      %v4440 = vpop.f32.mrf.mxu0
      %v4441 = vadd.f32 0.0, %v4440
      %4442 = vdwg.mxu0
      %4443 = vmatpush.msra.mxu0 0.0
      %4444 = vmatpush.msra.mxu0 0.0
      %4445 = vmatpush.msra.mxu0 0.0
      %4446 = vmatpush.msra.mxu0 0.0
      %4447 = vmatpush.msra.mxu0 0.0
      %4448 = vmatpush.msra.mxu0 0.0
      %4449 = vmatpush.msra.mxu0 0.0
      %4450 = vmatpush.msra.mxu0 0.0
      %4451 = vmatpush.msra.mxu0 0.0
      %4452 = vmatpush.msra.mxu0 0.0
      %4453 = vmatpush.msra.mxu0 0.0
      %4454 = vmatpush.msra.mxu0 0.0
      %4455 = vmatpush.msra.mxu0 0.0
      %4456 = vmatpush.msra.mxu0 0.0
      %4457 = vmatpush.msra.mxu0 0.0
      %4458 = vmatpush.msra.mxu0 %v4231
      %4459 = vmatmul.f32.gmra.mxu0 %v4209
      %v4460 = vpop.f32.mrf.mxu0
      %v4461 = vadd.f32 0.0, %v4460
      %4462 = vdwg.mxu0
      %4463 = vmatpush.msra.mxu0 0.0
      %4464 = vmatpush.msra.mxu0 0.0
      %4465 = vmatpush.msra.mxu0 0.0
      %4466 = vmatpush.msra.mxu0 0.0
      %4467 = vmatpush.msra.mxu0 0.0
      %4468 = vmatpush.msra.mxu0 0.0
      %4469 = vmatpush.msra.mxu0 0.0
      %4470 = vmatpush.msra.mxu0 0.0
      %4471 = vmatpush.msra.mxu0 0.0
      %4472 = vmatpush.msra.mxu0 0.0
      %4473 = vmatpush.msra.mxu0 0.0
      %4474 = vmatpush.msra.mxu0 0.0
      %4475 = vmatpush.msra.mxu0 0.0
      %4476 = vmatpush.msra.mxu0 0.0
      %4477 = vmatpush.msra.mxu0 0.0
      %4478 = vmatpush.msra.mxu0 %v4233
      %4479 = vmatmul.f32.gmra.mxu0 %v4209
      %v4480 = vpop.f32.mrf.mxu0
      %v4481 = vadd.f32 0.0, %v4480
      %4482 = vdwg.mxu0
      %4483 = vmatpush.msra.mxu0 0.0
      %4484 = vmatpush.msra.mxu0 0.0
      %4485 = vmatpush.msra.mxu0 0.0
      %4486 = vmatpush.msra.mxu0 0.0
      %4487 = vmatpush.msra.mxu0 0.0
      %4488 = vmatpush.msra.mxu0 0.0
      %4489 = vmatpush.msra.mxu0 0.0
      %4490 = vmatpush.msra.mxu0 0.0
      %4491 = vmatpush.msra.mxu0 0.0
      %4492 = vmatpush.msra.mxu0 0.0
      %4493 = vmatpush.msra.mxu0 0.0
      %4494 = vmatpush.msra.mxu0 0.0
      %4495 = vmatpush.msra.mxu0 0.0
      %4496 = vmatpush.msra.mxu0 0.0
      %4497 = vmatpush.msra.mxu0 0.0
      %4498 = vmatpush.msra.mxu0 %v4235
      %4499 = vmatmul.f32.gmra.mxu0 %v4209
      %v4500 = vpop.f32.mrf.mxu0
      %v4501 = vadd.f32 0.0, %v4500
      %4502 = vdwg.mxu0
      %4503 = vmatpush.msra.mxu0 0.0
      %4504 = vmatpush.msra.mxu0 0.0
      %4505 = vmatpush.msra.mxu0 0.0
      %4506 = vmatpush.msra.mxu0 0.0
      %4507 = vmatpush.msra.mxu0 0.0
      %4508 = vmatpush.msra.mxu0 0.0
      %4509 = vmatpush.msra.mxu0 0.0
      %4510 = vmatpush.msra.mxu0 0.0
      %4511 = vmatpush.msra.mxu0 0.0
      %4512 = vmatpush.msra.mxu0 0.0
      %4513 = vmatpush.msra.mxu0 0.0
      %4514 = vmatpush.msra.mxu0 0.0
      %4515 = vmatpush.msra.mxu0 0.0
      %4516 = vmatpush.msra.mxu0 0.0
      %4517 = vmatpush.msra.mxu0 0.0
      %4518 = vmatpush.msra.mxu0 %v4237
      %4519 = vmatmul.f32.gmra.mxu0 %v4209
      %v4520 = vpop.f32.mrf.mxu0
      %v4521 = vadd.f32 0.0, %v4520
      %4522 = vdwg.mxu0
      %4523 = vmatpush.msra.mxu0 0.0
      %4524 = vmatpush.msra.mxu0 0.0
      %4525 = vmatpush.msra.mxu0 0.0
      %4526 = vmatpush.msra.mxu0 0.0
      %4527 = vmatpush.msra.mxu0 0.0
      %4528 = vmatpush.msra.mxu0 0.0
      %4529 = vmatpush.msra.mxu0 0.0
      %4530 = vmatpush.msra.mxu0 0.0
      %4531 = vmatpush.msra.mxu0 0.0
      %4532 = vmatpush.msra.mxu0 0.0
      %4533 = vmatpush.msra.mxu0 0.0
      %4534 = vmatpush.msra.mxu0 0.0
      %4535 = vmatpush.msra.mxu0 0.0
      %4536 = vmatpush.msra.mxu0 0.0
      %4537 = vmatpush.msra.mxu0 0.0
      %4538 = vmatpush.msra.mxu0 %v4239
      %4539 = vmatmul.f32.gmra.mxu0 %v4209
      %v4540 = vpop.f32.mrf.mxu0
      %v4541 = vadd.f32 0.0, %v4540
      %4542 = vdwg.mxu0
      %4543 = vmatpush.msra.mxu0 0.0
      %4544 = vmatpush.msra.mxu0 0.0
      %4545 = vmatpush.msra.mxu0 0.0
      %4546 = vmatpush.msra.mxu0 0.0
      %4547 = vmatpush.msra.mxu0 0.0
      %4548 = vmatpush.msra.mxu0 0.0
      %4549 = vmatpush.msra.mxu0 0.0
      %4550 = vmatpush.msra.mxu0 0.0
      %4551 = vmatpush.msra.mxu0 0.0
      %4552 = vmatpush.msra.mxu0 0.0
      %4553 = vmatpush.msra.mxu0 0.0
      %4554 = vmatpush.msra.mxu0 0.0
      %4555 = vmatpush.msra.mxu0 0.0
      %4556 = vmatpush.msra.mxu0 0.0
      %4557 = vmatpush.msra.mxu0 0.0
      %4558 = vmatpush.msra.mxu0 %v4241
      %4559 = vmatmul.f32.gmra.mxu0 %v4209
      %v4560 = vpop.f32.mrf.mxu0
      %v4561 = vadd.f32 0.0, %v4560
      %4562 = vdwg.mxu0
      %v4563 = vadd.f32 %v4093, %v4261
      %v4564 = vadd.f32 %v4094, %v4281
      %v4565 = vadd.f32 %v4095, %v4301
      %v4566 = vadd.f32 %v4096, %v4321
      %v4567 = vadd.f32 %v4097, %v4341
      %v4568 = vadd.f32 %v4098, %v4361
      %v4569 = vadd.f32 %v4099, %v4381
      %v4570 = vadd.f32 %v4100, %v4401
      %v4571 = vadd.f32 %v4101, %v4421
      %v4572 = vadd.f32 %v4102, %v4441
      %v4573 = vadd.f32 %v4103, %v4461
      %v4574 = vadd.f32 %v4104, %v4481
      %v4575 = vadd.f32 %v4105, %v4501
      %v4576 = vadd.f32 %v4106, %v4521
      %v4577 = vadd.f32 %v4107, %v4541
      %v4578 = vadd.f32 %v4108, %v4561
      %v4579 = vld [vmem:[%s3] sm:$0xff]
      %4581 = vset.pattern.permute.xlu0 0
      %4582 = vperm.xlu0 %4581, %v4579
      %v4583 = vpop.permute.xlu0 %4582
      %v4585 = vadd.f32 %v4563, %v4583
      %v4586 = vadd.f32 %v4564, %v4583
      %v4587 = vadd.f32 %v4565, %v4583
      %v4588 = vadd.f32 %v4566, %v4583
      %v4589 = vadd.f32 %v4567, %v4583
      %v4590 = vadd.f32 %v4568, %v4583
      %v4591 = vadd.f32 %v4569, %v4583
      %v4592 = vadd.f32 %v4570, %v4583
      %v4593 = vadd.f32 %v4571, %v4583
      %v4594 = vadd.f32 %v4572, %v4583
      %v4595 = vadd.f32 %v4573, %v4583
      %v4596 = vadd.f32 %v4574, %v4583
      %v4597 = vadd.f32 %v4575, %v4583
      %v4598 = vadd.f32 %v4576, %v4583
      %v4599 = vadd.f32 %v4577, %v4583
      %v4600 = vadd.f32 %v4578, %v4583
      %v4601 = vmax.f32 %v4585, 0.0
      %v4602 = vmax.f32 %v4586, 0.0
      %v4603 = vmax.f32 %v4587, 0.0
      %v4604 = vmax.f32 %v4588, 0.0
      %v4605 = vmax.f32 %v4589, 0.0
      %v4606 = vmax.f32 %v4590, 0.0
      %v4607 = vmax.f32 %v4591, 0.0
      %v4608 = vmax.f32 %v4592, 0.0
      %v4609 = vmax.f32 %v4593, 0.0
      %v4610 = vmax.f32 %v4594, 0.0
      %v4611 = vmax.f32 %v4595, 0.0
      %v4612 = vmax.f32 %v4596, 0.0
      %v4613 = vmax.f32 %v4597, 0.0
      %v4614 = vmax.f32 %v4598, 0.0
      %v4615 = vmax.f32 %v4599, 0.0
      %v4616 = vmax.f32 %v4600, 0.0
      %v4617 = vmin.f32 %v4601, 20.0
      %v4618 = vmin.f32 %v4602, 20.0
      %v4619 = vmin.f32 %v4603, 20.0
      %v4620 = vmin.f32 %v4604, 20.0
      %v4621 = vmin.f32 %v4605, 20.0
      %v4622 = vmin.f32 %v4606, 20.0
      %v4623 = vmin.f32 %v4607, 20.0
      %v4624 = vmin.f32 %v4608, 20.0
      %v4625 = vmin.f32 %v4609, 20.0
      %v4626 = vmin.f32 %v4610, 20.0
      %v4627 = vmin.f32 %v4611, 20.0
      %v4628 = vmin.f32 %v4612, 20.0
      %v4629 = vmin.f32 %v4613, 20.0
      %v4630 = vmin.f32 %v4614, 20.0
      %v4631 = vmin.f32 %v4615, 20.0
      %v4632 = vmin.f32 %v4616, 20.0
      %4633 = vst [vmem:[#allocation3] sm:$0xff] 0.0
      %4634 = vst [vmem:[#allocation3 + $0x8] sm:$0xff] 0.0
      %4635 = vst [vmem:[#allocation3 + $0x10] sm:$0xff] 0.0
      %4636 = vst [vmem:[#allocation3 + $0x18] sm:$0xff] 0.0
      %4637 = vst [vmem:[#allocation3 + $0x20] sm:$0xff] 0.0
      %4638 = vst [vmem:[#allocation3 + $0x28] sm:$0xff] 0.0
      %4639 = vst [vmem:[#allocation3 + $0x30] sm:$0xff] 0.0
      %4640 = vst [vmem:[#allocation3 + $0x38] sm:$0xff] 0.0
      %4641 = vst [vmem:[#allocation3 + $0x40] sm:$0xff] 0.0
      %4642 = vst [vmem:[#allocation3 + $0x48] sm:$0xff] 0.0
      %4643 = vst [vmem:[#allocation3 + $0x50] sm:$0xff] 0.0
      %4644 = vst [vmem:[#allocation3 + $0x58] sm:$0xff] 0.0
      %4645 = vst [vmem:[#allocation3 + $0x60] sm:$0xff] 0.0
      %4646 = vst [vmem:[#allocation3 + $0x68] sm:$0xff] 0.0
      %4647 = vst [vmem:[#allocation3 + $0x70] sm:$0xff] 0.0
      %4648 = vst [vmem:[#allocation3 + $0x78] sm:$0xff] 0.0
      %4649 = vst [vmem:[#allocation3 + $0x80] sm:$0xff] 0.0
      %4650 = vst [vmem:[#allocation3 + $0x88] sm:$0xff] 0.0
      %4651 = vst [vmem:[#allocation3 + $0x90] sm:$0xff] 0.0
      %4652 = vst [vmem:[#allocation3 + $0x8] sm:$0xff] %v4617
      %4653 = vst [vmem:[#allocation3 + $0x10] sm:$0xff] %v4618
      %4654 = vst [vmem:[#allocation3 + $0x18] sm:$0xff] %v4619
      %4655 = vst [vmem:[#allocation3 + $0x20] sm:$0xff] %v4620
      %4656 = vst [vmem:[#allocation3 + $0x28] sm:$0xff] %v4621
      %4657 = vst [vmem:[#allocation3 + $0x30] sm:$0xff] %v4622
      %4658 = vst [vmem:[#allocation3 + $0x38] sm:$0xff] %v4623
      %4659 = vst [vmem:[#allocation3 + $0x40] sm:$0xff] %v4624
      %4660 = vst [vmem:[#allocation3 + $0x48] sm:$0xff] %v4625
      %4661 = vst [vmem:[#allocation3 + $0x50] sm:$0xff] %v4626
      %4662 = vst [vmem:[#allocation3 + $0x58] sm:$0xff] %v4627
      %4663 = vst [vmem:[#allocation3 + $0x60] sm:$0xff] %v4628
      %4664 = vst [vmem:[#allocation3 + $0x68] sm:$0xff] %v4629
      %4665 = vst [vmem:[#allocation3 + $0x70] sm:$0xff] %v4630
      %4666 = vst [vmem:[#allocation3 + $0x78] sm:$0xff] %v4631
      %4667 = vst [vmem:[#allocation3 + $0x80] sm:$0xff] %v4632
      %v4668 = vld [vmem:[%s4] sm:$0xff]
      %v4669 = vld [vmem:[#allocation3] sm:$0xff]
      %v4670 = vld [vmem:[#allocation3 + $0x8] sm:$0xff]
      %v4671 = vld [vmem:[#allocation3 + $0x10] sm:$0xff]
      %v4672 = vld [vmem:[#allocation3 + $0x18] sm:$0xff]
      %v4673 = vld [vmem:[#allocation3 + $0x20] sm:$0xff]
      %v4674 = vld [vmem:[#allocation3 + $0x28] sm:$0xff]
      %v4675 = vld [vmem:[#allocation3 + $0x30] sm:$0xff]
      %v4676 = vld [vmem:[#allocation3 + $0x38] sm:$0xff]
      %v4677 = vld [vmem:[#allocation3 + $0x40] sm:$0xff]
      %v4678 = vld [vmem:[#allocation3 + $0x48] sm:$0xff]
      %v4679 = vld [vmem:[#allocation3 + $0x50] sm:$0xff]
      %v4680 = vld [vmem:[#allocation3 + $0x58] sm:$0xff]
      %v4681 = vld [vmem:[#allocation3 + $0x60] sm:$0xff]
      %v4682 = vld [vmem:[#allocation3 + $0x68] sm:$0xff]
      %v4683 = vld [vmem:[#allocation3 + $0x70] sm:$0xff]
      %v4684 = vld [vmem:[#allocation3 + $0x78] sm:$0xff]
      %s4685 = scalar_lea.vmem %s4, 8
      %v4686 = vld [vmem:[%s4685] sm:$0xff]
      %v4687 = vld [vmem:[#allocation3 + $0x80] sm:$0xff]
      %4705 = vrot.lane.b32.xlu0 %v4669, 127
      %v4706 = vpop.permute.xlu0 %4705
      %4707 = vrot.lane.b32.xlu0 %v4670, 127
      %v4708 = vpop.permute.xlu0 %4707
      %4709 = vrot.lane.b32.xlu0 %v4671, 127
      %v4710 = vpop.permute.xlu0 %4709
      %4711 = vrot.lane.b32.xlu0 %v4672, 127
      %v4712 = vpop.permute.xlu0 %4711
      %4713 = vrot.lane.b32.xlu0 %v4673, 127
      %v4714 = vpop.permute.xlu0 %4713
      %4715 = vrot.lane.b32.xlu0 %v4674, 127
      %v4716 = vpop.permute.xlu0 %4715
      %4717 = vrot.lane.b32.xlu0 %v4675, 127
      %v4718 = vpop.permute.xlu0 %4717
      %4719 = vrot.lane.b32.xlu0 %v4676, 127
      %v4720 = vpop.permute.xlu0 %4719
      %4721 = vrot.lane.b32.xlu0 %v4677, 127
      %v4722 = vpop.permute.xlu0 %4721
      %4723 = vrot.lane.b32.xlu0 %v4678, 127
      %v4724 = vpop.permute.xlu0 %4723
      %4725 = vrot.lane.b32.xlu0 %v4679, 127
      %v4726 = vpop.permute.xlu0 %4725
      %4727 = vrot.lane.b32.xlu0 %v4680, 127
      %v4728 = vpop.permute.xlu0 %4727
      %4729 = vrot.lane.b32.xlu0 %v4681, 127
      %v4730 = vpop.permute.xlu0 %4729
      %4731 = vrot.lane.b32.xlu0 %v4682, 127
      %v4732 = vpop.permute.xlu0 %4731
      %4733 = vrot.lane.b32.xlu0 %v4683, 127
      %v4734 = vpop.permute.xlu0 %4733
      %4735 = vrot.lane.b32.xlu0 %v4684, 127
      %v4736 = vpop.permute.xlu0 %4735
      %4737 = vrot.lane.b32.xlu0 %v4687, 127
      %v4738 = vpop.permute.xlu0 %4737
      %v4739 = vsel %vm640, %v4706, %v4708
      %v4740 = vsel %vm640, %v4708, %v4710
      %v4741 = vsel %vm640, %v4710, %v4712
      %v4742 = vsel %vm640, %v4712, %v4714
      %v4743 = vsel %vm640, %v4714, %v4716
      %v4744 = vsel %vm640, %v4716, %v4718
      %v4745 = vsel %vm640, %v4718, %v4720
      %v4746 = vsel %vm640, %v4720, %v4722
      %v4747 = vsel %vm640, %v4722, %v4724
      %v4748 = vsel %vm640, %v4724, %v4726
      %v4749 = vsel %vm640, %v4726, %v4728
      %v4750 = vsel %vm640, %v4728, %v4730
      %v4751 = vsel %vm640, %v4730, %v4732
      %v4752 = vsel %vm640, %v4732, %v4734
      %v4753 = vsel %vm640, %v4734, %v4736
      %v4754 = vsel %vm640, %v4736, %v4738
      %vm4771 = vcmask 64512
      %v4773 = vsel %vm4771, %v4686, 0
      %4775 = vmatpush.msra.mxu0 0.0
      %4776 = vmatpush.msra.mxu0 0.0
      %4777 = vmatpush.msra.mxu0 0.0
      %4778 = vmatpush.msra.mxu0 0.0
      %4779 = vmatpush.msra.mxu0 0.0
      %4780 = vmatpush.msra.mxu0 0.0
      %4781 = vmatpush.msra.mxu0 0.0
      %4782 = vmatpush.msra.mxu0 0.0
      %4783 = vmatpush.msra.mxu0 0.0
      %4784 = vmatpush.msra.mxu0 0.0
      %4785 = vmatpush.msra.mxu0 0.0
      %4786 = vmatpush.msra.mxu0 0.0
      %4787 = vmatpush.msra.mxu0 0.0
      %4788 = vmatpush.msra.mxu0 0.0
      %4789 = vmatpush.msra.mxu0 0.0
      %4790 = vmatpush.msra.mxu0 %v4739
      %4791 = vmatmul.f32.gmra.mxu0 %v4773
      %v4792 = vpop.f32.mrf.mxu0
      %v4793 = vadd.f32 0.0, %v4792
      %4794 = vdwg.mxu0
      %4795 = vmatpush.msra.mxu0 0.0
      %4796 = vmatpush.msra.mxu0 0.0
      %4797 = vmatpush.msra.mxu0 0.0
      %4798 = vmatpush.msra.mxu0 0.0
      %4799 = vmatpush.msra.mxu0 0.0
      %4800 = vmatpush.msra.mxu0 0.0
      %4801 = vmatpush.msra.mxu0 0.0
      %4802 = vmatpush.msra.mxu0 0.0
      %4803 = vmatpush.msra.mxu0 0.0
      %4804 = vmatpush.msra.mxu0 0.0
      %4805 = vmatpush.msra.mxu0 0.0
      %4806 = vmatpush.msra.mxu0 0.0
      %4807 = vmatpush.msra.mxu0 0.0
      %4808 = vmatpush.msra.mxu0 0.0
      %4809 = vmatpush.msra.mxu0 0.0
      %4810 = vmatpush.msra.mxu0 %v4740
      %4811 = vmatmul.f32.gmra.mxu0 %v4773
      %v4812 = vpop.f32.mrf.mxu0
      %v4813 = vadd.f32 0.0, %v4812
      %4814 = vdwg.mxu0
      %4815 = vmatpush.msra.mxu0 0.0
      %4816 = vmatpush.msra.mxu0 0.0
      %4817 = vmatpush.msra.mxu0 0.0
      %4818 = vmatpush.msra.mxu0 0.0
      %4819 = vmatpush.msra.mxu0 0.0
      %4820 = vmatpush.msra.mxu0 0.0
      %4821 = vmatpush.msra.mxu0 0.0
      %4822 = vmatpush.msra.mxu0 0.0
      %4823 = vmatpush.msra.mxu0 0.0
      %4824 = vmatpush.msra.mxu0 0.0
      %4825 = vmatpush.msra.mxu0 0.0
      %4826 = vmatpush.msra.mxu0 0.0
      %4827 = vmatpush.msra.mxu0 0.0
      %4828 = vmatpush.msra.mxu0 0.0
      %4829 = vmatpush.msra.mxu0 0.0
      %4830 = vmatpush.msra.mxu0 %v4741
      %4831 = vmatmul.f32.gmra.mxu0 %v4773
      %v4832 = vpop.f32.mrf.mxu0
      %v4833 = vadd.f32 0.0, %v4832
      %4834 = vdwg.mxu0
      %4835 = vmatpush.msra.mxu0 0.0
      %4836 = vmatpush.msra.mxu0 0.0
      %4837 = vmatpush.msra.mxu0 0.0
      %4838 = vmatpush.msra.mxu0 0.0
      %4839 = vmatpush.msra.mxu0 0.0
      %4840 = vmatpush.msra.mxu0 0.0
      %4841 = vmatpush.msra.mxu0 0.0
      %4842 = vmatpush.msra.mxu0 0.0
      %4843 = vmatpush.msra.mxu0 0.0
      %4844 = vmatpush.msra.mxu0 0.0
      %4845 = vmatpush.msra.mxu0 0.0
      %4846 = vmatpush.msra.mxu0 0.0
      %4847 = vmatpush.msra.mxu0 0.0
      %4848 = vmatpush.msra.mxu0 0.0
      %4849 = vmatpush.msra.mxu0 0.0
      %4850 = vmatpush.msra.mxu0 %v4742
      %4851 = vmatmul.f32.gmra.mxu0 %v4773
      %v4852 = vpop.f32.mrf.mxu0
      %v4853 = vadd.f32 0.0, %v4852
      %4854 = vdwg.mxu0
      %4855 = vmatpush.msra.mxu0 0.0
      %4856 = vmatpush.msra.mxu0 0.0
      %4857 = vmatpush.msra.mxu0 0.0
      %4858 = vmatpush.msra.mxu0 0.0
      %4859 = vmatpush.msra.mxu0 0.0
      %4860 = vmatpush.msra.mxu0 0.0
      %4861 = vmatpush.msra.mxu0 0.0
      %4862 = vmatpush.msra.mxu0 0.0
      %4863 = vmatpush.msra.mxu0 0.0
      %4864 = vmatpush.msra.mxu0 0.0
      %4865 = vmatpush.msra.mxu0 0.0
      %4866 = vmatpush.msra.mxu0 0.0
      %4867 = vmatpush.msra.mxu0 0.0
      %4868 = vmatpush.msra.mxu0 0.0
      %4869 = vmatpush.msra.mxu0 0.0
      %4870 = vmatpush.msra.mxu0 %v4743
      %4871 = vmatmul.f32.gmra.mxu0 %v4773
      %v4872 = vpop.f32.mrf.mxu0
      %v4873 = vadd.f32 0.0, %v4872
      %4874 = vdwg.mxu0
      %4875 = vmatpush.msra.mxu0 0.0
      %4876 = vmatpush.msra.mxu0 0.0
      %4877 = vmatpush.msra.mxu0 0.0
      %4878 = vmatpush.msra.mxu0 0.0
      %4879 = vmatpush.msra.mxu0 0.0
      %4880 = vmatpush.msra.mxu0 0.0
      %4881 = vmatpush.msra.mxu0 0.0
      %4882 = vmatpush.msra.mxu0 0.0
      %4883 = vmatpush.msra.mxu0 0.0
      %4884 = vmatpush.msra.mxu0 0.0
      %4885 = vmatpush.msra.mxu0 0.0
      %4886 = vmatpush.msra.mxu0 0.0
      %4887 = vmatpush.msra.mxu0 0.0
      %4888 = vmatpush.msra.mxu0 0.0
      %4889 = vmatpush.msra.mxu0 0.0
      %4890 = vmatpush.msra.mxu0 %v4744
      %4891 = vmatmul.f32.gmra.mxu0 %v4773
      %v4892 = vpop.f32.mrf.mxu0
      %v4893 = vadd.f32 0.0, %v4892
      %4894 = vdwg.mxu0
      %4895 = vmatpush.msra.mxu0 0.0
      %4896 = vmatpush.msra.mxu0 0.0
      %4897 = vmatpush.msra.mxu0 0.0
      %4898 = vmatpush.msra.mxu0 0.0
      %4899 = vmatpush.msra.mxu0 0.0
      %4900 = vmatpush.msra.mxu0 0.0
      %4901 = vmatpush.msra.mxu0 0.0
      %4902 = vmatpush.msra.mxu0 0.0
      %4903 = vmatpush.msra.mxu0 0.0
      %4904 = vmatpush.msra.mxu0 0.0
      %4905 = vmatpush.msra.mxu0 0.0
      %4906 = vmatpush.msra.mxu0 0.0
      %4907 = vmatpush.msra.mxu0 0.0
      %4908 = vmatpush.msra.mxu0 0.0
      %4909 = vmatpush.msra.mxu0 0.0
      %4910 = vmatpush.msra.mxu0 %v4745
      %4911 = vmatmul.f32.gmra.mxu0 %v4773
      %v4912 = vpop.f32.mrf.mxu0
      %v4913 = vadd.f32 0.0, %v4912
      %4914 = vdwg.mxu0
      %4915 = vmatpush.msra.mxu0 0.0
      %4916 = vmatpush.msra.mxu0 0.0
      %4917 = vmatpush.msra.mxu0 0.0
      %4918 = vmatpush.msra.mxu0 0.0
      %4919 = vmatpush.msra.mxu0 0.0
      %4920 = vmatpush.msra.mxu0 0.0
      %4921 = vmatpush.msra.mxu0 0.0
      %4922 = vmatpush.msra.mxu0 0.0
      %4923 = vmatpush.msra.mxu0 0.0
      %4924 = vmatpush.msra.mxu0 0.0
      %4925 = vmatpush.msra.mxu0 0.0
      %4926 = vmatpush.msra.mxu0 0.0
      %4927 = vmatpush.msra.mxu0 0.0
      %4928 = vmatpush.msra.mxu0 0.0
      %4929 = vmatpush.msra.mxu0 0.0
      %4930 = vmatpush.msra.mxu0 %v4746
      %4931 = vmatmul.f32.gmra.mxu0 %v4773
      %v4932 = vpop.f32.mrf.mxu0
      %v4933 = vadd.f32 0.0, %v4932
      %4934 = vdwg.mxu0
      %4935 = vmatpush.msra.mxu0 0.0
      %4936 = vmatpush.msra.mxu0 0.0
      %4937 = vmatpush.msra.mxu0 0.0
      %4938 = vmatpush.msra.mxu0 0.0
      %4939 = vmatpush.msra.mxu0 0.0
      %4940 = vmatpush.msra.mxu0 0.0
      %4941 = vmatpush.msra.mxu0 0.0
      %4942 = vmatpush.msra.mxu0 0.0
      %4943 = vmatpush.msra.mxu0 0.0
      %4944 = vmatpush.msra.mxu0 0.0
      %4945 = vmatpush.msra.mxu0 0.0
      %4946 = vmatpush.msra.mxu0 0.0
      %4947 = vmatpush.msra.mxu0 0.0
      %4948 = vmatpush.msra.mxu0 0.0
      %4949 = vmatpush.msra.mxu0 0.0
      %4950 = vmatpush.msra.mxu0 %v4747
      %4951 = vmatmul.f32.gmra.mxu0 %v4773
      %v4952 = vpop.f32.mrf.mxu0
      %v4953 = vadd.f32 0.0, %v4952
      %4954 = vdwg.mxu0
      %4955 = vmatpush.msra.mxu0 0.0
      %4956 = vmatpush.msra.mxu0 0.0
      %4957 = vmatpush.msra.mxu0 0.0
      %4958 = vmatpush.msra.mxu0 0.0
      %4959 = vmatpush.msra.mxu0 0.0
      %4960 = vmatpush.msra.mxu0 0.0
      %4961 = vmatpush.msra.mxu0 0.0
      %4962 = vmatpush.msra.mxu0 0.0
      %4963 = vmatpush.msra.mxu0 0.0
      %4964 = vmatpush.msra.mxu0 0.0
      %4965 = vmatpush.msra.mxu0 0.0
      %4966 = vmatpush.msra.mxu0 0.0
      %4967 = vmatpush.msra.mxu0 0.0
      %4968 = vmatpush.msra.mxu0 0.0
      %4969 = vmatpush.msra.mxu0 0.0
      %4970 = vmatpush.msra.mxu0 %v4748
      %4971 = vmatmul.f32.gmra.mxu0 %v4773
      %v4972 = vpop.f32.mrf.mxu0
      %v4973 = vadd.f32 0.0, %v4972
      %4974 = vdwg.mxu0
      %4975 = vmatpush.msra.mxu0 0.0
      %4976 = vmatpush.msra.mxu0 0.0
      %4977 = vmatpush.msra.mxu0 0.0
      %4978 = vmatpush.msra.mxu0 0.0
      %4979 = vmatpush.msra.mxu0 0.0
      %4980 = vmatpush.msra.mxu0 0.0
      %4981 = vmatpush.msra.mxu0 0.0
      %4982 = vmatpush.msra.mxu0 0.0
      %4983 = vmatpush.msra.mxu0 0.0
      %4984 = vmatpush.msra.mxu0 0.0
      %4985 = vmatpush.msra.mxu0 0.0
      %4986 = vmatpush.msra.mxu0 0.0
      %4987 = vmatpush.msra.mxu0 0.0
      %4988 = vmatpush.msra.mxu0 0.0
      %4989 = vmatpush.msra.mxu0 0.0
      %4990 = vmatpush.msra.mxu0 %v4749
      %4991 = vmatmul.f32.gmra.mxu0 %v4773
      %v4992 = vpop.f32.mrf.mxu0
      %v4993 = vadd.f32 0.0, %v4992
      %4994 = vdwg.mxu0
      %4995 = vmatpush.msra.mxu0 0.0
      %4996 = vmatpush.msra.mxu0 0.0
      %4997 = vmatpush.msra.mxu0 0.0
      %4998 = vmatpush.msra.mxu0 0.0
      %4999 = vmatpush.msra.mxu0 0.0
      %5000 = vmatpush.msra.mxu0 0.0
      %5001 = vmatpush.msra.mxu0 0.0
      %5002 = vmatpush.msra.mxu0 0.0
      %5003 = vmatpush.msra.mxu0 0.0
      %5004 = vmatpush.msra.mxu0 0.0
      %5005 = vmatpush.msra.mxu0 0.0
      %5006 = vmatpush.msra.mxu0 0.0
      %5007 = vmatpush.msra.mxu0 0.0
      %5008 = vmatpush.msra.mxu0 0.0
      %5009 = vmatpush.msra.mxu0 0.0
      %5010 = vmatpush.msra.mxu0 %v4750
      %5011 = vmatmul.f32.gmra.mxu0 %v4773
      %v5012 = vpop.f32.mrf.mxu0
      %v5013 = vadd.f32 0.0, %v5012
      %5014 = vdwg.mxu0
      %5015 = vmatpush.msra.mxu0 0.0
      %5016 = vmatpush.msra.mxu0 0.0
      %5017 = vmatpush.msra.mxu0 0.0
      %5018 = vmatpush.msra.mxu0 0.0
      %5019 = vmatpush.msra.mxu0 0.0
      %5020 = vmatpush.msra.mxu0 0.0
      %5021 = vmatpush.msra.mxu0 0.0
      %5022 = vmatpush.msra.mxu0 0.0
      %5023 = vmatpush.msra.mxu0 0.0
      %5024 = vmatpush.msra.mxu0 0.0
      %5025 = vmatpush.msra.mxu0 0.0
      %5026 = vmatpush.msra.mxu0 0.0
      %5027 = vmatpush.msra.mxu0 0.0
      %5028 = vmatpush.msra.mxu0 0.0
      %5029 = vmatpush.msra.mxu0 0.0
      %5030 = vmatpush.msra.mxu0 %v4751
      %5031 = vmatmul.f32.gmra.mxu0 %v4773
      %v5032 = vpop.f32.mrf.mxu0
      %v5033 = vadd.f32 0.0, %v5032
      %5034 = vdwg.mxu0
      %5035 = vmatpush.msra.mxu0 0.0
      %5036 = vmatpush.msra.mxu0 0.0
      %5037 = vmatpush.msra.mxu0 0.0
      %5038 = vmatpush.msra.mxu0 0.0
      %5039 = vmatpush.msra.mxu0 0.0
      %5040 = vmatpush.msra.mxu0 0.0
      %5041 = vmatpush.msra.mxu0 0.0
      %5042 = vmatpush.msra.mxu0 0.0
      %5043 = vmatpush.msra.mxu0 0.0
      %5044 = vmatpush.msra.mxu0 0.0
      %5045 = vmatpush.msra.mxu0 0.0
      %5046 = vmatpush.msra.mxu0 0.0
      %5047 = vmatpush.msra.mxu0 0.0
      %5048 = vmatpush.msra.mxu0 0.0
      %5049 = vmatpush.msra.mxu0 0.0
      %5050 = vmatpush.msra.mxu0 %v4752
      %5051 = vmatmul.f32.gmra.mxu0 %v4773
      %v5052 = vpop.f32.mrf.mxu0
      %v5053 = vadd.f32 0.0, %v5052
      %5054 = vdwg.mxu0
      %5055 = vmatpush.msra.mxu0 0.0
      %5056 = vmatpush.msra.mxu0 0.0
      %5057 = vmatpush.msra.mxu0 0.0
      %5058 = vmatpush.msra.mxu0 0.0
      %5059 = vmatpush.msra.mxu0 0.0
      %5060 = vmatpush.msra.mxu0 0.0
      %5061 = vmatpush.msra.mxu0 0.0
      %5062 = vmatpush.msra.mxu0 0.0
      %5063 = vmatpush.msra.mxu0 0.0
      %5064 = vmatpush.msra.mxu0 0.0
      %5065 = vmatpush.msra.mxu0 0.0
      %5066 = vmatpush.msra.mxu0 0.0
      %5067 = vmatpush.msra.mxu0 0.0
      %5068 = vmatpush.msra.mxu0 0.0
      %5069 = vmatpush.msra.mxu0 0.0
      %5070 = vmatpush.msra.mxu0 %v4753
      %5071 = vmatmul.f32.gmra.mxu0 %v4773
      %v5072 = vpop.f32.mrf.mxu0
      %v5073 = vadd.f32 0.0, %v5072
      %5074 = vdwg.mxu0
      %5075 = vmatpush.msra.mxu0 0.0
      %5076 = vmatpush.msra.mxu0 0.0
      %5077 = vmatpush.msra.mxu0 0.0
      %5078 = vmatpush.msra.mxu0 0.0
      %5079 = vmatpush.msra.mxu0 0.0
      %5080 = vmatpush.msra.mxu0 0.0
      %5081 = vmatpush.msra.mxu0 0.0
      %5082 = vmatpush.msra.mxu0 0.0
      %5083 = vmatpush.msra.mxu0 0.0
      %5084 = vmatpush.msra.mxu0 0.0
      %5085 = vmatpush.msra.mxu0 0.0
      %5086 = vmatpush.msra.mxu0 0.0
      %5087 = vmatpush.msra.mxu0 0.0
      %5088 = vmatpush.msra.mxu0 0.0
      %5089 = vmatpush.msra.mxu0 0.0
      %5090 = vmatpush.msra.mxu0 %v4754
      %5091 = vmatmul.f32.gmra.mxu0 %v4773
      %v5092 = vpop.f32.mrf.mxu0
      %v5093 = vadd.f32 0.0, %v5092
      %5094 = vdwg.mxu0
      %v5096 = vsel %vm4771, %v4668, 0
      %5098 = vmatpush.msra.mxu0 0.0
      %5099 = vmatpush.msra.mxu0 0.0
      %5100 = vmatpush.msra.mxu0 0.0
      %5101 = vmatpush.msra.mxu0 0.0
      %5102 = vmatpush.msra.mxu0 0.0
      %5103 = vmatpush.msra.mxu0 0.0
      %5104 = vmatpush.msra.mxu0 0.0
      %5105 = vmatpush.msra.mxu0 0.0
      %5106 = vmatpush.msra.mxu0 0.0
      %5107 = vmatpush.msra.mxu0 0.0
      %5108 = vmatpush.msra.mxu0 0.0
      %5109 = vmatpush.msra.mxu0 0.0
      %5110 = vmatpush.msra.mxu0 0.0
      %5111 = vmatpush.msra.mxu0 0.0
      %5112 = vmatpush.msra.mxu0 0.0
      %5113 = vmatpush.msra.mxu0 %v4669
      %5114 = vmatmul.f32.gmra.mxu0 %v5096
      %v5115 = vpop.f32.mrf.mxu0
      %v5116 = vadd.f32 %v4793, %v5115
      %5117 = vdwg.mxu0
      %5118 = vmatpush.msra.mxu0 0.0
      %5119 = vmatpush.msra.mxu0 0.0
      %5120 = vmatpush.msra.mxu0 0.0
      %5121 = vmatpush.msra.mxu0 0.0
      %5122 = vmatpush.msra.mxu0 0.0
      %5123 = vmatpush.msra.mxu0 0.0
      %5124 = vmatpush.msra.mxu0 0.0
      %5125 = vmatpush.msra.mxu0 0.0
      %5126 = vmatpush.msra.mxu0 0.0
      %5127 = vmatpush.msra.mxu0 0.0
      %5128 = vmatpush.msra.mxu0 0.0
      %5129 = vmatpush.msra.mxu0 0.0
      %5130 = vmatpush.msra.mxu0 0.0
      %5131 = vmatpush.msra.mxu0 0.0
      %5132 = vmatpush.msra.mxu0 0.0
      %5133 = vmatpush.msra.mxu0 %v4670
      %5134 = vmatmul.f32.gmra.mxu0 %v5096
      %v5135 = vpop.f32.mrf.mxu0
      %v5136 = vadd.f32 %v4813, %v5135
      %5137 = vdwg.mxu0
      %5138 = vmatpush.msra.mxu0 0.0
      %5139 = vmatpush.msra.mxu0 0.0
      %5140 = vmatpush.msra.mxu0 0.0
      %5141 = vmatpush.msra.mxu0 0.0
      %5142 = vmatpush.msra.mxu0 0.0
      %5143 = vmatpush.msra.mxu0 0.0
      %5144 = vmatpush.msra.mxu0 0.0
      %5145 = vmatpush.msra.mxu0 0.0
      %5146 = vmatpush.msra.mxu0 0.0
      %5147 = vmatpush.msra.mxu0 0.0
      %5148 = vmatpush.msra.mxu0 0.0
      %5149 = vmatpush.msra.mxu0 0.0
      %5150 = vmatpush.msra.mxu0 0.0
      %5151 = vmatpush.msra.mxu0 0.0
      %5152 = vmatpush.msra.mxu0 0.0
      %5153 = vmatpush.msra.mxu0 %v4671
      %5154 = vmatmul.f32.gmra.mxu0 %v5096
      %v5155 = vpop.f32.mrf.mxu0
      %v5156 = vadd.f32 %v4833, %v5155
      %5157 = vdwg.mxu0
      %5158 = vmatpush.msra.mxu0 0.0
      %5159 = vmatpush.msra.mxu0 0.0
      %5160 = vmatpush.msra.mxu0 0.0
      %5161 = vmatpush.msra.mxu0 0.0
      %5162 = vmatpush.msra.mxu0 0.0
      %5163 = vmatpush.msra.mxu0 0.0
      %5164 = vmatpush.msra.mxu0 0.0
      %5165 = vmatpush.msra.mxu0 0.0
      %5166 = vmatpush.msra.mxu0 0.0
      %5167 = vmatpush.msra.mxu0 0.0
      %5168 = vmatpush.msra.mxu0 0.0
      %5169 = vmatpush.msra.mxu0 0.0
      %5170 = vmatpush.msra.mxu0 0.0
      %5171 = vmatpush.msra.mxu0 0.0
      %5172 = vmatpush.msra.mxu0 0.0
      %5173 = vmatpush.msra.mxu0 %v4672
      %5174 = vmatmul.f32.gmra.mxu0 %v5096
      %v5175 = vpop.f32.mrf.mxu0
      %v5176 = vadd.f32 %v4853, %v5175
      %5177 = vdwg.mxu0
      %5178 = vmatpush.msra.mxu0 0.0
      %5179 = vmatpush.msra.mxu0 0.0
      %5180 = vmatpush.msra.mxu0 0.0
      %5181 = vmatpush.msra.mxu0 0.0
      %5182 = vmatpush.msra.mxu0 0.0
      %5183 = vmatpush.msra.mxu0 0.0
      %5184 = vmatpush.msra.mxu0 0.0
      %5185 = vmatpush.msra.mxu0 0.0
      %5186 = vmatpush.msra.mxu0 0.0
      %5187 = vmatpush.msra.mxu0 0.0
      %5188 = vmatpush.msra.mxu0 0.0
      %5189 = vmatpush.msra.mxu0 0.0
      %5190 = vmatpush.msra.mxu0 0.0
      %5191 = vmatpush.msra.mxu0 0.0
      %5192 = vmatpush.msra.mxu0 0.0
      %5193 = vmatpush.msra.mxu0 %v4673
      %5194 = vmatmul.f32.gmra.mxu0 %v5096
      %v5195 = vpop.f32.mrf.mxu0
      %v5196 = vadd.f32 %v4873, %v5195
      %5197 = vdwg.mxu0
      %5198 = vmatpush.msra.mxu0 0.0
      %5199 = vmatpush.msra.mxu0 0.0
      %5200 = vmatpush.msra.mxu0 0.0
      %5201 = vmatpush.msra.mxu0 0.0
      %5202 = vmatpush.msra.mxu0 0.0
      %5203 = vmatpush.msra.mxu0 0.0
      %5204 = vmatpush.msra.mxu0 0.0
      %5205 = vmatpush.msra.mxu0 0.0
      %5206 = vmatpush.msra.mxu0 0.0
      %5207 = vmatpush.msra.mxu0 0.0
      %5208 = vmatpush.msra.mxu0 0.0
      %5209 = vmatpush.msra.mxu0 0.0
      %5210 = vmatpush.msra.mxu0 0.0
      %5211 = vmatpush.msra.mxu0 0.0
      %5212 = vmatpush.msra.mxu0 0.0
      %5213 = vmatpush.msra.mxu0 %v4674
      %5214 = vmatmul.f32.gmra.mxu0 %v5096
      %v5215 = vpop.f32.mrf.mxu0
      %v5216 = vadd.f32 %v4893, %v5215
      %5217 = vdwg.mxu0
      %5218 = vmatpush.msra.mxu0 0.0
      %5219 = vmatpush.msra.mxu0 0.0
      %5220 = vmatpush.msra.mxu0 0.0
      %5221 = vmatpush.msra.mxu0 0.0
      %5222 = vmatpush.msra.mxu0 0.0
      %5223 = vmatpush.msra.mxu0 0.0
      %5224 = vmatpush.msra.mxu0 0.0
      %5225 = vmatpush.msra.mxu0 0.0
      %5226 = vmatpush.msra.mxu0 0.0
      %5227 = vmatpush.msra.mxu0 0.0
      %5228 = vmatpush.msra.mxu0 0.0
      %5229 = vmatpush.msra.mxu0 0.0
      %5230 = vmatpush.msra.mxu0 0.0
      %5231 = vmatpush.msra.mxu0 0.0
      %5232 = vmatpush.msra.mxu0 0.0
      %5233 = vmatpush.msra.mxu0 %v4675
      %5234 = vmatmul.f32.gmra.mxu0 %v5096
      %v5235 = vpop.f32.mrf.mxu0
      %v5236 = vadd.f32 %v4913, %v5235
      %5237 = vdwg.mxu0
      %5238 = vmatpush.msra.mxu0 0.0
      %5239 = vmatpush.msra.mxu0 0.0
      %5240 = vmatpush.msra.mxu0 0.0
      %5241 = vmatpush.msra.mxu0 0.0
      %5242 = vmatpush.msra.mxu0 0.0
      %5243 = vmatpush.msra.mxu0 0.0
      %5244 = vmatpush.msra.mxu0 0.0
      %5245 = vmatpush.msra.mxu0 0.0
      %5246 = vmatpush.msra.mxu0 0.0
      %5247 = vmatpush.msra.mxu0 0.0
      %5248 = vmatpush.msra.mxu0 0.0
      %5249 = vmatpush.msra.mxu0 0.0
      %5250 = vmatpush.msra.mxu0 0.0
      %5251 = vmatpush.msra.mxu0 0.0
      %5252 = vmatpush.msra.mxu0 0.0
      %5253 = vmatpush.msra.mxu0 %v4676
      %5254 = vmatmul.f32.gmra.mxu0 %v5096
      %v5255 = vpop.f32.mrf.mxu0
      %v5256 = vadd.f32 %v4933, %v5255
      %5257 = vdwg.mxu0
      %5258 = vmatpush.msra.mxu0 0.0
      %5259 = vmatpush.msra.mxu0 0.0
      %5260 = vmatpush.msra.mxu0 0.0
      %5261 = vmatpush.msra.mxu0 0.0
      %5262 = vmatpush.msra.mxu0 0.0
      %5263 = vmatpush.msra.mxu0 0.0
      %5264 = vmatpush.msra.mxu0 0.0
      %5265 = vmatpush.msra.mxu0 0.0
      %5266 = vmatpush.msra.mxu0 0.0
      %5267 = vmatpush.msra.mxu0 0.0
      %5268 = vmatpush.msra.mxu0 0.0
      %5269 = vmatpush.msra.mxu0 0.0
      %5270 = vmatpush.msra.mxu0 0.0
      %5271 = vmatpush.msra.mxu0 0.0
      %5272 = vmatpush.msra.mxu0 0.0
      %5273 = vmatpush.msra.mxu0 %v4677
      %5274 = vmatmul.f32.gmra.mxu0 %v5096
      %v5275 = vpop.f32.mrf.mxu0
      %v5276 = vadd.f32 %v4953, %v5275
      %5277 = vdwg.mxu0
      %5278 = vmatpush.msra.mxu0 0.0
      %5279 = vmatpush.msra.mxu0 0.0
      %5280 = vmatpush.msra.mxu0 0.0
      %5281 = vmatpush.msra.mxu0 0.0
      %5282 = vmatpush.msra.mxu0 0.0
      %5283 = vmatpush.msra.mxu0 0.0
      %5284 = vmatpush.msra.mxu0 0.0
      %5285 = vmatpush.msra.mxu0 0.0
      %5286 = vmatpush.msra.mxu0 0.0
      %5287 = vmatpush.msra.mxu0 0.0
      %5288 = vmatpush.msra.mxu0 0.0
      %5289 = vmatpush.msra.mxu0 0.0
      %5290 = vmatpush.msra.mxu0 0.0
      %5291 = vmatpush.msra.mxu0 0.0
      %5292 = vmatpush.msra.mxu0 0.0
      %5293 = vmatpush.msra.mxu0 %v4678
      %5294 = vmatmul.f32.gmra.mxu0 %v5096
      %v5295 = vpop.f32.mrf.mxu0
      %v5296 = vadd.f32 %v4973, %v5295
      %5297 = vdwg.mxu0
      %5298 = vmatpush.msra.mxu0 0.0
      %5299 = vmatpush.msra.mxu0 0.0
      %5300 = vmatpush.msra.mxu0 0.0
      %5301 = vmatpush.msra.mxu0 0.0
      %5302 = vmatpush.msra.mxu0 0.0
      %5303 = vmatpush.msra.mxu0 0.0
      %5304 = vmatpush.msra.mxu0 0.0
      %5305 = vmatpush.msra.mxu0 0.0
      %5306 = vmatpush.msra.mxu0 0.0
      %5307 = vmatpush.msra.mxu0 0.0
      %5308 = vmatpush.msra.mxu0 0.0
      %5309 = vmatpush.msra.mxu0 0.0
      %5310 = vmatpush.msra.mxu0 0.0
      %5311 = vmatpush.msra.mxu0 0.0
      %5312 = vmatpush.msra.mxu0 0.0
      %5313 = vmatpush.msra.mxu0 %v4679
      %5314 = vmatmul.f32.gmra.mxu0 %v5096
      %v5315 = vpop.f32.mrf.mxu0
      %v5316 = vadd.f32 %v4993, %v5315
      %5317 = vdwg.mxu0
      %5318 = vmatpush.msra.mxu0 0.0
      %5319 = vmatpush.msra.mxu0 0.0
      %5320 = vmatpush.msra.mxu0 0.0
      %5321 = vmatpush.msra.mxu0 0.0
      %5322 = vmatpush.msra.mxu0 0.0
      %5323 = vmatpush.msra.mxu0 0.0
      %5324 = vmatpush.msra.mxu0 0.0
      %5325 = vmatpush.msra.mxu0 0.0
      %5326 = vmatpush.msra.mxu0 0.0
      %5327 = vmatpush.msra.mxu0 0.0
      %5328 = vmatpush.msra.mxu0 0.0
      %5329 = vmatpush.msra.mxu0 0.0
      %5330 = vmatpush.msra.mxu0 0.0
      %5331 = vmatpush.msra.mxu0 0.0
      %5332 = vmatpush.msra.mxu0 0.0
      %5333 = vmatpush.msra.mxu0 %v4680
      %5334 = vmatmul.f32.gmra.mxu0 %v5096
      %v5335 = vpop.f32.mrf.mxu0
      %v5336 = vadd.f32 %v5013, %v5335
      %5337 = vdwg.mxu0
      %5338 = vmatpush.msra.mxu0 0.0
      %5339 = vmatpush.msra.mxu0 0.0
      %5340 = vmatpush.msra.mxu0 0.0
      %5341 = vmatpush.msra.mxu0 0.0
      %5342 = vmatpush.msra.mxu0 0.0
      %5343 = vmatpush.msra.mxu0 0.0
      %5344 = vmatpush.msra.mxu0 0.0
      %5345 = vmatpush.msra.mxu0 0.0
      %5346 = vmatpush.msra.mxu0 0.0
      %5347 = vmatpush.msra.mxu0 0.0
      %5348 = vmatpush.msra.mxu0 0.0
      %5349 = vmatpush.msra.mxu0 0.0
      %5350 = vmatpush.msra.mxu0 0.0
      %5351 = vmatpush.msra.mxu0 0.0
      %5352 = vmatpush.msra.mxu0 0.0
      %5353 = vmatpush.msra.mxu0 %v4681
      %5354 = vmatmul.f32.gmra.mxu0 %v5096
      %v5355 = vpop.f32.mrf.mxu0
      %v5356 = vadd.f32 %v5033, %v5355
      %5357 = vdwg.mxu0
      %5358 = vmatpush.msra.mxu0 0.0
      %5359 = vmatpush.msra.mxu0 0.0
      %5360 = vmatpush.msra.mxu0 0.0
      %5361 = vmatpush.msra.mxu0 0.0
      %5362 = vmatpush.msra.mxu0 0.0
      %5363 = vmatpush.msra.mxu0 0.0
      %5364 = vmatpush.msra.mxu0 0.0
      %5365 = vmatpush.msra.mxu0 0.0
      %5366 = vmatpush.msra.mxu0 0.0
      %5367 = vmatpush.msra.mxu0 0.0
      %5368 = vmatpush.msra.mxu0 0.0
      %5369 = vmatpush.msra.mxu0 0.0
      %5370 = vmatpush.msra.mxu0 0.0
      %5371 = vmatpush.msra.mxu0 0.0
      %5372 = vmatpush.msra.mxu0 0.0
      %5373 = vmatpush.msra.mxu0 %v4682
      %5374 = vmatmul.f32.gmra.mxu0 %v5096
      %v5375 = vpop.f32.mrf.mxu0
      %v5376 = vadd.f32 %v5053, %v5375
      %5377 = vdwg.mxu0
      %5378 = vmatpush.msra.mxu0 0.0
      %5379 = vmatpush.msra.mxu0 0.0
      %5380 = vmatpush.msra.mxu0 0.0
      %5381 = vmatpush.msra.mxu0 0.0
      %5382 = vmatpush.msra.mxu0 0.0
      %5383 = vmatpush.msra.mxu0 0.0
      %5384 = vmatpush.msra.mxu0 0.0
      %5385 = vmatpush.msra.mxu0 0.0
      %5386 = vmatpush.msra.mxu0 0.0
      %5387 = vmatpush.msra.mxu0 0.0
      %5388 = vmatpush.msra.mxu0 0.0
      %5389 = vmatpush.msra.mxu0 0.0
      %5390 = vmatpush.msra.mxu0 0.0
      %5391 = vmatpush.msra.mxu0 0.0
      %5392 = vmatpush.msra.mxu0 0.0
      %5393 = vmatpush.msra.mxu0 %v4683
      %5394 = vmatmul.f32.gmra.mxu0 %v5096
      %v5395 = vpop.f32.mrf.mxu0
      %v5396 = vadd.f32 %v5073, %v5395
      %5397 = vdwg.mxu0
      %5398 = vmatpush.msra.mxu0 0.0
      %5399 = vmatpush.msra.mxu0 0.0
      %5400 = vmatpush.msra.mxu0 0.0
      %5401 = vmatpush.msra.mxu0 0.0
      %5402 = vmatpush.msra.mxu0 0.0
      %5403 = vmatpush.msra.mxu0 0.0
      %5404 = vmatpush.msra.mxu0 0.0
      %5405 = vmatpush.msra.mxu0 0.0
      %5406 = vmatpush.msra.mxu0 0.0
      %5407 = vmatpush.msra.mxu0 0.0
      %5408 = vmatpush.msra.mxu0 0.0
      %5409 = vmatpush.msra.mxu0 0.0
      %5410 = vmatpush.msra.mxu0 0.0
      %5411 = vmatpush.msra.mxu0 0.0
      %5412 = vmatpush.msra.mxu0 0.0
      %5413 = vmatpush.msra.mxu0 %v4684
      %5414 = vmatmul.f32.gmra.mxu0 %v5096
      %v5415 = vpop.f32.mrf.mxu0
      %v5416 = vadd.f32 %v5093, %v5415
      %5417 = vdwg.mxu0
      %s5418 = scalar_lea.vmem %s4, 16
      %v5419 = vld [vmem:[%s5418] sm:$0xff]
      %5420 = vrot.lane.b32.xlu0 %v4669, 126
      %v5421 = vpop.permute.xlu0 %5420
      %5422 = vrot.lane.b32.xlu0 %v4670, 126
      %v5423 = vpop.permute.xlu0 %5422
      %5424 = vrot.lane.b32.xlu0 %v4671, 126
      %v5425 = vpop.permute.xlu0 %5424
      %5426 = vrot.lane.b32.xlu0 %v4672, 126
      %v5427 = vpop.permute.xlu0 %5426
      %5428 = vrot.lane.b32.xlu0 %v4673, 126
      %v5429 = vpop.permute.xlu0 %5428
      %5430 = vrot.lane.b32.xlu0 %v4674, 126
      %v5431 = vpop.permute.xlu0 %5430
      %5432 = vrot.lane.b32.xlu0 %v4675, 126
      %v5433 = vpop.permute.xlu0 %5432
      %5434 = vrot.lane.b32.xlu0 %v4676, 126
      %v5435 = vpop.permute.xlu0 %5434
      %5436 = vrot.lane.b32.xlu0 %v4677, 126
      %v5437 = vpop.permute.xlu0 %5436
      %5438 = vrot.lane.b32.xlu0 %v4678, 126
      %v5439 = vpop.permute.xlu0 %5438
      %5440 = vrot.lane.b32.xlu0 %v4679, 126
      %v5441 = vpop.permute.xlu0 %5440
      %5442 = vrot.lane.b32.xlu0 %v4680, 126
      %v5443 = vpop.permute.xlu0 %5442
      %5444 = vrot.lane.b32.xlu0 %v4681, 126
      %v5445 = vpop.permute.xlu0 %5444
      %5446 = vrot.lane.b32.xlu0 %v4682, 126
      %v5447 = vpop.permute.xlu0 %5446
      %5448 = vrot.lane.b32.xlu0 %v4683, 126
      %v5449 = vpop.permute.xlu0 %5448
      %5450 = vrot.lane.b32.xlu0 %v4684, 126
      %v5451 = vpop.permute.xlu0 %5450
      %5452 = vrot.lane.b32.xlu0 %v4687, 126
      %v5453 = vpop.permute.xlu0 %5452
      %v5454 = vsel %vm1479, %v5421, %v5423
      %v5455 = vsel %vm1479, %v5423, %v5425
      %v5456 = vsel %vm1479, %v5425, %v5427
      %v5457 = vsel %vm1479, %v5427, %v5429
      %v5458 = vsel %vm1479, %v5429, %v5431
      %v5459 = vsel %vm1479, %v5431, %v5433
      %v5460 = vsel %vm1479, %v5433, %v5435
      %v5461 = vsel %vm1479, %v5435, %v5437
      %v5462 = vsel %vm1479, %v5437, %v5439
      %v5463 = vsel %vm1479, %v5439, %v5441
      %v5464 = vsel %vm1479, %v5441, %v5443
      %v5465 = vsel %vm1479, %v5443, %v5445
      %v5466 = vsel %vm1479, %v5445, %v5447
      %v5467 = vsel %vm1479, %v5447, %v5449
      %v5468 = vsel %vm1479, %v5449, %v5451
      %v5469 = vsel %vm1479, %v5451, %v5453
      %v5487 = vsel %vm4771, %v5419, 0
      %5489 = vmatpush.msra.mxu0 0.0
      %5490 = vmatpush.msra.mxu0 0.0
      %5491 = vmatpush.msra.mxu0 0.0
      %5492 = vmatpush.msra.mxu0 0.0
      %5493 = vmatpush.msra.mxu0 0.0
      %5494 = vmatpush.msra.mxu0 0.0
      %5495 = vmatpush.msra.mxu0 0.0
      %5496 = vmatpush.msra.mxu0 0.0
      %5497 = vmatpush.msra.mxu0 0.0
      %5498 = vmatpush.msra.mxu0 0.0
      %5499 = vmatpush.msra.mxu0 0.0
      %5500 = vmatpush.msra.mxu0 0.0
      %5501 = vmatpush.msra.mxu0 0.0
      %5502 = vmatpush.msra.mxu0 0.0
      %5503 = vmatpush.msra.mxu0 0.0
      %5504 = vmatpush.msra.mxu0 %v5454
      %5505 = vmatmul.f32.gmra.mxu0 %v5487
      %v5506 = vpop.f32.mrf.mxu0
      %v5507 = vadd.f32 0.0, %v5506
      %5508 = vdwg.mxu0
      %5509 = vmatpush.msra.mxu0 0.0
      %5510 = vmatpush.msra.mxu0 0.0
      %5511 = vmatpush.msra.mxu0 0.0
      %5512 = vmatpush.msra.mxu0 0.0
      %5513 = vmatpush.msra.mxu0 0.0
      %5514 = vmatpush.msra.mxu0 0.0
      %5515 = vmatpush.msra.mxu0 0.0
      %5516 = vmatpush.msra.mxu0 0.0
      %5517 = vmatpush.msra.mxu0 0.0
      %5518 = vmatpush.msra.mxu0 0.0
      %5519 = vmatpush.msra.mxu0 0.0
      %5520 = vmatpush.msra.mxu0 0.0
      %5521 = vmatpush.msra.mxu0 0.0
      %5522 = vmatpush.msra.mxu0 0.0
      %5523 = vmatpush.msra.mxu0 0.0
      %5524 = vmatpush.msra.mxu0 %v5455
      %5525 = vmatmul.f32.gmra.mxu0 %v5487
      %v5526 = vpop.f32.mrf.mxu0
      %v5527 = vadd.f32 0.0, %v5526
      %5528 = vdwg.mxu0
      %5529 = vmatpush.msra.mxu0 0.0
      %5530 = vmatpush.msra.mxu0 0.0
      %5531 = vmatpush.msra.mxu0 0.0
      %5532 = vmatpush.msra.mxu0 0.0
      %5533 = vmatpush.msra.mxu0 0.0
      %5534 = vmatpush.msra.mxu0 0.0
      %5535 = vmatpush.msra.mxu0 0.0
      %5536 = vmatpush.msra.mxu0 0.0
      %5537 = vmatpush.msra.mxu0 0.0
      %5538 = vmatpush.msra.mxu0 0.0
      %5539 = vmatpush.msra.mxu0 0.0
      %5540 = vmatpush.msra.mxu0 0.0
      %5541 = vmatpush.msra.mxu0 0.0
      %5542 = vmatpush.msra.mxu0 0.0
      %5543 = vmatpush.msra.mxu0 0.0
      %5544 = vmatpush.msra.mxu0 %v5456
      %5545 = vmatmul.f32.gmra.mxu0 %v5487
      %v5546 = vpop.f32.mrf.mxu0
      %v5547 = vadd.f32 0.0, %v5546
      %5548 = vdwg.mxu0
      %5549 = vmatpush.msra.mxu0 0.0
      %5550 = vmatpush.msra.mxu0 0.0
      %5551 = vmatpush.msra.mxu0 0.0
      %5552 = vmatpush.msra.mxu0 0.0
      %5553 = vmatpush.msra.mxu0 0.0
      %5554 = vmatpush.msra.mxu0 0.0
      %5555 = vmatpush.msra.mxu0 0.0
      %5556 = vmatpush.msra.mxu0 0.0
      %5557 = vmatpush.msra.mxu0 0.0
      %5558 = vmatpush.msra.mxu0 0.0
      %5559 = vmatpush.msra.mxu0 0.0
      %5560 = vmatpush.msra.mxu0 0.0
      %5561 = vmatpush.msra.mxu0 0.0
      %5562 = vmatpush.msra.mxu0 0.0
      %5563 = vmatpush.msra.mxu0 0.0
      %5564 = vmatpush.msra.mxu0 %v5457
      %5565 = vmatmul.f32.gmra.mxu0 %v5487
      %v5566 = vpop.f32.mrf.mxu0
      %v5567 = vadd.f32 0.0, %v5566
      %5568 = vdwg.mxu0
      %5569 = vmatpush.msra.mxu0 0.0
      %5570 = vmatpush.msra.mxu0 0.0
      %5571 = vmatpush.msra.mxu0 0.0
      %5572 = vmatpush.msra.mxu0 0.0
      %5573 = vmatpush.msra.mxu0 0.0
      %5574 = vmatpush.msra.mxu0 0.0
      %5575 = vmatpush.msra.mxu0 0.0
      %5576 = vmatpush.msra.mxu0 0.0
      %5577 = vmatpush.msra.mxu0 0.0
      %5578 = vmatpush.msra.mxu0 0.0
      %5579 = vmatpush.msra.mxu0 0.0
      %5580 = vmatpush.msra.mxu0 0.0
      %5581 = vmatpush.msra.mxu0 0.0
      %5582 = vmatpush.msra.mxu0 0.0
      %5583 = vmatpush.msra.mxu0 0.0
      %5584 = vmatpush.msra.mxu0 %v5458
      %5585 = vmatmul.f32.gmra.mxu0 %v5487
      %v5586 = vpop.f32.mrf.mxu0
      %v5587 = vadd.f32 0.0, %v5586
      %5588 = vdwg.mxu0
      %5589 = vmatpush.msra.mxu0 0.0
      %5590 = vmatpush.msra.mxu0 0.0
      %5591 = vmatpush.msra.mxu0 0.0
      %5592 = vmatpush.msra.mxu0 0.0
      %5593 = vmatpush.msra.mxu0 0.0
      %5594 = vmatpush.msra.mxu0 0.0
      %5595 = vmatpush.msra.mxu0 0.0
      %5596 = vmatpush.msra.mxu0 0.0
      %5597 = vmatpush.msra.mxu0 0.0
      %5598 = vmatpush.msra.mxu0 0.0
      %5599 = vmatpush.msra.mxu0 0.0
      %5600 = vmatpush.msra.mxu0 0.0
      %5601 = vmatpush.msra.mxu0 0.0
      %5602 = vmatpush.msra.mxu0 0.0
      %5603 = vmatpush.msra.mxu0 0.0
      %5604 = vmatpush.msra.mxu0 %v5459
      %5605 = vmatmul.f32.gmra.mxu0 %v5487
      %v5606 = vpop.f32.mrf.mxu0
      %v5607 = vadd.f32 0.0, %v5606
      %5608 = vdwg.mxu0
      %5609 = vmatpush.msra.mxu0 0.0
      %5610 = vmatpush.msra.mxu0 0.0
      %5611 = vmatpush.msra.mxu0 0.0
      %5612 = vmatpush.msra.mxu0 0.0
      %5613 = vmatpush.msra.mxu0 0.0
      %5614 = vmatpush.msra.mxu0 0.0
      %5615 = vmatpush.msra.mxu0 0.0
      %5616 = vmatpush.msra.mxu0 0.0
      %5617 = vmatpush.msra.mxu0 0.0
      %5618 = vmatpush.msra.mxu0 0.0
      %5619 = vmatpush.msra.mxu0 0.0
      %5620 = vmatpush.msra.mxu0 0.0
      %5621 = vmatpush.msra.mxu0 0.0
      %5622 = vmatpush.msra.mxu0 0.0
      %5623 = vmatpush.msra.mxu0 0.0
      %5624 = vmatpush.msra.mxu0 %v5460
      %5625 = vmatmul.f32.gmra.mxu0 %v5487
      %v5626 = vpop.f32.mrf.mxu0
      %v5627 = vadd.f32 0.0, %v5626
      %5628 = vdwg.mxu0
      %5629 = vmatpush.msra.mxu0 0.0
      %5630 = vmatpush.msra.mxu0 0.0
      %5631 = vmatpush.msra.mxu0 0.0
      %5632 = vmatpush.msra.mxu0 0.0
      %5633 = vmatpush.msra.mxu0 0.0
      %5634 = vmatpush.msra.mxu0 0.0
      %5635 = vmatpush.msra.mxu0 0.0
      %5636 = vmatpush.msra.mxu0 0.0
      %5637 = vmatpush.msra.mxu0 0.0
      %5638 = vmatpush.msra.mxu0 0.0
      %5639 = vmatpush.msra.mxu0 0.0
      %5640 = vmatpush.msra.mxu0 0.0
      %5641 = vmatpush.msra.mxu0 0.0
      %5642 = vmatpush.msra.mxu0 0.0
      %5643 = vmatpush.msra.mxu0 0.0
      %5644 = vmatpush.msra.mxu0 %v5461
      %5645 = vmatmul.f32.gmra.mxu0 %v5487
      %v5646 = vpop.f32.mrf.mxu0
      %v5647 = vadd.f32 0.0, %v5646
      %5648 = vdwg.mxu0
      %5649 = vmatpush.msra.mxu0 0.0
      %5650 = vmatpush.msra.mxu0 0.0
      %5651 = vmatpush.msra.mxu0 0.0
      %5652 = vmatpush.msra.mxu0 0.0
      %5653 = vmatpush.msra.mxu0 0.0
      %5654 = vmatpush.msra.mxu0 0.0
      %5655 = vmatpush.msra.mxu0 0.0
      %5656 = vmatpush.msra.mxu0 0.0
      %5657 = vmatpush.msra.mxu0 0.0
      %5658 = vmatpush.msra.mxu0 0.0
      %5659 = vmatpush.msra.mxu0 0.0
      %5660 = vmatpush.msra.mxu0 0.0
      %5661 = vmatpush.msra.mxu0 0.0
      %5662 = vmatpush.msra.mxu0 0.0
      %5663 = vmatpush.msra.mxu0 0.0
      %5664 = vmatpush.msra.mxu0 %v5462
      %5665 = vmatmul.f32.gmra.mxu0 %v5487
      %v5666 = vpop.f32.mrf.mxu0
      %v5667 = vadd.f32 0.0, %v5666
      %5668 = vdwg.mxu0
      %5669 = vmatpush.msra.mxu0 0.0
      %5670 = vmatpush.msra.mxu0 0.0
      %5671 = vmatpush.msra.mxu0 0.0
      %5672 = vmatpush.msra.mxu0 0.0
      %5673 = vmatpush.msra.mxu0 0.0
      %5674 = vmatpush.msra.mxu0 0.0
      %5675 = vmatpush.msra.mxu0 0.0
      %5676 = vmatpush.msra.mxu0 0.0
      %5677 = vmatpush.msra.mxu0 0.0
      %5678 = vmatpush.msra.mxu0 0.0
      %5679 = vmatpush.msra.mxu0 0.0
      %5680 = vmatpush.msra.mxu0 0.0
      %5681 = vmatpush.msra.mxu0 0.0
      %5682 = vmatpush.msra.mxu0 0.0
      %5683 = vmatpush.msra.mxu0 0.0
      %5684 = vmatpush.msra.mxu0 %v5463
      %5685 = vmatmul.f32.gmra.mxu0 %v5487
      %v5686 = vpop.f32.mrf.mxu0
      %v5687 = vadd.f32 0.0, %v5686
      %5688 = vdwg.mxu0
      %5689 = vmatpush.msra.mxu0 0.0
      %5690 = vmatpush.msra.mxu0 0.0
      %5691 = vmatpush.msra.mxu0 0.0
      %5692 = vmatpush.msra.mxu0 0.0
      %5693 = vmatpush.msra.mxu0 0.0
      %5694 = vmatpush.msra.mxu0 0.0
      %5695 = vmatpush.msra.mxu0 0.0
      %5696 = vmatpush.msra.mxu0 0.0
      %5697 = vmatpush.msra.mxu0 0.0
      %5698 = vmatpush.msra.mxu0 0.0
      %5699 = vmatpush.msra.mxu0 0.0
      %5700 = vmatpush.msra.mxu0 0.0
      %5701 = vmatpush.msra.mxu0 0.0
      %5702 = vmatpush.msra.mxu0 0.0
      %5703 = vmatpush.msra.mxu0 0.0
      %5704 = vmatpush.msra.mxu0 %v5464
      %5705 = vmatmul.f32.gmra.mxu0 %v5487
      %v5706 = vpop.f32.mrf.mxu0
      %v5707 = vadd.f32 0.0, %v5706
      %5708 = vdwg.mxu0
      %5709 = vmatpush.msra.mxu0 0.0
      %5710 = vmatpush.msra.mxu0 0.0
      %5711 = vmatpush.msra.mxu0 0.0
      %5712 = vmatpush.msra.mxu0 0.0
      %5713 = vmatpush.msra.mxu0 0.0
      %5714 = vmatpush.msra.mxu0 0.0
      %5715 = vmatpush.msra.mxu0 0.0
      %5716 = vmatpush.msra.mxu0 0.0
      %5717 = vmatpush.msra.mxu0 0.0
      %5718 = vmatpush.msra.mxu0 0.0
      %5719 = vmatpush.msra.mxu0 0.0
      %5720 = vmatpush.msra.mxu0 0.0
      %5721 = vmatpush.msra.mxu0 0.0
      %5722 = vmatpush.msra.mxu0 0.0
      %5723 = vmatpush.msra.mxu0 0.0
      %5724 = vmatpush.msra.mxu0 %v5465
      %5725 = vmatmul.f32.gmra.mxu0 %v5487
      %v5726 = vpop.f32.mrf.mxu0
      %v5727 = vadd.f32 0.0, %v5726
      %5728 = vdwg.mxu0
      %5729 = vmatpush.msra.mxu0 0.0
      %5730 = vmatpush.msra.mxu0 0.0
      %5731 = vmatpush.msra.mxu0 0.0
      %5732 = vmatpush.msra.mxu0 0.0
      %5733 = vmatpush.msra.mxu0 0.0
      %5734 = vmatpush.msra.mxu0 0.0
      %5735 = vmatpush.msra.mxu0 0.0
      %5736 = vmatpush.msra.mxu0 0.0
      %5737 = vmatpush.msra.mxu0 0.0
      %5738 = vmatpush.msra.mxu0 0.0
      %5739 = vmatpush.msra.mxu0 0.0
      %5740 = vmatpush.msra.mxu0 0.0
      %5741 = vmatpush.msra.mxu0 0.0
      %5742 = vmatpush.msra.mxu0 0.0
      %5743 = vmatpush.msra.mxu0 0.0
      %5744 = vmatpush.msra.mxu0 %v5466
      %5745 = vmatmul.f32.gmra.mxu0 %v5487
      %v5746 = vpop.f32.mrf.mxu0
      %v5747 = vadd.f32 0.0, %v5746
      %5748 = vdwg.mxu0
      %5749 = vmatpush.msra.mxu0 0.0
      %5750 = vmatpush.msra.mxu0 0.0
      %5751 = vmatpush.msra.mxu0 0.0
      %5752 = vmatpush.msra.mxu0 0.0
      %5753 = vmatpush.msra.mxu0 0.0
      %5754 = vmatpush.msra.mxu0 0.0
      %5755 = vmatpush.msra.mxu0 0.0
      %5756 = vmatpush.msra.mxu0 0.0
      %5757 = vmatpush.msra.mxu0 0.0
      %5758 = vmatpush.msra.mxu0 0.0
      %5759 = vmatpush.msra.mxu0 0.0
      %5760 = vmatpush.msra.mxu0 0.0
      %5761 = vmatpush.msra.mxu0 0.0
      %5762 = vmatpush.msra.mxu0 0.0
      %5763 = vmatpush.msra.mxu0 0.0
      %5764 = vmatpush.msra.mxu0 %v5467
      %5765 = vmatmul.f32.gmra.mxu0 %v5487
      %v5766 = vpop.f32.mrf.mxu0
      %v5767 = vadd.f32 0.0, %v5766
      %5768 = vdwg.mxu0
      %5769 = vmatpush.msra.mxu0 0.0
      %5770 = vmatpush.msra.mxu0 0.0
      %5771 = vmatpush.msra.mxu0 0.0
      %5772 = vmatpush.msra.mxu0 0.0
      %5773 = vmatpush.msra.mxu0 0.0
      %5774 = vmatpush.msra.mxu0 0.0
      %5775 = vmatpush.msra.mxu0 0.0
      %5776 = vmatpush.msra.mxu0 0.0
      %5777 = vmatpush.msra.mxu0 0.0
      %5778 = vmatpush.msra.mxu0 0.0
      %5779 = vmatpush.msra.mxu0 0.0
      %5780 = vmatpush.msra.mxu0 0.0
      %5781 = vmatpush.msra.mxu0 0.0
      %5782 = vmatpush.msra.mxu0 0.0
      %5783 = vmatpush.msra.mxu0 0.0
      %5784 = vmatpush.msra.mxu0 %v5468
      %5785 = vmatmul.f32.gmra.mxu0 %v5487
      %v5786 = vpop.f32.mrf.mxu0
      %v5787 = vadd.f32 0.0, %v5786
      %5788 = vdwg.mxu0
      %5789 = vmatpush.msra.mxu0 0.0
      %5790 = vmatpush.msra.mxu0 0.0
      %5791 = vmatpush.msra.mxu0 0.0
      %5792 = vmatpush.msra.mxu0 0.0
      %5793 = vmatpush.msra.mxu0 0.0
      %5794 = vmatpush.msra.mxu0 0.0
      %5795 = vmatpush.msra.mxu0 0.0
      %5796 = vmatpush.msra.mxu0 0.0
      %5797 = vmatpush.msra.mxu0 0.0
      %5798 = vmatpush.msra.mxu0 0.0
      %5799 = vmatpush.msra.mxu0 0.0
      %5800 = vmatpush.msra.mxu0 0.0
      %5801 = vmatpush.msra.mxu0 0.0
      %5802 = vmatpush.msra.mxu0 0.0
      %5803 = vmatpush.msra.mxu0 0.0
      %5804 = vmatpush.msra.mxu0 %v5469
      %5805 = vmatmul.f32.gmra.mxu0 %v5487
      %v5806 = vpop.f32.mrf.mxu0
      %v5807 = vadd.f32 0.0, %v5806
      %5808 = vdwg.mxu0
      %v5809 = vadd.f32 %v5116, %v5507
      %v5810 = vadd.f32 %v5136, %v5527
      %v5811 = vadd.f32 %v5156, %v5547
      %v5812 = vadd.f32 %v5176, %v5567
      %v5813 = vadd.f32 %v5196, %v5587
      %v5814 = vadd.f32 %v5216, %v5607
      %v5815 = vadd.f32 %v5236, %v5627
      %v5816 = vadd.f32 %v5256, %v5647
      %v5817 = vadd.f32 %v5276, %v5667
      %v5818 = vadd.f32 %v5296, %v5687
      %v5819 = vadd.f32 %v5316, %v5707
      %v5820 = vadd.f32 %v5336, %v5727
      %v5821 = vadd.f32 %v5356, %v5747
      %v5822 = vadd.f32 %v5376, %v5767
      %v5823 = vadd.f32 %v5396, %v5787
      %v5824 = vadd.f32 %v5416, %v5807
      %s5825 = scalar_lea.vmem %s4, 24
      %v5826 = vld [vmem:[%s5825] sm:$0xff]
      %v5828 = vsel %vm4771, %v5826, 0
      %5830 = vmatpush.msra.mxu0 0.0
      %5831 = vmatpush.msra.mxu0 0.0
      %5832 = vmatpush.msra.mxu0 0.0
      %5833 = vmatpush.msra.mxu0 0.0
      %5834 = vmatpush.msra.mxu0 0.0
      %5835 = vmatpush.msra.mxu0 0.0
      %5836 = vmatpush.msra.mxu0 0.0
      %5837 = vmatpush.msra.mxu0 0.0
      %5838 = vmatpush.msra.mxu0 0.0
      %5839 = vmatpush.msra.mxu0 0.0
      %5840 = vmatpush.msra.mxu0 0.0
      %5841 = vmatpush.msra.mxu0 0.0
      %5842 = vmatpush.msra.mxu0 0.0
      %5843 = vmatpush.msra.mxu0 0.0
      %5844 = vmatpush.msra.mxu0 0.0
      %5845 = vmatpush.msra.mxu0 %v4670
      %5846 = vmatmul.f32.gmra.mxu0 %v5828
      %v5847 = vpop.f32.mrf.mxu0
      %v5848 = vadd.f32 0.0, %v5847
      %5849 = vdwg.mxu0
      %5850 = vmatpush.msra.mxu0 0.0
      %5851 = vmatpush.msra.mxu0 0.0
      %5852 = vmatpush.msra.mxu0 0.0
      %5853 = vmatpush.msra.mxu0 0.0
      %5854 = vmatpush.msra.mxu0 0.0
      %5855 = vmatpush.msra.mxu0 0.0
      %5856 = vmatpush.msra.mxu0 0.0
      %5857 = vmatpush.msra.mxu0 0.0
      %5858 = vmatpush.msra.mxu0 0.0
      %5859 = vmatpush.msra.mxu0 0.0
      %5860 = vmatpush.msra.mxu0 0.0
      %5861 = vmatpush.msra.mxu0 0.0
      %5862 = vmatpush.msra.mxu0 0.0
      %5863 = vmatpush.msra.mxu0 0.0
      %5864 = vmatpush.msra.mxu0 0.0
      %5865 = vmatpush.msra.mxu0 %v4671
      %5866 = vmatmul.f32.gmra.mxu0 %v5828
      %v5867 = vpop.f32.mrf.mxu0
      %v5868 = vadd.f32 0.0, %v5867
      %5869 = vdwg.mxu0
      %5870 = vmatpush.msra.mxu0 0.0
      %5871 = vmatpush.msra.mxu0 0.0
      %5872 = vmatpush.msra.mxu0 0.0
      %5873 = vmatpush.msra.mxu0 0.0
      %5874 = vmatpush.msra.mxu0 0.0
      %5875 = vmatpush.msra.mxu0 0.0
      %5876 = vmatpush.msra.mxu0 0.0
      %5877 = vmatpush.msra.mxu0 0.0
      %5878 = vmatpush.msra.mxu0 0.0
      %5879 = vmatpush.msra.mxu0 0.0
      %5880 = vmatpush.msra.mxu0 0.0
      %5881 = vmatpush.msra.mxu0 0.0
      %5882 = vmatpush.msra.mxu0 0.0
      %5883 = vmatpush.msra.mxu0 0.0
      %5884 = vmatpush.msra.mxu0 0.0
      %5885 = vmatpush.msra.mxu0 %v4672
      %5886 = vmatmul.f32.gmra.mxu0 %v5828
      %v5887 = vpop.f32.mrf.mxu0
      %v5888 = vadd.f32 0.0, %v5887
      %5889 = vdwg.mxu0
      %5890 = vmatpush.msra.mxu0 0.0
      %5891 = vmatpush.msra.mxu0 0.0
      %5892 = vmatpush.msra.mxu0 0.0
      %5893 = vmatpush.msra.mxu0 0.0
      %5894 = vmatpush.msra.mxu0 0.0
      %5895 = vmatpush.msra.mxu0 0.0
      %5896 = vmatpush.msra.mxu0 0.0
      %5897 = vmatpush.msra.mxu0 0.0
      %5898 = vmatpush.msra.mxu0 0.0
      %5899 = vmatpush.msra.mxu0 0.0
      %5900 = vmatpush.msra.mxu0 0.0
      %5901 = vmatpush.msra.mxu0 0.0
      %5902 = vmatpush.msra.mxu0 0.0
      %5903 = vmatpush.msra.mxu0 0.0
      %5904 = vmatpush.msra.mxu0 0.0
      %5905 = vmatpush.msra.mxu0 %v4673
      %5906 = vmatmul.f32.gmra.mxu0 %v5828
      %v5907 = vpop.f32.mrf.mxu0
      %v5908 = vadd.f32 0.0, %v5907
      %5909 = vdwg.mxu0
      %5910 = vmatpush.msra.mxu0 0.0
      %5911 = vmatpush.msra.mxu0 0.0
      %5912 = vmatpush.msra.mxu0 0.0
      %5913 = vmatpush.msra.mxu0 0.0
      %5914 = vmatpush.msra.mxu0 0.0
      %5915 = vmatpush.msra.mxu0 0.0
      %5916 = vmatpush.msra.mxu0 0.0
      %5917 = vmatpush.msra.mxu0 0.0
      %5918 = vmatpush.msra.mxu0 0.0
      %5919 = vmatpush.msra.mxu0 0.0
      %5920 = vmatpush.msra.mxu0 0.0
      %5921 = vmatpush.msra.mxu0 0.0
      %5922 = vmatpush.msra.mxu0 0.0
      %5923 = vmatpush.msra.mxu0 0.0
      %5924 = vmatpush.msra.mxu0 0.0
      %5925 = vmatpush.msra.mxu0 %v4674
      %5926 = vmatmul.f32.gmra.mxu0 %v5828
      %v5927 = vpop.f32.mrf.mxu0
      %v5928 = vadd.f32 0.0, %v5927
      %5929 = vdwg.mxu0
      %5930 = vmatpush.msra.mxu0 0.0
      %5931 = vmatpush.msra.mxu0 0.0
      %5932 = vmatpush.msra.mxu0 0.0
      %5933 = vmatpush.msra.mxu0 0.0
      %5934 = vmatpush.msra.mxu0 0.0
      %5935 = vmatpush.msra.mxu0 0.0
      %5936 = vmatpush.msra.mxu0 0.0
      %5937 = vmatpush.msra.mxu0 0.0
      %5938 = vmatpush.msra.mxu0 0.0
      %5939 = vmatpush.msra.mxu0 0.0
      %5940 = vmatpush.msra.mxu0 0.0
      %5941 = vmatpush.msra.mxu0 0.0
      %5942 = vmatpush.msra.mxu0 0.0
      %5943 = vmatpush.msra.mxu0 0.0
      %5944 = vmatpush.msra.mxu0 0.0
      %5945 = vmatpush.msra.mxu0 %v4675
      %5946 = vmatmul.f32.gmra.mxu0 %v5828
      %v5947 = vpop.f32.mrf.mxu0
      %v5948 = vadd.f32 0.0, %v5947
      %5949 = vdwg.mxu0
      %5950 = vmatpush.msra.mxu0 0.0
      %5951 = vmatpush.msra.mxu0 0.0
      %5952 = vmatpush.msra.mxu0 0.0
      %5953 = vmatpush.msra.mxu0 0.0
      %5954 = vmatpush.msra.mxu0 0.0
      %5955 = vmatpush.msra.mxu0 0.0
      %5956 = vmatpush.msra.mxu0 0.0
      %5957 = vmatpush.msra.mxu0 0.0
      %5958 = vmatpush.msra.mxu0 0.0
      %5959 = vmatpush.msra.mxu0 0.0
      %5960 = vmatpush.msra.mxu0 0.0
      %5961 = vmatpush.msra.mxu0 0.0
      %5962 = vmatpush.msra.mxu0 0.0
      %5963 = vmatpush.msra.mxu0 0.0
      %5964 = vmatpush.msra.mxu0 0.0
      %5965 = vmatpush.msra.mxu0 %v4676
      %5966 = vmatmul.f32.gmra.mxu0 %v5828
      %v5967 = vpop.f32.mrf.mxu0
      %v5968 = vadd.f32 0.0, %v5967
      %5969 = vdwg.mxu0
      %5970 = vmatpush.msra.mxu0 0.0
      %5971 = vmatpush.msra.mxu0 0.0
      %5972 = vmatpush.msra.mxu0 0.0
      %5973 = vmatpush.msra.mxu0 0.0
      %5974 = vmatpush.msra.mxu0 0.0
      %5975 = vmatpush.msra.mxu0 0.0
      %5976 = vmatpush.msra.mxu0 0.0
      %5977 = vmatpush.msra.mxu0 0.0
      %5978 = vmatpush.msra.mxu0 0.0
      %5979 = vmatpush.msra.mxu0 0.0
      %5980 = vmatpush.msra.mxu0 0.0
      %5981 = vmatpush.msra.mxu0 0.0
      %5982 = vmatpush.msra.mxu0 0.0
      %5983 = vmatpush.msra.mxu0 0.0
      %5984 = vmatpush.msra.mxu0 0.0
      %5985 = vmatpush.msra.mxu0 %v4677
      %5986 = vmatmul.f32.gmra.mxu0 %v5828
      %v5987 = vpop.f32.mrf.mxu0
      %v5988 = vadd.f32 0.0, %v5987
      %5989 = vdwg.mxu0
      %5990 = vmatpush.msra.mxu0 0.0
      %5991 = vmatpush.msra.mxu0 0.0
      %5992 = vmatpush.msra.mxu0 0.0
      %5993 = vmatpush.msra.mxu0 0.0
      %5994 = vmatpush.msra.mxu0 0.0
      %5995 = vmatpush.msra.mxu0 0.0
      %5996 = vmatpush.msra.mxu0 0.0
      %5997 = vmatpush.msra.mxu0 0.0
      %5998 = vmatpush.msra.mxu0 0.0
      %5999 = vmatpush.msra.mxu0 0.0
      %6000 = vmatpush.msra.mxu0 0.0
      %6001 = vmatpush.msra.mxu0 0.0
      %6002 = vmatpush.msra.mxu0 0.0
      %6003 = vmatpush.msra.mxu0 0.0
      %6004 = vmatpush.msra.mxu0 0.0
      %6005 = vmatpush.msra.mxu0 %v4678
      %6006 = vmatmul.f32.gmra.mxu0 %v5828
      %v6007 = vpop.f32.mrf.mxu0
      %v6008 = vadd.f32 0.0, %v6007
      %6009 = vdwg.mxu0
      %6010 = vmatpush.msra.mxu0 0.0
      %6011 = vmatpush.msra.mxu0 0.0
      %6012 = vmatpush.msra.mxu0 0.0
      %6013 = vmatpush.msra.mxu0 0.0
      %6014 = vmatpush.msra.mxu0 0.0
      %6015 = vmatpush.msra.mxu0 0.0
      %6016 = vmatpush.msra.mxu0 0.0
      %6017 = vmatpush.msra.mxu0 0.0
      %6018 = vmatpush.msra.mxu0 0.0
      %6019 = vmatpush.msra.mxu0 0.0
      %6020 = vmatpush.msra.mxu0 0.0
      %6021 = vmatpush.msra.mxu0 0.0
      %6022 = vmatpush.msra.mxu0 0.0
      %6023 = vmatpush.msra.mxu0 0.0
      %6024 = vmatpush.msra.mxu0 0.0
      %6025 = vmatpush.msra.mxu0 %v4679
      %6026 = vmatmul.f32.gmra.mxu0 %v5828
      %v6027 = vpop.f32.mrf.mxu0
      %v6028 = vadd.f32 0.0, %v6027
      %6029 = vdwg.mxu0
      %6030 = vmatpush.msra.mxu0 0.0
      %6031 = vmatpush.msra.mxu0 0.0
      %6032 = vmatpush.msra.mxu0 0.0
      %6033 = vmatpush.msra.mxu0 0.0
      %6034 = vmatpush.msra.mxu0 0.0
      %6035 = vmatpush.msra.mxu0 0.0
      %6036 = vmatpush.msra.mxu0 0.0
      %6037 = vmatpush.msra.mxu0 0.0
      %6038 = vmatpush.msra.mxu0 0.0
      %6039 = vmatpush.msra.mxu0 0.0
      %6040 = vmatpush.msra.mxu0 0.0
      %6041 = vmatpush.msra.mxu0 0.0
      %6042 = vmatpush.msra.mxu0 0.0
      %6043 = vmatpush.msra.mxu0 0.0
      %6044 = vmatpush.msra.mxu0 0.0
      %6045 = vmatpush.msra.mxu0 %v4680
      %6046 = vmatmul.f32.gmra.mxu0 %v5828
      %v6047 = vpop.f32.mrf.mxu0
      %v6048 = vadd.f32 0.0, %v6047
      %6049 = vdwg.mxu0
      %6050 = vmatpush.msra.mxu0 0.0
      %6051 = vmatpush.msra.mxu0 0.0
      %6052 = vmatpush.msra.mxu0 0.0
      %6053 = vmatpush.msra.mxu0 0.0
      %6054 = vmatpush.msra.mxu0 0.0
      %6055 = vmatpush.msra.mxu0 0.0
      %6056 = vmatpush.msra.mxu0 0.0
      %6057 = vmatpush.msra.mxu0 0.0
      %6058 = vmatpush.msra.mxu0 0.0
      %6059 = vmatpush.msra.mxu0 0.0
      %6060 = vmatpush.msra.mxu0 0.0
      %6061 = vmatpush.msra.mxu0 0.0
      %6062 = vmatpush.msra.mxu0 0.0
      %6063 = vmatpush.msra.mxu0 0.0
      %6064 = vmatpush.msra.mxu0 0.0
      %6065 = vmatpush.msra.mxu0 %v4681
      %6066 = vmatmul.f32.gmra.mxu0 %v5828
      %v6067 = vpop.f32.mrf.mxu0
      %v6068 = vadd.f32 0.0, %v6067
      %6069 = vdwg.mxu0
      %6070 = vmatpush.msra.mxu0 0.0
      %6071 = vmatpush.msra.mxu0 0.0
      %6072 = vmatpush.msra.mxu0 0.0
      %6073 = vmatpush.msra.mxu0 0.0
      %6074 = vmatpush.msra.mxu0 0.0
      %6075 = vmatpush.msra.mxu0 0.0
      %6076 = vmatpush.msra.mxu0 0.0
      %6077 = vmatpush.msra.mxu0 0.0
      %6078 = vmatpush.msra.mxu0 0.0
      %6079 = vmatpush.msra.mxu0 0.0
      %6080 = vmatpush.msra.mxu0 0.0
      %6081 = vmatpush.msra.mxu0 0.0
      %6082 = vmatpush.msra.mxu0 0.0
      %6083 = vmatpush.msra.mxu0 0.0
      %6084 = vmatpush.msra.mxu0 0.0
      %6085 = vmatpush.msra.mxu0 %v4682
      %6086 = vmatmul.f32.gmra.mxu0 %v5828
      %v6087 = vpop.f32.mrf.mxu0
      %v6088 = vadd.f32 0.0, %v6087
      %6089 = vdwg.mxu0
      %6090 = vmatpush.msra.mxu0 0.0
      %6091 = vmatpush.msra.mxu0 0.0
      %6092 = vmatpush.msra.mxu0 0.0
      %6093 = vmatpush.msra.mxu0 0.0
      %6094 = vmatpush.msra.mxu0 0.0
      %6095 = vmatpush.msra.mxu0 0.0
      %6096 = vmatpush.msra.mxu0 0.0
      %6097 = vmatpush.msra.mxu0 0.0
      %6098 = vmatpush.msra.mxu0 0.0
      %6099 = vmatpush.msra.mxu0 0.0
      %6100 = vmatpush.msra.mxu0 0.0
      %6101 = vmatpush.msra.mxu0 0.0
      %6102 = vmatpush.msra.mxu0 0.0
      %6103 = vmatpush.msra.mxu0 0.0
      %6104 = vmatpush.msra.mxu0 0.0
      %6105 = vmatpush.msra.mxu0 %v4683
      %6106 = vmatmul.f32.gmra.mxu0 %v5828
      %v6107 = vpop.f32.mrf.mxu0
      %v6108 = vadd.f32 0.0, %v6107
      %6109 = vdwg.mxu0
      %6110 = vmatpush.msra.mxu0 0.0
      %6111 = vmatpush.msra.mxu0 0.0
      %6112 = vmatpush.msra.mxu0 0.0
      %6113 = vmatpush.msra.mxu0 0.0
      %6114 = vmatpush.msra.mxu0 0.0
      %6115 = vmatpush.msra.mxu0 0.0
      %6116 = vmatpush.msra.mxu0 0.0
      %6117 = vmatpush.msra.mxu0 0.0
      %6118 = vmatpush.msra.mxu0 0.0
      %6119 = vmatpush.msra.mxu0 0.0
      %6120 = vmatpush.msra.mxu0 0.0
      %6121 = vmatpush.msra.mxu0 0.0
      %6122 = vmatpush.msra.mxu0 0.0
      %6123 = vmatpush.msra.mxu0 0.0
      %6124 = vmatpush.msra.mxu0 0.0
      %6125 = vmatpush.msra.mxu0 %v4684
      %6126 = vmatmul.f32.gmra.mxu0 %v5828
      %v6127 = vpop.f32.mrf.mxu0
      %v6128 = vadd.f32 0.0, %v6127
      %6129 = vdwg.mxu0
      %6130 = vmatpush.msra.mxu0 0.0
      %6131 = vmatpush.msra.mxu0 0.0
      %6132 = vmatpush.msra.mxu0 0.0
      %6133 = vmatpush.msra.mxu0 0.0
      %6134 = vmatpush.msra.mxu0 0.0
      %6135 = vmatpush.msra.mxu0 0.0
      %6136 = vmatpush.msra.mxu0 0.0
      %6137 = vmatpush.msra.mxu0 0.0
      %6138 = vmatpush.msra.mxu0 0.0
      %6139 = vmatpush.msra.mxu0 0.0
      %6140 = vmatpush.msra.mxu0 0.0
      %6141 = vmatpush.msra.mxu0 0.0
      %6142 = vmatpush.msra.mxu0 0.0
      %6143 = vmatpush.msra.mxu0 0.0
      %6144 = vmatpush.msra.mxu0 0.0
      %6145 = vmatpush.msra.mxu0 %v4687
      %6146 = vmatmul.f32.gmra.mxu0 %v5828
      %v6147 = vpop.f32.mrf.mxu0
      %v6148 = vadd.f32 0.0, %v6147
      %6149 = vdwg.mxu0
      %v6150 = vadd.f32 %v5809, %v5848
      %v6151 = vadd.f32 %v5810, %v5868
      %v6152 = vadd.f32 %v5811, %v5888
      %v6153 = vadd.f32 %v5812, %v5908
      %v6154 = vadd.f32 %v5813, %v5928
      %v6155 = vadd.f32 %v5814, %v5948
      %v6156 = vadd.f32 %v5815, %v5968
      %v6157 = vadd.f32 %v5816, %v5988
      %v6158 = vadd.f32 %v5817, %v6008
      %v6159 = vadd.f32 %v5818, %v6028
      %v6160 = vadd.f32 %v5819, %v6048
      %v6161 = vadd.f32 %v5820, %v6068
      %v6162 = vadd.f32 %v5821, %v6088
      %v6163 = vadd.f32 %v5822, %v6108
      %v6164 = vadd.f32 %v5823, %v6128
      %v6165 = vadd.f32 %v5824, %v6148
      %s6166 = scalar_lea.vmem %s4, 32
      %v6167 = vld [vmem:[%s6166] sm:$0xff]
      %v6168 = vld [vmem:[#allocation3 + $0x8] sm:$0xff]
      %v6169 = vld [vmem:[#allocation3 + $0x10] sm:$0xff]
      %v6170 = vld [vmem:[#allocation3 + $0x18] sm:$0xff]
      %v6171 = vld [vmem:[#allocation3 + $0x20] sm:$0xff]
      %v6172 = vld [vmem:[#allocation3 + $0x28] sm:$0xff]
      %v6173 = vld [vmem:[#allocation3 + $0x30] sm:$0xff]
      %v6174 = vld [vmem:[#allocation3 + $0x38] sm:$0xff]
      %v6175 = vld [vmem:[#allocation3 + $0x40] sm:$0xff]
      %v6176 = vld [vmem:[#allocation3 + $0x48] sm:$0xff]
      %v6177 = vld [vmem:[#allocation3 + $0x50] sm:$0xff]
      %v6178 = vld [vmem:[#allocation3 + $0x58] sm:$0xff]
      %v6179 = vld [vmem:[#allocation3 + $0x60] sm:$0xff]
      %v6180 = vld [vmem:[#allocation3 + $0x68] sm:$0xff]
      %v6181 = vld [vmem:[#allocation3 + $0x70] sm:$0xff]
      %v6182 = vld [vmem:[#allocation3 + $0x78] sm:$0xff]
      %v6183 = vld [vmem:[#allocation3 + $0x80] sm:$0xff]
      %v6184 = vld [vmem:[#allocation3 + $0x88] sm:$0xff]
      %6202 = vrot.lane.b32.xlu0 %v6168, 127
      %v6203 = vpop.permute.xlu0 %6202
      %6204 = vrot.lane.b32.xlu0 %v6169, 127
      %v6205 = vpop.permute.xlu0 %6204
      %6206 = vrot.lane.b32.xlu0 %v6170, 127
      %v6207 = vpop.permute.xlu0 %6206
      %6208 = vrot.lane.b32.xlu0 %v6171, 127
      %v6209 = vpop.permute.xlu0 %6208
      %6210 = vrot.lane.b32.xlu0 %v6172, 127
      %v6211 = vpop.permute.xlu0 %6210
      %6212 = vrot.lane.b32.xlu0 %v6173, 127
      %v6213 = vpop.permute.xlu0 %6212
      %6214 = vrot.lane.b32.xlu0 %v6174, 127
      %v6215 = vpop.permute.xlu0 %6214
      %6216 = vrot.lane.b32.xlu0 %v6175, 127
      %v6217 = vpop.permute.xlu0 %6216
      %6218 = vrot.lane.b32.xlu0 %v6176, 127
      %v6219 = vpop.permute.xlu0 %6218
      %6220 = vrot.lane.b32.xlu0 %v6177, 127
      %v6221 = vpop.permute.xlu0 %6220
      %6222 = vrot.lane.b32.xlu0 %v6178, 127
      %v6223 = vpop.permute.xlu0 %6222
      %6224 = vrot.lane.b32.xlu0 %v6179, 127
      %v6225 = vpop.permute.xlu0 %6224
      %6226 = vrot.lane.b32.xlu0 %v6180, 127
      %v6227 = vpop.permute.xlu0 %6226
      %6228 = vrot.lane.b32.xlu0 %v6181, 127
      %v6229 = vpop.permute.xlu0 %6228
      %6230 = vrot.lane.b32.xlu0 %v6182, 127
      %v6231 = vpop.permute.xlu0 %6230
      %6232 = vrot.lane.b32.xlu0 %v6183, 127
      %v6233 = vpop.permute.xlu0 %6232
      %6234 = vrot.lane.b32.xlu0 %v6184, 127
      %v6235 = vpop.permute.xlu0 %6234
      %v6236 = vsel %vm640, %v6203, %v6205
      %v6237 = vsel %vm640, %v6205, %v6207
      %v6238 = vsel %vm640, %v6207, %v6209
      %v6239 = vsel %vm640, %v6209, %v6211
      %v6240 = vsel %vm640, %v6211, %v6213
      %v6241 = vsel %vm640, %v6213, %v6215
      %v6242 = vsel %vm640, %v6215, %v6217
      %v6243 = vsel %vm640, %v6217, %v6219
      %v6244 = vsel %vm640, %v6219, %v6221
      %v6245 = vsel %vm640, %v6221, %v6223
      %v6246 = vsel %vm640, %v6223, %v6225
      %v6247 = vsel %vm640, %v6225, %v6227
      %v6248 = vsel %vm640, %v6227, %v6229
      %v6249 = vsel %vm640, %v6229, %v6231
      %v6250 = vsel %vm640, %v6231, %v6233
      %v6251 = vsel %vm640, %v6233, %v6235
      %v6269 = vsel %vm4771, %v6167, 0
      %6271 = vmatpush.msra.mxu0 0.0
      %6272 = vmatpush.msra.mxu0 0.0
      %6273 = vmatpush.msra.mxu0 0.0
      %6274 = vmatpush.msra.mxu0 0.0
      %6275 = vmatpush.msra.mxu0 0.0
      %6276 = vmatpush.msra.mxu0 0.0
      %6277 = vmatpush.msra.mxu0 0.0
      %6278 = vmatpush.msra.mxu0 0.0
      %6279 = vmatpush.msra.mxu0 0.0
      %6280 = vmatpush.msra.mxu0 0.0
      %6281 = vmatpush.msra.mxu0 0.0
      %6282 = vmatpush.msra.mxu0 0.0
      %6283 = vmatpush.msra.mxu0 0.0
      %6284 = vmatpush.msra.mxu0 0.0
      %6285 = vmatpush.msra.mxu0 0.0
      %6286 = vmatpush.msra.mxu0 %v6236
      %6287 = vmatmul.f32.gmra.mxu0 %v6269
      %v6288 = vpop.f32.mrf.mxu0
      %v6289 = vadd.f32 0.0, %v6288
      %6290 = vdwg.mxu0
      %6291 = vmatpush.msra.mxu0 0.0
      %6292 = vmatpush.msra.mxu0 0.0
      %6293 = vmatpush.msra.mxu0 0.0
      %6294 = vmatpush.msra.mxu0 0.0
      %6295 = vmatpush.msra.mxu0 0.0
      %6296 = vmatpush.msra.mxu0 0.0
      %6297 = vmatpush.msra.mxu0 0.0
      %6298 = vmatpush.msra.mxu0 0.0
      %6299 = vmatpush.msra.mxu0 0.0
      %6300 = vmatpush.msra.mxu0 0.0
      %6301 = vmatpush.msra.mxu0 0.0
      %6302 = vmatpush.msra.mxu0 0.0
      %6303 = vmatpush.msra.mxu0 0.0
      %6304 = vmatpush.msra.mxu0 0.0
      %6305 = vmatpush.msra.mxu0 0.0
      %6306 = vmatpush.msra.mxu0 %v6237
      %6307 = vmatmul.f32.gmra.mxu0 %v6269
      %v6308 = vpop.f32.mrf.mxu0
      %v6309 = vadd.f32 0.0, %v6308
      %6310 = vdwg.mxu0
      %6311 = vmatpush.msra.mxu0 0.0
      %6312 = vmatpush.msra.mxu0 0.0
      %6313 = vmatpush.msra.mxu0 0.0
      %6314 = vmatpush.msra.mxu0 0.0
      %6315 = vmatpush.msra.mxu0 0.0
      %6316 = vmatpush.msra.mxu0 0.0
      %6317 = vmatpush.msra.mxu0 0.0
      %6318 = vmatpush.msra.mxu0 0.0
      %6319 = vmatpush.msra.mxu0 0.0
      %6320 = vmatpush.msra.mxu0 0.0
      %6321 = vmatpush.msra.mxu0 0.0
      %6322 = vmatpush.msra.mxu0 0.0
      %6323 = vmatpush.msra.mxu0 0.0
      %6324 = vmatpush.msra.mxu0 0.0
      %6325 = vmatpush.msra.mxu0 0.0
      %6326 = vmatpush.msra.mxu0 %v6238
      %6327 = vmatmul.f32.gmra.mxu0 %v6269
      %v6328 = vpop.f32.mrf.mxu0
      %v6329 = vadd.f32 0.0, %v6328
      %6330 = vdwg.mxu0
      %6331 = vmatpush.msra.mxu0 0.0
      %6332 = vmatpush.msra.mxu0 0.0
      %6333 = vmatpush.msra.mxu0 0.0
      %6334 = vmatpush.msra.mxu0 0.0
      %6335 = vmatpush.msra.mxu0 0.0
      %6336 = vmatpush.msra.mxu0 0.0
      %6337 = vmatpush.msra.mxu0 0.0
      %6338 = vmatpush.msra.mxu0 0.0
      %6339 = vmatpush.msra.mxu0 0.0
      %6340 = vmatpush.msra.mxu0 0.0
      %6341 = vmatpush.msra.mxu0 0.0
      %6342 = vmatpush.msra.mxu0 0.0
      %6343 = vmatpush.msra.mxu0 0.0
      %6344 = vmatpush.msra.mxu0 0.0
      %6345 = vmatpush.msra.mxu0 0.0
      %6346 = vmatpush.msra.mxu0 %v6239
      %6347 = vmatmul.f32.gmra.mxu0 %v6269
      %v6348 = vpop.f32.mrf.mxu0
      %v6349 = vadd.f32 0.0, %v6348
      %6350 = vdwg.mxu0
      %6351 = vmatpush.msra.mxu0 0.0
      %6352 = vmatpush.msra.mxu0 0.0
      %6353 = vmatpush.msra.mxu0 0.0
      %6354 = vmatpush.msra.mxu0 0.0
      %6355 = vmatpush.msra.mxu0 0.0
      %6356 = vmatpush.msra.mxu0 0.0
      %6357 = vmatpush.msra.mxu0 0.0
      %6358 = vmatpush.msra.mxu0 0.0
      %6359 = vmatpush.msra.mxu0 0.0
      %6360 = vmatpush.msra.mxu0 0.0
      %6361 = vmatpush.msra.mxu0 0.0
      %6362 = vmatpush.msra.mxu0 0.0
      %6363 = vmatpush.msra.mxu0 0.0
      %6364 = vmatpush.msra.mxu0 0.0
      %6365 = vmatpush.msra.mxu0 0.0
      %6366 = vmatpush.msra.mxu0 %v6240
      %6367 = vmatmul.f32.gmra.mxu0 %v6269
      %v6368 = vpop.f32.mrf.mxu0
      %v6369 = vadd.f32 0.0, %v6368
      %6370 = vdwg.mxu0
      %6371 = vmatpush.msra.mxu0 0.0
      %6372 = vmatpush.msra.mxu0 0.0
      %6373 = vmatpush.msra.mxu0 0.0
      %6374 = vmatpush.msra.mxu0 0.0
      %6375 = vmatpush.msra.mxu0 0.0
      %6376 = vmatpush.msra.mxu0 0.0
      %6377 = vmatpush.msra.mxu0 0.0
      %6378 = vmatpush.msra.mxu0 0.0
      %6379 = vmatpush.msra.mxu0 0.0
      %6380 = vmatpush.msra.mxu0 0.0
      %6381 = vmatpush.msra.mxu0 0.0
      %6382 = vmatpush.msra.mxu0 0.0
      %6383 = vmatpush.msra.mxu0 0.0
      %6384 = vmatpush.msra.mxu0 0.0
      %6385 = vmatpush.msra.mxu0 0.0
      %6386 = vmatpush.msra.mxu0 %v6241
      %6387 = vmatmul.f32.gmra.mxu0 %v6269
      %v6388 = vpop.f32.mrf.mxu0
      %v6389 = vadd.f32 0.0, %v6388
      %6390 = vdwg.mxu0
      %6391 = vmatpush.msra.mxu0 0.0
      %6392 = vmatpush.msra.mxu0 0.0
      %6393 = vmatpush.msra.mxu0 0.0
      %6394 = vmatpush.msra.mxu0 0.0
      %6395 = vmatpush.msra.mxu0 0.0
      %6396 = vmatpush.msra.mxu0 0.0
      %6397 = vmatpush.msra.mxu0 0.0
      %6398 = vmatpush.msra.mxu0 0.0
      %6399 = vmatpush.msra.mxu0 0.0
      %6400 = vmatpush.msra.mxu0 0.0
      %6401 = vmatpush.msra.mxu0 0.0
      %6402 = vmatpush.msra.mxu0 0.0
      %6403 = vmatpush.msra.mxu0 0.0
      %6404 = vmatpush.msra.mxu0 0.0
      %6405 = vmatpush.msra.mxu0 0.0
      %6406 = vmatpush.msra.mxu0 %v6242
      %6407 = vmatmul.f32.gmra.mxu0 %v6269
      %v6408 = vpop.f32.mrf.mxu0
      %v6409 = vadd.f32 0.0, %v6408
      %6410 = vdwg.mxu0
      %6411 = vmatpush.msra.mxu0 0.0
      %6412 = vmatpush.msra.mxu0 0.0
      %6413 = vmatpush.msra.mxu0 0.0
      %6414 = vmatpush.msra.mxu0 0.0
      %6415 = vmatpush.msra.mxu0 0.0
      %6416 = vmatpush.msra.mxu0 0.0
      %6417 = vmatpush.msra.mxu0 0.0
      %6418 = vmatpush.msra.mxu0 0.0
      %6419 = vmatpush.msra.mxu0 0.0
      %6420 = vmatpush.msra.mxu0 0.0
      %6421 = vmatpush.msra.mxu0 0.0
      %6422 = vmatpush.msra.mxu0 0.0
      %6423 = vmatpush.msra.mxu0 0.0
      %6424 = vmatpush.msra.mxu0 0.0
      %6425 = vmatpush.msra.mxu0 0.0
      %6426 = vmatpush.msra.mxu0 %v6243
      %6427 = vmatmul.f32.gmra.mxu0 %v6269
      %v6428 = vpop.f32.mrf.mxu0
      %v6429 = vadd.f32 0.0, %v6428
      %6430 = vdwg.mxu0
      %6431 = vmatpush.msra.mxu0 0.0
      %6432 = vmatpush.msra.mxu0 0.0
      %6433 = vmatpush.msra.mxu0 0.0
      %6434 = vmatpush.msra.mxu0 0.0
      %6435 = vmatpush.msra.mxu0 0.0
      %6436 = vmatpush.msra.mxu0 0.0
      %6437 = vmatpush.msra.mxu0 0.0
      %6438 = vmatpush.msra.mxu0 0.0
      %6439 = vmatpush.msra.mxu0 0.0
      %6440 = vmatpush.msra.mxu0 0.0
      %6441 = vmatpush.msra.mxu0 0.0
      %6442 = vmatpush.msra.mxu0 0.0
      %6443 = vmatpush.msra.mxu0 0.0
      %6444 = vmatpush.msra.mxu0 0.0
      %6445 = vmatpush.msra.mxu0 0.0
      %6446 = vmatpush.msra.mxu0 %v6244
      %6447 = vmatmul.f32.gmra.mxu0 %v6269
      %v6448 = vpop.f32.mrf.mxu0
      %v6449 = vadd.f32 0.0, %v6448
      %6450 = vdwg.mxu0
      %6451 = vmatpush.msra.mxu0 0.0
      %6452 = vmatpush.msra.mxu0 0.0
      %6453 = vmatpush.msra.mxu0 0.0
      %6454 = vmatpush.msra.mxu0 0.0
      %6455 = vmatpush.msra.mxu0 0.0
      %6456 = vmatpush.msra.mxu0 0.0
      %6457 = vmatpush.msra.mxu0 0.0
      %6458 = vmatpush.msra.mxu0 0.0
      %6459 = vmatpush.msra.mxu0 0.0
      %6460 = vmatpush.msra.mxu0 0.0
      %6461 = vmatpush.msra.mxu0 0.0
      %6462 = vmatpush.msra.mxu0 0.0
      %6463 = vmatpush.msra.mxu0 0.0
      %6464 = vmatpush.msra.mxu0 0.0
      %6465 = vmatpush.msra.mxu0 0.0
      %6466 = vmatpush.msra.mxu0 %v6245
      %6467 = vmatmul.f32.gmra.mxu0 %v6269
      %v6468 = vpop.f32.mrf.mxu0
      %v6469 = vadd.f32 0.0, %v6468
      %6470 = vdwg.mxu0
      %6471 = vmatpush.msra.mxu0 0.0
      %6472 = vmatpush.msra.mxu0 0.0
      %6473 = vmatpush.msra.mxu0 0.0
      %6474 = vmatpush.msra.mxu0 0.0
      %6475 = vmatpush.msra.mxu0 0.0
      %6476 = vmatpush.msra.mxu0 0.0
      %6477 = vmatpush.msra.mxu0 0.0
      %6478 = vmatpush.msra.mxu0 0.0
      %6479 = vmatpush.msra.mxu0 0.0
      %6480 = vmatpush.msra.mxu0 0.0
      %6481 = vmatpush.msra.mxu0 0.0
      %6482 = vmatpush.msra.mxu0 0.0
      %6483 = vmatpush.msra.mxu0 0.0
      %6484 = vmatpush.msra.mxu0 0.0
      %6485 = vmatpush.msra.mxu0 0.0
      %6486 = vmatpush.msra.mxu0 %v6246
      %6487 = vmatmul.f32.gmra.mxu0 %v6269
      %v6488 = vpop.f32.mrf.mxu0
      %v6489 = vadd.f32 0.0, %v6488
      %6490 = vdwg.mxu0
      %6491 = vmatpush.msra.mxu0 0.0
      %6492 = vmatpush.msra.mxu0 0.0
      %6493 = vmatpush.msra.mxu0 0.0
      %6494 = vmatpush.msra.mxu0 0.0
      %6495 = vmatpush.msra.mxu0 0.0
      %6496 = vmatpush.msra.mxu0 0.0
      %6497 = vmatpush.msra.mxu0 0.0
      %6498 = vmatpush.msra.mxu0 0.0
      %6499 = vmatpush.msra.mxu0 0.0
      %6500 = vmatpush.msra.mxu0 0.0
      %6501 = vmatpush.msra.mxu0 0.0
      %6502 = vmatpush.msra.mxu0 0.0
      %6503 = vmatpush.msra.mxu0 0.0
      %6504 = vmatpush.msra.mxu0 0.0
      %6505 = vmatpush.msra.mxu0 0.0
      %6506 = vmatpush.msra.mxu0 %v6247
      %6507 = vmatmul.f32.gmra.mxu0 %v6269
      %v6508 = vpop.f32.mrf.mxu0
      %v6509 = vadd.f32 0.0, %v6508
      %6510 = vdwg.mxu0
      %6511 = vmatpush.msra.mxu0 0.0
      %6512 = vmatpush.msra.mxu0 0.0
      %6513 = vmatpush.msra.mxu0 0.0
      %6514 = vmatpush.msra.mxu0 0.0
      %6515 = vmatpush.msra.mxu0 0.0
      %6516 = vmatpush.msra.mxu0 0.0
      %6517 = vmatpush.msra.mxu0 0.0
      %6518 = vmatpush.msra.mxu0 0.0
      %6519 = vmatpush.msra.mxu0 0.0
      %6520 = vmatpush.msra.mxu0 0.0
      %6521 = vmatpush.msra.mxu0 0.0
      %6522 = vmatpush.msra.mxu0 0.0
      %6523 = vmatpush.msra.mxu0 0.0
      %6524 = vmatpush.msra.mxu0 0.0
      %6525 = vmatpush.msra.mxu0 0.0
      %6526 = vmatpush.msra.mxu0 %v6248
      %6527 = vmatmul.f32.gmra.mxu0 %v6269
      %v6528 = vpop.f32.mrf.mxu0
      %v6529 = vadd.f32 0.0, %v6528
      %6530 = vdwg.mxu0
      %6531 = vmatpush.msra.mxu0 0.0
      %6532 = vmatpush.msra.mxu0 0.0
      %6533 = vmatpush.msra.mxu0 0.0
      %6534 = vmatpush.msra.mxu0 0.0
      %6535 = vmatpush.msra.mxu0 0.0
      %6536 = vmatpush.msra.mxu0 0.0
      %6537 = vmatpush.msra.mxu0 0.0
      %6538 = vmatpush.msra.mxu0 0.0
      %6539 = vmatpush.msra.mxu0 0.0
      %6540 = vmatpush.msra.mxu0 0.0
      %6541 = vmatpush.msra.mxu0 0.0
      %6542 = vmatpush.msra.mxu0 0.0
      %6543 = vmatpush.msra.mxu0 0.0
      %6544 = vmatpush.msra.mxu0 0.0
      %6545 = vmatpush.msra.mxu0 0.0
      %6546 = vmatpush.msra.mxu0 %v6249
      %6547 = vmatmul.f32.gmra.mxu0 %v6269
      %v6548 = vpop.f32.mrf.mxu0
      %v6549 = vadd.f32 0.0, %v6548
      %6550 = vdwg.mxu0
      %6551 = vmatpush.msra.mxu0 0.0
      %6552 = vmatpush.msra.mxu0 0.0
      %6553 = vmatpush.msra.mxu0 0.0
      %6554 = vmatpush.msra.mxu0 0.0
      %6555 = vmatpush.msra.mxu0 0.0
      %6556 = vmatpush.msra.mxu0 0.0
      %6557 = vmatpush.msra.mxu0 0.0
      %6558 = vmatpush.msra.mxu0 0.0
      %6559 = vmatpush.msra.mxu0 0.0
      %6560 = vmatpush.msra.mxu0 0.0
      %6561 = vmatpush.msra.mxu0 0.0
      %6562 = vmatpush.msra.mxu0 0.0
      %6563 = vmatpush.msra.mxu0 0.0
      %6564 = vmatpush.msra.mxu0 0.0
      %6565 = vmatpush.msra.mxu0 0.0
      %6566 = vmatpush.msra.mxu0 %v6250
      %6567 = vmatmul.f32.gmra.mxu0 %v6269
      %v6568 = vpop.f32.mrf.mxu0
      %v6569 = vadd.f32 0.0, %v6568
      %6570 = vdwg.mxu0
      %6571 = vmatpush.msra.mxu0 0.0
      %6572 = vmatpush.msra.mxu0 0.0
      %6573 = vmatpush.msra.mxu0 0.0
      %6574 = vmatpush.msra.mxu0 0.0
      %6575 = vmatpush.msra.mxu0 0.0
      %6576 = vmatpush.msra.mxu0 0.0
      %6577 = vmatpush.msra.mxu0 0.0
      %6578 = vmatpush.msra.mxu0 0.0
      %6579 = vmatpush.msra.mxu0 0.0
      %6580 = vmatpush.msra.mxu0 0.0
      %6581 = vmatpush.msra.mxu0 0.0
      %6582 = vmatpush.msra.mxu0 0.0
      %6583 = vmatpush.msra.mxu0 0.0
      %6584 = vmatpush.msra.mxu0 0.0
      %6585 = vmatpush.msra.mxu0 0.0
      %6586 = vmatpush.msra.mxu0 %v6251
      %6587 = vmatmul.f32.gmra.mxu0 %v6269
      %v6588 = vpop.f32.mrf.mxu0
      %v6589 = vadd.f32 0.0, %v6588
      %6590 = vdwg.mxu0
      %v6591 = vadd.f32 %v6150, %v6289
      %v6592 = vadd.f32 %v6151, %v6309
      %v6593 = vadd.f32 %v6152, %v6329
      %v6594 = vadd.f32 %v6153, %v6349
      %v6595 = vadd.f32 %v6154, %v6369
      %v6596 = vadd.f32 %v6155, %v6389
      %v6597 = vadd.f32 %v6156, %v6409
      %v6598 = vadd.f32 %v6157, %v6429
      %v6599 = vadd.f32 %v6158, %v6449
      %v6600 = vadd.f32 %v6159, %v6469
      %v6601 = vadd.f32 %v6160, %v6489
      %v6602 = vadd.f32 %v6161, %v6509
      %v6603 = vadd.f32 %v6162, %v6529
      %v6604 = vadd.f32 %v6163, %v6549
      %v6605 = vadd.f32 %v6164, %v6569
      %v6606 = vadd.f32 %v6165, %v6589
      %s6607 = scalar_lea.vmem %s4, 40
      %v6608 = vld [vmem:[%s6607] sm:$0xff]
      %6609 = vrot.lane.b32.xlu0 %v6168, 126
      %v6610 = vpop.permute.xlu0 %6609
      %6611 = vrot.lane.b32.xlu0 %v6169, 126
      %v6612 = vpop.permute.xlu0 %6611
      %6613 = vrot.lane.b32.xlu0 %v6170, 126
      %v6614 = vpop.permute.xlu0 %6613
      %6615 = vrot.lane.b32.xlu0 %v6171, 126
      %v6616 = vpop.permute.xlu0 %6615
      %6617 = vrot.lane.b32.xlu0 %v6172, 126
      %v6618 = vpop.permute.xlu0 %6617
      %6619 = vrot.lane.b32.xlu0 %v6173, 126
      %v6620 = vpop.permute.xlu0 %6619
      %6621 = vrot.lane.b32.xlu0 %v6174, 126
      %v6622 = vpop.permute.xlu0 %6621
      %6623 = vrot.lane.b32.xlu0 %v6175, 126
      %v6624 = vpop.permute.xlu0 %6623
      %6625 = vrot.lane.b32.xlu0 %v6176, 126
      %v6626 = vpop.permute.xlu0 %6625
      %6627 = vrot.lane.b32.xlu0 %v6177, 126
      %v6628 = vpop.permute.xlu0 %6627
      %6629 = vrot.lane.b32.xlu0 %v6178, 126
      %v6630 = vpop.permute.xlu0 %6629
      %6631 = vrot.lane.b32.xlu0 %v6179, 126
      %v6632 = vpop.permute.xlu0 %6631
      %6633 = vrot.lane.b32.xlu0 %v6180, 126
      %v6634 = vpop.permute.xlu0 %6633
      %6635 = vrot.lane.b32.xlu0 %v6181, 126
      %v6636 = vpop.permute.xlu0 %6635
      %6637 = vrot.lane.b32.xlu0 %v6182, 126
      %v6638 = vpop.permute.xlu0 %6637
      %6639 = vrot.lane.b32.xlu0 %v6183, 126
      %v6640 = vpop.permute.xlu0 %6639
      %6641 = vrot.lane.b32.xlu0 %v6184, 126
      %v6642 = vpop.permute.xlu0 %6641
      %v6643 = vsel %vm1479, %v6610, %v6612
      %v6644 = vsel %vm1479, %v6612, %v6614
      %v6645 = vsel %vm1479, %v6614, %v6616
      %v6646 = vsel %vm1479, %v6616, %v6618
      %v6647 = vsel %vm1479, %v6618, %v6620
      %v6648 = vsel %vm1479, %v6620, %v6622
      %v6649 = vsel %vm1479, %v6622, %v6624
      %v6650 = vsel %vm1479, %v6624, %v6626
      %v6651 = vsel %vm1479, %v6626, %v6628
      %v6652 = vsel %vm1479, %v6628, %v6630
      %v6653 = vsel %vm1479, %v6630, %v6632
      %v6654 = vsel %vm1479, %v6632, %v6634
      %v6655 = vsel %vm1479, %v6634, %v6636
      %v6656 = vsel %vm1479, %v6636, %v6638
      %v6657 = vsel %vm1479, %v6638, %v6640
      %v6658 = vsel %vm1479, %v6640, %v6642
      %v6676 = vsel %vm4771, %v6608, 0
      %6678 = vmatpush.msra.mxu0 0.0
      %6679 = vmatpush.msra.mxu0 0.0
      %6680 = vmatpush.msra.mxu0 0.0
      %6681 = vmatpush.msra.mxu0 0.0
      %6682 = vmatpush.msra.mxu0 0.0
      %6683 = vmatpush.msra.mxu0 0.0
      %6684 = vmatpush.msra.mxu0 0.0
      %6685 = vmatpush.msra.mxu0 0.0
      %6686 = vmatpush.msra.mxu0 0.0
      %6687 = vmatpush.msra.mxu0 0.0
      %6688 = vmatpush.msra.mxu0 0.0
      %6689 = vmatpush.msra.mxu0 0.0
      %6690 = vmatpush.msra.mxu0 0.0
      %6691 = vmatpush.msra.mxu0 0.0
      %6692 = vmatpush.msra.mxu0 0.0
      %6693 = vmatpush.msra.mxu0 %v6643
      %6694 = vmatmul.f32.gmra.mxu0 %v6676
      %v6695 = vpop.f32.mrf.mxu0
      %v6696 = vadd.f32 0.0, %v6695
      %6697 = vdwg.mxu0
      %6698 = vmatpush.msra.mxu0 0.0
      %6699 = vmatpush.msra.mxu0 0.0
      %6700 = vmatpush.msra.mxu0 0.0
      %6701 = vmatpush.msra.mxu0 0.0
      %6702 = vmatpush.msra.mxu0 0.0
      %6703 = vmatpush.msra.mxu0 0.0
      %6704 = vmatpush.msra.mxu0 0.0
      %6705 = vmatpush.msra.mxu0 0.0
      %6706 = vmatpush.msra.mxu0 0.0
      %6707 = vmatpush.msra.mxu0 0.0
      %6708 = vmatpush.msra.mxu0 0.0
      %6709 = vmatpush.msra.mxu0 0.0
      %6710 = vmatpush.msra.mxu0 0.0
      %6711 = vmatpush.msra.mxu0 0.0
      %6712 = vmatpush.msra.mxu0 0.0
      %6713 = vmatpush.msra.mxu0 %v6644
      %6714 = vmatmul.f32.gmra.mxu0 %v6676
      %v6715 = vpop.f32.mrf.mxu0
      %v6716 = vadd.f32 0.0, %v6715
      %6717 = vdwg.mxu0
      %6718 = vmatpush.msra.mxu0 0.0
      %6719 = vmatpush.msra.mxu0 0.0
      %6720 = vmatpush.msra.mxu0 0.0
      %6721 = vmatpush.msra.mxu0 0.0
      %6722 = vmatpush.msra.mxu0 0.0
      %6723 = vmatpush.msra.mxu0 0.0
      %6724 = vmatpush.msra.mxu0 0.0
      %6725 = vmatpush.msra.mxu0 0.0
      %6726 = vmatpush.msra.mxu0 0.0
      %6727 = vmatpush.msra.mxu0 0.0
      %6728 = vmatpush.msra.mxu0 0.0
      %6729 = vmatpush.msra.mxu0 0.0
      %6730 = vmatpush.msra.mxu0 0.0
      %6731 = vmatpush.msra.mxu0 0.0
      %6732 = vmatpush.msra.mxu0 0.0
      %6733 = vmatpush.msra.mxu0 %v6645
      %6734 = vmatmul.f32.gmra.mxu0 %v6676
      %v6735 = vpop.f32.mrf.mxu0
      %v6736 = vadd.f32 0.0, %v6735
      %6737 = vdwg.mxu0
      %6738 = vmatpush.msra.mxu0 0.0
      %6739 = vmatpush.msra.mxu0 0.0
      %6740 = vmatpush.msra.mxu0 0.0
      %6741 = vmatpush.msra.mxu0 0.0
      %6742 = vmatpush.msra.mxu0 0.0
      %6743 = vmatpush.msra.mxu0 0.0
      %6744 = vmatpush.msra.mxu0 0.0
      %6745 = vmatpush.msra.mxu0 0.0
      %6746 = vmatpush.msra.mxu0 0.0
      %6747 = vmatpush.msra.mxu0 0.0
      %6748 = vmatpush.msra.mxu0 0.0
      %6749 = vmatpush.msra.mxu0 0.0
      %6750 = vmatpush.msra.mxu0 0.0
      %6751 = vmatpush.msra.mxu0 0.0
      %6752 = vmatpush.msra.mxu0 0.0
      %6753 = vmatpush.msra.mxu0 %v6646
      %6754 = vmatmul.f32.gmra.mxu0 %v6676
      %v6755 = vpop.f32.mrf.mxu0
      %v6756 = vadd.f32 0.0, %v6755
      %6757 = vdwg.mxu0
      %6758 = vmatpush.msra.mxu0 0.0
      %6759 = vmatpush.msra.mxu0 0.0
      %6760 = vmatpush.msra.mxu0 0.0
      %6761 = vmatpush.msra.mxu0 0.0
      %6762 = vmatpush.msra.mxu0 0.0
      %6763 = vmatpush.msra.mxu0 0.0
      %6764 = vmatpush.msra.mxu0 0.0
      %6765 = vmatpush.msra.mxu0 0.0
      %6766 = vmatpush.msra.mxu0 0.0
      %6767 = vmatpush.msra.mxu0 0.0
      %6768 = vmatpush.msra.mxu0 0.0
      %6769 = vmatpush.msra.mxu0 0.0
      %6770 = vmatpush.msra.mxu0 0.0
      %6771 = vmatpush.msra.mxu0 0.0
      %6772 = vmatpush.msra.mxu0 0.0
      %6773 = vmatpush.msra.mxu0 %v6647
      %6774 = vmatmul.f32.gmra.mxu0 %v6676
      %v6775 = vpop.f32.mrf.mxu0
      %v6776 = vadd.f32 0.0, %v6775
      %6777 = vdwg.mxu0
      %6778 = vmatpush.msra.mxu0 0.0
      %6779 = vmatpush.msra.mxu0 0.0
      %6780 = vmatpush.msra.mxu0 0.0
      %6781 = vmatpush.msra.mxu0 0.0
      %6782 = vmatpush.msra.mxu0 0.0
      %6783 = vmatpush.msra.mxu0 0.0
      %6784 = vmatpush.msra.mxu0 0.0
      %6785 = vmatpush.msra.mxu0 0.0
      %6786 = vmatpush.msra.mxu0 0.0
      %6787 = vmatpush.msra.mxu0 0.0
      %6788 = vmatpush.msra.mxu0 0.0
      %6789 = vmatpush.msra.mxu0 0.0
      %6790 = vmatpush.msra.mxu0 0.0
      %6791 = vmatpush.msra.mxu0 0.0
      %6792 = vmatpush.msra.mxu0 0.0
      %6793 = vmatpush.msra.mxu0 %v6648
      %6794 = vmatmul.f32.gmra.mxu0 %v6676
      %v6795 = vpop.f32.mrf.mxu0
      %v6796 = vadd.f32 0.0, %v6795
      %6797 = vdwg.mxu0
      %6798 = vmatpush.msra.mxu0 0.0
      %6799 = vmatpush.msra.mxu0 0.0
      %6800 = vmatpush.msra.mxu0 0.0
      %6801 = vmatpush.msra.mxu0 0.0
      %6802 = vmatpush.msra.mxu0 0.0
      %6803 = vmatpush.msra.mxu0 0.0
      %6804 = vmatpush.msra.mxu0 0.0
      %6805 = vmatpush.msra.mxu0 0.0
      %6806 = vmatpush.msra.mxu0 0.0
      %6807 = vmatpush.msra.mxu0 0.0
      %6808 = vmatpush.msra.mxu0 0.0
      %6809 = vmatpush.msra.mxu0 0.0
      %6810 = vmatpush.msra.mxu0 0.0
      %6811 = vmatpush.msra.mxu0 0.0
      %6812 = vmatpush.msra.mxu0 0.0
      %6813 = vmatpush.msra.mxu0 %v6649
      %6814 = vmatmul.f32.gmra.mxu0 %v6676
      %v6815 = vpop.f32.mrf.mxu0
      %v6816 = vadd.f32 0.0, %v6815
      %6817 = vdwg.mxu0
      %6818 = vmatpush.msra.mxu0 0.0
      %6819 = vmatpush.msra.mxu0 0.0
      %6820 = vmatpush.msra.mxu0 0.0
      %6821 = vmatpush.msra.mxu0 0.0
      %6822 = vmatpush.msra.mxu0 0.0
      %6823 = vmatpush.msra.mxu0 0.0
      %6824 = vmatpush.msra.mxu0 0.0
      %6825 = vmatpush.msra.mxu0 0.0
      %6826 = vmatpush.msra.mxu0 0.0
      %6827 = vmatpush.msra.mxu0 0.0
      %6828 = vmatpush.msra.mxu0 0.0
      %6829 = vmatpush.msra.mxu0 0.0
      %6830 = vmatpush.msra.mxu0 0.0
      %6831 = vmatpush.msra.mxu0 0.0
      %6832 = vmatpush.msra.mxu0 0.0
      %6833 = vmatpush.msra.mxu0 %v6650
      %6834 = vmatmul.f32.gmra.mxu0 %v6676
      %v6835 = vpop.f32.mrf.mxu0
      %v6836 = vadd.f32 0.0, %v6835
      %6837 = vdwg.mxu0
      %6838 = vmatpush.msra.mxu0 0.0
      %6839 = vmatpush.msra.mxu0 0.0
      %6840 = vmatpush.msra.mxu0 0.0
      %6841 = vmatpush.msra.mxu0 0.0
      %6842 = vmatpush.msra.mxu0 0.0
      %6843 = vmatpush.msra.mxu0 0.0
      %6844 = vmatpush.msra.mxu0 0.0
      %6845 = vmatpush.msra.mxu0 0.0
      %6846 = vmatpush.msra.mxu0 0.0
      %6847 = vmatpush.msra.mxu0 0.0
      %6848 = vmatpush.msra.mxu0 0.0
      %6849 = vmatpush.msra.mxu0 0.0
      %6850 = vmatpush.msra.mxu0 0.0
      %6851 = vmatpush.msra.mxu0 0.0
      %6852 = vmatpush.msra.mxu0 0.0
      %6853 = vmatpush.msra.mxu0 %v6651
      %6854 = vmatmul.f32.gmra.mxu0 %v6676
      %v6855 = vpop.f32.mrf.mxu0
      %v6856 = vadd.f32 0.0, %v6855
      %6857 = vdwg.mxu0
      %6858 = vmatpush.msra.mxu0 0.0
      %6859 = vmatpush.msra.mxu0 0.0
      %6860 = vmatpush.msra.mxu0 0.0
      %6861 = vmatpush.msra.mxu0 0.0
      %6862 = vmatpush.msra.mxu0 0.0
      %6863 = vmatpush.msra.mxu0 0.0
      %6864 = vmatpush.msra.mxu0 0.0
      %6865 = vmatpush.msra.mxu0 0.0
      %6866 = vmatpush.msra.mxu0 0.0
      %6867 = vmatpush.msra.mxu0 0.0
      %6868 = vmatpush.msra.mxu0 0.0
      %6869 = vmatpush.msra.mxu0 0.0
      %6870 = vmatpush.msra.mxu0 0.0
      %6871 = vmatpush.msra.mxu0 0.0
      %6872 = vmatpush.msra.mxu0 0.0
      %6873 = vmatpush.msra.mxu0 %v6652
      %6874 = vmatmul.f32.gmra.mxu0 %v6676
      %v6875 = vpop.f32.mrf.mxu0
      %v6876 = vadd.f32 0.0, %v6875
      %6877 = vdwg.mxu0
      %6878 = vmatpush.msra.mxu0 0.0
      %6879 = vmatpush.msra.mxu0 0.0
      %6880 = vmatpush.msra.mxu0 0.0
      %6881 = vmatpush.msra.mxu0 0.0
      %6882 = vmatpush.msra.mxu0 0.0
      %6883 = vmatpush.msra.mxu0 0.0
      %6884 = vmatpush.msra.mxu0 0.0
      %6885 = vmatpush.msra.mxu0 0.0
      %6886 = vmatpush.msra.mxu0 0.0
      %6887 = vmatpush.msra.mxu0 0.0
      %6888 = vmatpush.msra.mxu0 0.0
      %6889 = vmatpush.msra.mxu0 0.0
      %6890 = vmatpush.msra.mxu0 0.0
      %6891 = vmatpush.msra.mxu0 0.0
      %6892 = vmatpush.msra.mxu0 0.0
      %6893 = vmatpush.msra.mxu0 %v6653
      %6894 = vmatmul.f32.gmra.mxu0 %v6676
      %v6895 = vpop.f32.mrf.mxu0
      %v6896 = vadd.f32 0.0, %v6895
      %6897 = vdwg.mxu0
      %6898 = vmatpush.msra.mxu0 0.0
      %6899 = vmatpush.msra.mxu0 0.0
      %6900 = vmatpush.msra.mxu0 0.0
      %6901 = vmatpush.msra.mxu0 0.0
      %6902 = vmatpush.msra.mxu0 0.0
      %6903 = vmatpush.msra.mxu0 0.0
      %6904 = vmatpush.msra.mxu0 0.0
      %6905 = vmatpush.msra.mxu0 0.0
      %6906 = vmatpush.msra.mxu0 0.0
      %6907 = vmatpush.msra.mxu0 0.0
      %6908 = vmatpush.msra.mxu0 0.0
      %6909 = vmatpush.msra.mxu0 0.0
      %6910 = vmatpush.msra.mxu0 0.0
      %6911 = vmatpush.msra.mxu0 0.0
      %6912 = vmatpush.msra.mxu0 0.0
      %6913 = vmatpush.msra.mxu0 %v6654
      %6914 = vmatmul.f32.gmra.mxu0 %v6676
      %v6915 = vpop.f32.mrf.mxu0
      %v6916 = vadd.f32 0.0, %v6915
      %6917 = vdwg.mxu0
      %6918 = vmatpush.msra.mxu0 0.0
      %6919 = vmatpush.msra.mxu0 0.0
      %6920 = vmatpush.msra.mxu0 0.0
      %6921 = vmatpush.msra.mxu0 0.0
      %6922 = vmatpush.msra.mxu0 0.0
      %6923 = vmatpush.msra.mxu0 0.0
      %6924 = vmatpush.msra.mxu0 0.0
      %6925 = vmatpush.msra.mxu0 0.0
      %6926 = vmatpush.msra.mxu0 0.0
      %6927 = vmatpush.msra.mxu0 0.0
      %6928 = vmatpush.msra.mxu0 0.0
      %6929 = vmatpush.msra.mxu0 0.0
      %6930 = vmatpush.msra.mxu0 0.0
      %6931 = vmatpush.msra.mxu0 0.0
      %6932 = vmatpush.msra.mxu0 0.0
      %6933 = vmatpush.msra.mxu0 %v6655
      %6934 = vmatmul.f32.gmra.mxu0 %v6676
      %v6935 = vpop.f32.mrf.mxu0
      %v6936 = vadd.f32 0.0, %v6935
      %6937 = vdwg.mxu0
      %6938 = vmatpush.msra.mxu0 0.0
      %6939 = vmatpush.msra.mxu0 0.0
      %6940 = vmatpush.msra.mxu0 0.0
      %6941 = vmatpush.msra.mxu0 0.0
      %6942 = vmatpush.msra.mxu0 0.0
      %6943 = vmatpush.msra.mxu0 0.0
      %6944 = vmatpush.msra.mxu0 0.0
      %6945 = vmatpush.msra.mxu0 0.0
      %6946 = vmatpush.msra.mxu0 0.0
      %6947 = vmatpush.msra.mxu0 0.0
      %6948 = vmatpush.msra.mxu0 0.0
      %6949 = vmatpush.msra.mxu0 0.0
      %6950 = vmatpush.msra.mxu0 0.0
      %6951 = vmatpush.msra.mxu0 0.0
      %6952 = vmatpush.msra.mxu0 0.0
      %6953 = vmatpush.msra.mxu0 %v6656
      %6954 = vmatmul.f32.gmra.mxu0 %v6676
      %v6955 = vpop.f32.mrf.mxu0
      %v6956 = vadd.f32 0.0, %v6955
      %6957 = vdwg.mxu0
      %6958 = vmatpush.msra.mxu0 0.0
      %6959 = vmatpush.msra.mxu0 0.0
      %6960 = vmatpush.msra.mxu0 0.0
      %6961 = vmatpush.msra.mxu0 0.0
      %6962 = vmatpush.msra.mxu0 0.0
      %6963 = vmatpush.msra.mxu0 0.0
      %6964 = vmatpush.msra.mxu0 0.0
      %6965 = vmatpush.msra.mxu0 0.0
      %6966 = vmatpush.msra.mxu0 0.0
      %6967 = vmatpush.msra.mxu0 0.0
      %6968 = vmatpush.msra.mxu0 0.0
      %6969 = vmatpush.msra.mxu0 0.0
      %6970 = vmatpush.msra.mxu0 0.0
      %6971 = vmatpush.msra.mxu0 0.0
      %6972 = vmatpush.msra.mxu0 0.0
      %6973 = vmatpush.msra.mxu0 %v6657
      %6974 = vmatmul.f32.gmra.mxu0 %v6676
      %v6975 = vpop.f32.mrf.mxu0
      %v6976 = vadd.f32 0.0, %v6975
      %6977 = vdwg.mxu0
      %6978 = vmatpush.msra.mxu0 0.0
      %6979 = vmatpush.msra.mxu0 0.0
      %6980 = vmatpush.msra.mxu0 0.0
      %6981 = vmatpush.msra.mxu0 0.0
      %6982 = vmatpush.msra.mxu0 0.0
      %6983 = vmatpush.msra.mxu0 0.0
      %6984 = vmatpush.msra.mxu0 0.0
      %6985 = vmatpush.msra.mxu0 0.0
      %6986 = vmatpush.msra.mxu0 0.0
      %6987 = vmatpush.msra.mxu0 0.0
      %6988 = vmatpush.msra.mxu0 0.0
      %6989 = vmatpush.msra.mxu0 0.0
      %6990 = vmatpush.msra.mxu0 0.0
      %6991 = vmatpush.msra.mxu0 0.0
      %6992 = vmatpush.msra.mxu0 0.0
      %6993 = vmatpush.msra.mxu0 %v6658
      %6994 = vmatmul.f32.gmra.mxu0 %v6676
      %v6995 = vpop.f32.mrf.mxu0
      %v6996 = vadd.f32 0.0, %v6995
      %6997 = vdwg.mxu0
      %v6998 = vadd.f32 %v6591, %v6696
      %v6999 = vadd.f32 %v6592, %v6716
      %v7000 = vadd.f32 %v6593, %v6736
      %v7001 = vadd.f32 %v6594, %v6756
      %v7002 = vadd.f32 %v6595, %v6776
      %v7003 = vadd.f32 %v6596, %v6796
      %v7004 = vadd.f32 %v6597, %v6816
      %v7005 = vadd.f32 %v6598, %v6836
      %v7006 = vadd.f32 %v6599, %v6856
      %v7007 = vadd.f32 %v6600, %v6876
      %v7008 = vadd.f32 %v6601, %v6896
      %v7009 = vadd.f32 %v6602, %v6916
      %v7010 = vadd.f32 %v6603, %v6936
      %v7011 = vadd.f32 %v6604, %v6956
      %v7012 = vadd.f32 %v6605, %v6976
      %v7013 = vadd.f32 %v6606, %v6996
      %s7014 = scalar_lea.vmem %s4, 48
      %v7015 = vld [vmem:[%s7014] sm:$0xff]
      %v7017 = vsel %vm4771, %v7015, 0
      %7019 = vmatpush.msra.mxu0 0.0
      %7020 = vmatpush.msra.mxu0 0.0
      %7021 = vmatpush.msra.mxu0 0.0
      %7022 = vmatpush.msra.mxu0 0.0
      %7023 = vmatpush.msra.mxu0 0.0
      %7024 = vmatpush.msra.mxu0 0.0
      %7025 = vmatpush.msra.mxu0 0.0
      %7026 = vmatpush.msra.mxu0 0.0
      %7027 = vmatpush.msra.mxu0 0.0
      %7028 = vmatpush.msra.mxu0 0.0
      %7029 = vmatpush.msra.mxu0 0.0
      %7030 = vmatpush.msra.mxu0 0.0
      %7031 = vmatpush.msra.mxu0 0.0
      %7032 = vmatpush.msra.mxu0 0.0
      %7033 = vmatpush.msra.mxu0 0.0
      %7034 = vmatpush.msra.mxu0 %v6169
      %7035 = vmatmul.f32.gmra.mxu0 %v7017
      %v7036 = vpop.f32.mrf.mxu0
      %v7037 = vadd.f32 0.0, %v7036
      %7038 = vdwg.mxu0
      %7039 = vmatpush.msra.mxu0 0.0
      %7040 = vmatpush.msra.mxu0 0.0
      %7041 = vmatpush.msra.mxu0 0.0
      %7042 = vmatpush.msra.mxu0 0.0
      %7043 = vmatpush.msra.mxu0 0.0
      %7044 = vmatpush.msra.mxu0 0.0
      %7045 = vmatpush.msra.mxu0 0.0
      %7046 = vmatpush.msra.mxu0 0.0
      %7047 = vmatpush.msra.mxu0 0.0
      %7048 = vmatpush.msra.mxu0 0.0
      %7049 = vmatpush.msra.mxu0 0.0
      %7050 = vmatpush.msra.mxu0 0.0
      %7051 = vmatpush.msra.mxu0 0.0
      %7052 = vmatpush.msra.mxu0 0.0
      %7053 = vmatpush.msra.mxu0 0.0
      %7054 = vmatpush.msra.mxu0 %v6170
      %7055 = vmatmul.f32.gmra.mxu0 %v7017
      %v7056 = vpop.f32.mrf.mxu0
      %v7057 = vadd.f32 0.0, %v7056
      %7058 = vdwg.mxu0
      %7059 = vmatpush.msra.mxu0 0.0
      %7060 = vmatpush.msra.mxu0 0.0
      %7061 = vmatpush.msra.mxu0 0.0
      %7062 = vmatpush.msra.mxu0 0.0
      %7063 = vmatpush.msra.mxu0 0.0
      %7064 = vmatpush.msra.mxu0 0.0
      %7065 = vmatpush.msra.mxu0 0.0
      %7066 = vmatpush.msra.mxu0 0.0
      %7067 = vmatpush.msra.mxu0 0.0
      %7068 = vmatpush.msra.mxu0 0.0
      %7069 = vmatpush.msra.mxu0 0.0
      %7070 = vmatpush.msra.mxu0 0.0
      %7071 = vmatpush.msra.mxu0 0.0
      %7072 = vmatpush.msra.mxu0 0.0
      %7073 = vmatpush.msra.mxu0 0.0
      %7074 = vmatpush.msra.mxu0 %v6171
      %7075 = vmatmul.f32.gmra.mxu0 %v7017
      %v7076 = vpop.f32.mrf.mxu0
      %v7077 = vadd.f32 0.0, %v7076
      %7078 = vdwg.mxu0
      %7079 = vmatpush.msra.mxu0 0.0
      %7080 = vmatpush.msra.mxu0 0.0
      %7081 = vmatpush.msra.mxu0 0.0
      %7082 = vmatpush.msra.mxu0 0.0
      %7083 = vmatpush.msra.mxu0 0.0
      %7084 = vmatpush.msra.mxu0 0.0
      %7085 = vmatpush.msra.mxu0 0.0
      %7086 = vmatpush.msra.mxu0 0.0
      %7087 = vmatpush.msra.mxu0 0.0
      %7088 = vmatpush.msra.mxu0 0.0
      %7089 = vmatpush.msra.mxu0 0.0
      %7090 = vmatpush.msra.mxu0 0.0
      %7091 = vmatpush.msra.mxu0 0.0
      %7092 = vmatpush.msra.mxu0 0.0
      %7093 = vmatpush.msra.mxu0 0.0
      %7094 = vmatpush.msra.mxu0 %v6172
      %7095 = vmatmul.f32.gmra.mxu0 %v7017
      %v7096 = vpop.f32.mrf.mxu0
      %v7097 = vadd.f32 0.0, %v7096
      %7098 = vdwg.mxu0
      %7099 = vmatpush.msra.mxu0 0.0
      %7100 = vmatpush.msra.mxu0 0.0
      %7101 = vmatpush.msra.mxu0 0.0
      %7102 = vmatpush.msra.mxu0 0.0
      %7103 = vmatpush.msra.mxu0 0.0
      %7104 = vmatpush.msra.mxu0 0.0
      %7105 = vmatpush.msra.mxu0 0.0
      %7106 = vmatpush.msra.mxu0 0.0
      %7107 = vmatpush.msra.mxu0 0.0
      %7108 = vmatpush.msra.mxu0 0.0
      %7109 = vmatpush.msra.mxu0 0.0
      %7110 = vmatpush.msra.mxu0 0.0
      %7111 = vmatpush.msra.mxu0 0.0
      %7112 = vmatpush.msra.mxu0 0.0
      %7113 = vmatpush.msra.mxu0 0.0
      %7114 = vmatpush.msra.mxu0 %v6173
      %7115 = vmatmul.f32.gmra.mxu0 %v7017
      %v7116 = vpop.f32.mrf.mxu0
      %v7117 = vadd.f32 0.0, %v7116
      %7118 = vdwg.mxu0
      %7119 = vmatpush.msra.mxu0 0.0
      %7120 = vmatpush.msra.mxu0 0.0
      %7121 = vmatpush.msra.mxu0 0.0
      %7122 = vmatpush.msra.mxu0 0.0
      %7123 = vmatpush.msra.mxu0 0.0
      %7124 = vmatpush.msra.mxu0 0.0
      %7125 = vmatpush.msra.mxu0 0.0
      %7126 = vmatpush.msra.mxu0 0.0
      %7127 = vmatpush.msra.mxu0 0.0
      %7128 = vmatpush.msra.mxu0 0.0
      %7129 = vmatpush.msra.mxu0 0.0
      %7130 = vmatpush.msra.mxu0 0.0
      %7131 = vmatpush.msra.mxu0 0.0
      %7132 = vmatpush.msra.mxu0 0.0
      %7133 = vmatpush.msra.mxu0 0.0
      %7134 = vmatpush.msra.mxu0 %v6174
      %7135 = vmatmul.f32.gmra.mxu0 %v7017
      %v7136 = vpop.f32.mrf.mxu0
      %v7137 = vadd.f32 0.0, %v7136
      %7138 = vdwg.mxu0
      %7139 = vmatpush.msra.mxu0 0.0
      %7140 = vmatpush.msra.mxu0 0.0
      %7141 = vmatpush.msra.mxu0 0.0
      %7142 = vmatpush.msra.mxu0 0.0
      %7143 = vmatpush.msra.mxu0 0.0
      %7144 = vmatpush.msra.mxu0 0.0
      %7145 = vmatpush.msra.mxu0 0.0
      %7146 = vmatpush.msra.mxu0 0.0
      %7147 = vmatpush.msra.mxu0 0.0
      %7148 = vmatpush.msra.mxu0 0.0
      %7149 = vmatpush.msra.mxu0 0.0
      %7150 = vmatpush.msra.mxu0 0.0
      %7151 = vmatpush.msra.mxu0 0.0
      %7152 = vmatpush.msra.mxu0 0.0
      %7153 = vmatpush.msra.mxu0 0.0
      %7154 = vmatpush.msra.mxu0 %v6175
      %7155 = vmatmul.f32.gmra.mxu0 %v7017
      %v7156 = vpop.f32.mrf.mxu0
      %v7157 = vadd.f32 0.0, %v7156
      %7158 = vdwg.mxu0
      %7159 = vmatpush.msra.mxu0 0.0
      %7160 = vmatpush.msra.mxu0 0.0
      %7161 = vmatpush.msra.mxu0 0.0
      %7162 = vmatpush.msra.mxu0 0.0
      %7163 = vmatpush.msra.mxu0 0.0
      %7164 = vmatpush.msra.mxu0 0.0
      %7165 = vmatpush.msra.mxu0 0.0
      %7166 = vmatpush.msra.mxu0 0.0
      %7167 = vmatpush.msra.mxu0 0.0
      %7168 = vmatpush.msra.mxu0 0.0
      %7169 = vmatpush.msra.mxu0 0.0
      %7170 = vmatpush.msra.mxu0 0.0
      %7171 = vmatpush.msra.mxu0 0.0
      %7172 = vmatpush.msra.mxu0 0.0
      %7173 = vmatpush.msra.mxu0 0.0
      %7174 = vmatpush.msra.mxu0 %v6176
      %7175 = vmatmul.f32.gmra.mxu0 %v7017
      %v7176 = vpop.f32.mrf.mxu0
      %v7177 = vadd.f32 0.0, %v7176
      %7178 = vdwg.mxu0
      %7179 = vmatpush.msra.mxu0 0.0
      %7180 = vmatpush.msra.mxu0 0.0
      %7181 = vmatpush.msra.mxu0 0.0
      %7182 = vmatpush.msra.mxu0 0.0
      %7183 = vmatpush.msra.mxu0 0.0
      %7184 = vmatpush.msra.mxu0 0.0
      %7185 = vmatpush.msra.mxu0 0.0
      %7186 = vmatpush.msra.mxu0 0.0
      %7187 = vmatpush.msra.mxu0 0.0
      %7188 = vmatpush.msra.mxu0 0.0
      %7189 = vmatpush.msra.mxu0 0.0
      %7190 = vmatpush.msra.mxu0 0.0
      %7191 = vmatpush.msra.mxu0 0.0
      %7192 = vmatpush.msra.mxu0 0.0
      %7193 = vmatpush.msra.mxu0 0.0
      %7194 = vmatpush.msra.mxu0 %v6177
      %7195 = vmatmul.f32.gmra.mxu0 %v7017
      %v7196 = vpop.f32.mrf.mxu0
      %v7197 = vadd.f32 0.0, %v7196
      %7198 = vdwg.mxu0
      %7199 = vmatpush.msra.mxu0 0.0
      %7200 = vmatpush.msra.mxu0 0.0
      %7201 = vmatpush.msra.mxu0 0.0
      %7202 = vmatpush.msra.mxu0 0.0
      %7203 = vmatpush.msra.mxu0 0.0
      %7204 = vmatpush.msra.mxu0 0.0
      %7205 = vmatpush.msra.mxu0 0.0
      %7206 = vmatpush.msra.mxu0 0.0
      %7207 = vmatpush.msra.mxu0 0.0
      %7208 = vmatpush.msra.mxu0 0.0
      %7209 = vmatpush.msra.mxu0 0.0
      %7210 = vmatpush.msra.mxu0 0.0
      %7211 = vmatpush.msra.mxu0 0.0
      %7212 = vmatpush.msra.mxu0 0.0
      %7213 = vmatpush.msra.mxu0 0.0
      %7214 = vmatpush.msra.mxu0 %v6178
      %7215 = vmatmul.f32.gmra.mxu0 %v7017
      %v7216 = vpop.f32.mrf.mxu0
      %v7217 = vadd.f32 0.0, %v7216
      %7218 = vdwg.mxu0
      %7219 = vmatpush.msra.mxu0 0.0
      %7220 = vmatpush.msra.mxu0 0.0
      %7221 = vmatpush.msra.mxu0 0.0
      %7222 = vmatpush.msra.mxu0 0.0
      %7223 = vmatpush.msra.mxu0 0.0
      %7224 = vmatpush.msra.mxu0 0.0
      %7225 = vmatpush.msra.mxu0 0.0
      %7226 = vmatpush.msra.mxu0 0.0
      %7227 = vmatpush.msra.mxu0 0.0
      %7228 = vmatpush.msra.mxu0 0.0
      %7229 = vmatpush.msra.mxu0 0.0
      %7230 = vmatpush.msra.mxu0 0.0
      %7231 = vmatpush.msra.mxu0 0.0
      %7232 = vmatpush.msra.mxu0 0.0
      %7233 = vmatpush.msra.mxu0 0.0
      %7234 = vmatpush.msra.mxu0 %v6179
      %7235 = vmatmul.f32.gmra.mxu0 %v7017
      %v7236 = vpop.f32.mrf.mxu0
      %v7237 = vadd.f32 0.0, %v7236
      %7238 = vdwg.mxu0
      %7239 = vmatpush.msra.mxu0 0.0
      %7240 = vmatpush.msra.mxu0 0.0
      %7241 = vmatpush.msra.mxu0 0.0
      %7242 = vmatpush.msra.mxu0 0.0
      %7243 = vmatpush.msra.mxu0 0.0
      %7244 = vmatpush.msra.mxu0 0.0
      %7245 = vmatpush.msra.mxu0 0.0
      %7246 = vmatpush.msra.mxu0 0.0
      %7247 = vmatpush.msra.mxu0 0.0
      %7248 = vmatpush.msra.mxu0 0.0
      %7249 = vmatpush.msra.mxu0 0.0
      %7250 = vmatpush.msra.mxu0 0.0
      %7251 = vmatpush.msra.mxu0 0.0
      %7252 = vmatpush.msra.mxu0 0.0
      %7253 = vmatpush.msra.mxu0 0.0
      %7254 = vmatpush.msra.mxu0 %v6180
      %7255 = vmatmul.f32.gmra.mxu0 %v7017
      %v7256 = vpop.f32.mrf.mxu0
      %v7257 = vadd.f32 0.0, %v7256
      %7258 = vdwg.mxu0
      %7259 = vmatpush.msra.mxu0 0.0
      %7260 = vmatpush.msra.mxu0 0.0
      %7261 = vmatpush.msra.mxu0 0.0
      %7262 = vmatpush.msra.mxu0 0.0
      %7263 = vmatpush.msra.mxu0 0.0
      %7264 = vmatpush.msra.mxu0 0.0
      %7265 = vmatpush.msra.mxu0 0.0
      %7266 = vmatpush.msra.mxu0 0.0
      %7267 = vmatpush.msra.mxu0 0.0
      %7268 = vmatpush.msra.mxu0 0.0
      %7269 = vmatpush.msra.mxu0 0.0
      %7270 = vmatpush.msra.mxu0 0.0
      %7271 = vmatpush.msra.mxu0 0.0
      %7272 = vmatpush.msra.mxu0 0.0
      %7273 = vmatpush.msra.mxu0 0.0
      %7274 = vmatpush.msra.mxu0 %v6181
      %7275 = vmatmul.f32.gmra.mxu0 %v7017
      %v7276 = vpop.f32.mrf.mxu0
      %v7277 = vadd.f32 0.0, %v7276
      %7278 = vdwg.mxu0
      %7279 = vmatpush.msra.mxu0 0.0
      %7280 = vmatpush.msra.mxu0 0.0
      %7281 = vmatpush.msra.mxu0 0.0
      %7282 = vmatpush.msra.mxu0 0.0
      %7283 = vmatpush.msra.mxu0 0.0
      %7284 = vmatpush.msra.mxu0 0.0
      %7285 = vmatpush.msra.mxu0 0.0
      %7286 = vmatpush.msra.mxu0 0.0
      %7287 = vmatpush.msra.mxu0 0.0
      %7288 = vmatpush.msra.mxu0 0.0
      %7289 = vmatpush.msra.mxu0 0.0
      %7290 = vmatpush.msra.mxu0 0.0
      %7291 = vmatpush.msra.mxu0 0.0
      %7292 = vmatpush.msra.mxu0 0.0
      %7293 = vmatpush.msra.mxu0 0.0
      %7294 = vmatpush.msra.mxu0 %v6182
      %7295 = vmatmul.f32.gmra.mxu0 %v7017
      %v7296 = vpop.f32.mrf.mxu0
      %v7297 = vadd.f32 0.0, %v7296
      %7298 = vdwg.mxu0
      %7299 = vmatpush.msra.mxu0 0.0
      %7300 = vmatpush.msra.mxu0 0.0
      %7301 = vmatpush.msra.mxu0 0.0
      %7302 = vmatpush.msra.mxu0 0.0
      %7303 = vmatpush.msra.mxu0 0.0
      %7304 = vmatpush.msra.mxu0 0.0
      %7305 = vmatpush.msra.mxu0 0.0
      %7306 = vmatpush.msra.mxu0 0.0
      %7307 = vmatpush.msra.mxu0 0.0
      %7308 = vmatpush.msra.mxu0 0.0
      %7309 = vmatpush.msra.mxu0 0.0
      %7310 = vmatpush.msra.mxu0 0.0
      %7311 = vmatpush.msra.mxu0 0.0
      %7312 = vmatpush.msra.mxu0 0.0
      %7313 = vmatpush.msra.mxu0 0.0
      %7314 = vmatpush.msra.mxu0 %v6183
      %7315 = vmatmul.f32.gmra.mxu0 %v7017
      %v7316 = vpop.f32.mrf.mxu0
      %v7317 = vadd.f32 0.0, %v7316
      %7318 = vdwg.mxu0
      %7319 = vmatpush.msra.mxu0 0.0
      %7320 = vmatpush.msra.mxu0 0.0
      %7321 = vmatpush.msra.mxu0 0.0
      %7322 = vmatpush.msra.mxu0 0.0
      %7323 = vmatpush.msra.mxu0 0.0
      %7324 = vmatpush.msra.mxu0 0.0
      %7325 = vmatpush.msra.mxu0 0.0
      %7326 = vmatpush.msra.mxu0 0.0
      %7327 = vmatpush.msra.mxu0 0.0
      %7328 = vmatpush.msra.mxu0 0.0
      %7329 = vmatpush.msra.mxu0 0.0
      %7330 = vmatpush.msra.mxu0 0.0
      %7331 = vmatpush.msra.mxu0 0.0
      %7332 = vmatpush.msra.mxu0 0.0
      %7333 = vmatpush.msra.mxu0 0.0
      %7334 = vmatpush.msra.mxu0 %v6184
      %7335 = vmatmul.f32.gmra.mxu0 %v7017
      %v7336 = vpop.f32.mrf.mxu0
      %v7337 = vadd.f32 0.0, %v7336
      %7338 = vdwg.mxu0
      %v7339 = vadd.f32 %v6998, %v7037
      %v7340 = vadd.f32 %v6999, %v7057
      %v7341 = vadd.f32 %v7000, %v7077
      %v7342 = vadd.f32 %v7001, %v7097
      %v7343 = vadd.f32 %v7002, %v7117
      %v7344 = vadd.f32 %v7003, %v7137
      %v7345 = vadd.f32 %v7004, %v7157
      %v7346 = vadd.f32 %v7005, %v7177
      %v7347 = vadd.f32 %v7006, %v7197
      %v7348 = vadd.f32 %v7007, %v7217
      %v7349 = vadd.f32 %v7008, %v7237
      %v7350 = vadd.f32 %v7009, %v7257
      %v7351 = vadd.f32 %v7010, %v7277
      %v7352 = vadd.f32 %v7011, %v7297
      %v7353 = vadd.f32 %v7012, %v7317
      %v7354 = vadd.f32 %v7013, %v7337
      %s7355 = scalar_lea.vmem %s4, 56
      %v7356 = vld [vmem:[%s7355] sm:$0xff]
      %v7357 = vld [vmem:[#allocation3 + $0x10] sm:$0xff]
      %v7358 = vld [vmem:[#allocation3 + $0x18] sm:$0xff]
      %v7359 = vld [vmem:[#allocation3 + $0x20] sm:$0xff]
      %v7360 = vld [vmem:[#allocation3 + $0x28] sm:$0xff]
      %v7361 = vld [vmem:[#allocation3 + $0x30] sm:$0xff]
      %v7362 = vld [vmem:[#allocation3 + $0x38] sm:$0xff]
      %v7363 = vld [vmem:[#allocation3 + $0x40] sm:$0xff]
      %v7364 = vld [vmem:[#allocation3 + $0x48] sm:$0xff]
      %v7365 = vld [vmem:[#allocation3 + $0x50] sm:$0xff]
      %v7366 = vld [vmem:[#allocation3 + $0x58] sm:$0xff]
      %v7367 = vld [vmem:[#allocation3 + $0x60] sm:$0xff]
      %v7368 = vld [vmem:[#allocation3 + $0x68] sm:$0xff]
      %v7369 = vld [vmem:[#allocation3 + $0x70] sm:$0xff]
      %v7370 = vld [vmem:[#allocation3 + $0x78] sm:$0xff]
      %v7371 = vld [vmem:[#allocation3 + $0x80] sm:$0xff]
      %v7372 = vld [vmem:[#allocation3 + $0x88] sm:$0xff]
      %v7373 = vld [vmem:[#allocation3 + $0x90] sm:$0xff]
      %7391 = vrot.lane.b32.xlu0 %v7357, 127
      %v7392 = vpop.permute.xlu0 %7391
      %7393 = vrot.lane.b32.xlu0 %v7358, 127
      %v7394 = vpop.permute.xlu0 %7393
      %7395 = vrot.lane.b32.xlu0 %v7359, 127
      %v7396 = vpop.permute.xlu0 %7395
      %7397 = vrot.lane.b32.xlu0 %v7360, 127
      %v7398 = vpop.permute.xlu0 %7397
      %7399 = vrot.lane.b32.xlu0 %v7361, 127
      %v7400 = vpop.permute.xlu0 %7399
      %7401 = vrot.lane.b32.xlu0 %v7362, 127
      %v7402 = vpop.permute.xlu0 %7401
      %7403 = vrot.lane.b32.xlu0 %v7363, 127
      %v7404 = vpop.permute.xlu0 %7403
      %7405 = vrot.lane.b32.xlu0 %v7364, 127
      %v7406 = vpop.permute.xlu0 %7405
      %7407 = vrot.lane.b32.xlu0 %v7365, 127
      %v7408 = vpop.permute.xlu0 %7407
      %7409 = vrot.lane.b32.xlu0 %v7366, 127
      %v7410 = vpop.permute.xlu0 %7409
      %7411 = vrot.lane.b32.xlu0 %v7367, 127
      %v7412 = vpop.permute.xlu0 %7411
      %7413 = vrot.lane.b32.xlu0 %v7368, 127
      %v7414 = vpop.permute.xlu0 %7413
      %7415 = vrot.lane.b32.xlu0 %v7369, 127
      %v7416 = vpop.permute.xlu0 %7415
      %7417 = vrot.lane.b32.xlu0 %v7370, 127
      %v7418 = vpop.permute.xlu0 %7417
      %7419 = vrot.lane.b32.xlu0 %v7371, 127
      %v7420 = vpop.permute.xlu0 %7419
      %7421 = vrot.lane.b32.xlu0 %v7372, 127
      %v7422 = vpop.permute.xlu0 %7421
      %7423 = vrot.lane.b32.xlu0 %v7373, 127
      %v7424 = vpop.permute.xlu0 %7423
      %v7425 = vsel %vm640, %v7392, %v7394
      %v7426 = vsel %vm640, %v7394, %v7396
      %v7427 = vsel %vm640, %v7396, %v7398
      %v7428 = vsel %vm640, %v7398, %v7400
      %v7429 = vsel %vm640, %v7400, %v7402
      %v7430 = vsel %vm640, %v7402, %v7404
      %v7431 = vsel %vm640, %v7404, %v7406
      %v7432 = vsel %vm640, %v7406, %v7408
      %v7433 = vsel %vm640, %v7408, %v7410
      %v7434 = vsel %vm640, %v7410, %v7412
      %v7435 = vsel %vm640, %v7412, %v7414
      %v7436 = vsel %vm640, %v7414, %v7416
      %v7437 = vsel %vm640, %v7416, %v7418
      %v7438 = vsel %vm640, %v7418, %v7420
      %v7439 = vsel %vm640, %v7420, %v7422
      %v7440 = vsel %vm640, %v7422, %v7424
      %v7458 = vsel %vm4771, %v7356, 0
      %7460 = vmatpush.msra.mxu0 0.0
      %7461 = vmatpush.msra.mxu0 0.0
      %7462 = vmatpush.msra.mxu0 0.0
      %7463 = vmatpush.msra.mxu0 0.0
      %7464 = vmatpush.msra.mxu0 0.0
      %7465 = vmatpush.msra.mxu0 0.0
      %7466 = vmatpush.msra.mxu0 0.0
      %7467 = vmatpush.msra.mxu0 0.0
      %7468 = vmatpush.msra.mxu0 0.0
      %7469 = vmatpush.msra.mxu0 0.0
      %7470 = vmatpush.msra.mxu0 0.0
      %7471 = vmatpush.msra.mxu0 0.0
      %7472 = vmatpush.msra.mxu0 0.0
      %7473 = vmatpush.msra.mxu0 0.0
      %7474 = vmatpush.msra.mxu0 0.0
      %7475 = vmatpush.msra.mxu0 %v7425
      %7476 = vmatmul.f32.gmra.mxu0 %v7458
      %v7477 = vpop.f32.mrf.mxu0
      %v7478 = vadd.f32 0.0, %v7477
      %7479 = vdwg.mxu0
      %7480 = vmatpush.msra.mxu0 0.0
      %7481 = vmatpush.msra.mxu0 0.0
      %7482 = vmatpush.msra.mxu0 0.0
      %7483 = vmatpush.msra.mxu0 0.0
      %7484 = vmatpush.msra.mxu0 0.0
      %7485 = vmatpush.msra.mxu0 0.0
      %7486 = vmatpush.msra.mxu0 0.0
      %7487 = vmatpush.msra.mxu0 0.0
      %7488 = vmatpush.msra.mxu0 0.0
      %7489 = vmatpush.msra.mxu0 0.0
      %7490 = vmatpush.msra.mxu0 0.0
      %7491 = vmatpush.msra.mxu0 0.0
      %7492 = vmatpush.msra.mxu0 0.0
      %7493 = vmatpush.msra.mxu0 0.0
      %7494 = vmatpush.msra.mxu0 0.0
      %7495 = vmatpush.msra.mxu0 %v7426
      %7496 = vmatmul.f32.gmra.mxu0 %v7458
      %v7497 = vpop.f32.mrf.mxu0
      %v7498 = vadd.f32 0.0, %v7497
      %7499 = vdwg.mxu0
      %7500 = vmatpush.msra.mxu0 0.0
      %7501 = vmatpush.msra.mxu0 0.0
      %7502 = vmatpush.msra.mxu0 0.0
      %7503 = vmatpush.msra.mxu0 0.0
      %7504 = vmatpush.msra.mxu0 0.0
      %7505 = vmatpush.msra.mxu0 0.0
      %7506 = vmatpush.msra.mxu0 0.0
      %7507 = vmatpush.msra.mxu0 0.0
      %7508 = vmatpush.msra.mxu0 0.0
      %7509 = vmatpush.msra.mxu0 0.0
      %7510 = vmatpush.msra.mxu0 0.0
      %7511 = vmatpush.msra.mxu0 0.0
      %7512 = vmatpush.msra.mxu0 0.0
      %7513 = vmatpush.msra.mxu0 0.0
      %7514 = vmatpush.msra.mxu0 0.0
      %7515 = vmatpush.msra.mxu0 %v7427
      %7516 = vmatmul.f32.gmra.mxu0 %v7458
      %v7517 = vpop.f32.mrf.mxu0
      %v7518 = vadd.f32 0.0, %v7517
      %7519 = vdwg.mxu0
      %7520 = vmatpush.msra.mxu0 0.0
      %7521 = vmatpush.msra.mxu0 0.0
      %7522 = vmatpush.msra.mxu0 0.0
      %7523 = vmatpush.msra.mxu0 0.0
      %7524 = vmatpush.msra.mxu0 0.0
      %7525 = vmatpush.msra.mxu0 0.0
      %7526 = vmatpush.msra.mxu0 0.0
      %7527 = vmatpush.msra.mxu0 0.0
      %7528 = vmatpush.msra.mxu0 0.0
      %7529 = vmatpush.msra.mxu0 0.0
      %7530 = vmatpush.msra.mxu0 0.0
      %7531 = vmatpush.msra.mxu0 0.0
      %7532 = vmatpush.msra.mxu0 0.0
      %7533 = vmatpush.msra.mxu0 0.0
      %7534 = vmatpush.msra.mxu0 0.0
      %7535 = vmatpush.msra.mxu0 %v7428
      %7536 = vmatmul.f32.gmra.mxu0 %v7458
      %v7537 = vpop.f32.mrf.mxu0
      %v7538 = vadd.f32 0.0, %v7537
      %7539 = vdwg.mxu0
      %7540 = vmatpush.msra.mxu0 0.0
      %7541 = vmatpush.msra.mxu0 0.0
      %7542 = vmatpush.msra.mxu0 0.0
      %7543 = vmatpush.msra.mxu0 0.0
      %7544 = vmatpush.msra.mxu0 0.0
      %7545 = vmatpush.msra.mxu0 0.0
      %7546 = vmatpush.msra.mxu0 0.0
      %7547 = vmatpush.msra.mxu0 0.0
      %7548 = vmatpush.msra.mxu0 0.0
      %7549 = vmatpush.msra.mxu0 0.0
      %7550 = vmatpush.msra.mxu0 0.0
      %7551 = vmatpush.msra.mxu0 0.0
      %7552 = vmatpush.msra.mxu0 0.0
      %7553 = vmatpush.msra.mxu0 0.0
      %7554 = vmatpush.msra.mxu0 0.0
      %7555 = vmatpush.msra.mxu0 %v7429
      %7556 = vmatmul.f32.gmra.mxu0 %v7458
      %v7557 = vpop.f32.mrf.mxu0
      %v7558 = vadd.f32 0.0, %v7557
      %7559 = vdwg.mxu0
      %7560 = vmatpush.msra.mxu0 0.0
      %7561 = vmatpush.msra.mxu0 0.0
      %7562 = vmatpush.msra.mxu0 0.0
      %7563 = vmatpush.msra.mxu0 0.0
      %7564 = vmatpush.msra.mxu0 0.0
      %7565 = vmatpush.msra.mxu0 0.0
      %7566 = vmatpush.msra.mxu0 0.0
      %7567 = vmatpush.msra.mxu0 0.0
      %7568 = vmatpush.msra.mxu0 0.0
      %7569 = vmatpush.msra.mxu0 0.0
      %7570 = vmatpush.msra.mxu0 0.0
      %7571 = vmatpush.msra.mxu0 0.0
      %7572 = vmatpush.msra.mxu0 0.0
      %7573 = vmatpush.msra.mxu0 0.0
      %7574 = vmatpush.msra.mxu0 0.0
      %7575 = vmatpush.msra.mxu0 %v7430
      %7576 = vmatmul.f32.gmra.mxu0 %v7458
      %v7577 = vpop.f32.mrf.mxu0
      %v7578 = vadd.f32 0.0, %v7577
      %7579 = vdwg.mxu0
      %7580 = vmatpush.msra.mxu0 0.0
      %7581 = vmatpush.msra.mxu0 0.0
      %7582 = vmatpush.msra.mxu0 0.0
      %7583 = vmatpush.msra.mxu0 0.0
      %7584 = vmatpush.msra.mxu0 0.0
      %7585 = vmatpush.msra.mxu0 0.0
      %7586 = vmatpush.msra.mxu0 0.0
      %7587 = vmatpush.msra.mxu0 0.0
      %7588 = vmatpush.msra.mxu0 0.0
      %7589 = vmatpush.msra.mxu0 0.0
      %7590 = vmatpush.msra.mxu0 0.0
      %7591 = vmatpush.msra.mxu0 0.0
      %7592 = vmatpush.msra.mxu0 0.0
      %7593 = vmatpush.msra.mxu0 0.0
      %7594 = vmatpush.msra.mxu0 0.0
      %7595 = vmatpush.msra.mxu0 %v7431
      %7596 = vmatmul.f32.gmra.mxu0 %v7458
      %v7597 = vpop.f32.mrf.mxu0
      %v7598 = vadd.f32 0.0, %v7597
      %7599 = vdwg.mxu0
      %7600 = vmatpush.msra.mxu0 0.0
      %7601 = vmatpush.msra.mxu0 0.0
      %7602 = vmatpush.msra.mxu0 0.0
      %7603 = vmatpush.msra.mxu0 0.0
      %7604 = vmatpush.msra.mxu0 0.0
      %7605 = vmatpush.msra.mxu0 0.0
      %7606 = vmatpush.msra.mxu0 0.0
      %7607 = vmatpush.msra.mxu0 0.0
      %7608 = vmatpush.msra.mxu0 0.0
      %7609 = vmatpush.msra.mxu0 0.0
      %7610 = vmatpush.msra.mxu0 0.0
      %7611 = vmatpush.msra.mxu0 0.0
      %7612 = vmatpush.msra.mxu0 0.0
      %7613 = vmatpush.msra.mxu0 0.0
      %7614 = vmatpush.msra.mxu0 0.0
      %7615 = vmatpush.msra.mxu0 %v7432
      %7616 = vmatmul.f32.gmra.mxu0 %v7458
      %v7617 = vpop.f32.mrf.mxu0
      %v7618 = vadd.f32 0.0, %v7617
      %7619 = vdwg.mxu0
      %7620 = vmatpush.msra.mxu0 0.0
      %7621 = vmatpush.msra.mxu0 0.0
      %7622 = vmatpush.msra.mxu0 0.0
      %7623 = vmatpush.msra.mxu0 0.0
      %7624 = vmatpush.msra.mxu0 0.0
      %7625 = vmatpush.msra.mxu0 0.0
      %7626 = vmatpush.msra.mxu0 0.0
      %7627 = vmatpush.msra.mxu0 0.0
      %7628 = vmatpush.msra.mxu0 0.0
      %7629 = vmatpush.msra.mxu0 0.0
      %7630 = vmatpush.msra.mxu0 0.0
      %7631 = vmatpush.msra.mxu0 0.0
      %7632 = vmatpush.msra.mxu0 0.0
      %7633 = vmatpush.msra.mxu0 0.0
      %7634 = vmatpush.msra.mxu0 0.0
      %7635 = vmatpush.msra.mxu0 %v7433
      %7636 = vmatmul.f32.gmra.mxu0 %v7458
      %v7637 = vpop.f32.mrf.mxu0
      %v7638 = vadd.f32 0.0, %v7637
      %7639 = vdwg.mxu0
      %7640 = vmatpush.msra.mxu0 0.0
      %7641 = vmatpush.msra.mxu0 0.0
      %7642 = vmatpush.msra.mxu0 0.0
      %7643 = vmatpush.msra.mxu0 0.0
      %7644 = vmatpush.msra.mxu0 0.0
      %7645 = vmatpush.msra.mxu0 0.0
      %7646 = vmatpush.msra.mxu0 0.0
      %7647 = vmatpush.msra.mxu0 0.0
      %7648 = vmatpush.msra.mxu0 0.0
      %7649 = vmatpush.msra.mxu0 0.0
      %7650 = vmatpush.msra.mxu0 0.0
      %7651 = vmatpush.msra.mxu0 0.0
      %7652 = vmatpush.msra.mxu0 0.0
      %7653 = vmatpush.msra.mxu0 0.0
      %7654 = vmatpush.msra.mxu0 0.0
      %7655 = vmatpush.msra.mxu0 %v7434
      %7656 = vmatmul.f32.gmra.mxu0 %v7458
      %v7657 = vpop.f32.mrf.mxu0
      %v7658 = vadd.f32 0.0, %v7657
      %7659 = vdwg.mxu0
      %7660 = vmatpush.msra.mxu0 0.0
      %7661 = vmatpush.msra.mxu0 0.0
      %7662 = vmatpush.msra.mxu0 0.0
      %7663 = vmatpush.msra.mxu0 0.0
      %7664 = vmatpush.msra.mxu0 0.0
      %7665 = vmatpush.msra.mxu0 0.0
      %7666 = vmatpush.msra.mxu0 0.0
      %7667 = vmatpush.msra.mxu0 0.0
      %7668 = vmatpush.msra.mxu0 0.0
      %7669 = vmatpush.msra.mxu0 0.0
      %7670 = vmatpush.msra.mxu0 0.0
      %7671 = vmatpush.msra.mxu0 0.0
      %7672 = vmatpush.msra.mxu0 0.0
      %7673 = vmatpush.msra.mxu0 0.0
      %7674 = vmatpush.msra.mxu0 0.0
      %7675 = vmatpush.msra.mxu0 %v7435
      %7676 = vmatmul.f32.gmra.mxu0 %v7458
      %v7677 = vpop.f32.mrf.mxu0
      %v7678 = vadd.f32 0.0, %v7677
      %7679 = vdwg.mxu0
      %7680 = vmatpush.msra.mxu0 0.0
      %7681 = vmatpush.msra.mxu0 0.0
      %7682 = vmatpush.msra.mxu0 0.0
      %7683 = vmatpush.msra.mxu0 0.0
      %7684 = vmatpush.msra.mxu0 0.0
      %7685 = vmatpush.msra.mxu0 0.0
      %7686 = vmatpush.msra.mxu0 0.0
      %7687 = vmatpush.msra.mxu0 0.0
      %7688 = vmatpush.msra.mxu0 0.0
      %7689 = vmatpush.msra.mxu0 0.0
      %7690 = vmatpush.msra.mxu0 0.0
      %7691 = vmatpush.msra.mxu0 0.0
      %7692 = vmatpush.msra.mxu0 0.0
      %7693 = vmatpush.msra.mxu0 0.0
      %7694 = vmatpush.msra.mxu0 0.0
      %7695 = vmatpush.msra.mxu0 %v7436
      %7696 = vmatmul.f32.gmra.mxu0 %v7458
      %v7697 = vpop.f32.mrf.mxu0
      %v7698 = vadd.f32 0.0, %v7697
      %7699 = vdwg.mxu0
      %7700 = vmatpush.msra.mxu0 0.0
      %7701 = vmatpush.msra.mxu0 0.0
      %7702 = vmatpush.msra.mxu0 0.0
      %7703 = vmatpush.msra.mxu0 0.0
      %7704 = vmatpush.msra.mxu0 0.0
      %7705 = vmatpush.msra.mxu0 0.0
      %7706 = vmatpush.msra.mxu0 0.0
      %7707 = vmatpush.msra.mxu0 0.0
      %7708 = vmatpush.msra.mxu0 0.0
      %7709 = vmatpush.msra.mxu0 0.0
      %7710 = vmatpush.msra.mxu0 0.0
      %7711 = vmatpush.msra.mxu0 0.0
      %7712 = vmatpush.msra.mxu0 0.0
      %7713 = vmatpush.msra.mxu0 0.0
      %7714 = vmatpush.msra.mxu0 0.0
      %7715 = vmatpush.msra.mxu0 %v7437
      %7716 = vmatmul.f32.gmra.mxu0 %v7458
      %v7717 = vpop.f32.mrf.mxu0
      %v7718 = vadd.f32 0.0, %v7717
      %7719 = vdwg.mxu0
      %7720 = vmatpush.msra.mxu0 0.0
      %7721 = vmatpush.msra.mxu0 0.0
      %7722 = vmatpush.msra.mxu0 0.0
      %7723 = vmatpush.msra.mxu0 0.0
      %7724 = vmatpush.msra.mxu0 0.0
      %7725 = vmatpush.msra.mxu0 0.0
      %7726 = vmatpush.msra.mxu0 0.0
      %7727 = vmatpush.msra.mxu0 0.0
      %7728 = vmatpush.msra.mxu0 0.0
      %7729 = vmatpush.msra.mxu0 0.0
      %7730 = vmatpush.msra.mxu0 0.0
      %7731 = vmatpush.msra.mxu0 0.0
      %7732 = vmatpush.msra.mxu0 0.0
      %7733 = vmatpush.msra.mxu0 0.0
      %7734 = vmatpush.msra.mxu0 0.0
      %7735 = vmatpush.msra.mxu0 %v7438
      %7736 = vmatmul.f32.gmra.mxu0 %v7458
      %v7737 = vpop.f32.mrf.mxu0
      %v7738 = vadd.f32 0.0, %v7737
      %7739 = vdwg.mxu0
      %7740 = vmatpush.msra.mxu0 0.0
      %7741 = vmatpush.msra.mxu0 0.0
      %7742 = vmatpush.msra.mxu0 0.0
      %7743 = vmatpush.msra.mxu0 0.0
      %7744 = vmatpush.msra.mxu0 0.0
      %7745 = vmatpush.msra.mxu0 0.0
      %7746 = vmatpush.msra.mxu0 0.0
      %7747 = vmatpush.msra.mxu0 0.0
      %7748 = vmatpush.msra.mxu0 0.0
      %7749 = vmatpush.msra.mxu0 0.0
      %7750 = vmatpush.msra.mxu0 0.0
      %7751 = vmatpush.msra.mxu0 0.0
      %7752 = vmatpush.msra.mxu0 0.0
      %7753 = vmatpush.msra.mxu0 0.0
      %7754 = vmatpush.msra.mxu0 0.0
      %7755 = vmatpush.msra.mxu0 %v7439
      %7756 = vmatmul.f32.gmra.mxu0 %v7458
      %v7757 = vpop.f32.mrf.mxu0
      %v7758 = vadd.f32 0.0, %v7757
      %7759 = vdwg.mxu0
      %7760 = vmatpush.msra.mxu0 0.0
      %7761 = vmatpush.msra.mxu0 0.0
      %7762 = vmatpush.msra.mxu0 0.0
      %7763 = vmatpush.msra.mxu0 0.0
      %7764 = vmatpush.msra.mxu0 0.0
      %7765 = vmatpush.msra.mxu0 0.0
      %7766 = vmatpush.msra.mxu0 0.0
      %7767 = vmatpush.msra.mxu0 0.0
      %7768 = vmatpush.msra.mxu0 0.0
      %7769 = vmatpush.msra.mxu0 0.0
      %7770 = vmatpush.msra.mxu0 0.0
      %7771 = vmatpush.msra.mxu0 0.0
      %7772 = vmatpush.msra.mxu0 0.0
      %7773 = vmatpush.msra.mxu0 0.0
      %7774 = vmatpush.msra.mxu0 0.0
      %7775 = vmatpush.msra.mxu0 %v7440
      %7776 = vmatmul.f32.gmra.mxu0 %v7458
      %v7777 = vpop.f32.mrf.mxu0
      %v7778 = vadd.f32 0.0, %v7777
      %7779 = vdwg.mxu0
      %v7780 = vadd.f32 %v7339, %v7478
      %v7781 = vadd.f32 %v7340, %v7498
      %v7782 = vadd.f32 %v7341, %v7518
      %v7783 = vadd.f32 %v7342, %v7538
      %v7784 = vadd.f32 %v7343, %v7558
      %v7785 = vadd.f32 %v7344, %v7578
      %v7786 = vadd.f32 %v7345, %v7598
      %v7787 = vadd.f32 %v7346, %v7618
      %v7788 = vadd.f32 %v7347, %v7638
      %v7789 = vadd.f32 %v7348, %v7658
      %v7790 = vadd.f32 %v7349, %v7678
      %v7791 = vadd.f32 %v7350, %v7698
      %v7792 = vadd.f32 %v7351, %v7718
      %v7793 = vadd.f32 %v7352, %v7738
      %v7794 = vadd.f32 %v7353, %v7758
      %v7795 = vadd.f32 %v7354, %v7778
      %s7796 = scalar_lea.vmem %s4, 64
      %v7797 = vld [vmem:[%s7796] sm:$0xff]
      %7798 = vrot.lane.b32.xlu0 %v7357, 126
      %v7799 = vpop.permute.xlu0 %7798
      %7800 = vrot.lane.b32.xlu0 %v7358, 126
      %v7801 = vpop.permute.xlu0 %7800
      %7802 = vrot.lane.b32.xlu0 %v7359, 126
      %v7803 = vpop.permute.xlu0 %7802
      %7804 = vrot.lane.b32.xlu0 %v7360, 126
      %v7805 = vpop.permute.xlu0 %7804
      %7806 = vrot.lane.b32.xlu0 %v7361, 126
      %v7807 = vpop.permute.xlu0 %7806
      %7808 = vrot.lane.b32.xlu0 %v7362, 126
      %v7809 = vpop.permute.xlu0 %7808
      %7810 = vrot.lane.b32.xlu0 %v7363, 126
      %v7811 = vpop.permute.xlu0 %7810
      %7812 = vrot.lane.b32.xlu0 %v7364, 126
      %v7813 = vpop.permute.xlu0 %7812
      %7814 = vrot.lane.b32.xlu0 %v7365, 126
      %v7815 = vpop.permute.xlu0 %7814
      %7816 = vrot.lane.b32.xlu0 %v7366, 126
      %v7817 = vpop.permute.xlu0 %7816
      %7818 = vrot.lane.b32.xlu0 %v7367, 126
      %v7819 = vpop.permute.xlu0 %7818
      %7820 = vrot.lane.b32.xlu0 %v7368, 126
      %v7821 = vpop.permute.xlu0 %7820
      %7822 = vrot.lane.b32.xlu0 %v7369, 126
      %v7823 = vpop.permute.xlu0 %7822
      %7824 = vrot.lane.b32.xlu0 %v7370, 126
      %v7825 = vpop.permute.xlu0 %7824
      %7826 = vrot.lane.b32.xlu0 %v7371, 126
      %v7827 = vpop.permute.xlu0 %7826
      %7828 = vrot.lane.b32.xlu0 %v7372, 126
      %v7829 = vpop.permute.xlu0 %7828
      %7830 = vrot.lane.b32.xlu0 %v7373, 126
      %v7831 = vpop.permute.xlu0 %7830
      %v7832 = vsel %vm1479, %v7799, %v7801
      %v7833 = vsel %vm1479, %v7801, %v7803
      %v7834 = vsel %vm1479, %v7803, %v7805
      %v7835 = vsel %vm1479, %v7805, %v7807
      %v7836 = vsel %vm1479, %v7807, %v7809
      %v7837 = vsel %vm1479, %v7809, %v7811
      %v7838 = vsel %vm1479, %v7811, %v7813
      %v7839 = vsel %vm1479, %v7813, %v7815
      %v7840 = vsel %vm1479, %v7815, %v7817
      %v7841 = vsel %vm1479, %v7817, %v7819
      %v7842 = vsel %vm1479, %v7819, %v7821
      %v7843 = vsel %vm1479, %v7821, %v7823
      %v7844 = vsel %vm1479, %v7823, %v7825
      %v7845 = vsel %vm1479, %v7825, %v7827
      %v7846 = vsel %vm1479, %v7827, %v7829
      %v7847 = vsel %vm1479, %v7829, %v7831
      %v7865 = vsel %vm4771, %v7797, 0
      %7867 = vmatpush.msra.mxu0 0.0
      %7868 = vmatpush.msra.mxu0 0.0
      %7869 = vmatpush.msra.mxu0 0.0
      %7870 = vmatpush.msra.mxu0 0.0
      %7871 = vmatpush.msra.mxu0 0.0
      %7872 = vmatpush.msra.mxu0 0.0
      %7873 = vmatpush.msra.mxu0 0.0
      %7874 = vmatpush.msra.mxu0 0.0
      %7875 = vmatpush.msra.mxu0 0.0
      %7876 = vmatpush.msra.mxu0 0.0
      %7877 = vmatpush.msra.mxu0 0.0
      %7878 = vmatpush.msra.mxu0 0.0
      %7879 = vmatpush.msra.mxu0 0.0
      %7880 = vmatpush.msra.mxu0 0.0
      %7881 = vmatpush.msra.mxu0 0.0
      %7882 = vmatpush.msra.mxu0 %v7832
      %7883 = vmatmul.f32.gmra.mxu0 %v7865
      %v7884 = vpop.f32.mrf.mxu0
      %v7885 = vadd.f32 0.0, %v7884
      %7886 = vdwg.mxu0
      %7887 = vmatpush.msra.mxu0 0.0
      %7888 = vmatpush.msra.mxu0 0.0
      %7889 = vmatpush.msra.mxu0 0.0
      %7890 = vmatpush.msra.mxu0 0.0
      %7891 = vmatpush.msra.mxu0 0.0
      %7892 = vmatpush.msra.mxu0 0.0
      %7893 = vmatpush.msra.mxu0 0.0
      %7894 = vmatpush.msra.mxu0 0.0
      %7895 = vmatpush.msra.mxu0 0.0
      %7896 = vmatpush.msra.mxu0 0.0
      %7897 = vmatpush.msra.mxu0 0.0
      %7898 = vmatpush.msra.mxu0 0.0
      %7899 = vmatpush.msra.mxu0 0.0
      %7900 = vmatpush.msra.mxu0 0.0
      %7901 = vmatpush.msra.mxu0 0.0
      %7902 = vmatpush.msra.mxu0 %v7833
      %7903 = vmatmul.f32.gmra.mxu0 %v7865
      %v7904 = vpop.f32.mrf.mxu0
      %v7905 = vadd.f32 0.0, %v7904
      %7906 = vdwg.mxu0
      %7907 = vmatpush.msra.mxu0 0.0
      %7908 = vmatpush.msra.mxu0 0.0
      %7909 = vmatpush.msra.mxu0 0.0
      %7910 = vmatpush.msra.mxu0 0.0
      %7911 = vmatpush.msra.mxu0 0.0
      %7912 = vmatpush.msra.mxu0 0.0
      %7913 = vmatpush.msra.mxu0 0.0
      %7914 = vmatpush.msra.mxu0 0.0
      %7915 = vmatpush.msra.mxu0 0.0
      %7916 = vmatpush.msra.mxu0 0.0
      %7917 = vmatpush.msra.mxu0 0.0
      %7918 = vmatpush.msra.mxu0 0.0
      %7919 = vmatpush.msra.mxu0 0.0
      %7920 = vmatpush.msra.mxu0 0.0
      %7921 = vmatpush.msra.mxu0 0.0
      %7922 = vmatpush.msra.mxu0 %v7834
      %7923 = vmatmul.f32.gmra.mxu0 %v7865
      %v7924 = vpop.f32.mrf.mxu0
      %v7925 = vadd.f32 0.0, %v7924
      %7926 = vdwg.mxu0
      %7927 = vmatpush.msra.mxu0 0.0
      %7928 = vmatpush.msra.mxu0 0.0
      %7929 = vmatpush.msra.mxu0 0.0
      %7930 = vmatpush.msra.mxu0 0.0
      %7931 = vmatpush.msra.mxu0 0.0
      %7932 = vmatpush.msra.mxu0 0.0
      %7933 = vmatpush.msra.mxu0 0.0
      %7934 = vmatpush.msra.mxu0 0.0
      %7935 = vmatpush.msra.mxu0 0.0
      %7936 = vmatpush.msra.mxu0 0.0
      %7937 = vmatpush.msra.mxu0 0.0
      %7938 = vmatpush.msra.mxu0 0.0
      %7939 = vmatpush.msra.mxu0 0.0
      %7940 = vmatpush.msra.mxu0 0.0
      %7941 = vmatpush.msra.mxu0 0.0
      %7942 = vmatpush.msra.mxu0 %v7835
      %7943 = vmatmul.f32.gmra.mxu0 %v7865
      %v7944 = vpop.f32.mrf.mxu0
      %v7945 = vadd.f32 0.0, %v7944
      %7946 = vdwg.mxu0
      %7947 = vmatpush.msra.mxu0 0.0
      %7948 = vmatpush.msra.mxu0 0.0
      %7949 = vmatpush.msra.mxu0 0.0
      %7950 = vmatpush.msra.mxu0 0.0
      %7951 = vmatpush.msra.mxu0 0.0
      %7952 = vmatpush.msra.mxu0 0.0
      %7953 = vmatpush.msra.mxu0 0.0
      %7954 = vmatpush.msra.mxu0 0.0
      %7955 = vmatpush.msra.mxu0 0.0
      %7956 = vmatpush.msra.mxu0 0.0
      %7957 = vmatpush.msra.mxu0 0.0
      %7958 = vmatpush.msra.mxu0 0.0
      %7959 = vmatpush.msra.mxu0 0.0
      %7960 = vmatpush.msra.mxu0 0.0
      %7961 = vmatpush.msra.mxu0 0.0
      %7962 = vmatpush.msra.mxu0 %v7836
      %7963 = vmatmul.f32.gmra.mxu0 %v7865
      %v7964 = vpop.f32.mrf.mxu0
      %v7965 = vadd.f32 0.0, %v7964
      %7966 = vdwg.mxu0
      %7967 = vmatpush.msra.mxu0 0.0
      %7968 = vmatpush.msra.mxu0 0.0
      %7969 = vmatpush.msra.mxu0 0.0
      %7970 = vmatpush.msra.mxu0 0.0
      %7971 = vmatpush.msra.mxu0 0.0
      %7972 = vmatpush.msra.mxu0 0.0
      %7973 = vmatpush.msra.mxu0 0.0
      %7974 = vmatpush.msra.mxu0 0.0
      %7975 = vmatpush.msra.mxu0 0.0
      %7976 = vmatpush.msra.mxu0 0.0
      %7977 = vmatpush.msra.mxu0 0.0
      %7978 = vmatpush.msra.mxu0 0.0
      %7979 = vmatpush.msra.mxu0 0.0
      %7980 = vmatpush.msra.mxu0 0.0
      %7981 = vmatpush.msra.mxu0 0.0
      %7982 = vmatpush.msra.mxu0 %v7837
      %7983 = vmatmul.f32.gmra.mxu0 %v7865
      %v7984 = vpop.f32.mrf.mxu0
      %v7985 = vadd.f32 0.0, %v7984
      %7986 = vdwg.mxu0
      %7987 = vmatpush.msra.mxu0 0.0
      %7988 = vmatpush.msra.mxu0 0.0
      %7989 = vmatpush.msra.mxu0 0.0
      %7990 = vmatpush.msra.mxu0 0.0
      %7991 = vmatpush.msra.mxu0 0.0
      %7992 = vmatpush.msra.mxu0 0.0
      %7993 = vmatpush.msra.mxu0 0.0
      %7994 = vmatpush.msra.mxu0 0.0
      %7995 = vmatpush.msra.mxu0 0.0
      %7996 = vmatpush.msra.mxu0 0.0
      %7997 = vmatpush.msra.mxu0 0.0
      %7998 = vmatpush.msra.mxu0 0.0
      %7999 = vmatpush.msra.mxu0 0.0
      %8000 = vmatpush.msra.mxu0 0.0
      %8001 = vmatpush.msra.mxu0 0.0
      %8002 = vmatpush.msra.mxu0 %v7838
      %8003 = vmatmul.f32.gmra.mxu0 %v7865
      %v8004 = vpop.f32.mrf.mxu0
      %v8005 = vadd.f32 0.0, %v8004
      %8006 = vdwg.mxu0
      %8007 = vmatpush.msra.mxu0 0.0
      %8008 = vmatpush.msra.mxu0 0.0
      %8009 = vmatpush.msra.mxu0 0.0
      %8010 = vmatpush.msra.mxu0 0.0
      %8011 = vmatpush.msra.mxu0 0.0
      %8012 = vmatpush.msra.mxu0 0.0
      %8013 = vmatpush.msra.mxu0 0.0
      %8014 = vmatpush.msra.mxu0 0.0
      %8015 = vmatpush.msra.mxu0 0.0
      %8016 = vmatpush.msra.mxu0 0.0
      %8017 = vmatpush.msra.mxu0 0.0
      %8018 = vmatpush.msra.mxu0 0.0
      %8019 = vmatpush.msra.mxu0 0.0
      %8020 = vmatpush.msra.mxu0 0.0
      %8021 = vmatpush.msra.mxu0 0.0
      %8022 = vmatpush.msra.mxu0 %v7839
      %8023 = vmatmul.f32.gmra.mxu0 %v7865
      %v8024 = vpop.f32.mrf.mxu0
      %v8025 = vadd.f32 0.0, %v8024
      %8026 = vdwg.mxu0
      %8027 = vmatpush.msra.mxu0 0.0
      %8028 = vmatpush.msra.mxu0 0.0
      %8029 = vmatpush.msra.mxu0 0.0
      %8030 = vmatpush.msra.mxu0 0.0
      %8031 = vmatpush.msra.mxu0 0.0
      %8032 = vmatpush.msra.mxu0 0.0
      %8033 = vmatpush.msra.mxu0 0.0
      %8034 = vmatpush.msra.mxu0 0.0
      %8035 = vmatpush.msra.mxu0 0.0
      %8036 = vmatpush.msra.mxu0 0.0
      %8037 = vmatpush.msra.mxu0 0.0
      %8038 = vmatpush.msra.mxu0 0.0
      %8039 = vmatpush.msra.mxu0 0.0
      %8040 = vmatpush.msra.mxu0 0.0
      %8041 = vmatpush.msra.mxu0 0.0
      %8042 = vmatpush.msra.mxu0 %v7840
      %8043 = vmatmul.f32.gmra.mxu0 %v7865
      %v8044 = vpop.f32.mrf.mxu0
      %v8045 = vadd.f32 0.0, %v8044
      %8046 = vdwg.mxu0
      %8047 = vmatpush.msra.mxu0 0.0
      %8048 = vmatpush.msra.mxu0 0.0
      %8049 = vmatpush.msra.mxu0 0.0
      %8050 = vmatpush.msra.mxu0 0.0
      %8051 = vmatpush.msra.mxu0 0.0
      %8052 = vmatpush.msra.mxu0 0.0
      %8053 = vmatpush.msra.mxu0 0.0
      %8054 = vmatpush.msra.mxu0 0.0
      %8055 = vmatpush.msra.mxu0 0.0
      %8056 = vmatpush.msra.mxu0 0.0
      %8057 = vmatpush.msra.mxu0 0.0
      %8058 = vmatpush.msra.mxu0 0.0
      %8059 = vmatpush.msra.mxu0 0.0
      %8060 = vmatpush.msra.mxu0 0.0
      %8061 = vmatpush.msra.mxu0 0.0
      %8062 = vmatpush.msra.mxu0 %v7841
      %8063 = vmatmul.f32.gmra.mxu0 %v7865
      %v8064 = vpop.f32.mrf.mxu0
      %v8065 = vadd.f32 0.0, %v8064
      %8066 = vdwg.mxu0
      %8067 = vmatpush.msra.mxu0 0.0
      %8068 = vmatpush.msra.mxu0 0.0
      %8069 = vmatpush.msra.mxu0 0.0
      %8070 = vmatpush.msra.mxu0 0.0
      %8071 = vmatpush.msra.mxu0 0.0
      %8072 = vmatpush.msra.mxu0 0.0
      %8073 = vmatpush.msra.mxu0 0.0
      %8074 = vmatpush.msra.mxu0 0.0
      %8075 = vmatpush.msra.mxu0 0.0
      %8076 = vmatpush.msra.mxu0 0.0
      %8077 = vmatpush.msra.mxu0 0.0
      %8078 = vmatpush.msra.mxu0 0.0
      %8079 = vmatpush.msra.mxu0 0.0
      %8080 = vmatpush.msra.mxu0 0.0
      %8081 = vmatpush.msra.mxu0 0.0
      %8082 = vmatpush.msra.mxu0 %v7842
      %8083 = vmatmul.f32.gmra.mxu0 %v7865
      %v8084 = vpop.f32.mrf.mxu0
      %v8085 = vadd.f32 0.0, %v8084
      %8086 = vdwg.mxu0
      %8087 = vmatpush.msra.mxu0 0.0
      %8088 = vmatpush.msra.mxu0 0.0
      %8089 = vmatpush.msra.mxu0 0.0
      %8090 = vmatpush.msra.mxu0 0.0
      %8091 = vmatpush.msra.mxu0 0.0
      %8092 = vmatpush.msra.mxu0 0.0
      %8093 = vmatpush.msra.mxu0 0.0
      %8094 = vmatpush.msra.mxu0 0.0
      %8095 = vmatpush.msra.mxu0 0.0
      %8096 = vmatpush.msra.mxu0 0.0
      %8097 = vmatpush.msra.mxu0 0.0
      %8098 = vmatpush.msra.mxu0 0.0
      %8099 = vmatpush.msra.mxu0 0.0
      %8100 = vmatpush.msra.mxu0 0.0
      %8101 = vmatpush.msra.mxu0 0.0
      %8102 = vmatpush.msra.mxu0 %v7843
      %8103 = vmatmul.f32.gmra.mxu0 %v7865
      %v8104 = vpop.f32.mrf.mxu0
      %v8105 = vadd.f32 0.0, %v8104
      %8106 = vdwg.mxu0
      %8107 = vmatpush.msra.mxu0 0.0
      %8108 = vmatpush.msra.mxu0 0.0
      %8109 = vmatpush.msra.mxu0 0.0
      %8110 = vmatpush.msra.mxu0 0.0
      %8111 = vmatpush.msra.mxu0 0.0
      %8112 = vmatpush.msra.mxu0 0.0
      %8113 = vmatpush.msra.mxu0 0.0
      %8114 = vmatpush.msra.mxu0 0.0
      %8115 = vmatpush.msra.mxu0 0.0
      %8116 = vmatpush.msra.mxu0 0.0
      %8117 = vmatpush.msra.mxu0 0.0
      %8118 = vmatpush.msra.mxu0 0.0
      %8119 = vmatpush.msra.mxu0 0.0
      %8120 = vmatpush.msra.mxu0 0.0
      %8121 = vmatpush.msra.mxu0 0.0
      %8122 = vmatpush.msra.mxu0 %v7844
      %8123 = vmatmul.f32.gmra.mxu0 %v7865
      %v8124 = vpop.f32.mrf.mxu0
      %v8125 = vadd.f32 0.0, %v8124
      %8126 = vdwg.mxu0
      %8127 = vmatpush.msra.mxu0 0.0
      %8128 = vmatpush.msra.mxu0 0.0
      %8129 = vmatpush.msra.mxu0 0.0
      %8130 = vmatpush.msra.mxu0 0.0
      %8131 = vmatpush.msra.mxu0 0.0
      %8132 = vmatpush.msra.mxu0 0.0
      %8133 = vmatpush.msra.mxu0 0.0
      %8134 = vmatpush.msra.mxu0 0.0
      %8135 = vmatpush.msra.mxu0 0.0
      %8136 = vmatpush.msra.mxu0 0.0
      %8137 = vmatpush.msra.mxu0 0.0
      %8138 = vmatpush.msra.mxu0 0.0
      %8139 = vmatpush.msra.mxu0 0.0
      %8140 = vmatpush.msra.mxu0 0.0
      %8141 = vmatpush.msra.mxu0 0.0
      %8142 = vmatpush.msra.mxu0 %v7845
      %8143 = vmatmul.f32.gmra.mxu0 %v7865
      %v8144 = vpop.f32.mrf.mxu0
      %v8145 = vadd.f32 0.0, %v8144
      %8146 = vdwg.mxu0
      %8147 = vmatpush.msra.mxu0 0.0
      %8148 = vmatpush.msra.mxu0 0.0
      %8149 = vmatpush.msra.mxu0 0.0
      %8150 = vmatpush.msra.mxu0 0.0
      %8151 = vmatpush.msra.mxu0 0.0
      %8152 = vmatpush.msra.mxu0 0.0
      %8153 = vmatpush.msra.mxu0 0.0
      %8154 = vmatpush.msra.mxu0 0.0
      %8155 = vmatpush.msra.mxu0 0.0
      %8156 = vmatpush.msra.mxu0 0.0
      %8157 = vmatpush.msra.mxu0 0.0
      %8158 = vmatpush.msra.mxu0 0.0
      %8159 = vmatpush.msra.mxu0 0.0
      %8160 = vmatpush.msra.mxu0 0.0
      %8161 = vmatpush.msra.mxu0 0.0
      %8162 = vmatpush.msra.mxu0 %v7846
      %8163 = vmatmul.f32.gmra.mxu0 %v7865
      %v8164 = vpop.f32.mrf.mxu0
      %v8165 = vadd.f32 0.0, %v8164
      %8166 = vdwg.mxu0
      %8167 = vmatpush.msra.mxu0 0.0
      %8168 = vmatpush.msra.mxu0 0.0
      %8169 = vmatpush.msra.mxu0 0.0
      %8170 = vmatpush.msra.mxu0 0.0
      %8171 = vmatpush.msra.mxu0 0.0
      %8172 = vmatpush.msra.mxu0 0.0
      %8173 = vmatpush.msra.mxu0 0.0
      %8174 = vmatpush.msra.mxu0 0.0
      %8175 = vmatpush.msra.mxu0 0.0
      %8176 = vmatpush.msra.mxu0 0.0
      %8177 = vmatpush.msra.mxu0 0.0
      %8178 = vmatpush.msra.mxu0 0.0
      %8179 = vmatpush.msra.mxu0 0.0
      %8180 = vmatpush.msra.mxu0 0.0
      %8181 = vmatpush.msra.mxu0 0.0
      %8182 = vmatpush.msra.mxu0 %v7847
      %8183 = vmatmul.f32.gmra.mxu0 %v7865
      %v8184 = vpop.f32.mrf.mxu0
      %v8185 = vadd.f32 0.0, %v8184
      %8186 = vdwg.mxu0
      %v8187 = vadd.f32 %v7780, %v7885
      %v8188 = vadd.f32 %v7781, %v7905
      %v8189 = vadd.f32 %v7782, %v7925
      %v8190 = vadd.f32 %v7783, %v7945
      %v8191 = vadd.f32 %v7784, %v7965
      %v8192 = vadd.f32 %v7785, %v7985
      %v8193 = vadd.f32 %v7786, %v8005
      %v8194 = vadd.f32 %v7787, %v8025
      %v8195 = vadd.f32 %v7788, %v8045
      %v8196 = vadd.f32 %v7789, %v8065
      %v8197 = vadd.f32 %v7790, %v8085
      %v8198 = vadd.f32 %v7791, %v8105
      %v8199 = vadd.f32 %v7792, %v8125
      %v8200 = vadd.f32 %v7793, %v8145
      %v8201 = vadd.f32 %v7794, %v8165
      %v8202 = vadd.f32 %v7795, %v8185
      %v8203 = vld [vmem:[%s5] sm:$0xff]
      %8205 = vset.pattern.permute.xlu0 0
      %8206 = vperm.xlu0 %8205, %v8203
      %v8207 = vpop.permute.xlu0 %8206
      %v8209 = vadd.f32 %v8187, %v8207
      %v8210 = vadd.f32 %v8188, %v8207
      %v8211 = vadd.f32 %v8189, %v8207
      %v8212 = vadd.f32 %v8190, %v8207
      %v8213 = vadd.f32 %v8191, %v8207
      %v8214 = vadd.f32 %v8192, %v8207
      %v8215 = vadd.f32 %v8193, %v8207
      %v8216 = vadd.f32 %v8194, %v8207
      %v8217 = vadd.f32 %v8195, %v8207
      %v8218 = vadd.f32 %v8196, %v8207
      %v8219 = vadd.f32 %v8197, %v8207
      %v8220 = vadd.f32 %v8198, %v8207
      %v8221 = vadd.f32 %v8199, %v8207
      %v8222 = vadd.f32 %v8200, %v8207
      %v8223 = vadd.f32 %v8201, %v8207
      %v8224 = vadd.f32 %v8202, %v8207
      %v8225 = vlaneseq
      %v8226 = vand.u32 %v8225, 127
      %v8227 = vstv %s234
      %vm8228 = vcmp.lt.s32.totalorder %v8226, %v8227
      %v8229 = vsel %vm8228, %v8209, 0.0
      %v8231 = vrot.slane %v8229, 1
      %v8232 = vrot.slane %v8229, 2
      %v8233 = vrot.slane %v8229, 3
      %v8234 = vrot.slane %v8229, 4
      %v8235 = vrot.slane %v8229, 5
      %v8236 = vrot.slane %v8229, 6
      %v8237 = vrot.slane %v8229, 7
      %vm8245 = vcmask 90112
      %8246 = vst.msk [vmem:[%s233] sm:$0x1] %vm8245, %v8229
      %8247 = vst.msk [vmem:[%s233 + $0x10] sm:$0x1] %vm8245, %v8231
      %8248 = vst.msk [vmem:[%s233 + $0x20] sm:$0x1] %vm8245, %v8232
      %8249 = vst.msk [vmem:[%s233 + $0x30] sm:$0x1] %vm8245, %v8233
      %8250 = vst.msk [vmem:[%s233 + $0x40] sm:$0x1] %vm8245, %v8234
      %8251 = vst.msk [vmem:[%s233 + $0x50] sm:$0x1] %vm8245, %v8235
      %8252 = vst.msk [vmem:[%s233 + $0x60] sm:$0x1] %vm8245, %v8236
      %8253 = vst.msk [vmem:[%s233 + $0x70] sm:$0x1] %vm8245, %v8237
      %v8254 = vsel %vm8228, %v8210, 0.0
      %v8256 = vrot.slane %v8254, 1
      %v8257 = vrot.slane %v8254, 2
      %v8258 = vrot.slane %v8254, 3
      %v8259 = vrot.slane %v8254, 4
      %v8260 = vrot.slane %v8254, 5
      %v8261 = vrot.slane %v8254, 6
      %v8262 = vrot.slane %v8254, 7
      %8270 = vst.msk [vmem:[%s233 + $0x1] sm:$0x1] %vm8245, %v8254
      %8271 = vst.msk [vmem:[%s233 + $0x11] sm:$0x1] %vm8245, %v8256
      %8272 = vst.msk [vmem:[%s233 + $0x21] sm:$0x1] %vm8245, %v8257
      %8273 = vst.msk [vmem:[%s233 + $0x31] sm:$0x1] %vm8245, %v8258
      %8274 = vst.msk [vmem:[%s233 + $0x41] sm:$0x1] %vm8245, %v8259
      %8275 = vst.msk [vmem:[%s233 + $0x51] sm:$0x1] %vm8245, %v8260
      %8276 = vst.msk [vmem:[%s233 + $0x61] sm:$0x1] %vm8245, %v8261
      %8277 = vst.msk [vmem:[%s233 + $0x71] sm:$0x1] %vm8245, %v8262
      %v8278 = vsel %vm8228, %v8211, 0.0
      %v8280 = vrot.slane %v8278, 1
      %v8281 = vrot.slane %v8278, 2
      %v8282 = vrot.slane %v8278, 3
      %v8283 = vrot.slane %v8278, 4
      %v8284 = vrot.slane %v8278, 5
      %v8285 = vrot.slane %v8278, 6
      %v8286 = vrot.slane %v8278, 7
      %8294 = vst.msk [vmem:[%s233 + $0x2] sm:$0x1] %vm8245, %v8278
      %8295 = vst.msk [vmem:[%s233 + $0x12] sm:$0x1] %vm8245, %v8280
      %8296 = vst.msk [vmem:[%s233 + $0x22] sm:$0x1] %vm8245, %v8281
      %8297 = vst.msk [vmem:[%s233 + $0x32] sm:$0x1] %vm8245, %v8282
      %8298 = vst.msk [vmem:[%s233 + $0x42] sm:$0x1] %vm8245, %v8283
      %8299 = vst.msk [vmem:[%s233 + $0x52] sm:$0x1] %vm8245, %v8284
      %8300 = vst.msk [vmem:[%s233 + $0x62] sm:$0x1] %vm8245, %v8285
      %8301 = vst.msk [vmem:[%s233 + $0x72] sm:$0x1] %vm8245, %v8286
      %v8302 = vsel %vm8228, %v8212, 0.0
      %v8304 = vrot.slane %v8302, 1
      %v8305 = vrot.slane %v8302, 2
      %v8306 = vrot.slane %v8302, 3
      %v8307 = vrot.slane %v8302, 4
      %v8308 = vrot.slane %v8302, 5
      %v8309 = vrot.slane %v8302, 6
      %v8310 = vrot.slane %v8302, 7
      %8318 = vst.msk [vmem:[%s233 + $0x3] sm:$0x1] %vm8245, %v8302
      %8319 = vst.msk [vmem:[%s233 + $0x13] sm:$0x1] %vm8245, %v8304
      %8320 = vst.msk [vmem:[%s233 + $0x23] sm:$0x1] %vm8245, %v8305
      %8321 = vst.msk [vmem:[%s233 + $0x33] sm:$0x1] %vm8245, %v8306
      %8322 = vst.msk [vmem:[%s233 + $0x43] sm:$0x1] %vm8245, %v8307
      %8323 = vst.msk [vmem:[%s233 + $0x53] sm:$0x1] %vm8245, %v8308
      %8324 = vst.msk [vmem:[%s233 + $0x63] sm:$0x1] %vm8245, %v8309
      %8325 = vst.msk [vmem:[%s233 + $0x73] sm:$0x1] %vm8245, %v8310
      %v8326 = vsel %vm8228, %v8213, 0.0
      %v8328 = vrot.slane %v8326, 1
      %v8329 = vrot.slane %v8326, 2
      %v8330 = vrot.slane %v8326, 3
      %v8331 = vrot.slane %v8326, 4
      %v8332 = vrot.slane %v8326, 5
      %v8333 = vrot.slane %v8326, 6
      %v8334 = vrot.slane %v8326, 7
      %8342 = vst.msk [vmem:[%s233 + $0x4] sm:$0x1] %vm8245, %v8326
      %8343 = vst.msk [vmem:[%s233 + $0x14] sm:$0x1] %vm8245, %v8328
      %8344 = vst.msk [vmem:[%s233 + $0x24] sm:$0x1] %vm8245, %v8329
      %8345 = vst.msk [vmem:[%s233 + $0x34] sm:$0x1] %vm8245, %v8330
      %8346 = vst.msk [vmem:[%s233 + $0x44] sm:$0x1] %vm8245, %v8331
      %8347 = vst.msk [vmem:[%s233 + $0x54] sm:$0x1] %vm8245, %v8332
      %8348 = vst.msk [vmem:[%s233 + $0x64] sm:$0x1] %vm8245, %v8333
      %8349 = vst.msk [vmem:[%s233 + $0x74] sm:$0x1] %vm8245, %v8334
      %v8350 = vsel %vm8228, %v8214, 0.0
      %v8352 = vrot.slane %v8350, 1
      %v8353 = vrot.slane %v8350, 2
      %v8354 = vrot.slane %v8350, 3
      %v8355 = vrot.slane %v8350, 4
      %v8356 = vrot.slane %v8350, 5
      %v8357 = vrot.slane %v8350, 6
      %v8358 = vrot.slane %v8350, 7
      %8366 = vst.msk [vmem:[%s233 + $0x5] sm:$0x1] %vm8245, %v8350
      %8367 = vst.msk [vmem:[%s233 + $0x15] sm:$0x1] %vm8245, %v8352
      %8368 = vst.msk [vmem:[%s233 + $0x25] sm:$0x1] %vm8245, %v8353
      %8369 = vst.msk [vmem:[%s233 + $0x35] sm:$0x1] %vm8245, %v8354
      %8370 = vst.msk [vmem:[%s233 + $0x45] sm:$0x1] %vm8245, %v8355
      %8371 = vst.msk [vmem:[%s233 + $0x55] sm:$0x1] %vm8245, %v8356
      %8372 = vst.msk [vmem:[%s233 + $0x65] sm:$0x1] %vm8245, %v8357
      %8373 = vst.msk [vmem:[%s233 + $0x75] sm:$0x1] %vm8245, %v8358
      %v8374 = vsel %vm8228, %v8215, 0.0
      %v8376 = vrot.slane %v8374, 1
      %v8377 = vrot.slane %v8374, 2
      %v8378 = vrot.slane %v8374, 3
      %v8379 = vrot.slane %v8374, 4
      %v8380 = vrot.slane %v8374, 5
      %v8381 = vrot.slane %v8374, 6
      %v8382 = vrot.slane %v8374, 7
      %8390 = vst.msk [vmem:[%s233 + $0x6] sm:$0x1] %vm8245, %v8374
      %8391 = vst.msk [vmem:[%s233 + $0x16] sm:$0x1] %vm8245, %v8376
      %8392 = vst.msk [vmem:[%s233 + $0x26] sm:$0x1] %vm8245, %v8377
      %8393 = vst.msk [vmem:[%s233 + $0x36] sm:$0x1] %vm8245, %v8378
      %8394 = vst.msk [vmem:[%s233 + $0x46] sm:$0x1] %vm8245, %v8379
      %8395 = vst.msk [vmem:[%s233 + $0x56] sm:$0x1] %vm8245, %v8380
      %8396 = vst.msk [vmem:[%s233 + $0x66] sm:$0x1] %vm8245, %v8381
      %8397 = vst.msk [vmem:[%s233 + $0x76] sm:$0x1] %vm8245, %v8382
      %v8398 = vsel %vm8228, %v8216, 0.0
      %v8400 = vrot.slane %v8398, 1
      %v8401 = vrot.slane %v8398, 2
      %v8402 = vrot.slane %v8398, 3
      %v8403 = vrot.slane %v8398, 4
      %v8404 = vrot.slane %v8398, 5
      %v8405 = vrot.slane %v8398, 6
      %v8406 = vrot.slane %v8398, 7
      %8414 = vst.msk [vmem:[%s233 + $0x7] sm:$0x1] %vm8245, %v8398
      %8415 = vst.msk [vmem:[%s233 + $0x17] sm:$0x1] %vm8245, %v8400
      %8416 = vst.msk [vmem:[%s233 + $0x27] sm:$0x1] %vm8245, %v8401
      %8417 = vst.msk [vmem:[%s233 + $0x37] sm:$0x1] %vm8245, %v8402
      %8418 = vst.msk [vmem:[%s233 + $0x47] sm:$0x1] %vm8245, %v8403
      %8419 = vst.msk [vmem:[%s233 + $0x57] sm:$0x1] %vm8245, %v8404
      %8420 = vst.msk [vmem:[%s233 + $0x67] sm:$0x1] %vm8245, %v8405
      %8421 = vst.msk [vmem:[%s233 + $0x77] sm:$0x1] %vm8245, %v8406
      %v8422 = vsel %vm8228, %v8217, 0.0
      %v8424 = vrot.slane %v8422, 1
      %v8425 = vrot.slane %v8422, 2
      %v8426 = vrot.slane %v8422, 3
      %v8427 = vrot.slane %v8422, 4
      %v8428 = vrot.slane %v8422, 5
      %v8429 = vrot.slane %v8422, 6
      %v8430 = vrot.slane %v8422, 7
      %8438 = vst.msk [vmem:[%s233 + $0x8] sm:$0x1] %vm8245, %v8422
      %8439 = vst.msk [vmem:[%s233 + $0x18] sm:$0x1] %vm8245, %v8424
      %8440 = vst.msk [vmem:[%s233 + $0x28] sm:$0x1] %vm8245, %v8425
      %8441 = vst.msk [vmem:[%s233 + $0x38] sm:$0x1] %vm8245, %v8426
      %8442 = vst.msk [vmem:[%s233 + $0x48] sm:$0x1] %vm8245, %v8427
      %8443 = vst.msk [vmem:[%s233 + $0x58] sm:$0x1] %vm8245, %v8428
      %8444 = vst.msk [vmem:[%s233 + $0x68] sm:$0x1] %vm8245, %v8429
      %8445 = vst.msk [vmem:[%s233 + $0x78] sm:$0x1] %vm8245, %v8430
      %v8446 = vsel %vm8228, %v8218, 0.0
      %v8448 = vrot.slane %v8446, 1
      %v8449 = vrot.slane %v8446, 2
      %v8450 = vrot.slane %v8446, 3
      %v8451 = vrot.slane %v8446, 4
      %v8452 = vrot.slane %v8446, 5
      %v8453 = vrot.slane %v8446, 6
      %v8454 = vrot.slane %v8446, 7
      %8462 = vst.msk [vmem:[%s233 + $0x9] sm:$0x1] %vm8245, %v8446
      %8463 = vst.msk [vmem:[%s233 + $0x19] sm:$0x1] %vm8245, %v8448
      %8464 = vst.msk [vmem:[%s233 + $0x29] sm:$0x1] %vm8245, %v8449
      %8465 = vst.msk [vmem:[%s233 + $0x39] sm:$0x1] %vm8245, %v8450
      %8466 = vst.msk [vmem:[%s233 + $0x49] sm:$0x1] %vm8245, %v8451
      %8467 = vst.msk [vmem:[%s233 + $0x59] sm:$0x1] %vm8245, %v8452
      %8468 = vst.msk [vmem:[%s233 + $0x69] sm:$0x1] %vm8245, %v8453
      %8469 = vst.msk [vmem:[%s233 + $0x79] sm:$0x1] %vm8245, %v8454
      %v8470 = vsel %vm8228, %v8219, 0.0
      %v8472 = vrot.slane %v8470, 1
      %v8473 = vrot.slane %v8470, 2
      %v8474 = vrot.slane %v8470, 3
      %v8475 = vrot.slane %v8470, 4
      %v8476 = vrot.slane %v8470, 5
      %v8477 = vrot.slane %v8470, 6
      %v8478 = vrot.slane %v8470, 7
      %8486 = vst.msk [vmem:[%s233 + $0xa] sm:$0x1] %vm8245, %v8470
      %8487 = vst.msk [vmem:[%s233 + $0x1a] sm:$0x1] %vm8245, %v8472
      %8488 = vst.msk [vmem:[%s233 + $0x2a] sm:$0x1] %vm8245, %v8473
      %8489 = vst.msk [vmem:[%s233 + $0x3a] sm:$0x1] %vm8245, %v8474
      %8490 = vst.msk [vmem:[%s233 + $0x4a] sm:$0x1] %vm8245, %v8475
      %8491 = vst.msk [vmem:[%s233 + $0x5a] sm:$0x1] %vm8245, %v8476
      %8492 = vst.msk [vmem:[%s233 + $0x6a] sm:$0x1] %vm8245, %v8477
      %8493 = vst.msk [vmem:[%s233 + $0x7a] sm:$0x1] %vm8245, %v8478
      %v8494 = vsel %vm8228, %v8220, 0.0
      %v8496 = vrot.slane %v8494, 1
      %v8497 = vrot.slane %v8494, 2
      %v8498 = vrot.slane %v8494, 3
      %v8499 = vrot.slane %v8494, 4
      %v8500 = vrot.slane %v8494, 5
      %v8501 = vrot.slane %v8494, 6
      %v8502 = vrot.slane %v8494, 7
      %8510 = vst.msk [vmem:[%s233 + $0xb] sm:$0x1] %vm8245, %v8494
      %8511 = vst.msk [vmem:[%s233 + $0x1b] sm:$0x1] %vm8245, %v8496
      %8512 = vst.msk [vmem:[%s233 + $0x2b] sm:$0x1] %vm8245, %v8497
      %8513 = vst.msk [vmem:[%s233 + $0x3b] sm:$0x1] %vm8245, %v8498
      %8514 = vst.msk [vmem:[%s233 + $0x4b] sm:$0x1] %vm8245, %v8499
      %8515 = vst.msk [vmem:[%s233 + $0x5b] sm:$0x1] %vm8245, %v8500
      %8516 = vst.msk [vmem:[%s233 + $0x6b] sm:$0x1] %vm8245, %v8501
      %8517 = vst.msk [vmem:[%s233 + $0x7b] sm:$0x1] %vm8245, %v8502
      %v8518 = vsel %vm8228, %v8221, 0.0
      %v8520 = vrot.slane %v8518, 1
      %v8521 = vrot.slane %v8518, 2
      %v8522 = vrot.slane %v8518, 3
      %v8523 = vrot.slane %v8518, 4
      %v8524 = vrot.slane %v8518, 5
      %v8525 = vrot.slane %v8518, 6
      %v8526 = vrot.slane %v8518, 7
      %8534 = vst.msk [vmem:[%s233 + $0xc] sm:$0x1] %vm8245, %v8518
      %8535 = vst.msk [vmem:[%s233 + $0x1c] sm:$0x1] %vm8245, %v8520
      %8536 = vst.msk [vmem:[%s233 + $0x2c] sm:$0x1] %vm8245, %v8521
      %8537 = vst.msk [vmem:[%s233 + $0x3c] sm:$0x1] %vm8245, %v8522
      %8538 = vst.msk [vmem:[%s233 + $0x4c] sm:$0x1] %vm8245, %v8523
      %8539 = vst.msk [vmem:[%s233 + $0x5c] sm:$0x1] %vm8245, %v8524
      %8540 = vst.msk [vmem:[%s233 + $0x6c] sm:$0x1] %vm8245, %v8525
      %8541 = vst.msk [vmem:[%s233 + $0x7c] sm:$0x1] %vm8245, %v8526
      %v8542 = vsel %vm8228, %v8222, 0.0
      %v8544 = vrot.slane %v8542, 1
      %v8545 = vrot.slane %v8542, 2
      %v8546 = vrot.slane %v8542, 3
      %v8547 = vrot.slane %v8542, 4
      %v8548 = vrot.slane %v8542, 5
      %v8549 = vrot.slane %v8542, 6
      %v8550 = vrot.slane %v8542, 7
      %8558 = vst.msk [vmem:[%s233 + $0xd] sm:$0x1] %vm8245, %v8542
      %8559 = vst.msk [vmem:[%s233 + $0x1d] sm:$0x1] %vm8245, %v8544
      %8560 = vst.msk [vmem:[%s233 + $0x2d] sm:$0x1] %vm8245, %v8545
      %8561 = vst.msk [vmem:[%s233 + $0x3d] sm:$0x1] %vm8245, %v8546
      %8562 = vst.msk [vmem:[%s233 + $0x4d] sm:$0x1] %vm8245, %v8547
      %8563 = vst.msk [vmem:[%s233 + $0x5d] sm:$0x1] %vm8245, %v8548
      %8564 = vst.msk [vmem:[%s233 + $0x6d] sm:$0x1] %vm8245, %v8549
      %8565 = vst.msk [vmem:[%s233 + $0x7d] sm:$0x1] %vm8245, %v8550
      %v8566 = vsel %vm8228, %v8223, 0.0
      %v8568 = vrot.slane %v8566, 1
      %v8569 = vrot.slane %v8566, 2
      %v8570 = vrot.slane %v8566, 3
      %v8571 = vrot.slane %v8566, 4
      %v8572 = vrot.slane %v8566, 5
      %v8573 = vrot.slane %v8566, 6
      %v8574 = vrot.slane %v8566, 7
      %8582 = vst.msk [vmem:[%s233 + $0xe] sm:$0x1] %vm8245, %v8566
      %8583 = vst.msk [vmem:[%s233 + $0x1e] sm:$0x1] %vm8245, %v8568
      %8584 = vst.msk [vmem:[%s233 + $0x2e] sm:$0x1] %vm8245, %v8569
      %8585 = vst.msk [vmem:[%s233 + $0x3e] sm:$0x1] %vm8245, %v8570
      %8586 = vst.msk [vmem:[%s233 + $0x4e] sm:$0x1] %vm8245, %v8571
      %8587 = vst.msk [vmem:[%s233 + $0x5e] sm:$0x1] %vm8245, %v8572
      %8588 = vst.msk [vmem:[%s233 + $0x6e] sm:$0x1] %vm8245, %v8573
      %8589 = vst.msk [vmem:[%s233 + $0x7e] sm:$0x1] %vm8245, %v8574
      %v8590 = vsel %vm8228, %v8224, 0.0
      %v8592 = vrot.slane %v8590, 1
      %v8593 = vrot.slane %v8590, 2
      %v8594 = vrot.slane %v8590, 3
      %v8595 = vrot.slane %v8590, 4
      %v8596 = vrot.slane %v8590, 5
      %v8597 = vrot.slane %v8590, 6
      %v8598 = vrot.slane %v8590, 7
      %8606 = vst.msk [vmem:[%s233 + $0xf] sm:$0x1] %vm8245, %v8590
      %8607 = vst.msk [vmem:[%s233 + $0x1f] sm:$0x1] %vm8245, %v8592
      %8608 = vst.msk [vmem:[%s233 + $0x2f] sm:$0x1] %vm8245, %v8593
      %8609 = vst.msk [vmem:[%s233 + $0x3f] sm:$0x1] %vm8245, %v8594
      %8610 = vst.msk [vmem:[%s233 + $0x4f] sm:$0x1] %vm8245, %v8595
      %8611 = vst.msk [vmem:[%s233 + $0x5f] sm:$0x1] %vm8245, %v8596
      %8612 = vst.msk [vmem:[%s233 + $0x6f] sm:$0x1] %vm8245, %v8597
      %8613 = vst.msk [vmem:[%s233 + $0x7f] sm:$0x1] %vm8245, %v8598
      %p8614 = scmp.lt.s32.totalorder %s25, 1
      %s8615 = scalar_select %p8614, %s25, 1
      %s8616 = smul.addr %s8615, 16
      %s8617 = smul.addr %s8616, 8
      %s8618 = scalar_lea.vmem %s6, %s8617
      // Predicated region
      $region41: #{tpu_custom_call.1} parent=39 // pred_check
        %p8619 = pneg %p153
      $region42: #{tpu_custom_call.1} parent=39 // pred_check_branch
        %8621 = sbr.rel (%p8619) target = $region44
      $region43: #{tpu_custom_call.1} parent=39 // pred_region
        _
      $region44: #{tpu_custom_call.1} parent=39 // pred_fallthru
        _
    $region40: #{tpu_custom_call.1} parent=5 // pred_fallthru
      _
    %p8622 = scmp.le.s32.totalorder 2, %s20
    // Predicated region
    $region45: #{tpu_custom_call.1} parent=5 // pred_check
      %p8623 = pneg %p8622
    $region46: #{tpu_custom_call.1} parent=5 // pred_check_branch
      %8625 = sbr.rel (%p8623) target = $region48
    $region47: #{tpu_custom_call.1} parent=5 // pred_region
      %s8626 = ssub.s32 %s20, 2
      // Predicated region
      $region49: #{tpu_custom_call.1} parent=47 // pred_check
        %p8627 = pneg %p159
      $region50: #{tpu_custom_call.1} parent=47 // pred_check_branch
        %8629 = sbr.rel (%p8627) target = $region52
      $region51: #{tpu_custom_call.1} parent=47 // pred_region
        %p8630 = scmp.lt.s32.totalorder %s26, 1
        %s8631 = scalar_select %p8630, %s26, 1
        %s8632 = smul.addr %s8631, 16
        %s8633 = smul.addr %s8632, 8
        %s8634 = scalar_lea.vmem %s6, %s8633
      $region52: #{tpu_custom_call.1} parent=47 // pred_fallthru
        _
    $region48: #{tpu_custom_call.1} parent=5 // pred_fallthru
      _
  $region6: #{tpu_custom_call.1} parent=0 // loop_footer
    %s24 = sadd.s32 1, %s20
  $region7: #{tpu_custom_call.1} parent=0 // loop_footer_branch
    %19 = sbr.rel target = $region3
  $region8: #{tpu_custom_call.1} parent=0 // loop_exit
    _

</llo_original>
